<compile_context>
chip_gen: v7x
topology: tpu7x:2x2x1
jax: 0.10.0
libtpu: 0.0.40
codegen_flags: <defaults>
</compile_context>

<pallas_src>
import functools

import jax
import jax.numpy as jnp
from jax.experimental import pallas as pl
from jax.experimental.pallas import tpu as pltpu


def _attention_stem_kernel(H, W, Hp, Wp, Cin, Cout, K, S, P,
                           xp_ref, w_ref, o_ref):
    """One batch element.

    xp_ref : (1, Cin, Hp*Wp)       zero-padded input, padded spatial on lanes
    w_ref  : ((2+K*K)*Cout, Cin)   fused [q; k; emb-folded v per window] weights
    o_ref  : (1, Cout, H*W)
    """
    xp = xp_ref[0]                      # (Cin, Hp*Wp)
    w = w_ref[...]                      # (Ctot, Cin)

    # One fused 1x1 conv for q, k and all K*K emb-folded value maps (f32 acc).
    full = jnp.dot(w, xp, preferred_element_type=jnp.float32)   # (Ctot, Hp*Wp)
    full = full.reshape((2 + K * K) * Cout, Hp, Wp)

    # query: interior (= unpadded) region of the q map, lane-dense (Cout, H*W)
    q = jax.lax.slice(full, (0, P, P), (Cout, P + H, P + W))
    q = q.reshape(Cout, H * W)

    # key map over the whole padded image
    k_full = jax.lax.slice(full, (Cout, 0, 0), (2 * Cout, Hp, Wp))

    # Online softmax over the K*K window positions, per pixel and per channel.
    m_run = None
    l_run = None
    acc = None
    for ki in range(K):
        for kj in range(K):
            kk = ki * K + kj
            lim_h = ki + (H - 1) * S + 1
            lim_w = kj + (W - 1) * S + 1

            # window (ki, kj): static strided slice of the precomputed maps
            k_win = jax.lax.slice(k_full, (0, ki, kj),
                                  (Cout, lim_h, lim_w), (1, S, S))
            k_win = k_win.reshape(Cout, H * W)

            c0 = (2 + kk) * Cout
            v_win = jax.lax.slice(full, (c0, ki, kj),
                                  (c0 + Cout, lim_h, lim_w), (1, S, S))
            v_win = v_win.reshape(Cout, H * W)

            logit = q * k_win                         # (Cout, H*W), f32

            if m_run is None:                         # first window position
                m_run = logit
                l_run = jnp.ones_like(logit)
                acc = v_win
            else:
                m_new = jnp.maximum(m_run, logit)
                alpha = jnp.exp(m_run - m_new)
                p = jnp.exp(logit - m_new)
                l_run = alpha * l_run + p
                acc = alpha * acc + p * v_win
                m_run = m_new

    out = acc * pl.reciprocal(l_run, approx=True)     # softmax normalize (EUP)
    o_ref[0] = out.astype(o_ref.dtype)


def attention_stem(x_nchw, wq, wk, wv, emb_a, emb_b, emb_mix,
                   *, kernel_size, stride=1, padding=0, groups=1, m=4):
    """Pallas implementation of AttentionStem.forward.  Returns NCHW output."""
    B, Cin, H, W = x_nchw.shape
    Cout = wq.shape[1]
    K, S, P, M = kernel_size, stride, padding, m
    assert Cout % groups == 0
    Hp, Wp = H + 2 * P, W + 2 * P
    assert (H - 1) * S + K <= Hp and (W - 1) * S + K <= Wp, \
        "padding too small for the requested kernel_size / stride"

    # ---- parameter-only glue (tiny, done once in plain JAX) ----
    # positional mixture logits, softmax over m
    la = jnp.dot(emb_mix, emb_a)                          # (m, K)
    lb = jnp.dot(emb_mix, emb_b)                          # (m, K)
    emb = jax.nn.softmax((la[:, :, None] + lb[:, None, :]).reshape(M, K * K),
                         axis=0)                          # (m, K*K)

    # fold the mixture into the value weights: one (Cout, Cin) matrix per
    # window position; then fuse q / k / all-window-v into a single weight.
    wv_comb = jnp.einsum('mk,mio->koi', emb.astype(wv.dtype), wv)  # (K*K,Cout,Cin)
    w_all = jnp.concatenate([wq.T[None], wk.T[None], wv_comb], axis=0)
    w_all = w_all.reshape((2 + K * K) * Cout, Cin)

    # ---- layout glue: channels-first, zero-pad, flatten padded spatial ----
    xp = jnp.pad(x_nchw, ((0, 0), (0, 0), (P, P), (P, P)))
    xp = xp.reshape(B, Cin, Hp * Wp)

    kernel = functools.partial(_attention_stem_kernel,
                               H, W, Hp, Wp, Cin, Cout, K, S, P)

    out = pl.pallas_call(
        kernel,
        out_shape=jax.ShapeDtypeStruct((B, Cout, H * W), x_nchw.dtype),
        grid=(B,),
        in_specs=[
            pl.BlockSpec((1, Cin, Hp * Wp), lambda b: (b, 0, 0)),
            pl.BlockSpec(((2 + K * K) * Cout, Cin), lambda b: (0, 0)),
        ],
        out_specs=pl.BlockSpec((1, Cout, H * W), lambda b: (b, 0, 0)),
        compiler_params=pltpu.CompilerParams(
            dimension_semantics=("parallel",),
            vmem_limit_bytes=32 * 1024 * 1024),
    )(xp, w_all)

    return out.reshape(B, Cout, H, W)                     # NCHW


def attention_stem_reference(x_nchw, wq, wk, wv, emb_a, emb_b, emb_mix,
                             *, kernel_size, stride=1, padding=0, groups=1, m=4):
    """Pure-JAX mirror of the PyTorch forward (for validation)."""
    B, Cin, H, W = x_nchw.shape
    Cout = wq.shape[1]
    K, S, P, M = kernel_size, stride, padding, m
    xp = jnp.pad(x_nchw, ((0, 0), (0, 0), (P, P), (P, P)))
    q = jnp.einsum('bchw,cd->bdhw', x_nchw, wq)
    k = jnp.einsum('bchw,cd->bdhw', xp, wk)
    v = jnp.stack([jnp.einsum('bchw,cd->bdhw', xp, wv[i]) for i in range(M)], 0)

    la = jnp.dot(emb_mix, emb_a)
    lb = jnp.dot(emb_mix, emb_b)
    emb = jax.nn.softmax((la[:, :, None] + lb[:, None, :]).reshape(M, -1),
                         axis=0).reshape(M, K, K)

    logits, vsum = [], []
    for ki in range(K):
        for kj in range(K):
            hs, ws = ki + (H - 1) * S + 1, kj + (W - 1) * S + 1
            kwin = k[:, :, ki:hs:S, kj:ws:S]                   # (B,Cout,H,W)
            logits.append(q * kwin)
            vs = sum(emb[i, ki, kj] * v[i, :, :, ki:hs:S, kj:ws:S]
                     for i in range(M))
            vsum.append(vs)
    logits = jnp.stack(logits, axis=-1)                        # (B,Cout,H,W,K*K)
    vsum = jnp.stack(vsum, axis=-1)
    attn = jax.nn.softmax(logits, axis=-1)
    return jnp.sum(attn * vsum, axis=-1)                       # (B,Cout,H,W)


if __name__ == "__main__":
    # Small shapes consistent with the module: in=4, out=8, 3x3 window, pad=1.
    B, Cin, H, W = 2, 4, 16, 16
    Cout, K, S, P, G, M = 8, 3, 1, 1, 2, 4

    key = jax.random.PRNGKey(0)
    ks = jax.random.split(key, 7)
    x = jax.random.normal(ks[0], (B, Cin, H, W), jnp.float32)

    # Deterministic parameter init (kaiming-like scale for the 1x1 convs).
    scale = jnp.sqrt(2.0 / Cout)
    wq = jax.random.normal(ks[1], (Cin, Cout), jnp.float32) * scale
    wk = jax.random.normal(ks[2], (Cin, Cout), jnp.float32) * scale
    wv = jax.random.normal(ks[3], (M, Cin, Cout), jnp.float32) * scale
    emb_a = jax.random.normal(ks[4], (Cout // G, K), jnp.float32)
    emb_b = jax.random.normal(ks[5], (Cout // G, K), jnp.float32)
    emb_mix = jax.random.normal(ks[6], (M, Cout // G), jnp.float32)

    out = attention_stem(x, wq, wk, wv, emb_a, emb_b, emb_mix,
                         kernel_size=K, stride=S, padding=P, groups=G, m=M)
    out = jax.block_until_ready(out)
    assert out.shape == (B, Cout, H, W)

    ref = attention_stem_reference(x, wq, wk, wv, emb_a, emb_b, emb_mix,
                                   kernel_size=K, stride=S, padding=P,
                                   groups=G, m=M)
    ref = jax.block_until_ready(ref)

    max_err = float(jnp.max(jnp.abs(out - ref)))
    # tolerance covers the approximate (EUP) reciprocal in the softmax denom
    if not jnp.allclose(out, ref, atol=5e-3, rtol=5e-3):
        raise AssertionError(f"Pallas kernel mismatch, max abs err = {max_err}")

    print("KERNEL_OK")
</pallas_src>

<mosaic_0001>
module attributes {stable_mosaic.version = 11 : i64} {
  func.func @_attention_stem_kernel(%arg0: i32, %arg1: memref<1x4x324xf32, #tpu.memory_space<vmem>>, %arg2: memref<88x4xf32, #tpu.memory_space<vmem>>, %arg3: memref<1x8x256xf32, #tpu.memory_space<vmem>>) attributes {dimension_semantics = [#tpu.dimension_semantics<parallel>], iteration_bounds = array<i64: 2>, scalar_prefetch = 0 : i64, scratch_operands = 0 : i64, tpu.core_type = #tpu.core_type<tc>, window_params = [{transform_indices = @transform_0, window_bounds = array<i64: 1, 4, 324>}, {pipeline_mode = #tpu.pipeline_mode<synchronous>, transform_indices = @transform_1, window_bounds = array<i64: 88, 4>}, {transform_indices = @transform_2, window_bounds = array<i64: 1, 8, 256>}]} {
    %c0 = arith.constant 0 : index
    %c0_0 = arith.constant 0 : index
    %c0_1 = arith.constant 0 : index
    %0 = vector.load %arg1[%c0, %c0_0, %c0_1] : memref<1x4x324xf32, #tpu.memory_space<vmem>>, vector<1x4x324xf32>
    %1 = vector.shape_cast %0 : vector<1x4x324xf32> to vector<4x324xf32>
    %c0_2 = arith.constant 0 : index
    %c0_3 = arith.constant 0 : index
    %2 = vector.load %arg2[%c0_2, %c0_3] : memref<88x4xf32, #tpu.memory_space<vmem>>, vector<88x4xf32>
    %cst = arith.constant dense<0.000000e+00> : vector<88x324xf32>
    %3 = tpu.matmul %2, %1, %cst {dimension_numbers = #tpu.dot_dimension_numbers<[1], [0], [0], [1], [0, 0, 1, 1], [], []>} : vector<88x4xf32>, vector<4x324xf32>, vector<88x324xf32> -> vector<88x324xf32>
    %4 = vector.shape_cast %3 : vector<88x324xf32> to vector<88x18x18xf32>
    %5 = vector.extract_strided_slice %4 {offsets = [0, 1, 1], sizes = [8, 16, 16], strides = [1, 1, 1]} : vector<88x18x18xf32> to vector<8x16x16xf32>
    %6 = vector.shape_cast %5 : vector<8x16x16xf32> to vector<8x256xf32>
    %7 = vector.extract_strided_slice %4 {offsets = [8, 0, 0], sizes = [8, 18, 18], strides = [1, 1, 1]} : vector<88x18x18xf32> to vector<8x18x18xf32>
    %8 = vector.extract_strided_slice %7 {offsets = [0, 0, 0], sizes = [8, 16, 16], strides = [1, 1, 1]} : vector<8x18x18xf32> to vector<8x16x16xf32>
    %9 = vector.shape_cast %8 : vector<8x16x16xf32> to vector<8x256xf32>
    %10 = vector.extract_strided_slice %4 {offsets = [16, 0, 0], sizes = [8, 16, 16], strides = [1, 1, 1]} : vector<88x18x18xf32> to vector<8x16x16xf32>
    %11 = vector.shape_cast %10 : vector<8x16x16xf32> to vector<8x256xf32>
    %12 = arith.mulf %6, %9 : vector<8x256xf32>
    %cst_4 = arith.constant 1.000000e+00 : f32
    %13 = vector.broadcast %cst_4 : f32 to vector<8x256xf32>
    %14 = vector.extract_strided_slice %7 {offsets = [0, 0, 1], sizes = [8, 16, 16], strides = [1, 1, 1]} : vector<8x18x18xf32> to vector<8x16x16xf32>
    %15 = vector.shape_cast %14 : vector<8x16x16xf32> to vector<8x256xf32>
    %16 = vector.extract_strided_slice %4 {offsets = [24, 0, 1], sizes = [8, 16, 16], strides = [1, 1, 1]} : vector<88x18x18xf32> to vector<8x16x16xf32>
    %17 = vector.shape_cast %16 : vector<8x16x16xf32> to vector<8x256xf32>
    %18 = arith.mulf %6, %15 : vector<8x256xf32>
    %19 = arith.maximumf %12, %18 : vector<8x256xf32>
    %20 = arith.subf %12, %19 : vector<8x256xf32>
    %21 = math.exp %20 : vector<8x256xf32>
    %22 = arith.subf %18, %19 : vector<8x256xf32>
    %23 = math.exp %22 : vector<8x256xf32>
    %24 = arith.mulf %21, %13 : vector<8x256xf32>
    %25 = arith.addf %24, %23 : vector<8x256xf32>
    %26 = arith.mulf %21, %11 : vector<8x256xf32>
    %27 = arith.mulf %23, %17 : vector<8x256xf32>
    %28 = arith.addf %26, %27 : vector<8x256xf32>
    %29 = vector.extract_strided_slice %7 {offsets = [0, 0, 2], sizes = [8, 16, 16], strides = [1, 1, 1]} : vector<8x18x18xf32> to vector<8x16x16xf32>
    %30 = vector.shape_cast %29 : vector<8x16x16xf32> to vector<8x256xf32>
    %31 = vector.extract_strided_slice %4 {offsets = [32, 0, 2], sizes = [8, 16, 16], strides = [1, 1, 1]} : vector<88x18x18xf32> to vector<8x16x16xf32>
    %32 = vector.shape_cast %31 : vector<8x16x16xf32> to vector<8x256xf32>
    %33 = arith.mulf %6, %30 : vector<8x256xf32>
    %34 = arith.maximumf %19, %33 : vector<8x256xf32>
    %35 = arith.subf %19, %34 : vector<8x256xf32>
    %36 = math.exp %35 : vector<8x256xf32>
    %37 = arith.subf %33, %34 : vector<8x256xf32>
    %38 = math.exp %37 : vector<8x256xf32>
    %39 = arith.mulf %36, %25 : vector<8x256xf32>
    %40 = arith.addf %39, %38 : vector<8x256xf32>
    %41 = arith.mulf %36, %28 : vector<8x256xf32>
    %42 = arith.mulf %38, %32 : vector<8x256xf32>
    %43 = arith.addf %41, %42 : vector<8x256xf32>
    %44 = vector.extract_strided_slice %7 {offsets = [0, 1, 0], sizes = [8, 16, 16], strides = [1, 1, 1]} : vector<8x18x18xf32> to vector<8x16x16xf32>
    %45 = vector.shape_cast %44 : vector<8x16x16xf32> to vector<8x256xf32>
    %46 = vector.extract_strided_slice %4 {offsets = [40, 1, 0], sizes = [8, 16, 16], strides = [1, 1, 1]} : vector<88x18x18xf32> to vector<8x16x16xf32>
    %47 = vector.shape_cast %46 : vector<8x16x16xf32> to vector<8x256xf32>
    %48 = arith.mulf %6, %45 : vector<8x256xf32>
    %49 = arith.maximumf %34, %48 : vector<8x256xf32>
    %50 = arith.subf %34, %49 : vector<8x256xf32>
    %51 = math.exp %50 : vector<8x256xf32>
    %52 = arith.subf %48, %49 : vector<8x256xf32>
    %53 = math.exp %52 : vector<8x256xf32>
    %54 = arith.mulf %51, %40 : vector<8x256xf32>
    %55 = arith.addf %54, %53 : vector<8x256xf32>
    %56 = arith.mulf %51, %43 : vector<8x256xf32>
    %57 = arith.mulf %53, %47 : vector<8x256xf32>
    %58 = arith.addf %56, %57 : vector<8x256xf32>
    %59 = vector.extract_strided_slice %7 {offsets = [0, 1, 1], sizes = [8, 16, 16], strides = [1, 1, 1]} : vector<8x18x18xf32> to vector<8x16x16xf32>
    %60 = vector.shape_cast %59 : vector<8x16x16xf32> to vector<8x256xf32>
    %61 = vector.extract_strided_slice %4 {offsets = [48, 1, 1], sizes = [8, 16, 16], strides = [1, 1, 1]} : vector<88x18x18xf32> to vector<8x16x16xf32>
    %62 = vector.shape_cast %61 : vector<8x16x16xf32> to vector<8x256xf32>
    %63 = arith.mulf %6, %60 : vector<8x256xf32>
    %64 = arith.maximumf %49, %63 : vector<8x256xf32>
    %65 = arith.subf %49, %64 : vector<8x256xf32>
    %66 = math.exp %65 : vector<8x256xf32>
    %67 = arith.subf %63, %64 : vector<8x256xf32>
    %68 = math.exp %67 : vector<8x256xf32>
    %69 = arith.mulf %66, %55 : vector<8x256xf32>
    %70 = arith.addf %69, %68 : vector<8x256xf32>
    %71 = arith.mulf %66, %58 : vector<8x256xf32>
    %72 = arith.mulf %68, %62 : vector<8x256xf32>
    %73 = arith.addf %71, %72 : vector<8x256xf32>
    %74 = vector.extract_strided_slice %7 {offsets = [0, 1, 2], sizes = [8, 16, 16], strides = [1, 1, 1]} : vector<8x18x18xf32> to vector<8x16x16xf32>
    %75 = vector.shape_cast %74 : vector<8x16x16xf32> to vector<8x256xf32>
    %76 = vector.extract_strided_slice %4 {offsets = [56, 1, 2], sizes = [8, 16, 16], strides = [1, 1, 1]} : vector<88x18x18xf32> to vector<8x16x16xf32>
    %77 = vector.shape_cast %76 : vector<8x16x16xf32> to vector<8x256xf32>
    %78 = arith.mulf %6, %75 : vector<8x256xf32>
    %79 = arith.maximumf %64, %78 : vector<8x256xf32>
    %80 = arith.subf %64, %79 : vector<8x256xf32>
    %81 = math.exp %80 : vector<8x256xf32>
    %82 = arith.subf %78, %79 : vector<8x256xf32>
    %83 = math.exp %82 : vector<8x256xf32>
    %84 = arith.mulf %81, %70 : vector<8x256xf32>
    %85 = arith.addf %84, %83 : vector<8x256xf32>
    %86 = arith.mulf %81, %73 : vector<8x256xf32>
    %87 = arith.mulf %83, %77 : vector<8x256xf32>
    %88 = arith.addf %86, %87 : vector<8x256xf32>
    %89 = vector.extract_strided_slice %7 {offsets = [0, 2, 0], sizes = [8, 16, 16], strides = [1, 1, 1]} : vector<8x18x18xf32> to vector<8x16x16xf32>
    %90 = vector.shape_cast %89 : vector<8x16x16xf32> to vector<8x256xf32>
    %91 = vector.extract_strided_slice %4 {offsets = [64, 2, 0], sizes = [8, 16, 16], strides = [1, 1, 1]} : vector<88x18x18xf32> to vector<8x16x16xf32>
    %92 = vector.shape_cast %91 : vector<8x16x16xf32> to vector<8x256xf32>
    %93 = arith.mulf %6, %90 : vector<8x256xf32>
    %94 = arith.maximumf %79, %93 : vector<8x256xf32>
    %95 = arith.subf %79, %94 : vector<8x256xf32>
    %96 = math.exp %95 : vector<8x256xf32>
    %97 = arith.subf %93, %94 : vector<8x256xf32>
    %98 = math.exp %97 : vector<8x256xf32>
    %99 = arith.mulf %96, %85 : vector<8x256xf32>
    %100 = arith.addf %99, %98 : vector<8x256xf32>
    %101 = arith.mulf %96, %88 : vector<8x256xf32>
    %102 = arith.mulf %98, %92 : vector<8x256xf32>
    %103 = arith.addf %101, %102 : vector<8x256xf32>
    %104 = vector.extract_strided_slice %7 {offsets = [0, 2, 1], sizes = [8, 16, 16], strides = [1, 1, 1]} : vector<8x18x18xf32> to vector<8x16x16xf32>
    %105 = vector.shape_cast %104 : vector<8x16x16xf32> to vector<8x256xf32>
    %106 = vector.extract_strided_slice %4 {offsets = [72, 2, 1], sizes = [8, 16, 16], strides = [1, 1, 1]} : vector<88x18x18xf32> to vector<8x16x16xf32>
    %107 = vector.shape_cast %106 : vector<8x16x16xf32> to vector<8x256xf32>
    %108 = arith.mulf %6, %105 : vector<8x256xf32>
    %109 = arith.maximumf %94, %108 : vector<8x256xf32>
    %110 = arith.subf %94, %109 : vector<8x256xf32>
    %111 = math.exp %110 : vector<8x256xf32>
    %112 = arith.subf %108, %109 : vector<8x256xf32>
    %113 = math.exp %112 : vector<8x256xf32>
    %114 = arith.mulf %111, %100 : vector<8x256xf32>
    %115 = arith.addf %114, %113 : vector<8x256xf32>
    %116 = arith.mulf %111, %103 : vector<8x256xf32>
    %117 = arith.mulf %113, %107 : vector<8x256xf32>
    %118 = arith.addf %116, %117 : vector<8x256xf32>
    %119 = vector.extract_strided_slice %7 {offsets = [0, 2, 2], sizes = [8, 16, 16], strides = [1, 1, 1]} : vector<8x18x18xf32> to vector<8x16x16xf32>
    %120 = vector.shape_cast %119 : vector<8x16x16xf32> to vector<8x256xf32>
    %121 = vector.extract_strided_slice %4 {offsets = [80, 2, 2], sizes = [8, 16, 16], strides = [1, 1, 1]} : vector<88x18x18xf32> to vector<8x16x16xf32>
    %122 = vector.shape_cast %121 : vector<8x16x16xf32> to vector<8x256xf32>
    %123 = arith.mulf %6, %120 : vector<8x256xf32>
    %124 = arith.maximumf %109, %123 : vector<8x256xf32>
    %125 = arith.subf %109, %124 : vector<8x256xf32>
    %126 = math.exp %125 : vector<8x256xf32>
    %127 = arith.subf %123, %124 : vector<8x256xf32>
    %128 = math.exp %127 : vector<8x256xf32>
    %129 = arith.mulf %126, %115 : vector<8x256xf32>
    %130 = arith.addf %129, %128 : vector<8x256xf32>
    %131 = arith.mulf %126, %118 : vector<8x256xf32>
    %132 = arith.mulf %128, %122 : vector<8x256xf32>
    %133 = arith.addf %131, %132 : vector<8x256xf32>
    %134 = tpu.reciprocal %130 {approx = true} : vector<8x256xf32> -> vector<8x256xf32>
    %135 = arith.mulf %133, %134 : vector<8x256xf32>
    %c0_5 = arith.constant 0 : index
    %c0_6 = arith.constant 0 : index
    %c0_7 = arith.constant 0 : index
    %136 = vector.load %arg3[%c0_5, %c0_6, %c0_7] : memref<1x8x256xf32, #tpu.memory_space<vmem>>, vector<1x8x256xf32>
    %137 = vector.shape_cast %136 : vector<1x8x256xf32> to vector<8x256xf32>
    %138 = vector.shape_cast %135 : vector<8x256xf32> to vector<1x8x256xf32>
    tpu.vector_store %arg3[%c0_5, %c0_6, %c0_7], %138 {strides = array<i32>} : memref<1x8x256xf32, #tpu.memory_space<vmem>>, vector<1x8x256xf32>,
    return
  }
  func.func @transform_0(%arg0: i32) -> (i32, i32, i32) {
    %c0_i32 = arith.constant 0 : i32
    %c0_i32_0 = arith.constant 0 : i32
    %c0_i32_1 = arith.constant 0 : i32
    return %arg0, %c0_i32, %c0_i32_0 : i32, i32, i32
  }
  func.func @transform_1(%arg0: i32) -> (i32, i32) {
    %c0_i32 = arith.constant 0 : i32
    %c0_i32_0 = arith.constant 0 : i32
    %c0_i32_1 = arith.constant 0 : i32
    return %c0_i32, %c0_i32_0 : i32, i32
  }
  func.func @transform_2(%arg0: i32) -> (i32, i32, i32) {
    %c0_i32 = arith.constant 0 : i32
    %c0_i32_0 = arith.constant 0 : i32
    %c0_i32_1 = arith.constant 0 : i32
    return %arg0, %c0_i32, %c0_i32_0 : i32, i32, i32
  }
}

</mosaic_0001>

<llo_original>
// kernel: tpu_custom_call.1
$region0: #{tpu_custom_call.1}
  #allocation0 [shape = 'u32[]', space=smem, size = 0x4, offset = 0x4, fixed_abs, tag = 'smem constant byte address 0x4 - core index']
  #allocation1 [shape = 'u32[144,128]{1,0:T(1,128)}', space=vmem, size = 0x12000, scoped, tag = 'internal scratch']
  %s0 = inlined_call_operand.vmem [shape: f32[2,4,324], index: 0, kind: input, shape index: {}]
  %s1 = inlined_call_operand.vmem [shape: f32[88,4], index: 1, kind: input, shape index: {}]
  %s2 = inlined_call_operand.hbm [shape: f32[2,8,256], index: 2, kind: output, shape index: {}]
  %s3 = sld [smem:[#allocation0]]
  $region41: #{tpu_custom_call.1} parent=0
    _
  %s5 = ssub.s32 1, %s3
  %s6 = scalar_select 0, %s5, %s3
  $region1: #{tpu_custom_call.1} parent=0
    #allocation2 [shape = 'u8[16384]{0}', space=vmem, size = 0x4000, scoped, tag = 'output window, operand 0']
    #allocation3 [shape = 's32[2]{0}', space=sflag, size = 0x8, scoped, tag = 'scoped memory for tpu_custom_call.1']
    %7 = vsyncpa [#allocation3], 0
    %s8 = scalar_lea.sflag [#allocation3], 1
    %9 = vsyncpa %s8, 0
    loop: start=0, step=1, limit=4
    $region2: #{tpu_custom_call.1} parent=1 // loop_pre_header
      _
    $region3: #{tpu_custom_call.1} parent=1 // loop_header
      %s11 = sphi 0, %s15
      %p12 = scmp.ge.s32.totalorder %s11, 4
      %s21 = sphi 0, %s23
      %s24 = sphi 0, %s21
      %s25 = sphi 0, %s24
      %s41 = sphi 0, %s25
      %s45 = sphi 0, %s45
      %s47 = sphi 0, %s45
      %s48 = sphi 0, %s47
      %s62 = sphi 0, %s48
      %s68 = sphi 0, %s70
      %s71 = sphi 0, %s68
      %s72 = sphi 0, %s71
      %s88 = sphi 0, %s72
    $region4: #{tpu_custom_call.1} parent=1 // loop_header_branch
      %14 = sbr.rel (%p12) target = $region8
    $region5: #{tpu_custom_call.1} parent=1 // loop_body
      %s16 = ssub.s32 %s11, 1
      %s17 = ssub.s32 %s11, 2
      %s18 = sadd.s32 %s11, 1
      %s19 = ssub.s32 %s11, %s18
      %p20 = scmp.eq.s32.totalorder %s19, 0
      %s22 = sadd.s32 %s21, 1
      %s23 = scalar_select %p20, %s21, %s22
      %p26 = pneg %p20
      %p27 = scmp.eq.s32.totalorder %s11, 1
      %p28 = por %p26, %p27
      %p29 = scmp.ne.s32.totalorder %s21, %s24
      %p30 = scmp.eq.s32.totalorder %s11, 0
      %p31 = por %p29, %p30
      %p32 = scmp.ne.s32.totalorder %s21, %s24
      %p33 = scmp.eq.s32.totalorder %s16, 1
      %p34 = por %p32, %p33
      %p35 = scmp.ne.s32.totalorder %s24, %s25
      %p36 = scmp.eq.s32.totalorder %s16, 0
      %p37 = por %p35, %p36
      %p38 = scmp.ne.s32.totalorder %s24, %s25
      %p39 = scmp.eq.s32.totalorder %s17, 1
      %p40 = por %p38, %p39
      %p42 = scmp.ne.s32.totalorder %s25, %s41
      %p43 = scmp.eq.s32.totalorder %s17, 0
      %p44 = por %p42, %p43
      %s46 = sadd.s32 %s45, 1
      %p49 = scmp.eq.s32.totalorder %s11, 1
      %p50 = scmp.ne.s32.totalorder %s45, %s47
      %p51 = scmp.eq.s32.totalorder %s11, 0
      %p52 = por %p50, %p51
      %p53 = scmp.ne.s32.totalorder %s45, %s47
      %p54 = scmp.eq.s32.totalorder %s16, 1
      %p55 = por %p53, %p54
      %p56 = scmp.ne.s32.totalorder %s47, %s48
      %p57 = scmp.eq.s32.totalorder %s16, 0
      %p58 = por %p56, %p57
      %p59 = scmp.ne.s32.totalorder %s47, %s48
      %p60 = scmp.eq.s32.totalorder %s17, 1
      %p61 = por %p59, %p60
      %p63 = scmp.ne.s32.totalorder %s48, %s62
      %p64 = scmp.eq.s32.totalorder %s17, 0
      %p65 = por %p63, %p64
      %s66 = ssub.s32 %s11, %s18
      %p67 = scmp.eq.s32.totalorder %s66, 0
      %s69 = sadd.s32 %s68, 1
      %s70 = scalar_select %p67, %s68, %s69
      %p73 = pneg %p67
      %p74 = scmp.eq.s32.totalorder %s11, 1
      %p75 = por %p73, %p74
      %p76 = scmp.ne.s32.totalorder %s68, %s71
      %p77 = scmp.eq.s32.totalorder %s11, 0
      %p78 = por %p76, %p77
      %p79 = scmp.ne.s32.totalorder %s68, %s71
      %p80 = scmp.eq.s32.totalorder %s16, 1
      %p81 = por %p79, %p80
      %p82 = scmp.ne.s32.totalorder %s71, %s72
      %p83 = scmp.eq.s32.totalorder %s16, 0
      %p84 = por %p82, %p83
      %p85 = scmp.ne.s32.totalorder %s71, %s72
      %p86 = scmp.eq.s32.totalorder %s17, 1
      %p87 = por %p85, %p86
      %p89 = scmp.ne.s32.totalorder %s72, %s88
      %p90 = scmp.eq.s32.totalorder %s17, 0
      %p91 = por %p89, %p90
      %p92 = scmp.le.s32.totalorder 1, %s11
      %p93 = scmp.lt.s32.totalorder %s11, 3
      %p94 = pnand %p92, %p93
      %p95 = pneg %p94
      // Predicated region
      $region9: #{tpu_custom_call.1} parent=5 // pred_check
        _
      $region10: #{tpu_custom_call.1} parent=5 // pred_check_branch
        %97 = sbr.rel (%p94) target = $region12
      $region11: #{tpu_custom_call.1} parent=5 // pred_region
        %s98 = ssub.s32 %s11, 1
        // Predicated region
        $region13: #{tpu_custom_call.1} parent=11 // pred_check
          %p99 = pneg %p58
        $region14: #{tpu_custom_call.1} parent=11 // pred_check_branch
          %101 = sbr.rel (%p99) target = $region16
        $region15: #{tpu_custom_call.1} parent=11 // pred_region
          _
        $region16: #{tpu_custom_call.1} parent=11 // pred_fallthru
          _
      $region12: #{tpu_custom_call.1} parent=5 // pred_fallthru
        _
      %p102 = scmp.lt.s32.totalorder %s11, 2
      // Predicated region
      $region17: #{tpu_custom_call.1} parent=5 // pred_check
        %p103 = pneg %p102
      $region18: #{tpu_custom_call.1} parent=5 // pred_check_branch
        %105 = sbr.rel (%p103) target = $region20
      $region19: #{tpu_custom_call.1} parent=5 // pred_region
        // Predicated region
        $region21: #{tpu_custom_call.1} parent=19 // pred_check
          %p106 = pneg %p31
        $region22: #{tpu_custom_call.1} parent=19 // pred_check_branch
          %108 = sbr.rel (%p106) target = $region24
        $region23: #{tpu_custom_call.1} parent=19 // pred_region
          %p109 = scmp.lt.s32.totalorder %s11, 1
          %s110 = scalar_select %p109, %s11, 1
          %s111 = smul.addr %s110, 3
          %s112 = smul.addr %s111, 4
          %s113 = scalar_lea.vmem %s0, %s112
        $region24: #{tpu_custom_call.1} parent=19 // pred_fallthru
          _
      $region20: #{tpu_custom_call.1} parent=5 // pred_fallthru
        _
      %p114 = scmp.le.s32.totalorder 1, %s11
      %p115 = scmp.lt.s32.totalorder %s11, 3
      %p116 = pnand %p114, %p115
      %p117 = pneg %p116
      // Predicated region
      $region25: #{tpu_custom_call.1} parent=5 // pred_check
        _
      $region26: #{tpu_custom_call.1} parent=5 // pred_check_branch
        %119 = sbr.rel (%p116) target = $region28
      $region27: #{tpu_custom_call.1} parent=5 // pred_region
        %s120 = ssub.s32 %s11, 1
        %p121 = scmp.lt.s32.totalorder %s16, 1
        %s122 = scalar_select %p121, %s16, 1
        %s123 = smul.addr %s122, 3
        %s124 = smul.addr %s123, 4
        %s125 = scalar_lea.vmem %s0, %s124
        %p126 = pneg %p37
        %p127 = pneg %p34
        %p128 = pneg %p58
        %p129 = pneg %p55
        %p130 = pneg %p84
        %p131 = pneg %p81
        %s132 = sand.u32 %s71, 1
        %s133 = scalar_lea.sflag [#allocation3], %s132
        %s134 = sand.u32 %s71, 1
        %s135 = smul.addr %s134, 16
        %s136 = scalar_lea.vmem [#allocation2], %s135
        %p137 = scmp.lt.s32.totalorder %s16, 1
        %s138 = scalar_select %p137, %s16, 1
        %s139 = smul.addr %s138, 3
        %s140 = smul.addr %s139, 4
        %s141 = scalar_lea.vmem %s0, %s140
        %v142 = vld [vmem:[%s141] sm:$0xff]
        %v143 = vld [vmem:[%s141 + $0x8] sm:$0xf]
        %v144 = vld [vmem:[%s1] sm:$0xff]
        %v145 = vld [vmem:[%s1 + $0x8] sm:$0xff]
        %v146 = vld [vmem:[%s1 + $0x10] sm:$0xff]
        %v147 = vld [vmem:[%s1 + $0x18] sm:$0xff]
        %v148 = vld [vmem:[%s1 + $0x20] sm:$0xff]
        %v149 = vld [vmem:[%s1 + $0x28] sm:$0xff]
        %v150 = vld [vmem:[%s1 + $0x30] sm:$0xff]
        %v151 = vld [vmem:[%s1 + $0x38] sm:$0xff]
        %v152 = vld [vmem:[%s1 + $0x40] sm:$0xff]
        %v153 = vld [vmem:[%s1 + $0x48] sm:$0xff]
        %v154 = vld [vmem:[%s1 + $0x50] sm:$0xff]
        %v157 = vcombine.high %v142, %v142
        %vm158 = vcmask 31744
        %v160 = vsel %vm158, %v144, 0
        %v163 = vsel %vm158, %v145, 0
        %v166 = vsel %vm158, %v146, 0
        %v169 = vsel %vm158, %v147, 0
        %v172 = vsel %vm158, %v148, 0
        %v175 = vsel %vm158, %v149, 0
        %v178 = vsel %vm158, %v150, 0
        %v181 = vsel %vm158, %v151, 0
        %v184 = vsel %vm158, %v152, 0
        %v187 = vsel %vm158, %v153, 0
        %v190 = vsel %vm158, %v154, 0
        %vm192 = vcmask 1043456
        %v193 = vsel %vm192, %v142, 0
        %v195 = vsel %vm192, %v157, 0
        %v197 = vsel %vm192, %v143, 0
        %199 = vmatprep.subr.mxu0 %v195
        %200 = vmatpush1.msra.mxu0 %v193
        %201 = vmatprep.subr.mxu0 0.0
        %202 = vmatpush1.msra.mxu0 0.0
        %203 = vmatprep.subr.mxu0 0.0
        %204 = vmatpush1.msra.mxu0 0.0
        %205 = vmatprep.subr.mxu0 0.0
        %206 = vmatpush1.msra.mxu0 0.0
        %207 = vmatprep.subr.mxu0 0.0
        %208 = vmatpush1.msra.mxu0 0.0
        %209 = vmatprep.subr.mxu0 0.0
        %210 = vmatpush1.msra.mxu0 0.0
        %211 = vmatprep.subr.mxu0 0.0
        %212 = vmatpush1.msra.mxu0 0.0
        %213 = vmatprep.subr.mxu0 0.0
        %214 = vmatpush1.msra.mxu0 0.0
        %215 = vmatprep.subr.mxu0 0.0
        %216 = vmatpush1.msra.mxu0 0.0
        %217 = vmatprep.subr.mxu0 0.0
        %218 = vmatpush1.msra.mxu0 0.0
        %219 = vmatprep.subr.mxu0 0.0
        %220 = vmatpush1.msra.mxu0 0.0
        %221 = vmatprep.subr.mxu0 0.0
        %222 = vmatpush1.msra.mxu0 0.0
        %223 = vmatprep.subr.mxu0 0.0
        %224 = vmatpush1.msra.mxu0 0.0
        %225 = vmatprep.subr.mxu0 0.0
        %226 = vmatpush1.msra.mxu0 0.0
        %227 = vmatprep.subr.mxu0 0.0
        %228 = vmatpush1.msra.mxu0 0.0
        %229 = vmatprep.subr.mxu0 0.0
        %230 = vmatpush1.msra.mxu0 0.0
        %231 = vmatprep.subr.mxu0 0.0
        %232 = vmatpush1.msra.mxu0 0.0
        %233 = vmatprep.subr.mxu0 0.0
        %234 = vmatpush1.msra.mxu0 0.0
        %235 = vmatprep.subr.mxu0 0.0
        %236 = vmatpush1.msra.mxu0 0.0
        %237 = vmatprep.subr.mxu0 0.0
        %238 = vmatpush1.msra.mxu0 0.0
        %239 = vmatprep.subr.mxu0 0.0
        %240 = vmatpush1.msra.mxu0 0.0
        %241 = vmatprep.subr.mxu0 0.0
        %242 = vmatpush1.msra.mxu0 0.0
        %243 = vmatprep.subr.mxu0 0.0
        %244 = vmatpush1.msra.mxu0 0.0
        %245 = vmatprep.subr.mxu0 0.0
        %246 = vmatpush1.msra.mxu0 0.0
        %247 = vmatprep.subr.mxu0 0.0
        %248 = vmatpush1.msra.mxu0 0.0
        %249 = vmatprep.subr.mxu0 0.0
        %250 = vmatpush1.msra.mxu0 0.0
        %251 = vmatprep.subr.mxu0 0.0
        %252 = vmatpush1.msra.mxu0 0.0
        %253 = vmatprep.subr.mxu0 0.0
        %254 = vmatpush1.msra.mxu0 0.0
        %255 = vmatprep.subr.mxu0 0.0
        %256 = vmatpush1.msra.mxu0 0.0
        %257 = vmatprep.subr.mxu0 0.0
        %258 = vmatpush1.msra.mxu0 0.0
        %259 = vmatprep.subr.mxu0 0.0
        %260 = vmatpush1.msra.mxu0 0.0
        %261 = vmatprep.subr.mxu0 0.0
        %262 = vmatpush1.msra.mxu0 0.0
        %263 = vmatprep.mubr.f32.mxu0 0.0
        %264 = vmatmul.mubr.f32.gmra.mrb[0].mxu0 %v160
        %v265 = vpop.f32.mrb[0].mxu0
        %v266 = vadd.f32 0.0, %v265
        %v267 = vpop.f32.mrb[0].mxu0
        %v268 = vadd.f32 0.0, %v267
        %269 = vmatprep.mubr.f32.mxu0 0.0
        %270 = vmatmul.mubr.f32.gmra.mrb[0].mxu0 %v163
        %v271 = vpop.f32.mrb[0].mxu0
        %v272 = vadd.f32 0.0, %v271
        %v273 = vpop.f32.mrb[0].mxu0
        %v274 = vadd.f32 0.0, %v273
        %275 = vmatprep.mubr.f32.mxu0 0.0
        %276 = vmatmul.mubr.f32.gmra.mrb[0].mxu0 %v166
        %v277 = vpop.f32.mrb[0].mxu0
        %v278 = vadd.f32 0.0, %v277
        %v279 = vpop.f32.mrb[0].mxu0
        %v280 = vadd.f32 0.0, %v279
        %281 = vmatprep.mubr.f32.mxu0 0.0
        %282 = vmatmul.mubr.f32.gmra.mrb[0].mxu0 %v169
        %v283 = vpop.f32.mrb[0].mxu0
        %v284 = vadd.f32 0.0, %v283
        %v285 = vpop.f32.mrb[0].mxu0
        %v286 = vadd.f32 0.0, %v285
        %287 = vmatprep.mubr.f32.mxu0 0.0
        %288 = vmatmul.mubr.f32.gmra.mrb[0].mxu0 %v172
        %v289 = vpop.f32.mrb[0].mxu0
        %v290 = vadd.f32 0.0, %v289
        %v291 = vpop.f32.mrb[0].mxu0
        %v292 = vadd.f32 0.0, %v291
        %293 = vmatprep.mubr.f32.mxu0 0.0
        %294 = vmatmul.mubr.f32.gmra.mrb[0].mxu0 %v175
        %v295 = vpop.f32.mrb[0].mxu0
        %v296 = vadd.f32 0.0, %v295
        %v297 = vpop.f32.mrb[0].mxu0
        %v298 = vadd.f32 0.0, %v297
        %299 = vmatprep.mubr.f32.mxu0 0.0
        %300 = vmatmul.mubr.f32.gmra.mrb[0].mxu0 %v178
        %v301 = vpop.f32.mrb[0].mxu0
        %v302 = vadd.f32 0.0, %v301
        %v303 = vpop.f32.mrb[0].mxu0
        %v304 = vadd.f32 0.0, %v303
        %305 = vmatprep.mubr.f32.mxu0 0.0
        %306 = vmatmul.mubr.f32.gmra.mrb[0].mxu0 %v181
        %v307 = vpop.f32.mrb[0].mxu0
        %v308 = vadd.f32 0.0, %v307
        %v309 = vpop.f32.mrb[0].mxu0
        %v310 = vadd.f32 0.0, %v309
        %311 = vmatprep.mubr.f32.mxu0 0.0
        %312 = vmatmul.mubr.f32.gmra.mrb[0].mxu0 %v184
        %v313 = vpop.f32.mrb[0].mxu0
        %v314 = vadd.f32 0.0, %v313
        %v315 = vpop.f32.mrb[0].mxu0
        %v316 = vadd.f32 0.0, %v315
        %317 = vmatprep.mubr.f32.mxu0 0.0
        %318 = vmatmul.mubr.f32.gmra.mrb[0].mxu0 %v187
        %v319 = vpop.f32.mrb[0].mxu0
        %v320 = vadd.f32 0.0, %v319
        %v321 = vpop.f32.mrb[0].mxu0
        %v322 = vadd.f32 0.0, %v321
        %323 = vmatprep.mubr.f32.mxu0 0.0
        %324 = vmatmul.mubr.f32.gmra.mrb[0].mxu0 %v190
        %v325 = vpop.f32.mrb[0].mxu0
        %v326 = vadd.f32 0.0, %v325
        %v327 = vpop.f32.mrb[0].mxu0
        %v328 = vadd.f32 0.0, %v327
        %329 = vdwg.mxu0
        %330 = vmatprep.subr.mxu0 0.0
        %331 = vmatpush1.msra.mxu0 %v197
        %332 = vmatprep.subr.mxu0 0.0
        %333 = vmatpush1.msra.mxu0 0.0
        %334 = vmatprep.subr.mxu0 0.0
        %335 = vmatpush1.msra.mxu0 0.0
        %336 = vmatprep.subr.mxu0 0.0
        %337 = vmatpush1.msra.mxu0 0.0
        %338 = vmatprep.subr.mxu0 0.0
        %339 = vmatpush1.msra.mxu0 0.0
        %340 = vmatprep.subr.mxu0 0.0
        %341 = vmatpush1.msra.mxu0 0.0
        %342 = vmatprep.subr.mxu0 0.0
        %343 = vmatpush1.msra.mxu0 0.0
        %344 = vmatprep.subr.mxu0 0.0
        %345 = vmatpush1.msra.mxu0 0.0
        %346 = vmatprep.subr.mxu0 0.0
        %347 = vmatpush1.msra.mxu0 0.0
        %348 = vmatprep.subr.mxu0 0.0
        %349 = vmatpush1.msra.mxu0 0.0
        %350 = vmatprep.subr.mxu0 0.0
        %351 = vmatpush1.msra.mxu0 0.0
        %352 = vmatprep.subr.mxu0 0.0
        %353 = vmatpush1.msra.mxu0 0.0
        %354 = vmatprep.subr.mxu0 0.0
        %355 = vmatpush1.msra.mxu0 0.0
        %356 = vmatprep.subr.mxu0 0.0
        %357 = vmatpush1.msra.mxu0 0.0
        %358 = vmatprep.subr.mxu0 0.0
        %359 = vmatpush1.msra.mxu0 0.0
        %360 = vmatprep.subr.mxu0 0.0
        %361 = vmatpush1.msra.mxu0 0.0
        %362 = vmatprep.subr.mxu0 0.0
        %363 = vmatpush1.msra.mxu0 0.0
        %364 = vmatprep.subr.mxu0 0.0
        %365 = vmatpush1.msra.mxu0 0.0
        %366 = vmatprep.subr.mxu0 0.0
        %367 = vmatpush1.msra.mxu0 0.0
        %368 = vmatprep.subr.mxu0 0.0
        %369 = vmatpush1.msra.mxu0 0.0
        %370 = vmatprep.subr.mxu0 0.0
        %371 = vmatpush1.msra.mxu0 0.0
        %372 = vmatprep.subr.mxu0 0.0
        %373 = vmatpush1.msra.mxu0 0.0
        %374 = vmatprep.subr.mxu0 0.0
        %375 = vmatpush1.msra.mxu0 0.0
        %376 = vmatprep.subr.mxu0 0.0
        %377 = vmatpush1.msra.mxu0 0.0
        %378 = vmatprep.subr.mxu0 0.0
        %379 = vmatpush1.msra.mxu0 0.0
        %380 = vmatprep.subr.mxu0 0.0
        %381 = vmatpush1.msra.mxu0 0.0
        %382 = vmatprep.subr.mxu0 0.0
        %383 = vmatpush1.msra.mxu0 0.0
        %384 = vmatprep.subr.mxu0 0.0
        %385 = vmatpush1.msra.mxu0 0.0
        %386 = vmatprep.subr.mxu0 0.0
        %387 = vmatpush1.msra.mxu0 0.0
        %388 = vmatprep.subr.mxu0 0.0
        %389 = vmatpush1.msra.mxu0 0.0
        %390 = vmatprep.subr.mxu0 0.0
        %391 = vmatpush1.msra.mxu0 0.0
        %392 = vmatprep.subr.mxu0 0.0
        %393 = vmatpush1.msra.mxu0 0.0
        %394 = vmatprep.mubr.f32.mxu0 0.0
        %395 = vmatmul.mubr.f32.gmra.mrb[0].mxu0 %v160
        %v396 = vpop.f32.mrb[0].mxu0
        %v397 = vadd.f32 0.0, %v396
        %v398 = vpop.f32.mrb[0].mxu0
        %399 = vmatprep.mubr.f32.mxu0 0.0
        %400 = vmatmul.mubr.f32.gmra.mrb[0].mxu0 %v163
        %v401 = vpop.f32.mrb[0].mxu0
        %v402 = vadd.f32 0.0, %v401
        %v403 = vpop.f32.mrb[0].mxu0
        %404 = vmatprep.mubr.f32.mxu0 0.0
        %405 = vmatmul.mubr.f32.gmra.mrb[0].mxu0 %v166
        %v406 = vpop.f32.mrb[0].mxu0
        %v407 = vadd.f32 0.0, %v406
        %v408 = vpop.f32.mrb[0].mxu0
        %409 = vmatprep.mubr.f32.mxu0 0.0
        %410 = vmatmul.mubr.f32.gmra.mrb[0].mxu0 %v169
        %v411 = vpop.f32.mrb[0].mxu0
        %v412 = vadd.f32 0.0, %v411
        %v413 = vpop.f32.mrb[0].mxu0
        %414 = vmatprep.mubr.f32.mxu0 0.0
        %415 = vmatmul.mubr.f32.gmra.mrb[0].mxu0 %v172
        %v416 = vpop.f32.mrb[0].mxu0
        %v417 = vadd.f32 0.0, %v416
        %v418 = vpop.f32.mrb[0].mxu0
        %419 = vmatprep.mubr.f32.mxu0 0.0
        %420 = vmatmul.mubr.f32.gmra.mrb[0].mxu0 %v175
        %v421 = vpop.f32.mrb[0].mxu0
        %v422 = vadd.f32 0.0, %v421
        %v423 = vpop.f32.mrb[0].mxu0
        %424 = vmatprep.mubr.f32.mxu0 0.0
        %425 = vmatmul.mubr.f32.gmra.mrb[0].mxu0 %v178
        %v426 = vpop.f32.mrb[0].mxu0
        %v427 = vadd.f32 0.0, %v426
        %v428 = vpop.f32.mrb[0].mxu0
        %429 = vmatprep.mubr.f32.mxu0 0.0
        %430 = vmatmul.mubr.f32.gmra.mrb[0].mxu0 %v181
        %v431 = vpop.f32.mrb[0].mxu0
        %v432 = vadd.f32 0.0, %v431
        %v433 = vpop.f32.mrb[0].mxu0
        %434 = vmatprep.mubr.f32.mxu0 0.0
        %435 = vmatmul.mubr.f32.gmra.mrb[0].mxu0 %v184
        %v436 = vpop.f32.mrb[0].mxu0
        %v437 = vadd.f32 0.0, %v436
        %v438 = vpop.f32.mrb[0].mxu0
        %439 = vmatprep.mubr.f32.mxu0 0.0
        %440 = vmatmul.mubr.f32.gmra.mrb[0].mxu0 %v187
        %v441 = vpop.f32.mrb[0].mxu0
        %v442 = vadd.f32 0.0, %v441
        %v443 = vpop.f32.mrb[0].mxu0
        %444 = vmatprep.mubr.f32.mxu0 0.0
        %445 = vmatmul.mubr.f32.gmra.mrb[0].mxu0 %v190
        %v446 = vpop.f32.mrb[0].mxu0
        %v447 = vadd.f32 0.0, %v446
        %v448 = vpop.f32.mrb[0].mxu0
        %449 = vdwg.mxu0
        %461 = vrot.lane.b32.xlu0 %v266, 110
        %v462 = vpop.permute.xlu0 %461
        %463 = vrot.lane.b32.xlu0 %v272, 110
        %v464 = vpop.permute.xlu0 %463
        %465 = vrot.lane.b32.xlu0 %v278, 110
        %v466 = vpop.permute.xlu0 %465
        %467 = vrot.lane.b32.xlu0 %v284, 110
        %v468 = vpop.permute.xlu0 %467
        %469 = vrot.lane.b32.xlu0 %v290, 110
        %v470 = vpop.permute.xlu0 %469
        %471 = vrot.lane.b32.xlu0 %v296, 110
        %v472 = vpop.permute.xlu0 %471
        %473 = vrot.lane.b32.xlu0 %v302, 110
        %v474 = vpop.permute.xlu0 %473
        %475 = vrot.lane.b32.xlu0 %v308, 110
        %v476 = vpop.permute.xlu0 %475
        %477 = vrot.lane.b32.xlu0 %v314, 110
        %v478 = vpop.permute.xlu0 %477
        %479 = vrot.lane.b32.xlu0 %v320, 110
        %v480 = vpop.permute.xlu0 %479
        %481 = vrot.lane.b32.xlu0 %v326, 110
        %v482 = vpop.permute.xlu0 %481
        %494 = vrot.lane.b32.xlu0 %v266, 92
        %v495 = vpop.permute.xlu0 %494
        %496 = vrot.lane.b32.xlu0 %v272, 92
        %v497 = vpop.permute.xlu0 %496
        %498 = vrot.lane.b32.xlu0 %v278, 92
        %v499 = vpop.permute.xlu0 %498
        %500 = vrot.lane.b32.xlu0 %v284, 92
        %v501 = vpop.permute.xlu0 %500
        %502 = vrot.lane.b32.xlu0 %v290, 92
        %v503 = vpop.permute.xlu0 %502
        %504 = vrot.lane.b32.xlu0 %v296, 92
        %v505 = vpop.permute.xlu0 %504
        %506 = vrot.lane.b32.xlu0 %v302, 92
        %v507 = vpop.permute.xlu0 %506
        %508 = vrot.lane.b32.xlu0 %v308, 92
        %v509 = vpop.permute.xlu0 %508
        %510 = vrot.lane.b32.xlu0 %v314, 92
        %v511 = vpop.permute.xlu0 %510
        %512 = vrot.lane.b32.xlu0 %v320, 92
        %v513 = vpop.permute.xlu0 %512
        %514 = vrot.lane.b32.xlu0 %v326, 92
        %v515 = vpop.permute.xlu0 %514
        %527 = vrot.lane.b32.xlu0 %v266, 74
        %v528 = vpop.permute.xlu0 %527
        %529 = vrot.lane.b32.xlu0 %v272, 74
        %v530 = vpop.permute.xlu0 %529
        %531 = vrot.lane.b32.xlu0 %v278, 74
        %v532 = vpop.permute.xlu0 %531
        %533 = vrot.lane.b32.xlu0 %v284, 74
        %v534 = vpop.permute.xlu0 %533
        %535 = vrot.lane.b32.xlu0 %v290, 74
        %v536 = vpop.permute.xlu0 %535
        %537 = vrot.lane.b32.xlu0 %v296, 74
        %v538 = vpop.permute.xlu0 %537
        %539 = vrot.lane.b32.xlu0 %v302, 74
        %v540 = vpop.permute.xlu0 %539
        %541 = vrot.lane.b32.xlu0 %v308, 74
        %v542 = vpop.permute.xlu0 %541
        %543 = vrot.lane.b32.xlu0 %v314, 74
        %v544 = vpop.permute.xlu0 %543
        %545 = vrot.lane.b32.xlu0 %v320, 74
        %v546 = vpop.permute.xlu0 %545
        %547 = vrot.lane.b32.xlu0 %v326, 74
        %v548 = vpop.permute.xlu0 %547
        %560 = vrot.lane.b32.xlu0 %v266, 56
        %v561 = vpop.permute.xlu0 %560
        %562 = vrot.lane.b32.xlu0 %v272, 56
        %v563 = vpop.permute.xlu0 %562
        %564 = vrot.lane.b32.xlu0 %v278, 56
        %v565 = vpop.permute.xlu0 %564
        %566 = vrot.lane.b32.xlu0 %v284, 56
        %v567 = vpop.permute.xlu0 %566
        %568 = vrot.lane.b32.xlu0 %v290, 56
        %v569 = vpop.permute.xlu0 %568
        %570 = vrot.lane.b32.xlu0 %v296, 56
        %v571 = vpop.permute.xlu0 %570
        %572 = vrot.lane.b32.xlu0 %v302, 56
        %v573 = vpop.permute.xlu0 %572
        %574 = vrot.lane.b32.xlu0 %v308, 56
        %v575 = vpop.permute.xlu0 %574
        %576 = vrot.lane.b32.xlu0 %v314, 56
        %v577 = vpop.permute.xlu0 %576
        %578 = vrot.lane.b32.xlu0 %v320, 56
        %v579 = vpop.permute.xlu0 %578
        %580 = vrot.lane.b32.xlu0 %v326, 56
        %v581 = vpop.permute.xlu0 %580
        %593 = vrot.lane.b32.xlu0 %v266, 38
        %v594 = vpop.permute.xlu0 %593
        %595 = vrot.lane.b32.xlu0 %v272, 38
        %v596 = vpop.permute.xlu0 %595
        %597 = vrot.lane.b32.xlu0 %v278, 38
        %v598 = vpop.permute.xlu0 %597
        %599 = vrot.lane.b32.xlu0 %v284, 38
        %v600 = vpop.permute.xlu0 %599
        %601 = vrot.lane.b32.xlu0 %v290, 38
        %v602 = vpop.permute.xlu0 %601
        %603 = vrot.lane.b32.xlu0 %v296, 38
        %v604 = vpop.permute.xlu0 %603
        %605 = vrot.lane.b32.xlu0 %v302, 38
        %v606 = vpop.permute.xlu0 %605
        %607 = vrot.lane.b32.xlu0 %v308, 38
        %v608 = vpop.permute.xlu0 %607
        %609 = vrot.lane.b32.xlu0 %v314, 38
        %v610 = vpop.permute.xlu0 %609
        %611 = vrot.lane.b32.xlu0 %v320, 38
        %v612 = vpop.permute.xlu0 %611
        %613 = vrot.lane.b32.xlu0 %v326, 38
        %v614 = vpop.permute.xlu0 %613
        %626 = vrot.lane.b32.xlu0 %v266, 20
        %v627 = vpop.permute.xlu0 %626
        %628 = vrot.lane.b32.xlu0 %v272, 20
        %v629 = vpop.permute.xlu0 %628
        %630 = vrot.lane.b32.xlu0 %v278, 20
        %v631 = vpop.permute.xlu0 %630
        %632 = vrot.lane.b32.xlu0 %v284, 20
        %v633 = vpop.permute.xlu0 %632
        %634 = vrot.lane.b32.xlu0 %v290, 20
        %v635 = vpop.permute.xlu0 %634
        %636 = vrot.lane.b32.xlu0 %v296, 20
        %v637 = vpop.permute.xlu0 %636
        %638 = vrot.lane.b32.xlu0 %v302, 20
        %v639 = vpop.permute.xlu0 %638
        %640 = vrot.lane.b32.xlu0 %v308, 20
        %v641 = vpop.permute.xlu0 %640
        %642 = vrot.lane.b32.xlu0 %v314, 20
        %v643 = vpop.permute.xlu0 %642
        %644 = vrot.lane.b32.xlu0 %v320, 20
        %v645 = vpop.permute.xlu0 %644
        %646 = vrot.lane.b32.xlu0 %v326, 20
        %v647 = vpop.permute.xlu0 %646
        %670 = vrot.lane.b32.xlu0 %v266, 2
        %v671 = vpop.permute.xlu0 %670
        %672 = vrot.lane.b32.xlu0 %v268, 2
        %v673 = vpop.permute.xlu0 %672
        %674 = vrot.lane.b32.xlu0 %v272, 2
        %v675 = vpop.permute.xlu0 %674
        %676 = vrot.lane.b32.xlu0 %v274, 2
        %v677 = vpop.permute.xlu0 %676
        %678 = vrot.lane.b32.xlu0 %v278, 2
        %v679 = vpop.permute.xlu0 %678
        %680 = vrot.lane.b32.xlu0 %v280, 2
        %v681 = vpop.permute.xlu0 %680
        %682 = vrot.lane.b32.xlu0 %v284, 2
        %v683 = vpop.permute.xlu0 %682
        %684 = vrot.lane.b32.xlu0 %v286, 2
        %v685 = vpop.permute.xlu0 %684
        %686 = vrot.lane.b32.xlu0 %v290, 2
        %v687 = vpop.permute.xlu0 %686
        %688 = vrot.lane.b32.xlu0 %v292, 2
        %v689 = vpop.permute.xlu0 %688
        %690 = vrot.lane.b32.xlu0 %v296, 2
        %v691 = vpop.permute.xlu0 %690
        %692 = vrot.lane.b32.xlu0 %v298, 2
        %v693 = vpop.permute.xlu0 %692
        %694 = vrot.lane.b32.xlu0 %v302, 2
        %v695 = vpop.permute.xlu0 %694
        %696 = vrot.lane.b32.xlu0 %v304, 2
        %v697 = vpop.permute.xlu0 %696
        %698 = vrot.lane.b32.xlu0 %v308, 2
        %v699 = vpop.permute.xlu0 %698
        %700 = vrot.lane.b32.xlu0 %v310, 2
        %v701 = vpop.permute.xlu0 %700
        %702 = vrot.lane.b32.xlu0 %v314, 2
        %v703 = vpop.permute.xlu0 %702
        %704 = vrot.lane.b32.xlu0 %v316, 2
        %v705 = vpop.permute.xlu0 %704
        %706 = vrot.lane.b32.xlu0 %v320, 2
        %v707 = vpop.permute.xlu0 %706
        %708 = vrot.lane.b32.xlu0 %v322, 2
        %v709 = vpop.permute.xlu0 %708
        %710 = vrot.lane.b32.xlu0 %v326, 2
        %v711 = vpop.permute.xlu0 %710
        %712 = vrot.lane.b32.xlu0 %v328, 2
        %v713 = vpop.permute.xlu0 %712
        %vm714 = vcmask 15360
        %v715 = vsel %vm714, %v671, %v673
        %v716 = vsel %vm714, %v675, %v677
        %v717 = vsel %vm714, %v679, %v681
        %v718 = vsel %vm714, %v683, %v685
        %v719 = vsel %vm714, %v687, %v689
        %v720 = vsel %vm714, %v691, %v693
        %v721 = vsel %vm714, %v695, %v697
        %v722 = vsel %vm714, %v699, %v701
        %v723 = vsel %vm714, %v703, %v705
        %v724 = vsel %vm714, %v707, %v709
        %v725 = vsel %vm714, %v711, %v713
        %737 = vrot.lane.b32.xlu0 %v268, 112
        %v738 = vpop.permute.xlu0 %737
        %739 = vrot.lane.b32.xlu0 %v274, 112
        %v740 = vpop.permute.xlu0 %739
        %741 = vrot.lane.b32.xlu0 %v280, 112
        %v742 = vpop.permute.xlu0 %741
        %743 = vrot.lane.b32.xlu0 %v286, 112
        %v744 = vpop.permute.xlu0 %743
        %745 = vrot.lane.b32.xlu0 %v292, 112
        %v746 = vpop.permute.xlu0 %745
        %747 = vrot.lane.b32.xlu0 %v298, 112
        %v748 = vpop.permute.xlu0 %747
        %749 = vrot.lane.b32.xlu0 %v304, 112
        %v750 = vpop.permute.xlu0 %749
        %751 = vrot.lane.b32.xlu0 %v310, 112
        %v752 = vpop.permute.xlu0 %751
        %753 = vrot.lane.b32.xlu0 %v316, 112
        %v754 = vpop.permute.xlu0 %753
        %755 = vrot.lane.b32.xlu0 %v322, 112
        %v756 = vpop.permute.xlu0 %755
        %757 = vrot.lane.b32.xlu0 %v328, 112
        %v758 = vpop.permute.xlu0 %757
        %770 = vrot.lane.b32.xlu0 %v268, 94
        %v771 = vpop.permute.xlu0 %770
        %772 = vrot.lane.b32.xlu0 %v274, 94
        %v773 = vpop.permute.xlu0 %772
        %774 = vrot.lane.b32.xlu0 %v280, 94
        %v775 = vpop.permute.xlu0 %774
        %776 = vrot.lane.b32.xlu0 %v286, 94
        %v777 = vpop.permute.xlu0 %776
        %778 = vrot.lane.b32.xlu0 %v292, 94
        %v779 = vpop.permute.xlu0 %778
        %780 = vrot.lane.b32.xlu0 %v298, 94
        %v781 = vpop.permute.xlu0 %780
        %782 = vrot.lane.b32.xlu0 %v304, 94
        %v783 = vpop.permute.xlu0 %782
        %784 = vrot.lane.b32.xlu0 %v310, 94
        %v785 = vpop.permute.xlu0 %784
        %786 = vrot.lane.b32.xlu0 %v316, 94
        %v787 = vpop.permute.xlu0 %786
        %788 = vrot.lane.b32.xlu0 %v322, 94
        %v789 = vpop.permute.xlu0 %788
        %790 = vrot.lane.b32.xlu0 %v328, 94
        %v791 = vpop.permute.xlu0 %790
        %803 = vrot.lane.b32.xlu0 %v268, 76
        %v804 = vpop.permute.xlu0 %803
        %805 = vrot.lane.b32.xlu0 %v274, 76
        %v806 = vpop.permute.xlu0 %805
        %807 = vrot.lane.b32.xlu0 %v280, 76
        %v808 = vpop.permute.xlu0 %807
        %809 = vrot.lane.b32.xlu0 %v286, 76
        %v810 = vpop.permute.xlu0 %809
        %811 = vrot.lane.b32.xlu0 %v292, 76
        %v812 = vpop.permute.xlu0 %811
        %813 = vrot.lane.b32.xlu0 %v298, 76
        %v814 = vpop.permute.xlu0 %813
        %815 = vrot.lane.b32.xlu0 %v304, 76
        %v816 = vpop.permute.xlu0 %815
        %817 = vrot.lane.b32.xlu0 %v310, 76
        %v818 = vpop.permute.xlu0 %817
        %819 = vrot.lane.b32.xlu0 %v316, 76
        %v820 = vpop.permute.xlu0 %819
        %821 = vrot.lane.b32.xlu0 %v322, 76
        %v822 = vpop.permute.xlu0 %821
        %823 = vrot.lane.b32.xlu0 %v328, 76
        %v824 = vpop.permute.xlu0 %823
        %836 = vrot.lane.b32.xlu0 %v268, 58
        %v837 = vpop.permute.xlu0 %836
        %838 = vrot.lane.b32.xlu0 %v274, 58
        %v839 = vpop.permute.xlu0 %838
        %840 = vrot.lane.b32.xlu0 %v280, 58
        %v841 = vpop.permute.xlu0 %840
        %842 = vrot.lane.b32.xlu0 %v286, 58
        %v843 = vpop.permute.xlu0 %842
        %844 = vrot.lane.b32.xlu0 %v292, 58
        %v845 = vpop.permute.xlu0 %844
        %846 = vrot.lane.b32.xlu0 %v298, 58
        %v847 = vpop.permute.xlu0 %846
        %848 = vrot.lane.b32.xlu0 %v304, 58
        %v849 = vpop.permute.xlu0 %848
        %850 = vrot.lane.b32.xlu0 %v310, 58
        %v851 = vpop.permute.xlu0 %850
        %852 = vrot.lane.b32.xlu0 %v316, 58
        %v853 = vpop.permute.xlu0 %852
        %854 = vrot.lane.b32.xlu0 %v322, 58
        %v855 = vpop.permute.xlu0 %854
        %856 = vrot.lane.b32.xlu0 %v328, 58
        %v857 = vpop.permute.xlu0 %856
        %869 = vrot.lane.b32.xlu0 %v268, 40
        %v870 = vpop.permute.xlu0 %869
        %871 = vrot.lane.b32.xlu0 %v274, 40
        %v872 = vpop.permute.xlu0 %871
        %873 = vrot.lane.b32.xlu0 %v280, 40
        %v874 = vpop.permute.xlu0 %873
        %875 = vrot.lane.b32.xlu0 %v286, 40
        %v876 = vpop.permute.xlu0 %875
        %877 = vrot.lane.b32.xlu0 %v292, 40
        %v878 = vpop.permute.xlu0 %877
        %879 = vrot.lane.b32.xlu0 %v298, 40
        %v880 = vpop.permute.xlu0 %879
        %881 = vrot.lane.b32.xlu0 %v304, 40
        %v882 = vpop.permute.xlu0 %881
        %883 = vrot.lane.b32.xlu0 %v310, 40
        %v884 = vpop.permute.xlu0 %883
        %885 = vrot.lane.b32.xlu0 %v316, 40
        %v886 = vpop.permute.xlu0 %885
        %887 = vrot.lane.b32.xlu0 %v322, 40
        %v888 = vpop.permute.xlu0 %887
        %889 = vrot.lane.b32.xlu0 %v328, 40
        %v890 = vpop.permute.xlu0 %889
        %902 = vrot.lane.b32.xlu0 %v268, 22
        %v903 = vpop.permute.xlu0 %902
        %904 = vrot.lane.b32.xlu0 %v274, 22
        %v905 = vpop.permute.xlu0 %904
        %906 = vrot.lane.b32.xlu0 %v280, 22
        %v907 = vpop.permute.xlu0 %906
        %908 = vrot.lane.b32.xlu0 %v286, 22
        %v909 = vpop.permute.xlu0 %908
        %910 = vrot.lane.b32.xlu0 %v292, 22
        %v911 = vpop.permute.xlu0 %910
        %912 = vrot.lane.b32.xlu0 %v298, 22
        %v913 = vpop.permute.xlu0 %912
        %914 = vrot.lane.b32.xlu0 %v304, 22
        %v915 = vpop.permute.xlu0 %914
        %916 = vrot.lane.b32.xlu0 %v310, 22
        %v917 = vpop.permute.xlu0 %916
        %918 = vrot.lane.b32.xlu0 %v316, 22
        %v919 = vpop.permute.xlu0 %918
        %920 = vrot.lane.b32.xlu0 %v322, 22
        %v921 = vpop.permute.xlu0 %920
        %922 = vrot.lane.b32.xlu0 %v328, 22
        %v923 = vpop.permute.xlu0 %922
        %946 = vrot.lane.b32.xlu0 %v268, 4
        %v947 = vpop.permute.xlu0 %946
        %948 = vrot.lane.b32.xlu0 %v397, 4
        %v949 = vpop.permute.xlu0 %948
        %950 = vrot.lane.b32.xlu0 %v274, 4
        %v951 = vpop.permute.xlu0 %950
        %952 = vrot.lane.b32.xlu0 %v402, 4
        %v953 = vpop.permute.xlu0 %952
        %954 = vrot.lane.b32.xlu0 %v280, 4
        %v955 = vpop.permute.xlu0 %954
        %956 = vrot.lane.b32.xlu0 %v407, 4
        %v957 = vpop.permute.xlu0 %956
        %958 = vrot.lane.b32.xlu0 %v286, 4
        %v959 = vpop.permute.xlu0 %958
        %960 = vrot.lane.b32.xlu0 %v412, 4
        %v961 = vpop.permute.xlu0 %960
        %962 = vrot.lane.b32.xlu0 %v292, 4
        %v963 = vpop.permute.xlu0 %962
        %964 = vrot.lane.b32.xlu0 %v417, 4
        %v965 = vpop.permute.xlu0 %964
        %966 = vrot.lane.b32.xlu0 %v298, 4
        %v967 = vpop.permute.xlu0 %966
        %968 = vrot.lane.b32.xlu0 %v422, 4
        %v969 = vpop.permute.xlu0 %968
        %970 = vrot.lane.b32.xlu0 %v304, 4
        %v971 = vpop.permute.xlu0 %970
        %972 = vrot.lane.b32.xlu0 %v427, 4
        %v973 = vpop.permute.xlu0 %972
        %974 = vrot.lane.b32.xlu0 %v310, 4
        %v975 = vpop.permute.xlu0 %974
        %976 = vrot.lane.b32.xlu0 %v432, 4
        %v977 = vpop.permute.xlu0 %976
        %978 = vrot.lane.b32.xlu0 %v316, 4
        %v979 = vpop.permute.xlu0 %978
        %980 = vrot.lane.b32.xlu0 %v437, 4
        %v981 = vpop.permute.xlu0 %980
        %982 = vrot.lane.b32.xlu0 %v322, 4
        %v983 = vpop.permute.xlu0 %982
        %984 = vrot.lane.b32.xlu0 %v442, 4
        %v985 = vpop.permute.xlu0 %984
        %986 = vrot.lane.b32.xlu0 %v328, 4
        %v987 = vpop.permute.xlu0 %986
        %988 = vrot.lane.b32.xlu0 %v447, 4
        %v989 = vpop.permute.xlu0 %988
        %v990 = vsel %vm158, %v947, %v949
        %v991 = vsel %vm158, %v951, %v953
        %v992 = vsel %vm158, %v955, %v957
        %v993 = vsel %vm158, %v959, %v961
        %v994 = vsel %vm158, %v963, %v965
        %v995 = vsel %vm158, %v967, %v969
        %v996 = vsel %vm158, %v971, %v973
        %v997 = vsel %vm158, %v975, %v977
        %v998 = vsel %vm158, %v979, %v981
        %v999 = vsel %vm158, %v983, %v985
        %v1000 = vsel %vm158, %v987, %v989
        %1012 = vrot.lane.b32.xlu0 %v397, 114
        %v1013 = vpop.permute.xlu0 %1012
        %1014 = vrot.lane.b32.xlu0 %v402, 114
        %v1015 = vpop.permute.xlu0 %1014
        %1016 = vrot.lane.b32.xlu0 %v407, 114
        %v1017 = vpop.permute.xlu0 %1016
        %1018 = vrot.lane.b32.xlu0 %v412, 114
        %v1019 = vpop.permute.xlu0 %1018
        %1020 = vrot.lane.b32.xlu0 %v417, 114
        %v1021 = vpop.permute.xlu0 %1020
        %1022 = vrot.lane.b32.xlu0 %v422, 114
        %v1023 = vpop.permute.xlu0 %1022
        %1024 = vrot.lane.b32.xlu0 %v427, 114
        %v1025 = vpop.permute.xlu0 %1024
        %1026 = vrot.lane.b32.xlu0 %v432, 114
        %v1027 = vpop.permute.xlu0 %1026
        %1028 = vrot.lane.b32.xlu0 %v437, 114
        %v1029 = vpop.permute.xlu0 %1028
        %1030 = vrot.lane.b32.xlu0 %v442, 114
        %v1031 = vpop.permute.xlu0 %1030
        %1032 = vrot.lane.b32.xlu0 %v447, 114
        %v1033 = vpop.permute.xlu0 %1032
        %1045 = vrot.lane.b32.xlu0 %v397, 96
        %v1046 = vpop.permute.xlu0 %1045
        %1047 = vrot.lane.b32.xlu0 %v402, 96
        %v1048 = vpop.permute.xlu0 %1047
        %1049 = vrot.lane.b32.xlu0 %v422, 96
        %v1050 = vpop.permute.xlu0 %1049
        %1051 = vrot.lane.b32.xlu0 %v427, 96
        %v1052 = vpop.permute.xlu0 %1051
        %1053 = vrot.lane.b32.xlu0 %v432, 96
        %v1054 = vpop.permute.xlu0 %1053
        %1055 = vrot.lane.b32.xlu0 %v437, 96
        %v1056 = vpop.permute.xlu0 %1055
        %1057 = vrot.lane.b32.xlu0 %v442, 96
        %v1058 = vpop.permute.xlu0 %1057
        %1059 = vrot.lane.b32.xlu0 %v447, 96
        %v1060 = vpop.permute.xlu0 %1059
        %1069 = vrot.lane.b32.xlu0 %v397, 78
        %v1070 = vpop.permute.xlu0 %1069
        %1071 = vrot.lane.b32.xlu0 %v402, 78
        %v1072 = vpop.permute.xlu0 %1071
        %1073 = vrot.lane.b32.xlu0 %v422, 78
        %v1074 = vpop.permute.xlu0 %1073
        %1075 = vrot.lane.b32.xlu0 %v427, 78
        %v1076 = vpop.permute.xlu0 %1075
        %1077 = vrot.lane.b32.xlu0 %v432, 78
        %v1078 = vpop.permute.xlu0 %1077
        %1079 = vrot.lane.b32.xlu0 %v437, 78
        %v1080 = vpop.permute.xlu0 %1079
        %1081 = vrot.lane.b32.xlu0 %v442, 78
        %v1082 = vpop.permute.xlu0 %1081
        %1083 = vrot.lane.b32.xlu0 %v447, 78
        %v1084 = vpop.permute.xlu0 %1083
        %v1093 = vcombine.low %v266, %v495
        %v1094 = vcombine.high %v266, %v495
        %v1096 = vunpack.c.l.s4 1983009808
        %v1097 = vunpack.c.0.s8 %v1096
        %v1098 = vlaneseq
        %v1099 = vshrl.u32 %v1098, 7
        %v1100 = vsub.s32 %v1097, %v1099
        %v1101 = vrot.slane %v1093, %v1100
        %v1103 = vunpack.c.l.s4 1983009808
        %v1104 = vunpack.c.0.s8 %v1103
        %v1105 = vlaneseq
        %v1106 = vshrl.u32 %v1105, 7
        %v1107 = vsub.s32 %v1104, %v1106
        %v1108 = vrot.slane %v1094, %v1107
        %v1109 = vcombine.low %v462, %v528
        %v1110 = vcombine.high %v462, %v528
        %v1112 = vunpack.c.l.s4 1983009808
        %v1113 = vunpack.c.0.s8 %v1112
        %v1114 = vlaneseq
        %v1115 = vshrl.u32 %v1114, 7
        %v1116 = vsub.s32 %v1113, %v1115
        %v1117 = vrot.slane %v1109, %v1116
        %v1119 = vunpack.c.l.s4 1983009808
        %v1120 = vunpack.c.0.s8 %v1119
        %v1121 = vlaneseq
        %v1122 = vshrl.u32 %v1121, 7
        %v1123 = vsub.s32 %v1120, %v1122
        %v1124 = vrot.slane %v1110, %v1123
        %v1125 = vcombine.low %v561, %v627
        %v1126 = vcombine.high %v561, %v627
        %v1128 = vunpack.c.l.s4 1983009808
        %v1129 = vunpack.c.0.s8 %v1128
        %v1130 = vlaneseq
        %v1131 = vshrl.u32 %v1130, 7
        %v1132 = vsub.s32 %v1129, %v1131
        %v1133 = vrot.slane %v1125, %v1132
        %v1135 = vunpack.c.l.s4 1983009808
        %v1136 = vunpack.c.0.s8 %v1135
        %v1137 = vlaneseq
        %v1138 = vshrl.u32 %v1137, 7
        %v1139 = vsub.s32 %v1136, %v1138
        %v1140 = vrot.slane %v1126, %v1139
        %v1141 = vcombine.low %v594, %v715
        %v1142 = vcombine.high %v594, %v715
        %v1144 = vunpack.c.l.s4 1983009808
        %v1145 = vunpack.c.0.s8 %v1144
        %v1146 = vlaneseq
        %v1147 = vshrl.u32 %v1146, 7
        %v1148 = vsub.s32 %v1145, %v1147
        %v1149 = vrot.slane %v1141, %v1148
        %v1151 = vunpack.c.l.s4 1983009808
        %v1152 = vunpack.c.0.s8 %v1151
        %v1153 = vlaneseq
        %v1154 = vshrl.u32 %v1153, 7
        %v1155 = vsub.s32 %v1152, %v1154
        %v1156 = vrot.slane %v1142, %v1155
        %v1157 = vcombine.low %v1101, %v1117
        %v1158 = vcombine.high %v1101, %v1117
        %v1160 = vunpack.c.l.s4 1934713408
        %v1161 = vunpack.c.0.s8 %v1160
        %v1162 = vlaneseq
        %v1163 = vshrl.u32 %v1162, 7
        %v1164 = vsub.s32 %v1161, %v1163
        %v1165 = vrot.slane %v1157, %v1164
        %v1167 = vunpack.c.l.s4 1934713408
        %v1168 = vunpack.c.0.s8 %v1167
        %v1169 = vlaneseq
        %v1170 = vshrl.u32 %v1169, 7
        %v1171 = vsub.s32 %v1168, %v1170
        %v1172 = vrot.slane %v1158, %v1171
        %v1173 = vcombine.low %v1108, %v1124
        %v1174 = vcombine.high %v1108, %v1124
        %v1176 = vunpack.c.l.s4 1934713408
        %v1177 = vunpack.c.0.s8 %v1176
        %v1178 = vlaneseq
        %v1179 = vshrl.u32 %v1178, 7
        %v1180 = vsub.s32 %v1177, %v1179
        %v1181 = vrot.slane %v1173, %v1180
        %v1183 = vunpack.c.l.s4 1934713408
        %v1184 = vunpack.c.0.s8 %v1183
        %v1185 = vlaneseq
        %v1186 = vshrl.u32 %v1185, 7
        %v1187 = vsub.s32 %v1184, %v1186
        %v1188 = vrot.slane %v1174, %v1187
        %v1189 = vcombine.low %v1133, %v1149
        %v1190 = vcombine.high %v1133, %v1149
        %v1192 = vunpack.c.l.s4 1934713408
        %v1193 = vunpack.c.0.s8 %v1192
        %v1194 = vlaneseq
        %v1195 = vshrl.u32 %v1194, 7
        %v1196 = vsub.s32 %v1193, %v1195
        %v1197 = vrot.slane %v1189, %v1196
        %v1199 = vunpack.c.l.s4 1934713408
        %v1200 = vunpack.c.0.s8 %v1199
        %v1201 = vlaneseq
        %v1202 = vshrl.u32 %v1201, 7
        %v1203 = vsub.s32 %v1200, %v1202
        %v1204 = vrot.slane %v1190, %v1203
        %v1205 = vcombine.low %v1140, %v1156
        %v1206 = vcombine.high %v1140, %v1156
        %v1208 = vunpack.c.l.s4 1934713408
        %v1209 = vunpack.c.0.s8 %v1208
        %v1210 = vlaneseq
        %v1211 = vshrl.u32 %v1210, 7
        %v1212 = vsub.s32 %v1209, %v1211
        %v1213 = vrot.slane %v1205, %v1212
        %v1215 = vunpack.c.l.s4 1934713408
        %v1216 = vunpack.c.0.s8 %v1215
        %v1217 = vlaneseq
        %v1218 = vshrl.u32 %v1217, 7
        %v1219 = vsub.s32 %v1216, %v1218
        %v1220 = vrot.slane %v1206, %v1219
        %v1221 = vcombine.low %v1165, %v1197
        %v1222 = vcombine.high %v1165, %v1197
        %v1223 = vcombine.low %v1172, %v1204
        %v1224 = vcombine.high %v1172, %v1204
        %v1225 = vcombine.low %v1181, %v1213
        %v1226 = vcombine.high %v1181, %v1213
        %v1227 = vcombine.low %v1188, %v1220
        %v1228 = vcombine.high %v1188, %v1220
        %v1229 = vcombine.low %v738, %v804
        %v1230 = vcombine.high %v738, %v804
        %v1232 = vunpack.c.l.s4 1983009808
        %v1233 = vunpack.c.0.s8 %v1232
        %v1234 = vlaneseq
        %v1235 = vshrl.u32 %v1234, 7
        %v1236 = vsub.s32 %v1233, %v1235
        %v1237 = vrot.slane %v1229, %v1236
        %v1239 = vunpack.c.l.s4 1983009808
        %v1240 = vunpack.c.0.s8 %v1239
        %v1241 = vlaneseq
        %v1242 = vshrl.u32 %v1241, 7
        %v1243 = vsub.s32 %v1240, %v1242
        %v1244 = vrot.slane %v1230, %v1243
        %v1245 = vcombine.low %v771, %v837
        %v1246 = vcombine.high %v771, %v837
        %v1248 = vunpack.c.l.s4 1983009808
        %v1249 = vunpack.c.0.s8 %v1248
        %v1250 = vlaneseq
        %v1251 = vshrl.u32 %v1250, 7
        %v1252 = vsub.s32 %v1249, %v1251
        %v1253 = vrot.slane %v1245, %v1252
        %v1255 = vunpack.c.l.s4 1983009808
        %v1256 = vunpack.c.0.s8 %v1255
        %v1257 = vlaneseq
        %v1258 = vshrl.u32 %v1257, 7
        %v1259 = vsub.s32 %v1256, %v1258
        %v1260 = vrot.slane %v1246, %v1259
        %v1261 = vcombine.low %v870, %v990
        %v1262 = vcombine.high %v870, %v990
        %v1264 = vunpack.c.l.s4 1983009808
        %v1265 = vunpack.c.0.s8 %v1264
        %v1266 = vlaneseq
        %v1267 = vshrl.u32 %v1266, 7
        %v1268 = vsub.s32 %v1265, %v1267
        %v1269 = vrot.slane %v1261, %v1268
        %v1271 = vunpack.c.l.s4 1983009808
        %v1272 = vunpack.c.0.s8 %v1271
        %v1273 = vlaneseq
        %v1274 = vshrl.u32 %v1273, 7
        %v1275 = vsub.s32 %v1272, %v1274
        %v1276 = vrot.slane %v1262, %v1275
        %v1277 = vcombine.low %v903, %v1013
        %v1278 = vcombine.high %v903, %v1013
        %v1280 = vunpack.c.l.s4 1983009808
        %v1281 = vunpack.c.0.s8 %v1280
        %v1282 = vlaneseq
        %v1283 = vshrl.u32 %v1282, 7
        %v1284 = vsub.s32 %v1281, %v1283
        %v1285 = vrot.slane %v1277, %v1284
        %v1287 = vunpack.c.l.s4 1983009808
        %v1288 = vunpack.c.0.s8 %v1287
        %v1289 = vlaneseq
        %v1290 = vshrl.u32 %v1289, 7
        %v1291 = vsub.s32 %v1288, %v1290
        %v1292 = vrot.slane %v1278, %v1291
        %v1293 = vcombine.low %v1237, %v1253
        %v1294 = vcombine.high %v1237, %v1253
        %v1296 = vunpack.c.l.s4 1934713408
        %v1297 = vunpack.c.0.s8 %v1296
        %v1298 = vlaneseq
        %v1299 = vshrl.u32 %v1298, 7
        %v1300 = vsub.s32 %v1297, %v1299
        %v1301 = vrot.slane %v1293, %v1300
        %v1303 = vunpack.c.l.s4 1934713408
        %v1304 = vunpack.c.0.s8 %v1303
        %v1305 = vlaneseq
        %v1306 = vshrl.u32 %v1305, 7
        %v1307 = vsub.s32 %v1304, %v1306
        %v1308 = vrot.slane %v1294, %v1307
        %v1309 = vcombine.low %v1244, %v1260
        %v1310 = vcombine.high %v1244, %v1260
        %v1312 = vunpack.c.l.s4 1934713408
        %v1313 = vunpack.c.0.s8 %v1312
        %v1314 = vlaneseq
        %v1315 = vshrl.u32 %v1314, 7
        %v1316 = vsub.s32 %v1313, %v1315
        %v1317 = vrot.slane %v1309, %v1316
        %v1319 = vunpack.c.l.s4 1934713408
        %v1320 = vunpack.c.0.s8 %v1319
        %v1321 = vlaneseq
        %v1322 = vshrl.u32 %v1321, 7
        %v1323 = vsub.s32 %v1320, %v1322
        %v1324 = vrot.slane %v1310, %v1323
        %v1325 = vcombine.low %v1269, %v1285
        %v1326 = vcombine.high %v1269, %v1285
        %v1328 = vunpack.c.l.s4 1934713408
        %v1329 = vunpack.c.0.s8 %v1328
        %v1330 = vlaneseq
        %v1331 = vshrl.u32 %v1330, 7
        %v1332 = vsub.s32 %v1329, %v1331
        %v1333 = vrot.slane %v1325, %v1332
        %v1335 = vunpack.c.l.s4 1934713408
        %v1336 = vunpack.c.0.s8 %v1335
        %v1337 = vlaneseq
        %v1338 = vshrl.u32 %v1337, 7
        %v1339 = vsub.s32 %v1336, %v1338
        %v1340 = vrot.slane %v1326, %v1339
        %v1341 = vcombine.low %v1276, %v1292
        %v1342 = vcombine.high %v1276, %v1292
        %v1344 = vunpack.c.l.s4 1934713408
        %v1345 = vunpack.c.0.s8 %v1344
        %v1346 = vlaneseq
        %v1347 = vshrl.u32 %v1346, 7
        %v1348 = vsub.s32 %v1345, %v1347
        %v1349 = vrot.slane %v1341, %v1348
        %v1351 = vunpack.c.l.s4 1934713408
        %v1352 = vunpack.c.0.s8 %v1351
        %v1353 = vlaneseq
        %v1354 = vshrl.u32 %v1353, 7
        %v1355 = vsub.s32 %v1352, %v1354
        %v1356 = vrot.slane %v1342, %v1355
        %v1357 = vcombine.low %v1301, %v1333
        %v1358 = vcombine.high %v1301, %v1333
        %v1359 = vcombine.low %v1308, %v1340
        %v1360 = vcombine.high %v1308, %v1340
        %v1361 = vcombine.low %v1317, %v1349
        %v1362 = vcombine.high %v1317, %v1349
        %v1363 = vcombine.low %v1324, %v1356
        %v1364 = vcombine.high %v1324, %v1356
        %v1365 = vcombine.high %v1046, 0.0
        %v1367 = vunpack.c.l.s4 1983009808
        %v1368 = vunpack.c.0.s8 %v1367
        %v1369 = vlaneseq
        %v1370 = vshrl.u32 %v1369, 7
        %v1371 = vsub.s32 %v1368, %v1370
        %v1372 = vrot.slane %v1046, %v1371
        %v1374 = vunpack.c.l.s4 1983009808
        %v1375 = vunpack.c.0.s8 %v1374
        %v1376 = vlaneseq
        %v1377 = vshrl.u32 %v1376, 7
        %v1378 = vsub.s32 %v1375, %v1377
        %v1379 = vrot.slane %v1365, %v1378
        %v1380 = vcombine.high %v1070, 0.0
        %v1382 = vunpack.c.l.s4 1983009808
        %v1383 = vunpack.c.0.s8 %v1382
        %v1384 = vlaneseq
        %v1385 = vshrl.u32 %v1384, 7
        %v1386 = vsub.s32 %v1383, %v1385
        %v1387 = vrot.slane %v1070, %v1386
        %v1389 = vunpack.c.l.s4 1983009808
        %v1390 = vunpack.c.0.s8 %v1389
        %v1391 = vlaneseq
        %v1392 = vshrl.u32 %v1391, 7
        %v1393 = vsub.s32 %v1390, %v1392
        %v1394 = vrot.slane %v1380, %v1393
        %v1395 = vcombine.low %v1372, %v1387
        %v1396 = vcombine.high %v1372, %v1387
        %v1398 = vunpack.c.l.s4 1934713408
        %v1399 = vunpack.c.0.s8 %v1398
        %v1400 = vlaneseq
        %v1401 = vshrl.u32 %v1400, 7
        %v1402 = vsub.s32 %v1399, %v1401
        %v1403 = vrot.slane %v1395, %v1402
        %v1405 = vunpack.c.l.s4 1934713408
        %v1406 = vunpack.c.0.s8 %v1405
        %v1407 = vlaneseq
        %v1408 = vshrl.u32 %v1407, 7
        %v1409 = vsub.s32 %v1406, %v1408
        %v1410 = vrot.slane %v1396, %v1409
        %v1411 = vcombine.low %v1379, %v1394
        %v1412 = vcombine.high %v1379, %v1394
        %v1414 = vunpack.c.l.s4 1934713408
        %v1415 = vunpack.c.0.s8 %v1414
        %v1416 = vlaneseq
        %v1417 = vshrl.u32 %v1416, 7
        %v1418 = vsub.s32 %v1415, %v1417
        %v1419 = vrot.slane %v1411, %v1418
        %v1421 = vunpack.c.l.s4 1934713408
        %v1422 = vunpack.c.0.s8 %v1421
        %v1423 = vlaneseq
        %v1424 = vshrl.u32 %v1423, 7
        %v1425 = vsub.s32 %v1422, %v1424
        %v1426 = vrot.slane %v1412, %v1425
        %v1427 = vcombine.high %v1403, 0.0
        %v1428 = vcombine.high %v1410, 0.0
        %v1429 = vcombine.high %v1419, 0.0
        %v1430 = vcombine.high %v1426, 0.0
        %v1431 = vcombine.low %v272, %v497
        %v1432 = vcombine.high %v272, %v497
        %v1434 = vunpack.c.l.s4 1983009808
        %v1435 = vunpack.c.0.s8 %v1434
        %v1436 = vlaneseq
        %v1437 = vshrl.u32 %v1436, 7
        %v1438 = vsub.s32 %v1435, %v1437
        %v1439 = vrot.slane %v1431, %v1438
        %v1441 = vunpack.c.l.s4 1983009808
        %v1442 = vunpack.c.0.s8 %v1441
        %v1443 = vlaneseq
        %v1444 = vshrl.u32 %v1443, 7
        %v1445 = vsub.s32 %v1442, %v1444
        %v1446 = vrot.slane %v1432, %v1445
        %v1447 = vcombine.low %v464, %v530
        %v1448 = vcombine.high %v464, %v530
        %v1450 = vunpack.c.l.s4 1983009808
        %v1451 = vunpack.c.0.s8 %v1450
        %v1452 = vlaneseq
        %v1453 = vshrl.u32 %v1452, 7
        %v1454 = vsub.s32 %v1451, %v1453
        %v1455 = vrot.slane %v1447, %v1454
        %v1457 = vunpack.c.l.s4 1983009808
        %v1458 = vunpack.c.0.s8 %v1457
        %v1459 = vlaneseq
        %v1460 = vshrl.u32 %v1459, 7
        %v1461 = vsub.s32 %v1458, %v1460
        %v1462 = vrot.slane %v1448, %v1461
        %v1463 = vcombine.low %v563, %v629
        %v1464 = vcombine.high %v563, %v629
        %v1466 = vunpack.c.l.s4 1983009808
        %v1467 = vunpack.c.0.s8 %v1466
        %v1468 = vlaneseq
        %v1469 = vshrl.u32 %v1468, 7
        %v1470 = vsub.s32 %v1467, %v1469
        %v1471 = vrot.slane %v1463, %v1470
        %v1473 = vunpack.c.l.s4 1983009808
        %v1474 = vunpack.c.0.s8 %v1473
        %v1475 = vlaneseq
        %v1476 = vshrl.u32 %v1475, 7
        %v1477 = vsub.s32 %v1474, %v1476
        %v1478 = vrot.slane %v1464, %v1477
        %v1479 = vcombine.low %v596, %v716
        %v1480 = vcombine.high %v596, %v716
        %v1482 = vunpack.c.l.s4 1983009808
        %v1483 = vunpack.c.0.s8 %v1482
        %v1484 = vlaneseq
        %v1485 = vshrl.u32 %v1484, 7
        %v1486 = vsub.s32 %v1483, %v1485
        %v1487 = vrot.slane %v1479, %v1486
        %v1489 = vunpack.c.l.s4 1983009808
        %v1490 = vunpack.c.0.s8 %v1489
        %v1491 = vlaneseq
        %v1492 = vshrl.u32 %v1491, 7
        %v1493 = vsub.s32 %v1490, %v1492
        %v1494 = vrot.slane %v1480, %v1493
        %v1495 = vcombine.low %v1439, %v1455
        %v1496 = vcombine.high %v1439, %v1455
        %v1498 = vunpack.c.l.s4 1934713408
        %v1499 = vunpack.c.0.s8 %v1498
        %v1500 = vlaneseq
        %v1501 = vshrl.u32 %v1500, 7
        %v1502 = vsub.s32 %v1499, %v1501
        %v1503 = vrot.slane %v1495, %v1502
        %v1505 = vunpack.c.l.s4 1934713408
        %v1506 = vunpack.c.0.s8 %v1505
        %v1507 = vlaneseq
        %v1508 = vshrl.u32 %v1507, 7
        %v1509 = vsub.s32 %v1506, %v1508
        %v1510 = vrot.slane %v1496, %v1509
        %v1511 = vcombine.low %v1446, %v1462
        %v1512 = vcombine.high %v1446, %v1462
        %v1514 = vunpack.c.l.s4 1934713408
        %v1515 = vunpack.c.0.s8 %v1514
        %v1516 = vlaneseq
        %v1517 = vshrl.u32 %v1516, 7
        %v1518 = vsub.s32 %v1515, %v1517
        %v1519 = vrot.slane %v1511, %v1518
        %v1521 = vunpack.c.l.s4 1934713408
        %v1522 = vunpack.c.0.s8 %v1521
        %v1523 = vlaneseq
        %v1524 = vshrl.u32 %v1523, 7
        %v1525 = vsub.s32 %v1522, %v1524
        %v1526 = vrot.slane %v1512, %v1525
        %v1527 = vcombine.low %v1471, %v1487
        %v1528 = vcombine.high %v1471, %v1487
        %v1530 = vunpack.c.l.s4 1934713408
        %v1531 = vunpack.c.0.s8 %v1530
        %v1532 = vlaneseq
        %v1533 = vshrl.u32 %v1532, 7
        %v1534 = vsub.s32 %v1531, %v1533
        %v1535 = vrot.slane %v1527, %v1534
        %v1537 = vunpack.c.l.s4 1934713408
        %v1538 = vunpack.c.0.s8 %v1537
        %v1539 = vlaneseq
        %v1540 = vshrl.u32 %v1539, 7
        %v1541 = vsub.s32 %v1538, %v1540
        %v1542 = vrot.slane %v1528, %v1541
        %v1543 = vcombine.low %v1478, %v1494
        %v1544 = vcombine.high %v1478, %v1494
        %v1546 = vunpack.c.l.s4 1934713408
        %v1547 = vunpack.c.0.s8 %v1546
        %v1548 = vlaneseq
        %v1549 = vshrl.u32 %v1548, 7
        %v1550 = vsub.s32 %v1547, %v1549
        %v1551 = vrot.slane %v1543, %v1550
        %v1553 = vunpack.c.l.s4 1934713408
        %v1554 = vunpack.c.0.s8 %v1553
        %v1555 = vlaneseq
        %v1556 = vshrl.u32 %v1555, 7
        %v1557 = vsub.s32 %v1554, %v1556
        %v1558 = vrot.slane %v1544, %v1557
        %v1559 = vcombine.low %v1503, %v1535
        %v1560 = vcombine.high %v1503, %v1535
        %v1561 = vcombine.low %v1510, %v1542
        %v1562 = vcombine.high %v1510, %v1542
        %v1563 = vcombine.low %v1519, %v1551
        %v1564 = vcombine.high %v1519, %v1551
        %v1565 = vcombine.low %v1526, %v1558
        %v1566 = vcombine.high %v1526, %v1558
        %v1567 = vcombine.low %v740, %v806
        %v1568 = vcombine.high %v740, %v806
        %v1570 = vunpack.c.l.s4 1983009808
        %v1571 = vunpack.c.0.s8 %v1570
        %v1572 = vlaneseq
        %v1573 = vshrl.u32 %v1572, 7
        %v1574 = vsub.s32 %v1571, %v1573
        %v1575 = vrot.slane %v1567, %v1574
        %v1577 = vunpack.c.l.s4 1983009808
        %v1578 = vunpack.c.0.s8 %v1577
        %v1579 = vlaneseq
        %v1580 = vshrl.u32 %v1579, 7
        %v1581 = vsub.s32 %v1578, %v1580
        %v1582 = vrot.slane %v1568, %v1581
        %v1583 = vcombine.low %v773, %v839
        %v1584 = vcombine.high %v773, %v839
        %v1586 = vunpack.c.l.s4 1983009808
        %v1587 = vunpack.c.0.s8 %v1586
        %v1588 = vlaneseq
        %v1589 = vshrl.u32 %v1588, 7
        %v1590 = vsub.s32 %v1587, %v1589
        %v1591 = vrot.slane %v1583, %v1590
        %v1593 = vunpack.c.l.s4 1983009808
        %v1594 = vunpack.c.0.s8 %v1593
        %v1595 = vlaneseq
        %v1596 = vshrl.u32 %v1595, 7
        %v1597 = vsub.s32 %v1594, %v1596
        %v1598 = vrot.slane %v1584, %v1597
        %v1599 = vcombine.low %v872, %v991
        %v1600 = vcombine.high %v872, %v991
        %v1602 = vunpack.c.l.s4 1983009808
        %v1603 = vunpack.c.0.s8 %v1602
        %v1604 = vlaneseq
        %v1605 = vshrl.u32 %v1604, 7
        %v1606 = vsub.s32 %v1603, %v1605
        %v1607 = vrot.slane %v1599, %v1606
        %v1609 = vunpack.c.l.s4 1983009808
        %v1610 = vunpack.c.0.s8 %v1609
        %v1611 = vlaneseq
        %v1612 = vshrl.u32 %v1611, 7
        %v1613 = vsub.s32 %v1610, %v1612
        %v1614 = vrot.slane %v1600, %v1613
        %v1615 = vcombine.low %v905, %v1015
        %v1616 = vcombine.high %v905, %v1015
        %v1618 = vunpack.c.l.s4 1983009808
        %v1619 = vunpack.c.0.s8 %v1618
        %v1620 = vlaneseq
        %v1621 = vshrl.u32 %v1620, 7
        %v1622 = vsub.s32 %v1619, %v1621
        %v1623 = vrot.slane %v1615, %v1622
        %v1625 = vunpack.c.l.s4 1983009808
        %v1626 = vunpack.c.0.s8 %v1625
        %v1627 = vlaneseq
        %v1628 = vshrl.u32 %v1627, 7
        %v1629 = vsub.s32 %v1626, %v1628
        %v1630 = vrot.slane %v1616, %v1629
        %v1631 = vcombine.low %v1575, %v1591
        %v1632 = vcombine.high %v1575, %v1591
        %v1634 = vunpack.c.l.s4 1934713408
        %v1635 = vunpack.c.0.s8 %v1634
        %v1636 = vlaneseq
        %v1637 = vshrl.u32 %v1636, 7
        %v1638 = vsub.s32 %v1635, %v1637
        %v1639 = vrot.slane %v1631, %v1638
        %v1641 = vunpack.c.l.s4 1934713408
        %v1642 = vunpack.c.0.s8 %v1641
        %v1643 = vlaneseq
        %v1644 = vshrl.u32 %v1643, 7
        %v1645 = vsub.s32 %v1642, %v1644
        %v1646 = vrot.slane %v1632, %v1645
        %v1647 = vcombine.low %v1582, %v1598
        %v1648 = vcombine.high %v1582, %v1598
        %v1650 = vunpack.c.l.s4 1934713408
        %v1651 = vunpack.c.0.s8 %v1650
        %v1652 = vlaneseq
        %v1653 = vshrl.u32 %v1652, 7
        %v1654 = vsub.s32 %v1651, %v1653
        %v1655 = vrot.slane %v1647, %v1654
        %v1657 = vunpack.c.l.s4 1934713408
        %v1658 = vunpack.c.0.s8 %v1657
        %v1659 = vlaneseq
        %v1660 = vshrl.u32 %v1659, 7
        %v1661 = vsub.s32 %v1658, %v1660
        %v1662 = vrot.slane %v1648, %v1661
        %v1663 = vcombine.low %v1607, %v1623
        %v1664 = vcombine.high %v1607, %v1623
        %v1666 = vunpack.c.l.s4 1934713408
        %v1667 = vunpack.c.0.s8 %v1666
        %v1668 = vlaneseq
        %v1669 = vshrl.u32 %v1668, 7
        %v1670 = vsub.s32 %v1667, %v1669
        %v1671 = vrot.slane %v1663, %v1670
        %v1673 = vunpack.c.l.s4 1934713408
        %v1674 = vunpack.c.0.s8 %v1673
        %v1675 = vlaneseq
        %v1676 = vshrl.u32 %v1675, 7
        %v1677 = vsub.s32 %v1674, %v1676
        %v1678 = vrot.slane %v1664, %v1677
        %v1679 = vcombine.low %v1614, %v1630
        %v1680 = vcombine.high %v1614, %v1630
        %v1682 = vunpack.c.l.s4 1934713408
        %v1683 = vunpack.c.0.s8 %v1682
        %v1684 = vlaneseq
        %v1685 = vshrl.u32 %v1684, 7
        %v1686 = vsub.s32 %v1683, %v1685
        %v1687 = vrot.slane %v1679, %v1686
        %v1689 = vunpack.c.l.s4 1934713408
        %v1690 = vunpack.c.0.s8 %v1689
        %v1691 = vlaneseq
        %v1692 = vshrl.u32 %v1691, 7
        %v1693 = vsub.s32 %v1690, %v1692
        %v1694 = vrot.slane %v1680, %v1693
        %v1695 = vcombine.low %v1639, %v1671
        %v1696 = vcombine.high %v1639, %v1671
        %v1697 = vcombine.low %v1646, %v1678
        %v1698 = vcombine.high %v1646, %v1678
        %v1699 = vcombine.low %v1655, %v1687
        %v1700 = vcombine.high %v1655, %v1687
        %v1701 = vcombine.low %v1662, %v1694
        %v1702 = vcombine.high %v1662, %v1694
        %v1703 = vcombine.high %v1048, 0.0
        %v1705 = vunpack.c.l.s4 1983009808
        %v1706 = vunpack.c.0.s8 %v1705
        %v1707 = vlaneseq
        %v1708 = vshrl.u32 %v1707, 7
        %v1709 = vsub.s32 %v1706, %v1708
        %v1710 = vrot.slane %v1048, %v1709
        %v1712 = vunpack.c.l.s4 1983009808
        %v1713 = vunpack.c.0.s8 %v1712
        %v1714 = vlaneseq
        %v1715 = vshrl.u32 %v1714, 7
        %v1716 = vsub.s32 %v1713, %v1715
        %v1717 = vrot.slane %v1703, %v1716
        %v1718 = vcombine.high %v1072, 0.0
        %v1720 = vunpack.c.l.s4 1983009808
        %v1721 = vunpack.c.0.s8 %v1720
        %v1722 = vlaneseq
        %v1723 = vshrl.u32 %v1722, 7
        %v1724 = vsub.s32 %v1721, %v1723
        %v1725 = vrot.slane %v1072, %v1724
        %v1727 = vunpack.c.l.s4 1983009808
        %v1728 = vunpack.c.0.s8 %v1727
        %v1729 = vlaneseq
        %v1730 = vshrl.u32 %v1729, 7
        %v1731 = vsub.s32 %v1728, %v1730
        %v1732 = vrot.slane %v1718, %v1731
        %v1733 = vcombine.low %v1710, %v1725
        %v1734 = vcombine.high %v1710, %v1725
        %v1736 = vunpack.c.l.s4 1934713408
        %v1737 = vunpack.c.0.s8 %v1736
        %v1738 = vlaneseq
        %v1739 = vshrl.u32 %v1738, 7
        %v1740 = vsub.s32 %v1737, %v1739
        %v1741 = vrot.slane %v1733, %v1740
        %v1743 = vunpack.c.l.s4 1934713408
        %v1744 = vunpack.c.0.s8 %v1743
        %v1745 = vlaneseq
        %v1746 = vshrl.u32 %v1745, 7
        %v1747 = vsub.s32 %v1744, %v1746
        %v1748 = vrot.slane %v1734, %v1747
        %v1749 = vcombine.low %v1717, %v1732
        %v1750 = vcombine.high %v1717, %v1732
        %v1752 = vunpack.c.l.s4 1934713408
        %v1753 = vunpack.c.0.s8 %v1752
        %v1754 = vlaneseq
        %v1755 = vshrl.u32 %v1754, 7
        %v1756 = vsub.s32 %v1753, %v1755
        %v1757 = vrot.slane %v1749, %v1756
        %v1759 = vunpack.c.l.s4 1934713408
        %v1760 = vunpack.c.0.s8 %v1759
        %v1761 = vlaneseq
        %v1762 = vshrl.u32 %v1761, 7
        %v1763 = vsub.s32 %v1760, %v1762
        %v1764 = vrot.slane %v1750, %v1763
        %v1765 = vcombine.high %v1741, 0.0
        %v1766 = vcombine.high %v1748, 0.0
        %v1767 = vcombine.high %v1757, 0.0
        %v1768 = vcombine.high %v1764, 0.0
        %v1769 = vcombine.low %v278, %v499
        %v1770 = vcombine.high %v278, %v499
        %v1772 = vunpack.c.l.s4 1983009808
        %v1773 = vunpack.c.0.s8 %v1772
        %v1774 = vlaneseq
        %v1775 = vshrl.u32 %v1774, 7
        %v1776 = vsub.s32 %v1773, %v1775
        %v1777 = vrot.slane %v1769, %v1776
        %v1779 = vunpack.c.l.s4 1983009808
        %v1780 = vunpack.c.0.s8 %v1779
        %v1781 = vlaneseq
        %v1782 = vshrl.u32 %v1781, 7
        %v1783 = vsub.s32 %v1780, %v1782
        %v1784 = vrot.slane %v1770, %v1783
        %v1785 = vcombine.low %v466, %v532
        %v1786 = vcombine.high %v466, %v532
        %v1788 = vunpack.c.l.s4 1983009808
        %v1789 = vunpack.c.0.s8 %v1788
        %v1790 = vlaneseq
        %v1791 = vshrl.u32 %v1790, 7
        %v1792 = vsub.s32 %v1789, %v1791
        %v1793 = vrot.slane %v1785, %v1792
        %v1795 = vunpack.c.l.s4 1983009808
        %v1796 = vunpack.c.0.s8 %v1795
        %v1797 = vlaneseq
        %v1798 = vshrl.u32 %v1797, 7
        %v1799 = vsub.s32 %v1796, %v1798
        %v1800 = vrot.slane %v1786, %v1799
        %v1801 = vcombine.low %v565, %v631
        %v1802 = vcombine.high %v565, %v631
        %v1804 = vunpack.c.l.s4 1983009808
        %v1805 = vunpack.c.0.s8 %v1804
        %v1806 = vlaneseq
        %v1807 = vshrl.u32 %v1806, 7
        %v1808 = vsub.s32 %v1805, %v1807
        %v1809 = vrot.slane %v1801, %v1808
        %v1811 = vunpack.c.l.s4 1983009808
        %v1812 = vunpack.c.0.s8 %v1811
        %v1813 = vlaneseq
        %v1814 = vshrl.u32 %v1813, 7
        %v1815 = vsub.s32 %v1812, %v1814
        %v1816 = vrot.slane %v1802, %v1815
        %v1817 = vcombine.low %v598, %v717
        %v1818 = vcombine.high %v598, %v717
        %v1820 = vunpack.c.l.s4 1983009808
        %v1821 = vunpack.c.0.s8 %v1820
        %v1822 = vlaneseq
        %v1823 = vshrl.u32 %v1822, 7
        %v1824 = vsub.s32 %v1821, %v1823
        %v1825 = vrot.slane %v1817, %v1824
        %v1827 = vunpack.c.l.s4 1983009808
        %v1828 = vunpack.c.0.s8 %v1827
        %v1829 = vlaneseq
        %v1830 = vshrl.u32 %v1829, 7
        %v1831 = vsub.s32 %v1828, %v1830
        %v1832 = vrot.slane %v1818, %v1831
        %v1833 = vcombine.low %v1777, %v1793
        %v1834 = vcombine.high %v1777, %v1793
        %v1836 = vunpack.c.l.s4 1934713408
        %v1837 = vunpack.c.0.s8 %v1836
        %v1838 = vlaneseq
        %v1839 = vshrl.u32 %v1838, 7
        %v1840 = vsub.s32 %v1837, %v1839
        %v1841 = vrot.slane %v1833, %v1840
        %v1843 = vunpack.c.l.s4 1934713408
        %v1844 = vunpack.c.0.s8 %v1843
        %v1845 = vlaneseq
        %v1846 = vshrl.u32 %v1845, 7
        %v1847 = vsub.s32 %v1844, %v1846
        %v1848 = vrot.slane %v1834, %v1847
        %v1849 = vcombine.low %v1784, %v1800
        %v1850 = vcombine.high %v1784, %v1800
        %v1852 = vunpack.c.l.s4 1934713408
        %v1853 = vunpack.c.0.s8 %v1852
        %v1854 = vlaneseq
        %v1855 = vshrl.u32 %v1854, 7
        %v1856 = vsub.s32 %v1853, %v1855
        %v1857 = vrot.slane %v1849, %v1856
        %v1859 = vunpack.c.l.s4 1934713408
        %v1860 = vunpack.c.0.s8 %v1859
        %v1861 = vlaneseq
        %v1862 = vshrl.u32 %v1861, 7
        %v1863 = vsub.s32 %v1860, %v1862
        %v1864 = vrot.slane %v1850, %v1863
        %v1865 = vcombine.low %v1809, %v1825
        %v1866 = vcombine.high %v1809, %v1825
        %v1868 = vunpack.c.l.s4 1934713408
        %v1869 = vunpack.c.0.s8 %v1868
        %v1870 = vlaneseq
        %v1871 = vshrl.u32 %v1870, 7
        %v1872 = vsub.s32 %v1869, %v1871
        %v1873 = vrot.slane %v1865, %v1872
        %v1875 = vunpack.c.l.s4 1934713408
        %v1876 = vunpack.c.0.s8 %v1875
        %v1877 = vlaneseq
        %v1878 = vshrl.u32 %v1877, 7
        %v1879 = vsub.s32 %v1876, %v1878
        %v1880 = vrot.slane %v1866, %v1879
        %v1881 = vcombine.low %v1816, %v1832
        %v1882 = vcombine.high %v1816, %v1832
        %v1884 = vunpack.c.l.s4 1934713408
        %v1885 = vunpack.c.0.s8 %v1884
        %v1886 = vlaneseq
        %v1887 = vshrl.u32 %v1886, 7
        %v1888 = vsub.s32 %v1885, %v1887
        %v1889 = vrot.slane %v1881, %v1888
        %v1891 = vunpack.c.l.s4 1934713408
        %v1892 = vunpack.c.0.s8 %v1891
        %v1893 = vlaneseq
        %v1894 = vshrl.u32 %v1893, 7
        %v1895 = vsub.s32 %v1892, %v1894
        %v1896 = vrot.slane %v1882, %v1895
        %v1897 = vcombine.low %v1841, %v1873
        %v1898 = vcombine.high %v1841, %v1873
        %v1899 = vcombine.low %v1848, %v1880
        %v1900 = vcombine.high %v1848, %v1880
        %v1901 = vcombine.low %v1857, %v1889
        %v1902 = vcombine.high %v1857, %v1889
        %v1903 = vcombine.low %v1864, %v1896
        %v1904 = vcombine.high %v1864, %v1896
        %v1905 = vcombine.low %v742, %v808
        %v1906 = vcombine.high %v742, %v808
        %v1908 = vunpack.c.l.s4 1983009808
        %v1909 = vunpack.c.0.s8 %v1908
        %v1910 = vlaneseq
        %v1911 = vshrl.u32 %v1910, 7
        %v1912 = vsub.s32 %v1909, %v1911
        %v1913 = vrot.slane %v1905, %v1912
        %v1915 = vunpack.c.l.s4 1983009808
        %v1916 = vunpack.c.0.s8 %v1915
        %v1917 = vlaneseq
        %v1918 = vshrl.u32 %v1917, 7
        %v1919 = vsub.s32 %v1916, %v1918
        %v1920 = vrot.slane %v1906, %v1919
        %v1921 = vcombine.low %v775, %v841
        %v1922 = vcombine.high %v775, %v841
        %v1924 = vunpack.c.l.s4 1983009808
        %v1925 = vunpack.c.0.s8 %v1924
        %v1926 = vlaneseq
        %v1927 = vshrl.u32 %v1926, 7
        %v1928 = vsub.s32 %v1925, %v1927
        %v1929 = vrot.slane %v1921, %v1928
        %v1931 = vunpack.c.l.s4 1983009808
        %v1932 = vunpack.c.0.s8 %v1931
        %v1933 = vlaneseq
        %v1934 = vshrl.u32 %v1933, 7
        %v1935 = vsub.s32 %v1932, %v1934
        %v1936 = vrot.slane %v1922, %v1935
        %v1937 = vcombine.low %v874, %v992
        %v1938 = vcombine.high %v874, %v992
        %v1940 = vunpack.c.l.s4 1983009808
        %v1941 = vunpack.c.0.s8 %v1940
        %v1942 = vlaneseq
        %v1943 = vshrl.u32 %v1942, 7
        %v1944 = vsub.s32 %v1941, %v1943
        %v1945 = vrot.slane %v1937, %v1944
        %v1947 = vunpack.c.l.s4 1983009808
        %v1948 = vunpack.c.0.s8 %v1947
        %v1949 = vlaneseq
        %v1950 = vshrl.u32 %v1949, 7
        %v1951 = vsub.s32 %v1948, %v1950
        %v1952 = vrot.slane %v1938, %v1951
        %v1953 = vcombine.low %v907, %v1017
        %v1954 = vcombine.high %v907, %v1017
        %v1956 = vunpack.c.l.s4 1983009808
        %v1957 = vunpack.c.0.s8 %v1956
        %v1958 = vlaneseq
        %v1959 = vshrl.u32 %v1958, 7
        %v1960 = vsub.s32 %v1957, %v1959
        %v1961 = vrot.slane %v1953, %v1960
        %v1963 = vunpack.c.l.s4 1983009808
        %v1964 = vunpack.c.0.s8 %v1963
        %v1965 = vlaneseq
        %v1966 = vshrl.u32 %v1965, 7
        %v1967 = vsub.s32 %v1964, %v1966
        %v1968 = vrot.slane %v1954, %v1967
        %v1969 = vcombine.low %v1913, %v1929
        %v1970 = vcombine.high %v1913, %v1929
        %v1972 = vunpack.c.l.s4 1934713408
        %v1973 = vunpack.c.0.s8 %v1972
        %v1974 = vlaneseq
        %v1975 = vshrl.u32 %v1974, 7
        %v1976 = vsub.s32 %v1973, %v1975
        %v1977 = vrot.slane %v1969, %v1976
        %v1979 = vunpack.c.l.s4 1934713408
        %v1980 = vunpack.c.0.s8 %v1979
        %v1981 = vlaneseq
        %v1982 = vshrl.u32 %v1981, 7
        %v1983 = vsub.s32 %v1980, %v1982
        %v1984 = vrot.slane %v1970, %v1983
        %v1985 = vcombine.low %v1920, %v1936
        %v1986 = vcombine.high %v1920, %v1936
        %v1988 = vunpack.c.l.s4 1934713408
        %v1989 = vunpack.c.0.s8 %v1988
        %v1990 = vlaneseq
        %v1991 = vshrl.u32 %v1990, 7
        %v1992 = vsub.s32 %v1989, %v1991
        %v1993 = vrot.slane %v1985, %v1992
        %v1995 = vunpack.c.l.s4 1934713408
        %v1996 = vunpack.c.0.s8 %v1995
        %v1997 = vlaneseq
        %v1998 = vshrl.u32 %v1997, 7
        %v1999 = vsub.s32 %v1996, %v1998
        %v2000 = vrot.slane %v1986, %v1999
        %v2001 = vcombine.low %v1945, %v1961
        %v2002 = vcombine.high %v1945, %v1961
        %v2004 = vunpack.c.l.s4 1934713408
        %v2005 = vunpack.c.0.s8 %v2004
        %v2006 = vlaneseq
        %v2007 = vshrl.u32 %v2006, 7
        %v2008 = vsub.s32 %v2005, %v2007
        %v2009 = vrot.slane %v2001, %v2008
        %v2011 = vunpack.c.l.s4 1934713408
        %v2012 = vunpack.c.0.s8 %v2011
        %v2013 = vlaneseq
        %v2014 = vshrl.u32 %v2013, 7
        %v2015 = vsub.s32 %v2012, %v2014
        %v2016 = vrot.slane %v2002, %v2015
        %v2017 = vcombine.low %v1952, %v1968
        %v2018 = vcombine.high %v1952, %v1968
        %v2020 = vunpack.c.l.s4 1934713408
        %v2021 = vunpack.c.0.s8 %v2020
        %v2022 = vlaneseq
        %v2023 = vshrl.u32 %v2022, 7
        %v2024 = vsub.s32 %v2021, %v2023
        %v2025 = vrot.slane %v2017, %v2024
        %v2027 = vunpack.c.l.s4 1934713408
        %v2028 = vunpack.c.0.s8 %v2027
        %v2029 = vlaneseq
        %v2030 = vshrl.u32 %v2029, 7
        %v2031 = vsub.s32 %v2028, %v2030
        %v2032 = vrot.slane %v2018, %v2031
        %v2033 = vcombine.low %v1977, %v2009
        %v2034 = vcombine.high %v1977, %v2009
        %v2035 = vcombine.low %v1984, %v2016
        %v2036 = vcombine.high %v1984, %v2016
        %v2037 = vcombine.low %v1993, %v2025
        %v2038 = vcombine.high %v1993, %v2025
        %v2039 = vcombine.low %v2000, %v2032
        %v2040 = vcombine.high %v2000, %v2032
        %v2041 = vcombine.low %v284, %v501
        %v2042 = vcombine.high %v284, %v501
        %v2044 = vunpack.c.l.s4 1983009808
        %v2045 = vunpack.c.0.s8 %v2044
        %v2046 = vlaneseq
        %v2047 = vshrl.u32 %v2046, 7
        %v2048 = vsub.s32 %v2045, %v2047
        %v2049 = vrot.slane %v2041, %v2048
        %v2051 = vunpack.c.l.s4 1983009808
        %v2052 = vunpack.c.0.s8 %v2051
        %v2053 = vlaneseq
        %v2054 = vshrl.u32 %v2053, 7
        %v2055 = vsub.s32 %v2052, %v2054
        %v2056 = vrot.slane %v2042, %v2055
        %v2057 = vcombine.low %v468, %v534
        %v2058 = vcombine.high %v468, %v534
        %v2060 = vunpack.c.l.s4 1983009808
        %v2061 = vunpack.c.0.s8 %v2060
        %v2062 = vlaneseq
        %v2063 = vshrl.u32 %v2062, 7
        %v2064 = vsub.s32 %v2061, %v2063
        %v2065 = vrot.slane %v2057, %v2064
        %v2067 = vunpack.c.l.s4 1983009808
        %v2068 = vunpack.c.0.s8 %v2067
        %v2069 = vlaneseq
        %v2070 = vshrl.u32 %v2069, 7
        %v2071 = vsub.s32 %v2068, %v2070
        %v2072 = vrot.slane %v2058, %v2071
        %v2073 = vcombine.low %v567, %v633
        %v2074 = vcombine.high %v567, %v633
        %v2076 = vunpack.c.l.s4 1983009808
        %v2077 = vunpack.c.0.s8 %v2076
        %v2078 = vlaneseq
        %v2079 = vshrl.u32 %v2078, 7
        %v2080 = vsub.s32 %v2077, %v2079
        %v2081 = vrot.slane %v2073, %v2080
        %v2083 = vunpack.c.l.s4 1983009808
        %v2084 = vunpack.c.0.s8 %v2083
        %v2085 = vlaneseq
        %v2086 = vshrl.u32 %v2085, 7
        %v2087 = vsub.s32 %v2084, %v2086
        %v2088 = vrot.slane %v2074, %v2087
        %v2089 = vcombine.low %v600, %v718
        %v2090 = vcombine.high %v600, %v718
        %v2092 = vunpack.c.l.s4 1983009808
        %v2093 = vunpack.c.0.s8 %v2092
        %v2094 = vlaneseq
        %v2095 = vshrl.u32 %v2094, 7
        %v2096 = vsub.s32 %v2093, %v2095
        %v2097 = vrot.slane %v2089, %v2096
        %v2099 = vunpack.c.l.s4 1983009808
        %v2100 = vunpack.c.0.s8 %v2099
        %v2101 = vlaneseq
        %v2102 = vshrl.u32 %v2101, 7
        %v2103 = vsub.s32 %v2100, %v2102
        %v2104 = vrot.slane %v2090, %v2103
        %v2105 = vcombine.low %v2049, %v2065
        %v2106 = vcombine.high %v2049, %v2065
        %v2108 = vunpack.c.l.s4 1934713408
        %v2109 = vunpack.c.0.s8 %v2108
        %v2110 = vlaneseq
        %v2111 = vshrl.u32 %v2110, 7
        %v2112 = vsub.s32 %v2109, %v2111
        %v2113 = vrot.slane %v2105, %v2112
        %v2115 = vunpack.c.l.s4 1934713408
        %v2116 = vunpack.c.0.s8 %v2115
        %v2117 = vlaneseq
        %v2118 = vshrl.u32 %v2117, 7
        %v2119 = vsub.s32 %v2116, %v2118
        %v2120 = vrot.slane %v2106, %v2119
        %v2121 = vcombine.low %v2056, %v2072
        %v2122 = vcombine.high %v2056, %v2072
        %v2124 = vunpack.c.l.s4 1934713408
        %v2125 = vunpack.c.0.s8 %v2124
        %v2126 = vlaneseq
        %v2127 = vshrl.u32 %v2126, 7
        %v2128 = vsub.s32 %v2125, %v2127
        %v2129 = vrot.slane %v2121, %v2128
        %v2131 = vunpack.c.l.s4 1934713408
        %v2132 = vunpack.c.0.s8 %v2131
        %v2133 = vlaneseq
        %v2134 = vshrl.u32 %v2133, 7
        %v2135 = vsub.s32 %v2132, %v2134
        %v2136 = vrot.slane %v2122, %v2135
        %v2137 = vcombine.low %v2081, %v2097
        %v2138 = vcombine.high %v2081, %v2097
        %v2140 = vunpack.c.l.s4 1934713408
        %v2141 = vunpack.c.0.s8 %v2140
        %v2142 = vlaneseq
        %v2143 = vshrl.u32 %v2142, 7
        %v2144 = vsub.s32 %v2141, %v2143
        %v2145 = vrot.slane %v2137, %v2144
        %v2147 = vunpack.c.l.s4 1934713408
        %v2148 = vunpack.c.0.s8 %v2147
        %v2149 = vlaneseq
        %v2150 = vshrl.u32 %v2149, 7
        %v2151 = vsub.s32 %v2148, %v2150
        %v2152 = vrot.slane %v2138, %v2151
        %v2153 = vcombine.low %v2088, %v2104
        %v2154 = vcombine.high %v2088, %v2104
        %v2156 = vunpack.c.l.s4 1934713408
        %v2157 = vunpack.c.0.s8 %v2156
        %v2158 = vlaneseq
        %v2159 = vshrl.u32 %v2158, 7
        %v2160 = vsub.s32 %v2157, %v2159
        %v2161 = vrot.slane %v2153, %v2160
        %v2163 = vunpack.c.l.s4 1934713408
        %v2164 = vunpack.c.0.s8 %v2163
        %v2165 = vlaneseq
        %v2166 = vshrl.u32 %v2165, 7
        %v2167 = vsub.s32 %v2164, %v2166
        %v2168 = vrot.slane %v2154, %v2167
        %v2169 = vcombine.low %v2113, %v2145
        %v2170 = vcombine.high %v2113, %v2145
        %v2171 = vcombine.low %v2120, %v2152
        %v2172 = vcombine.high %v2120, %v2152
        %v2173 = vcombine.low %v2129, %v2161
        %v2174 = vcombine.high %v2129, %v2161
        %v2175 = vcombine.low %v2136, %v2168
        %v2176 = vcombine.high %v2136, %v2168
        %v2177 = vcombine.low %v744, %v810
        %v2178 = vcombine.high %v744, %v810
        %v2180 = vunpack.c.l.s4 1983009808
        %v2181 = vunpack.c.0.s8 %v2180
        %v2182 = vlaneseq
        %v2183 = vshrl.u32 %v2182, 7
        %v2184 = vsub.s32 %v2181, %v2183
        %v2185 = vrot.slane %v2177, %v2184
        %v2187 = vunpack.c.l.s4 1983009808
        %v2188 = vunpack.c.0.s8 %v2187
        %v2189 = vlaneseq
        %v2190 = vshrl.u32 %v2189, 7
        %v2191 = vsub.s32 %v2188, %v2190
        %v2192 = vrot.slane %v2178, %v2191
        %v2193 = vcombine.low %v777, %v843
        %v2194 = vcombine.high %v777, %v843
        %v2196 = vunpack.c.l.s4 1983009808
        %v2197 = vunpack.c.0.s8 %v2196
        %v2198 = vlaneseq
        %v2199 = vshrl.u32 %v2198, 7
        %v2200 = vsub.s32 %v2197, %v2199
        %v2201 = vrot.slane %v2193, %v2200
        %v2203 = vunpack.c.l.s4 1983009808
        %v2204 = vunpack.c.0.s8 %v2203
        %v2205 = vlaneseq
        %v2206 = vshrl.u32 %v2205, 7
        %v2207 = vsub.s32 %v2204, %v2206
        %v2208 = vrot.slane %v2194, %v2207
        %v2209 = vcombine.low %v876, %v993
        %v2210 = vcombine.high %v876, %v993
        %v2212 = vunpack.c.l.s4 1983009808
        %v2213 = vunpack.c.0.s8 %v2212
        %v2214 = vlaneseq
        %v2215 = vshrl.u32 %v2214, 7
        %v2216 = vsub.s32 %v2213, %v2215
        %v2217 = vrot.slane %v2209, %v2216
        %v2219 = vunpack.c.l.s4 1983009808
        %v2220 = vunpack.c.0.s8 %v2219
        %v2221 = vlaneseq
        %v2222 = vshrl.u32 %v2221, 7
        %v2223 = vsub.s32 %v2220, %v2222
        %v2224 = vrot.slane %v2210, %v2223
        %v2225 = vcombine.low %v909, %v1019
        %v2226 = vcombine.high %v909, %v1019
        %v2228 = vunpack.c.l.s4 1983009808
        %v2229 = vunpack.c.0.s8 %v2228
        %v2230 = vlaneseq
        %v2231 = vshrl.u32 %v2230, 7
        %v2232 = vsub.s32 %v2229, %v2231
        %v2233 = vrot.slane %v2225, %v2232
        %v2235 = vunpack.c.l.s4 1983009808
        %v2236 = vunpack.c.0.s8 %v2235
        %v2237 = vlaneseq
        %v2238 = vshrl.u32 %v2237, 7
        %v2239 = vsub.s32 %v2236, %v2238
        %v2240 = vrot.slane %v2226, %v2239
        %v2241 = vcombine.low %v2185, %v2201
        %v2242 = vcombine.high %v2185, %v2201
        %v2244 = vunpack.c.l.s4 1934713408
        %v2245 = vunpack.c.0.s8 %v2244
        %v2246 = vlaneseq
        %v2247 = vshrl.u32 %v2246, 7
        %v2248 = vsub.s32 %v2245, %v2247
        %v2249 = vrot.slane %v2241, %v2248
        %v2251 = vunpack.c.l.s4 1934713408
        %v2252 = vunpack.c.0.s8 %v2251
        %v2253 = vlaneseq
        %v2254 = vshrl.u32 %v2253, 7
        %v2255 = vsub.s32 %v2252, %v2254
        %v2256 = vrot.slane %v2242, %v2255
        %v2257 = vcombine.low %v2192, %v2208
        %v2258 = vcombine.high %v2192, %v2208
        %v2260 = vunpack.c.l.s4 1934713408
        %v2261 = vunpack.c.0.s8 %v2260
        %v2262 = vlaneseq
        %v2263 = vshrl.u32 %v2262, 7
        %v2264 = vsub.s32 %v2261, %v2263
        %v2265 = vrot.slane %v2257, %v2264
        %v2267 = vunpack.c.l.s4 1934713408
        %v2268 = vunpack.c.0.s8 %v2267
        %v2269 = vlaneseq
        %v2270 = vshrl.u32 %v2269, 7
        %v2271 = vsub.s32 %v2268, %v2270
        %v2272 = vrot.slane %v2258, %v2271
        %v2273 = vcombine.low %v2217, %v2233
        %v2274 = vcombine.high %v2217, %v2233
        %v2276 = vunpack.c.l.s4 1934713408
        %v2277 = vunpack.c.0.s8 %v2276
        %v2278 = vlaneseq
        %v2279 = vshrl.u32 %v2278, 7
        %v2280 = vsub.s32 %v2277, %v2279
        %v2281 = vrot.slane %v2273, %v2280
        %v2283 = vunpack.c.l.s4 1934713408
        %v2284 = vunpack.c.0.s8 %v2283
        %v2285 = vlaneseq
        %v2286 = vshrl.u32 %v2285, 7
        %v2287 = vsub.s32 %v2284, %v2286
        %v2288 = vrot.slane %v2274, %v2287
        %v2289 = vcombine.low %v2224, %v2240
        %v2290 = vcombine.high %v2224, %v2240
        %v2292 = vunpack.c.l.s4 1934713408
        %v2293 = vunpack.c.0.s8 %v2292
        %v2294 = vlaneseq
        %v2295 = vshrl.u32 %v2294, 7
        %v2296 = vsub.s32 %v2293, %v2295
        %v2297 = vrot.slane %v2289, %v2296
        %v2299 = vunpack.c.l.s4 1934713408
        %v2300 = vunpack.c.0.s8 %v2299
        %v2301 = vlaneseq
        %v2302 = vshrl.u32 %v2301, 7
        %v2303 = vsub.s32 %v2300, %v2302
        %v2304 = vrot.slane %v2290, %v2303
        %v2305 = vcombine.low %v2249, %v2281
        %v2306 = vcombine.high %v2249, %v2281
        %v2307 = vcombine.low %v2256, %v2288
        %v2308 = vcombine.high %v2256, %v2288
        %v2309 = vcombine.low %v2265, %v2297
        %v2310 = vcombine.high %v2265, %v2297
        %v2311 = vcombine.low %v2272, %v2304
        %v2312 = vcombine.high %v2272, %v2304
        %v2313 = vcombine.low %v290, %v503
        %v2314 = vcombine.high %v290, %v503
        %v2316 = vunpack.c.l.s4 1983009808
        %v2317 = vunpack.c.0.s8 %v2316
        %v2318 = vlaneseq
        %v2319 = vshrl.u32 %v2318, 7
        %v2320 = vsub.s32 %v2317, %v2319
        %v2321 = vrot.slane %v2313, %v2320
        %v2323 = vunpack.c.l.s4 1983009808
        %v2324 = vunpack.c.0.s8 %v2323
        %v2325 = vlaneseq
        %v2326 = vshrl.u32 %v2325, 7
        %v2327 = vsub.s32 %v2324, %v2326
        %v2328 = vrot.slane %v2314, %v2327
        %v2329 = vcombine.low %v470, %v536
        %v2330 = vcombine.high %v470, %v536
        %v2332 = vunpack.c.l.s4 1983009808
        %v2333 = vunpack.c.0.s8 %v2332
        %v2334 = vlaneseq
        %v2335 = vshrl.u32 %v2334, 7
        %v2336 = vsub.s32 %v2333, %v2335
        %v2337 = vrot.slane %v2329, %v2336
        %v2339 = vunpack.c.l.s4 1983009808
        %v2340 = vunpack.c.0.s8 %v2339
        %v2341 = vlaneseq
        %v2342 = vshrl.u32 %v2341, 7
        %v2343 = vsub.s32 %v2340, %v2342
        %v2344 = vrot.slane %v2330, %v2343
        %v2345 = vcombine.low %v569, %v635
        %v2346 = vcombine.high %v569, %v635
        %v2348 = vunpack.c.l.s4 1983009808
        %v2349 = vunpack.c.0.s8 %v2348
        %v2350 = vlaneseq
        %v2351 = vshrl.u32 %v2350, 7
        %v2352 = vsub.s32 %v2349, %v2351
        %v2353 = vrot.slane %v2345, %v2352
        %v2355 = vunpack.c.l.s4 1983009808
        %v2356 = vunpack.c.0.s8 %v2355
        %v2357 = vlaneseq
        %v2358 = vshrl.u32 %v2357, 7
        %v2359 = vsub.s32 %v2356, %v2358
        %v2360 = vrot.slane %v2346, %v2359
        %v2361 = vcombine.low %v602, %v719
        %v2362 = vcombine.high %v602, %v719
        %v2364 = vunpack.c.l.s4 1983009808
        %v2365 = vunpack.c.0.s8 %v2364
        %v2366 = vlaneseq
        %v2367 = vshrl.u32 %v2366, 7
        %v2368 = vsub.s32 %v2365, %v2367
        %v2369 = vrot.slane %v2361, %v2368
        %v2371 = vunpack.c.l.s4 1983009808
        %v2372 = vunpack.c.0.s8 %v2371
        %v2373 = vlaneseq
        %v2374 = vshrl.u32 %v2373, 7
        %v2375 = vsub.s32 %v2372, %v2374
        %v2376 = vrot.slane %v2362, %v2375
        %v2377 = vcombine.low %v2321, %v2337
        %v2378 = vcombine.high %v2321, %v2337
        %v2380 = vunpack.c.l.s4 1934713408
        %v2381 = vunpack.c.0.s8 %v2380
        %v2382 = vlaneseq
        %v2383 = vshrl.u32 %v2382, 7
        %v2384 = vsub.s32 %v2381, %v2383
        %v2385 = vrot.slane %v2377, %v2384
        %v2387 = vunpack.c.l.s4 1934713408
        %v2388 = vunpack.c.0.s8 %v2387
        %v2389 = vlaneseq
        %v2390 = vshrl.u32 %v2389, 7
        %v2391 = vsub.s32 %v2388, %v2390
        %v2392 = vrot.slane %v2378, %v2391
        %v2393 = vcombine.low %v2328, %v2344
        %v2394 = vcombine.high %v2328, %v2344
        %v2396 = vunpack.c.l.s4 1934713408
        %v2397 = vunpack.c.0.s8 %v2396
        %v2398 = vlaneseq
        %v2399 = vshrl.u32 %v2398, 7
        %v2400 = vsub.s32 %v2397, %v2399
        %v2401 = vrot.slane %v2393, %v2400
        %v2403 = vunpack.c.l.s4 1934713408
        %v2404 = vunpack.c.0.s8 %v2403
        %v2405 = vlaneseq
        %v2406 = vshrl.u32 %v2405, 7
        %v2407 = vsub.s32 %v2404, %v2406
        %v2408 = vrot.slane %v2394, %v2407
        %v2409 = vcombine.low %v2353, %v2369
        %v2410 = vcombine.high %v2353, %v2369
        %v2412 = vunpack.c.l.s4 1934713408
        %v2413 = vunpack.c.0.s8 %v2412
        %v2414 = vlaneseq
        %v2415 = vshrl.u32 %v2414, 7
        %v2416 = vsub.s32 %v2413, %v2415
        %v2417 = vrot.slane %v2409, %v2416
        %v2419 = vunpack.c.l.s4 1934713408
        %v2420 = vunpack.c.0.s8 %v2419
        %v2421 = vlaneseq
        %v2422 = vshrl.u32 %v2421, 7
        %v2423 = vsub.s32 %v2420, %v2422
        %v2424 = vrot.slane %v2410, %v2423
        %v2425 = vcombine.low %v2360, %v2376
        %v2426 = vcombine.high %v2360, %v2376
        %v2428 = vunpack.c.l.s4 1934713408
        %v2429 = vunpack.c.0.s8 %v2428
        %v2430 = vlaneseq
        %v2431 = vshrl.u32 %v2430, 7
        %v2432 = vsub.s32 %v2429, %v2431
        %v2433 = vrot.slane %v2425, %v2432
        %v2435 = vunpack.c.l.s4 1934713408
        %v2436 = vunpack.c.0.s8 %v2435
        %v2437 = vlaneseq
        %v2438 = vshrl.u32 %v2437, 7
        %v2439 = vsub.s32 %v2436, %v2438
        %v2440 = vrot.slane %v2426, %v2439
        %v2441 = vcombine.low %v2385, %v2417
        %v2442 = vcombine.high %v2385, %v2417
        %v2443 = vcombine.low %v2392, %v2424
        %v2444 = vcombine.high %v2392, %v2424
        %v2445 = vcombine.low %v2401, %v2433
        %v2446 = vcombine.high %v2401, %v2433
        %v2447 = vcombine.low %v2408, %v2440
        %v2448 = vcombine.high %v2408, %v2440
        %v2449 = vcombine.low %v746, %v812
        %v2450 = vcombine.high %v746, %v812
        %v2452 = vunpack.c.l.s4 1983009808
        %v2453 = vunpack.c.0.s8 %v2452
        %v2454 = vlaneseq
        %v2455 = vshrl.u32 %v2454, 7
        %v2456 = vsub.s32 %v2453, %v2455
        %v2457 = vrot.slane %v2449, %v2456
        %v2459 = vunpack.c.l.s4 1983009808
        %v2460 = vunpack.c.0.s8 %v2459
        %v2461 = vlaneseq
        %v2462 = vshrl.u32 %v2461, 7
        %v2463 = vsub.s32 %v2460, %v2462
        %v2464 = vrot.slane %v2450, %v2463
        %v2465 = vcombine.low %v779, %v845
        %v2466 = vcombine.high %v779, %v845
        %v2468 = vunpack.c.l.s4 1983009808
        %v2469 = vunpack.c.0.s8 %v2468
        %v2470 = vlaneseq
        %v2471 = vshrl.u32 %v2470, 7
        %v2472 = vsub.s32 %v2469, %v2471
        %v2473 = vrot.slane %v2465, %v2472
        %v2475 = vunpack.c.l.s4 1983009808
        %v2476 = vunpack.c.0.s8 %v2475
        %v2477 = vlaneseq
        %v2478 = vshrl.u32 %v2477, 7
        %v2479 = vsub.s32 %v2476, %v2478
        %v2480 = vrot.slane %v2466, %v2479
        %v2481 = vcombine.low %v878, %v994
        %v2482 = vcombine.high %v878, %v994
        %v2484 = vunpack.c.l.s4 1983009808
        %v2485 = vunpack.c.0.s8 %v2484
        %v2486 = vlaneseq
        %v2487 = vshrl.u32 %v2486, 7
        %v2488 = vsub.s32 %v2485, %v2487
        %v2489 = vrot.slane %v2481, %v2488
        %v2491 = vunpack.c.l.s4 1983009808
        %v2492 = vunpack.c.0.s8 %v2491
        %v2493 = vlaneseq
        %v2494 = vshrl.u32 %v2493, 7
        %v2495 = vsub.s32 %v2492, %v2494
        %v2496 = vrot.slane %v2482, %v2495
        %v2497 = vcombine.low %v911, %v1021
        %v2498 = vcombine.high %v911, %v1021
        %v2500 = vunpack.c.l.s4 1983009808
        %v2501 = vunpack.c.0.s8 %v2500
        %v2502 = vlaneseq
        %v2503 = vshrl.u32 %v2502, 7
        %v2504 = vsub.s32 %v2501, %v2503
        %v2505 = vrot.slane %v2497, %v2504
        %v2507 = vunpack.c.l.s4 1983009808
        %v2508 = vunpack.c.0.s8 %v2507
        %v2509 = vlaneseq
        %v2510 = vshrl.u32 %v2509, 7
        %v2511 = vsub.s32 %v2508, %v2510
        %v2512 = vrot.slane %v2498, %v2511
        %v2513 = vcombine.low %v2457, %v2473
        %v2514 = vcombine.high %v2457, %v2473
        %v2516 = vunpack.c.l.s4 1934713408
        %v2517 = vunpack.c.0.s8 %v2516
        %v2518 = vlaneseq
        %v2519 = vshrl.u32 %v2518, 7
        %v2520 = vsub.s32 %v2517, %v2519
        %v2521 = vrot.slane %v2513, %v2520
        %v2523 = vunpack.c.l.s4 1934713408
        %v2524 = vunpack.c.0.s8 %v2523
        %v2525 = vlaneseq
        %v2526 = vshrl.u32 %v2525, 7
        %v2527 = vsub.s32 %v2524, %v2526
        %v2528 = vrot.slane %v2514, %v2527
        %v2529 = vcombine.low %v2464, %v2480
        %v2530 = vcombine.high %v2464, %v2480
        %v2532 = vunpack.c.l.s4 1934713408
        %v2533 = vunpack.c.0.s8 %v2532
        %v2534 = vlaneseq
        %v2535 = vshrl.u32 %v2534, 7
        %v2536 = vsub.s32 %v2533, %v2535
        %v2537 = vrot.slane %v2529, %v2536
        %v2539 = vunpack.c.l.s4 1934713408
        %v2540 = vunpack.c.0.s8 %v2539
        %v2541 = vlaneseq
        %v2542 = vshrl.u32 %v2541, 7
        %v2543 = vsub.s32 %v2540, %v2542
        %v2544 = vrot.slane %v2530, %v2543
        %v2545 = vcombine.low %v2489, %v2505
        %v2546 = vcombine.high %v2489, %v2505
        %v2548 = vunpack.c.l.s4 1934713408
        %v2549 = vunpack.c.0.s8 %v2548
        %v2550 = vlaneseq
        %v2551 = vshrl.u32 %v2550, 7
        %v2552 = vsub.s32 %v2549, %v2551
        %v2553 = vrot.slane %v2545, %v2552
        %v2555 = vunpack.c.l.s4 1934713408
        %v2556 = vunpack.c.0.s8 %v2555
        %v2557 = vlaneseq
        %v2558 = vshrl.u32 %v2557, 7
        %v2559 = vsub.s32 %v2556, %v2558
        %v2560 = vrot.slane %v2546, %v2559
        %v2561 = vcombine.low %v2496, %v2512
        %v2562 = vcombine.high %v2496, %v2512
        %v2564 = vunpack.c.l.s4 1934713408
        %v2565 = vunpack.c.0.s8 %v2564
        %v2566 = vlaneseq
        %v2567 = vshrl.u32 %v2566, 7
        %v2568 = vsub.s32 %v2565, %v2567
        %v2569 = vrot.slane %v2561, %v2568
        %v2571 = vunpack.c.l.s4 1934713408
        %v2572 = vunpack.c.0.s8 %v2571
        %v2573 = vlaneseq
        %v2574 = vshrl.u32 %v2573, 7
        %v2575 = vsub.s32 %v2572, %v2574
        %v2576 = vrot.slane %v2562, %v2575
        %v2577 = vcombine.low %v2521, %v2553
        %v2578 = vcombine.high %v2521, %v2553
        %v2579 = vcombine.low %v2528, %v2560
        %v2580 = vcombine.high %v2528, %v2560
        %v2581 = vcombine.low %v2537, %v2569
        %v2582 = vcombine.high %v2537, %v2569
        %v2583 = vcombine.low %v2544, %v2576
        %v2584 = vcombine.high %v2544, %v2576
        %v2585 = vcombine.low %v296, %v505
        %v2586 = vcombine.high %v296, %v505
        %v2588 = vunpack.c.l.s4 1983009808
        %v2589 = vunpack.c.0.s8 %v2588
        %v2590 = vlaneseq
        %v2591 = vshrl.u32 %v2590, 7
        %v2592 = vsub.s32 %v2589, %v2591
        %v2593 = vrot.slane %v2585, %v2592
        %v2595 = vunpack.c.l.s4 1983009808
        %v2596 = vunpack.c.0.s8 %v2595
        %v2597 = vlaneseq
        %v2598 = vshrl.u32 %v2597, 7
        %v2599 = vsub.s32 %v2596, %v2598
        %v2600 = vrot.slane %v2586, %v2599
        %v2601 = vcombine.low %v472, %v538
        %v2602 = vcombine.high %v472, %v538
        %v2604 = vunpack.c.l.s4 1983009808
        %v2605 = vunpack.c.0.s8 %v2604
        %v2606 = vlaneseq
        %v2607 = vshrl.u32 %v2606, 7
        %v2608 = vsub.s32 %v2605, %v2607
        %v2609 = vrot.slane %v2601, %v2608
        %v2611 = vunpack.c.l.s4 1983009808
        %v2612 = vunpack.c.0.s8 %v2611
        %v2613 = vlaneseq
        %v2614 = vshrl.u32 %v2613, 7
        %v2615 = vsub.s32 %v2612, %v2614
        %v2616 = vrot.slane %v2602, %v2615
        %v2617 = vcombine.low %v571, %v637
        %v2618 = vcombine.high %v571, %v637
        %v2620 = vunpack.c.l.s4 1983009808
        %v2621 = vunpack.c.0.s8 %v2620
        %v2622 = vlaneseq
        %v2623 = vshrl.u32 %v2622, 7
        %v2624 = vsub.s32 %v2621, %v2623
        %v2625 = vrot.slane %v2617, %v2624
        %v2627 = vunpack.c.l.s4 1983009808
        %v2628 = vunpack.c.0.s8 %v2627
        %v2629 = vlaneseq
        %v2630 = vshrl.u32 %v2629, 7
        %v2631 = vsub.s32 %v2628, %v2630
        %v2632 = vrot.slane %v2618, %v2631
        %v2633 = vcombine.low %v604, %v720
        %v2634 = vcombine.high %v604, %v720
        %v2636 = vunpack.c.l.s4 1983009808
        %v2637 = vunpack.c.0.s8 %v2636
        %v2638 = vlaneseq
        %v2639 = vshrl.u32 %v2638, 7
        %v2640 = vsub.s32 %v2637, %v2639
        %v2641 = vrot.slane %v2633, %v2640
        %v2643 = vunpack.c.l.s4 1983009808
        %v2644 = vunpack.c.0.s8 %v2643
        %v2645 = vlaneseq
        %v2646 = vshrl.u32 %v2645, 7
        %v2647 = vsub.s32 %v2644, %v2646
        %v2648 = vrot.slane %v2634, %v2647
        %v2649 = vcombine.low %v2593, %v2609
        %v2650 = vcombine.high %v2593, %v2609
        %v2652 = vunpack.c.l.s4 1934713408
        %v2653 = vunpack.c.0.s8 %v2652
        %v2654 = vlaneseq
        %v2655 = vshrl.u32 %v2654, 7
        %v2656 = vsub.s32 %v2653, %v2655
        %v2657 = vrot.slane %v2649, %v2656
        %v2659 = vunpack.c.l.s4 1934713408
        %v2660 = vunpack.c.0.s8 %v2659
        %v2661 = vlaneseq
        %v2662 = vshrl.u32 %v2661, 7
        %v2663 = vsub.s32 %v2660, %v2662
        %v2664 = vrot.slane %v2650, %v2663
        %v2665 = vcombine.low %v2600, %v2616
        %v2666 = vcombine.high %v2600, %v2616
        %v2668 = vunpack.c.l.s4 1934713408
        %v2669 = vunpack.c.0.s8 %v2668
        %v2670 = vlaneseq
        %v2671 = vshrl.u32 %v2670, 7
        %v2672 = vsub.s32 %v2669, %v2671
        %v2673 = vrot.slane %v2665, %v2672
        %v2675 = vunpack.c.l.s4 1934713408
        %v2676 = vunpack.c.0.s8 %v2675
        %v2677 = vlaneseq
        %v2678 = vshrl.u32 %v2677, 7
        %v2679 = vsub.s32 %v2676, %v2678
        %v2680 = vrot.slane %v2666, %v2679
        %v2681 = vcombine.low %v2625, %v2641
        %v2682 = vcombine.high %v2625, %v2641
        %v2684 = vunpack.c.l.s4 1934713408
        %v2685 = vunpack.c.0.s8 %v2684
        %v2686 = vlaneseq
        %v2687 = vshrl.u32 %v2686, 7
        %v2688 = vsub.s32 %v2685, %v2687
        %v2689 = vrot.slane %v2681, %v2688
        %v2691 = vunpack.c.l.s4 1934713408
        %v2692 = vunpack.c.0.s8 %v2691
        %v2693 = vlaneseq
        %v2694 = vshrl.u32 %v2693, 7
        %v2695 = vsub.s32 %v2692, %v2694
        %v2696 = vrot.slane %v2682, %v2695
        %v2697 = vcombine.low %v2632, %v2648
        %v2698 = vcombine.high %v2632, %v2648
        %v2700 = vunpack.c.l.s4 1934713408
        %v2701 = vunpack.c.0.s8 %v2700
        %v2702 = vlaneseq
        %v2703 = vshrl.u32 %v2702, 7
        %v2704 = vsub.s32 %v2701, %v2703
        %v2705 = vrot.slane %v2697, %v2704
        %v2707 = vunpack.c.l.s4 1934713408
        %v2708 = vunpack.c.0.s8 %v2707
        %v2709 = vlaneseq
        %v2710 = vshrl.u32 %v2709, 7
        %v2711 = vsub.s32 %v2708, %v2710
        %v2712 = vrot.slane %v2698, %v2711
        %v2713 = vcombine.low %v2657, %v2689
        %v2714 = vcombine.high %v2657, %v2689
        %v2715 = vcombine.low %v2664, %v2696
        %v2716 = vcombine.high %v2664, %v2696
        %v2717 = vcombine.low %v2673, %v2705
        %v2718 = vcombine.high %v2673, %v2705
        %v2719 = vcombine.low %v2680, %v2712
        %v2720 = vcombine.high %v2680, %v2712
        %v2721 = vcombine.low %v748, %v814
        %v2722 = vcombine.high %v748, %v814
        %v2724 = vunpack.c.l.s4 1983009808
        %v2725 = vunpack.c.0.s8 %v2724
        %v2726 = vlaneseq
        %v2727 = vshrl.u32 %v2726, 7
        %v2728 = vsub.s32 %v2725, %v2727
        %v2729 = vrot.slane %v2721, %v2728
        %v2731 = vunpack.c.l.s4 1983009808
        %v2732 = vunpack.c.0.s8 %v2731
        %v2733 = vlaneseq
        %v2734 = vshrl.u32 %v2733, 7
        %v2735 = vsub.s32 %v2732, %v2734
        %v2736 = vrot.slane %v2722, %v2735
        %v2737 = vcombine.low %v781, %v847
        %v2738 = vcombine.high %v781, %v847
        %v2740 = vunpack.c.l.s4 1983009808
        %v2741 = vunpack.c.0.s8 %v2740
        %v2742 = vlaneseq
        %v2743 = vshrl.u32 %v2742, 7
        %v2744 = vsub.s32 %v2741, %v2743
        %v2745 = vrot.slane %v2737, %v2744
        %v2747 = vunpack.c.l.s4 1983009808
        %v2748 = vunpack.c.0.s8 %v2747
        %v2749 = vlaneseq
        %v2750 = vshrl.u32 %v2749, 7
        %v2751 = vsub.s32 %v2748, %v2750
        %v2752 = vrot.slane %v2738, %v2751
        %v2753 = vcombine.low %v880, %v995
        %v2754 = vcombine.high %v880, %v995
        %v2756 = vunpack.c.l.s4 1983009808
        %v2757 = vunpack.c.0.s8 %v2756
        %v2758 = vlaneseq
        %v2759 = vshrl.u32 %v2758, 7
        %v2760 = vsub.s32 %v2757, %v2759
        %v2761 = vrot.slane %v2753, %v2760
        %v2763 = vunpack.c.l.s4 1983009808
        %v2764 = vunpack.c.0.s8 %v2763
        %v2765 = vlaneseq
        %v2766 = vshrl.u32 %v2765, 7
        %v2767 = vsub.s32 %v2764, %v2766
        %v2768 = vrot.slane %v2754, %v2767
        %v2769 = vcombine.low %v913, %v1023
        %v2770 = vcombine.high %v913, %v1023
        %v2772 = vunpack.c.l.s4 1983009808
        %v2773 = vunpack.c.0.s8 %v2772
        %v2774 = vlaneseq
        %v2775 = vshrl.u32 %v2774, 7
        %v2776 = vsub.s32 %v2773, %v2775
        %v2777 = vrot.slane %v2769, %v2776
        %v2779 = vunpack.c.l.s4 1983009808
        %v2780 = vunpack.c.0.s8 %v2779
        %v2781 = vlaneseq
        %v2782 = vshrl.u32 %v2781, 7
        %v2783 = vsub.s32 %v2780, %v2782
        %v2784 = vrot.slane %v2770, %v2783
        %v2785 = vcombine.low %v2729, %v2745
        %v2786 = vcombine.high %v2729, %v2745
        %v2788 = vunpack.c.l.s4 1934713408
        %v2789 = vunpack.c.0.s8 %v2788
        %v2790 = vlaneseq
        %v2791 = vshrl.u32 %v2790, 7
        %v2792 = vsub.s32 %v2789, %v2791
        %v2793 = vrot.slane %v2785, %v2792
        %v2795 = vunpack.c.l.s4 1934713408
        %v2796 = vunpack.c.0.s8 %v2795
        %v2797 = vlaneseq
        %v2798 = vshrl.u32 %v2797, 7
        %v2799 = vsub.s32 %v2796, %v2798
        %v2800 = vrot.slane %v2786, %v2799
        %v2801 = vcombine.low %v2736, %v2752
        %v2802 = vcombine.high %v2736, %v2752
        %v2804 = vunpack.c.l.s4 1934713408
        %v2805 = vunpack.c.0.s8 %v2804
        %v2806 = vlaneseq
        %v2807 = vshrl.u32 %v2806, 7
        %v2808 = vsub.s32 %v2805, %v2807
        %v2809 = vrot.slane %v2801, %v2808
        %v2811 = vunpack.c.l.s4 1934713408
        %v2812 = vunpack.c.0.s8 %v2811
        %v2813 = vlaneseq
        %v2814 = vshrl.u32 %v2813, 7
        %v2815 = vsub.s32 %v2812, %v2814
        %v2816 = vrot.slane %v2802, %v2815
        %v2817 = vcombine.low %v2761, %v2777
        %v2818 = vcombine.high %v2761, %v2777
        %v2820 = vunpack.c.l.s4 1934713408
        %v2821 = vunpack.c.0.s8 %v2820
        %v2822 = vlaneseq
        %v2823 = vshrl.u32 %v2822, 7
        %v2824 = vsub.s32 %v2821, %v2823
        %v2825 = vrot.slane %v2817, %v2824
        %v2827 = vunpack.c.l.s4 1934713408
        %v2828 = vunpack.c.0.s8 %v2827
        %v2829 = vlaneseq
        %v2830 = vshrl.u32 %v2829, 7
        %v2831 = vsub.s32 %v2828, %v2830
        %v2832 = vrot.slane %v2818, %v2831
        %v2833 = vcombine.low %v2768, %v2784
        %v2834 = vcombine.high %v2768, %v2784
        %v2836 = vunpack.c.l.s4 1934713408
        %v2837 = vunpack.c.0.s8 %v2836
        %v2838 = vlaneseq
        %v2839 = vshrl.u32 %v2838, 7
        %v2840 = vsub.s32 %v2837, %v2839
        %v2841 = vrot.slane %v2833, %v2840
        %v2843 = vunpack.c.l.s4 1934713408
        %v2844 = vunpack.c.0.s8 %v2843
        %v2845 = vlaneseq
        %v2846 = vshrl.u32 %v2845, 7
        %v2847 = vsub.s32 %v2844, %v2846
        %v2848 = vrot.slane %v2834, %v2847
        %v2849 = vcombine.low %v2793, %v2825
        %v2850 = vcombine.high %v2793, %v2825
        %v2851 = vcombine.low %v2800, %v2832
        %v2852 = vcombine.high %v2800, %v2832
        %v2853 = vcombine.low %v2809, %v2841
        %v2854 = vcombine.high %v2809, %v2841
        %v2855 = vcombine.low %v2816, %v2848
        %v2856 = vcombine.high %v2816, %v2848
        %v2857 = vcombine.high %v1050, 0.0
        %v2859 = vunpack.c.l.s4 1983009808
        %v2860 = vunpack.c.0.s8 %v2859
        %v2861 = vlaneseq
        %v2862 = vshrl.u32 %v2861, 7
        %v2863 = vsub.s32 %v2860, %v2862
        %v2864 = vrot.slane %v1050, %v2863
        %v2866 = vunpack.c.l.s4 1983009808
        %v2867 = vunpack.c.0.s8 %v2866
        %v2868 = vlaneseq
        %v2869 = vshrl.u32 %v2868, 7
        %v2870 = vsub.s32 %v2867, %v2869
        %v2871 = vrot.slane %v2857, %v2870
        %v2872 = vcombine.high %v1074, 0.0
        %v2874 = vunpack.c.l.s4 1983009808
        %v2875 = vunpack.c.0.s8 %v2874
        %v2876 = vlaneseq
        %v2877 = vshrl.u32 %v2876, 7
        %v2878 = vsub.s32 %v2875, %v2877
        %v2879 = vrot.slane %v1074, %v2878
        %v2881 = vunpack.c.l.s4 1983009808
        %v2882 = vunpack.c.0.s8 %v2881
        %v2883 = vlaneseq
        %v2884 = vshrl.u32 %v2883, 7
        %v2885 = vsub.s32 %v2882, %v2884
        %v2886 = vrot.slane %v2872, %v2885
        %v2887 = vcombine.low %v2864, %v2879
        %v2888 = vcombine.high %v2864, %v2879
        %v2890 = vunpack.c.l.s4 1934713408
        %v2891 = vunpack.c.0.s8 %v2890
        %v2892 = vlaneseq
        %v2893 = vshrl.u32 %v2892, 7
        %v2894 = vsub.s32 %v2891, %v2893
        %v2895 = vrot.slane %v2887, %v2894
        %v2897 = vunpack.c.l.s4 1934713408
        %v2898 = vunpack.c.0.s8 %v2897
        %v2899 = vlaneseq
        %v2900 = vshrl.u32 %v2899, 7
        %v2901 = vsub.s32 %v2898, %v2900
        %v2902 = vrot.slane %v2888, %v2901
        %v2903 = vcombine.low %v2871, %v2886
        %v2904 = vcombine.high %v2871, %v2886
        %v2906 = vunpack.c.l.s4 1934713408
        %v2907 = vunpack.c.0.s8 %v2906
        %v2908 = vlaneseq
        %v2909 = vshrl.u32 %v2908, 7
        %v2910 = vsub.s32 %v2907, %v2909
        %v2911 = vrot.slane %v2903, %v2910
        %v2913 = vunpack.c.l.s4 1934713408
        %v2914 = vunpack.c.0.s8 %v2913
        %v2915 = vlaneseq
        %v2916 = vshrl.u32 %v2915, 7
        %v2917 = vsub.s32 %v2914, %v2916
        %v2918 = vrot.slane %v2904, %v2917
        %v2919 = vcombine.high %v2895, 0.0
        %v2920 = vcombine.high %v2902, 0.0
        %v2921 = vcombine.high %v2911, 0.0
        %v2922 = vcombine.high %v2918, 0.0
        %v2923 = vcombine.low %v302, %v507
        %v2924 = vcombine.high %v302, %v507
        %v2926 = vunpack.c.l.s4 1983009808
        %v2927 = vunpack.c.0.s8 %v2926
        %v2928 = vlaneseq
        %v2929 = vshrl.u32 %v2928, 7
        %v2930 = vsub.s32 %v2927, %v2929
        %v2931 = vrot.slane %v2923, %v2930
        %v2933 = vunpack.c.l.s4 1983009808
        %v2934 = vunpack.c.0.s8 %v2933
        %v2935 = vlaneseq
        %v2936 = vshrl.u32 %v2935, 7
        %v2937 = vsub.s32 %v2934, %v2936
        %v2938 = vrot.slane %v2924, %v2937
        %v2939 = vcombine.low %v474, %v540
        %v2940 = vcombine.high %v474, %v540
        %v2942 = vunpack.c.l.s4 1983009808
        %v2943 = vunpack.c.0.s8 %v2942
        %v2944 = vlaneseq
        %v2945 = vshrl.u32 %v2944, 7
        %v2946 = vsub.s32 %v2943, %v2945
        %v2947 = vrot.slane %v2939, %v2946
        %v2949 = vunpack.c.l.s4 1983009808
        %v2950 = vunpack.c.0.s8 %v2949
        %v2951 = vlaneseq
        %v2952 = vshrl.u32 %v2951, 7
        %v2953 = vsub.s32 %v2950, %v2952
        %v2954 = vrot.slane %v2940, %v2953
        %v2955 = vcombine.low %v573, %v639
        %v2956 = vcombine.high %v573, %v639
        %v2958 = vunpack.c.l.s4 1983009808
        %v2959 = vunpack.c.0.s8 %v2958
        %v2960 = vlaneseq
        %v2961 = vshrl.u32 %v2960, 7
        %v2962 = vsub.s32 %v2959, %v2961
        %v2963 = vrot.slane %v2955, %v2962
        %v2965 = vunpack.c.l.s4 1983009808
        %v2966 = vunpack.c.0.s8 %v2965
        %v2967 = vlaneseq
        %v2968 = vshrl.u32 %v2967, 7
        %v2969 = vsub.s32 %v2966, %v2968
        %v2970 = vrot.slane %v2956, %v2969
        %v2971 = vcombine.low %v606, %v721
        %v2972 = vcombine.high %v606, %v721
        %v2974 = vunpack.c.l.s4 1983009808
        %v2975 = vunpack.c.0.s8 %v2974
        %v2976 = vlaneseq
        %v2977 = vshrl.u32 %v2976, 7
        %v2978 = vsub.s32 %v2975, %v2977
        %v2979 = vrot.slane %v2971, %v2978
        %v2981 = vunpack.c.l.s4 1983009808
        %v2982 = vunpack.c.0.s8 %v2981
        %v2983 = vlaneseq
        %v2984 = vshrl.u32 %v2983, 7
        %v2985 = vsub.s32 %v2982, %v2984
        %v2986 = vrot.slane %v2972, %v2985
        %v2987 = vcombine.low %v2931, %v2947
        %v2988 = vcombine.high %v2931, %v2947
        %v2990 = vunpack.c.l.s4 1934713408
        %v2991 = vunpack.c.0.s8 %v2990
        %v2992 = vlaneseq
        %v2993 = vshrl.u32 %v2992, 7
        %v2994 = vsub.s32 %v2991, %v2993
        %v2995 = vrot.slane %v2987, %v2994
        %v2997 = vunpack.c.l.s4 1934713408
        %v2998 = vunpack.c.0.s8 %v2997
        %v2999 = vlaneseq
        %v3000 = vshrl.u32 %v2999, 7
        %v3001 = vsub.s32 %v2998, %v3000
        %v3002 = vrot.slane %v2988, %v3001
        %v3003 = vcombine.low %v2938, %v2954
        %v3004 = vcombine.high %v2938, %v2954
        %v3006 = vunpack.c.l.s4 1934713408
        %v3007 = vunpack.c.0.s8 %v3006
        %v3008 = vlaneseq
        %v3009 = vshrl.u32 %v3008, 7
        %v3010 = vsub.s32 %v3007, %v3009
        %v3011 = vrot.slane %v3003, %v3010
        %v3013 = vunpack.c.l.s4 1934713408
        %v3014 = vunpack.c.0.s8 %v3013
        %v3015 = vlaneseq
        %v3016 = vshrl.u32 %v3015, 7
        %v3017 = vsub.s32 %v3014, %v3016
        %v3018 = vrot.slane %v3004, %v3017
        %v3019 = vcombine.low %v2963, %v2979
        %v3020 = vcombine.high %v2963, %v2979
        %v3022 = vunpack.c.l.s4 1934713408
        %v3023 = vunpack.c.0.s8 %v3022
        %v3024 = vlaneseq
        %v3025 = vshrl.u32 %v3024, 7
        %v3026 = vsub.s32 %v3023, %v3025
        %v3027 = vrot.slane %v3019, %v3026
        %v3029 = vunpack.c.l.s4 1934713408
        %v3030 = vunpack.c.0.s8 %v3029
        %v3031 = vlaneseq
        %v3032 = vshrl.u32 %v3031, 7
        %v3033 = vsub.s32 %v3030, %v3032
        %v3034 = vrot.slane %v3020, %v3033
        %v3035 = vcombine.low %v2970, %v2986
        %v3036 = vcombine.high %v2970, %v2986
        %v3038 = vunpack.c.l.s4 1934713408
        %v3039 = vunpack.c.0.s8 %v3038
        %v3040 = vlaneseq
        %v3041 = vshrl.u32 %v3040, 7
        %v3042 = vsub.s32 %v3039, %v3041
        %v3043 = vrot.slane %v3035, %v3042
        %v3045 = vunpack.c.l.s4 1934713408
        %v3046 = vunpack.c.0.s8 %v3045
        %v3047 = vlaneseq
        %v3048 = vshrl.u32 %v3047, 7
        %v3049 = vsub.s32 %v3046, %v3048
        %v3050 = vrot.slane %v3036, %v3049
        %v3051 = vcombine.low %v2995, %v3027
        %v3052 = vcombine.high %v2995, %v3027
        %v3053 = vcombine.low %v3002, %v3034
        %v3054 = vcombine.high %v3002, %v3034
        %v3055 = vcombine.low %v3011, %v3043
        %v3056 = vcombine.high %v3011, %v3043
        %v3057 = vcombine.low %v3018, %v3050
        %v3058 = vcombine.high %v3018, %v3050
        %v3059 = vcombine.low %v750, %v816
        %v3060 = vcombine.high %v750, %v816
        %v3062 = vunpack.c.l.s4 1983009808
        %v3063 = vunpack.c.0.s8 %v3062
        %v3064 = vlaneseq
        %v3065 = vshrl.u32 %v3064, 7
        %v3066 = vsub.s32 %v3063, %v3065
        %v3067 = vrot.slane %v3059, %v3066
        %v3069 = vunpack.c.l.s4 1983009808
        %v3070 = vunpack.c.0.s8 %v3069
        %v3071 = vlaneseq
        %v3072 = vshrl.u32 %v3071, 7
        %v3073 = vsub.s32 %v3070, %v3072
        %v3074 = vrot.slane %v3060, %v3073
        %v3075 = vcombine.low %v783, %v849
        %v3076 = vcombine.high %v783, %v849
        %v3078 = vunpack.c.l.s4 1983009808
        %v3079 = vunpack.c.0.s8 %v3078
        %v3080 = vlaneseq
        %v3081 = vshrl.u32 %v3080, 7
        %v3082 = vsub.s32 %v3079, %v3081
        %v3083 = vrot.slane %v3075, %v3082
        %v3085 = vunpack.c.l.s4 1983009808
        %v3086 = vunpack.c.0.s8 %v3085
        %v3087 = vlaneseq
        %v3088 = vshrl.u32 %v3087, 7
        %v3089 = vsub.s32 %v3086, %v3088
        %v3090 = vrot.slane %v3076, %v3089
        %v3091 = vcombine.low %v882, %v996
        %v3092 = vcombine.high %v882, %v996
        %v3094 = vunpack.c.l.s4 1983009808
        %v3095 = vunpack.c.0.s8 %v3094
        %v3096 = vlaneseq
        %v3097 = vshrl.u32 %v3096, 7
        %v3098 = vsub.s32 %v3095, %v3097
        %v3099 = vrot.slane %v3091, %v3098
        %v3101 = vunpack.c.l.s4 1983009808
        %v3102 = vunpack.c.0.s8 %v3101
        %v3103 = vlaneseq
        %v3104 = vshrl.u32 %v3103, 7
        %v3105 = vsub.s32 %v3102, %v3104
        %v3106 = vrot.slane %v3092, %v3105
        %v3107 = vcombine.low %v915, %v1025
        %v3108 = vcombine.high %v915, %v1025
        %v3110 = vunpack.c.l.s4 1983009808
        %v3111 = vunpack.c.0.s8 %v3110
        %v3112 = vlaneseq
        %v3113 = vshrl.u32 %v3112, 7
        %v3114 = vsub.s32 %v3111, %v3113
        %v3115 = vrot.slane %v3107, %v3114
        %v3117 = vunpack.c.l.s4 1983009808
        %v3118 = vunpack.c.0.s8 %v3117
        %v3119 = vlaneseq
        %v3120 = vshrl.u32 %v3119, 7
        %v3121 = vsub.s32 %v3118, %v3120
        %v3122 = vrot.slane %v3108, %v3121
        %v3123 = vcombine.low %v3067, %v3083
        %v3124 = vcombine.high %v3067, %v3083
        %v3126 = vunpack.c.l.s4 1934713408
        %v3127 = vunpack.c.0.s8 %v3126
        %v3128 = vlaneseq
        %v3129 = vshrl.u32 %v3128, 7
        %v3130 = vsub.s32 %v3127, %v3129
        %v3131 = vrot.slane %v3123, %v3130
        %v3133 = vunpack.c.l.s4 1934713408
        %v3134 = vunpack.c.0.s8 %v3133
        %v3135 = vlaneseq
        %v3136 = vshrl.u32 %v3135, 7
        %v3137 = vsub.s32 %v3134, %v3136
        %v3138 = vrot.slane %v3124, %v3137
        %v3139 = vcombine.low %v3074, %v3090
        %v3140 = vcombine.high %v3074, %v3090
        %v3142 = vunpack.c.l.s4 1934713408
        %v3143 = vunpack.c.0.s8 %v3142
        %v3144 = vlaneseq
        %v3145 = vshrl.u32 %v3144, 7
        %v3146 = vsub.s32 %v3143, %v3145
        %v3147 = vrot.slane %v3139, %v3146
        %v3149 = vunpack.c.l.s4 1934713408
        %v3150 = vunpack.c.0.s8 %v3149
        %v3151 = vlaneseq
        %v3152 = vshrl.u32 %v3151, 7
        %v3153 = vsub.s32 %v3150, %v3152
        %v3154 = vrot.slane %v3140, %v3153
        %v3155 = vcombine.low %v3099, %v3115
        %v3156 = vcombine.high %v3099, %v3115
        %v3158 = vunpack.c.l.s4 1934713408
        %v3159 = vunpack.c.0.s8 %v3158
        %v3160 = vlaneseq
        %v3161 = vshrl.u32 %v3160, 7
        %v3162 = vsub.s32 %v3159, %v3161
        %v3163 = vrot.slane %v3155, %v3162
        %v3165 = vunpack.c.l.s4 1934713408
        %v3166 = vunpack.c.0.s8 %v3165
        %v3167 = vlaneseq
        %v3168 = vshrl.u32 %v3167, 7
        %v3169 = vsub.s32 %v3166, %v3168
        %v3170 = vrot.slane %v3156, %v3169
        %v3171 = vcombine.low %v3106, %v3122
        %v3172 = vcombine.high %v3106, %v3122
        %v3174 = vunpack.c.l.s4 1934713408
        %v3175 = vunpack.c.0.s8 %v3174
        %v3176 = vlaneseq
        %v3177 = vshrl.u32 %v3176, 7
        %v3178 = vsub.s32 %v3175, %v3177
        %v3179 = vrot.slane %v3171, %v3178
        %v3181 = vunpack.c.l.s4 1934713408
        %v3182 = vunpack.c.0.s8 %v3181
        %v3183 = vlaneseq
        %v3184 = vshrl.u32 %v3183, 7
        %v3185 = vsub.s32 %v3182, %v3184
        %v3186 = vrot.slane %v3172, %v3185
        %v3187 = vcombine.low %v3131, %v3163
        %v3188 = vcombine.high %v3131, %v3163
        %v3189 = vcombine.low %v3138, %v3170
        %v3190 = vcombine.high %v3138, %v3170
        %v3191 = vcombine.low %v3147, %v3179
        %v3192 = vcombine.high %v3147, %v3179
        %v3193 = vcombine.low %v3154, %v3186
        %v3194 = vcombine.high %v3154, %v3186
        %v3195 = vcombine.high %v1052, 0.0
        %v3197 = vunpack.c.l.s4 1983009808
        %v3198 = vunpack.c.0.s8 %v3197
        %v3199 = vlaneseq
        %v3200 = vshrl.u32 %v3199, 7
        %v3201 = vsub.s32 %v3198, %v3200
        %v3202 = vrot.slane %v1052, %v3201
        %v3204 = vunpack.c.l.s4 1983009808
        %v3205 = vunpack.c.0.s8 %v3204
        %v3206 = vlaneseq
        %v3207 = vshrl.u32 %v3206, 7
        %v3208 = vsub.s32 %v3205, %v3207
        %v3209 = vrot.slane %v3195, %v3208
        %v3210 = vcombine.high %v1076, 0.0
        %v3212 = vunpack.c.l.s4 1983009808
        %v3213 = vunpack.c.0.s8 %v3212
        %v3214 = vlaneseq
        %v3215 = vshrl.u32 %v3214, 7
        %v3216 = vsub.s32 %v3213, %v3215
        %v3217 = vrot.slane %v1076, %v3216
        %v3219 = vunpack.c.l.s4 1983009808
        %v3220 = vunpack.c.0.s8 %v3219
        %v3221 = vlaneseq
        %v3222 = vshrl.u32 %v3221, 7
        %v3223 = vsub.s32 %v3220, %v3222
        %v3224 = vrot.slane %v3210, %v3223
        %v3225 = vcombine.low %v3202, %v3217
        %v3226 = vcombine.high %v3202, %v3217
        %v3228 = vunpack.c.l.s4 1934713408
        %v3229 = vunpack.c.0.s8 %v3228
        %v3230 = vlaneseq
        %v3231 = vshrl.u32 %v3230, 7
        %v3232 = vsub.s32 %v3229, %v3231
        %v3233 = vrot.slane %v3225, %v3232
        %v3235 = vunpack.c.l.s4 1934713408
        %v3236 = vunpack.c.0.s8 %v3235
        %v3237 = vlaneseq
        %v3238 = vshrl.u32 %v3237, 7
        %v3239 = vsub.s32 %v3236, %v3238
        %v3240 = vrot.slane %v3226, %v3239
        %v3241 = vcombine.low %v3209, %v3224
        %v3242 = vcombine.high %v3209, %v3224
        %v3244 = vunpack.c.l.s4 1934713408
        %v3245 = vunpack.c.0.s8 %v3244
        %v3246 = vlaneseq
        %v3247 = vshrl.u32 %v3246, 7
        %v3248 = vsub.s32 %v3245, %v3247
        %v3249 = vrot.slane %v3241, %v3248
        %v3251 = vunpack.c.l.s4 1934713408
        %v3252 = vunpack.c.0.s8 %v3251
        %v3253 = vlaneseq
        %v3254 = vshrl.u32 %v3253, 7
        %v3255 = vsub.s32 %v3252, %v3254
        %v3256 = vrot.slane %v3242, %v3255
        %v3257 = vcombine.high %v3233, 0.0
        %v3258 = vcombine.high %v3240, 0.0
        %v3259 = vcombine.high %v3249, 0.0
        %v3260 = vcombine.high %v3256, 0.0
        %v3261 = vcombine.low %v308, %v509
        %v3262 = vcombine.high %v308, %v509
        %v3264 = vunpack.c.l.s4 1983009808
        %v3265 = vunpack.c.0.s8 %v3264
        %v3266 = vlaneseq
        %v3267 = vshrl.u32 %v3266, 7
        %v3268 = vsub.s32 %v3265, %v3267
        %v3269 = vrot.slane %v3261, %v3268
        %v3271 = vunpack.c.l.s4 1983009808
        %v3272 = vunpack.c.0.s8 %v3271
        %v3273 = vlaneseq
        %v3274 = vshrl.u32 %v3273, 7
        %v3275 = vsub.s32 %v3272, %v3274
        %v3276 = vrot.slane %v3262, %v3275
        %v3277 = vcombine.low %v476, %v542
        %v3278 = vcombine.high %v476, %v542
        %v3280 = vunpack.c.l.s4 1983009808
        %v3281 = vunpack.c.0.s8 %v3280
        %v3282 = vlaneseq
        %v3283 = vshrl.u32 %v3282, 7
        %v3284 = vsub.s32 %v3281, %v3283
        %v3285 = vrot.slane %v3277, %v3284
        %v3287 = vunpack.c.l.s4 1983009808
        %v3288 = vunpack.c.0.s8 %v3287
        %v3289 = vlaneseq
        %v3290 = vshrl.u32 %v3289, 7
        %v3291 = vsub.s32 %v3288, %v3290
        %v3292 = vrot.slane %v3278, %v3291
        %v3293 = vcombine.low %v575, %v641
        %v3294 = vcombine.high %v575, %v641
        %v3296 = vunpack.c.l.s4 1983009808
        %v3297 = vunpack.c.0.s8 %v3296
        %v3298 = vlaneseq
        %v3299 = vshrl.u32 %v3298, 7
        %v3300 = vsub.s32 %v3297, %v3299
        %v3301 = vrot.slane %v3293, %v3300
        %v3303 = vunpack.c.l.s4 1983009808
        %v3304 = vunpack.c.0.s8 %v3303
        %v3305 = vlaneseq
        %v3306 = vshrl.u32 %v3305, 7
        %v3307 = vsub.s32 %v3304, %v3306
        %v3308 = vrot.slane %v3294, %v3307
        %v3309 = vcombine.low %v608, %v722
        %v3310 = vcombine.high %v608, %v722
        %v3312 = vunpack.c.l.s4 1983009808
        %v3313 = vunpack.c.0.s8 %v3312
        %v3314 = vlaneseq
        %v3315 = vshrl.u32 %v3314, 7
        %v3316 = vsub.s32 %v3313, %v3315
        %v3317 = vrot.slane %v3309, %v3316
        %v3319 = vunpack.c.l.s4 1983009808
        %v3320 = vunpack.c.0.s8 %v3319
        %v3321 = vlaneseq
        %v3322 = vshrl.u32 %v3321, 7
        %v3323 = vsub.s32 %v3320, %v3322
        %v3324 = vrot.slane %v3310, %v3323
        %v3325 = vcombine.low %v3269, %v3285
        %v3326 = vcombine.high %v3269, %v3285
        %v3328 = vunpack.c.l.s4 1934713408
        %v3329 = vunpack.c.0.s8 %v3328
        %v3330 = vlaneseq
        %v3331 = vshrl.u32 %v3330, 7
        %v3332 = vsub.s32 %v3329, %v3331
        %v3333 = vrot.slane %v3325, %v3332
        %v3335 = vunpack.c.l.s4 1934713408
        %v3336 = vunpack.c.0.s8 %v3335
        %v3337 = vlaneseq
        %v3338 = vshrl.u32 %v3337, 7
        %v3339 = vsub.s32 %v3336, %v3338
        %v3340 = vrot.slane %v3326, %v3339
        %v3341 = vcombine.low %v3276, %v3292
        %v3342 = vcombine.high %v3276, %v3292
        %v3344 = vunpack.c.l.s4 1934713408
        %v3345 = vunpack.c.0.s8 %v3344
        %v3346 = vlaneseq
        %v3347 = vshrl.u32 %v3346, 7
        %v3348 = vsub.s32 %v3345, %v3347
        %v3349 = vrot.slane %v3341, %v3348
        %v3351 = vunpack.c.l.s4 1934713408
        %v3352 = vunpack.c.0.s8 %v3351
        %v3353 = vlaneseq
        %v3354 = vshrl.u32 %v3353, 7
        %v3355 = vsub.s32 %v3352, %v3354
        %v3356 = vrot.slane %v3342, %v3355
        %v3357 = vcombine.low %v3301, %v3317
        %v3358 = vcombine.high %v3301, %v3317
        %v3360 = vunpack.c.l.s4 1934713408
        %v3361 = vunpack.c.0.s8 %v3360
        %v3362 = vlaneseq
        %v3363 = vshrl.u32 %v3362, 7
        %v3364 = vsub.s32 %v3361, %v3363
        %v3365 = vrot.slane %v3357, %v3364
        %v3367 = vunpack.c.l.s4 1934713408
        %v3368 = vunpack.c.0.s8 %v3367
        %v3369 = vlaneseq
        %v3370 = vshrl.u32 %v3369, 7
        %v3371 = vsub.s32 %v3368, %v3370
        %v3372 = vrot.slane %v3358, %v3371
        %v3373 = vcombine.low %v3308, %v3324
        %v3374 = vcombine.high %v3308, %v3324
        %v3376 = vunpack.c.l.s4 1934713408
        %v3377 = vunpack.c.0.s8 %v3376
        %v3378 = vlaneseq
        %v3379 = vshrl.u32 %v3378, 7
        %v3380 = vsub.s32 %v3377, %v3379
        %v3381 = vrot.slane %v3373, %v3380
        %v3383 = vunpack.c.l.s4 1934713408
        %v3384 = vunpack.c.0.s8 %v3383
        %v3385 = vlaneseq
        %v3386 = vshrl.u32 %v3385, 7
        %v3387 = vsub.s32 %v3384, %v3386
        %v3388 = vrot.slane %v3374, %v3387
        %v3389 = vcombine.low %v3333, %v3365
        %v3390 = vcombine.high %v3333, %v3365
        %v3391 = vcombine.low %v3340, %v3372
        %v3392 = vcombine.high %v3340, %v3372
        %v3393 = vcombine.low %v3349, %v3381
        %v3394 = vcombine.high %v3349, %v3381
        %v3395 = vcombine.low %v3356, %v3388
        %v3396 = vcombine.high %v3356, %v3388
        %v3397 = vcombine.low %v752, %v818
        %v3398 = vcombine.high %v752, %v818
        %v3400 = vunpack.c.l.s4 1983009808
        %v3401 = vunpack.c.0.s8 %v3400
        %v3402 = vlaneseq
        %v3403 = vshrl.u32 %v3402, 7
        %v3404 = vsub.s32 %v3401, %v3403
        %v3405 = vrot.slane %v3397, %v3404
        %v3407 = vunpack.c.l.s4 1983009808
        %v3408 = vunpack.c.0.s8 %v3407
        %v3409 = vlaneseq
        %v3410 = vshrl.u32 %v3409, 7
        %v3411 = vsub.s32 %v3408, %v3410
        %v3412 = vrot.slane %v3398, %v3411
        %v3413 = vcombine.low %v785, %v851
        %v3414 = vcombine.high %v785, %v851
        %v3416 = vunpack.c.l.s4 1983009808
        %v3417 = vunpack.c.0.s8 %v3416
        %v3418 = vlaneseq
        %v3419 = vshrl.u32 %v3418, 7
        %v3420 = vsub.s32 %v3417, %v3419
        %v3421 = vrot.slane %v3413, %v3420
        %v3423 = vunpack.c.l.s4 1983009808
        %v3424 = vunpack.c.0.s8 %v3423
        %v3425 = vlaneseq
        %v3426 = vshrl.u32 %v3425, 7
        %v3427 = vsub.s32 %v3424, %v3426
        %v3428 = vrot.slane %v3414, %v3427
        %v3429 = vcombine.low %v884, %v997
        %v3430 = vcombine.high %v884, %v997
        %v3432 = vunpack.c.l.s4 1983009808
        %v3433 = vunpack.c.0.s8 %v3432
        %v3434 = vlaneseq
        %v3435 = vshrl.u32 %v3434, 7
        %v3436 = vsub.s32 %v3433, %v3435
        %v3437 = vrot.slane %v3429, %v3436
        %v3439 = vunpack.c.l.s4 1983009808
        %v3440 = vunpack.c.0.s8 %v3439
        %v3441 = vlaneseq
        %v3442 = vshrl.u32 %v3441, 7
        %v3443 = vsub.s32 %v3440, %v3442
        %v3444 = vrot.slane %v3430, %v3443
        %v3445 = vcombine.low %v917, %v1027
        %v3446 = vcombine.high %v917, %v1027
        %v3448 = vunpack.c.l.s4 1983009808
        %v3449 = vunpack.c.0.s8 %v3448
        %v3450 = vlaneseq
        %v3451 = vshrl.u32 %v3450, 7
        %v3452 = vsub.s32 %v3449, %v3451
        %v3453 = vrot.slane %v3445, %v3452
        %v3455 = vunpack.c.l.s4 1983009808
        %v3456 = vunpack.c.0.s8 %v3455
        %v3457 = vlaneseq
        %v3458 = vshrl.u32 %v3457, 7
        %v3459 = vsub.s32 %v3456, %v3458
        %v3460 = vrot.slane %v3446, %v3459
        %v3461 = vcombine.low %v3405, %v3421
        %v3462 = vcombine.high %v3405, %v3421
        %v3464 = vunpack.c.l.s4 1934713408
        %v3465 = vunpack.c.0.s8 %v3464
        %v3466 = vlaneseq
        %v3467 = vshrl.u32 %v3466, 7
        %v3468 = vsub.s32 %v3465, %v3467
        %v3469 = vrot.slane %v3461, %v3468
        %v3471 = vunpack.c.l.s4 1934713408
        %v3472 = vunpack.c.0.s8 %v3471
        %v3473 = vlaneseq
        %v3474 = vshrl.u32 %v3473, 7
        %v3475 = vsub.s32 %v3472, %v3474
        %v3476 = vrot.slane %v3462, %v3475
        %v3477 = vcombine.low %v3412, %v3428
        %v3478 = vcombine.high %v3412, %v3428
        %v3480 = vunpack.c.l.s4 1934713408
        %v3481 = vunpack.c.0.s8 %v3480
        %v3482 = vlaneseq
        %v3483 = vshrl.u32 %v3482, 7
        %v3484 = vsub.s32 %v3481, %v3483
        %v3485 = vrot.slane %v3477, %v3484
        %v3487 = vunpack.c.l.s4 1934713408
        %v3488 = vunpack.c.0.s8 %v3487
        %v3489 = vlaneseq
        %v3490 = vshrl.u32 %v3489, 7
        %v3491 = vsub.s32 %v3488, %v3490
        %v3492 = vrot.slane %v3478, %v3491
        %v3493 = vcombine.low %v3437, %v3453
        %v3494 = vcombine.high %v3437, %v3453
        %v3496 = vunpack.c.l.s4 1934713408
        %v3497 = vunpack.c.0.s8 %v3496
        %v3498 = vlaneseq
        %v3499 = vshrl.u32 %v3498, 7
        %v3500 = vsub.s32 %v3497, %v3499
        %v3501 = vrot.slane %v3493, %v3500
        %v3503 = vunpack.c.l.s4 1934713408
        %v3504 = vunpack.c.0.s8 %v3503
        %v3505 = vlaneseq
        %v3506 = vshrl.u32 %v3505, 7
        %v3507 = vsub.s32 %v3504, %v3506
        %v3508 = vrot.slane %v3494, %v3507
        %v3509 = vcombine.low %v3444, %v3460
        %v3510 = vcombine.high %v3444, %v3460
        %v3512 = vunpack.c.l.s4 1934713408
        %v3513 = vunpack.c.0.s8 %v3512
        %v3514 = vlaneseq
        %v3515 = vshrl.u32 %v3514, 7
        %v3516 = vsub.s32 %v3513, %v3515
        %v3517 = vrot.slane %v3509, %v3516
        %v3519 = vunpack.c.l.s4 1934713408
        %v3520 = vunpack.c.0.s8 %v3519
        %v3521 = vlaneseq
        %v3522 = vshrl.u32 %v3521, 7
        %v3523 = vsub.s32 %v3520, %v3522
        %v3524 = vrot.slane %v3510, %v3523
        %v3525 = vcombine.low %v3469, %v3501
        %v3526 = vcombine.high %v3469, %v3501
        %v3527 = vcombine.low %v3476, %v3508
        %v3528 = vcombine.high %v3476, %v3508
        %v3529 = vcombine.low %v3485, %v3517
        %v3530 = vcombine.high %v3485, %v3517
        %v3531 = vcombine.low %v3492, %v3524
        %v3532 = vcombine.high %v3492, %v3524
        %v3533 = vcombine.high %v1054, 0.0
        %v3535 = vunpack.c.l.s4 1983009808
        %v3536 = vunpack.c.0.s8 %v3535
        %v3537 = vlaneseq
        %v3538 = vshrl.u32 %v3537, 7
        %v3539 = vsub.s32 %v3536, %v3538
        %v3540 = vrot.slane %v1054, %v3539
        %v3542 = vunpack.c.l.s4 1983009808
        %v3543 = vunpack.c.0.s8 %v3542
        %v3544 = vlaneseq
        %v3545 = vshrl.u32 %v3544, 7
        %v3546 = vsub.s32 %v3543, %v3545
        %v3547 = vrot.slane %v3533, %v3546
        %v3548 = vcombine.high %v1078, 0.0
        %v3550 = vunpack.c.l.s4 1983009808
        %v3551 = vunpack.c.0.s8 %v3550
        %v3552 = vlaneseq
        %v3553 = vshrl.u32 %v3552, 7
        %v3554 = vsub.s32 %v3551, %v3553
        %v3555 = vrot.slane %v1078, %v3554
        %v3557 = vunpack.c.l.s4 1983009808
        %v3558 = vunpack.c.0.s8 %v3557
        %v3559 = vlaneseq
        %v3560 = vshrl.u32 %v3559, 7
        %v3561 = vsub.s32 %v3558, %v3560
        %v3562 = vrot.slane %v3548, %v3561
        %v3563 = vcombine.low %v3540, %v3555
        %v3564 = vcombine.high %v3540, %v3555
        %v3566 = vunpack.c.l.s4 1934713408
        %v3567 = vunpack.c.0.s8 %v3566
        %v3568 = vlaneseq
        %v3569 = vshrl.u32 %v3568, 7
        %v3570 = vsub.s32 %v3567, %v3569
        %v3571 = vrot.slane %v3563, %v3570
        %v3573 = vunpack.c.l.s4 1934713408
        %v3574 = vunpack.c.0.s8 %v3573
        %v3575 = vlaneseq
        %v3576 = vshrl.u32 %v3575, 7
        %v3577 = vsub.s32 %v3574, %v3576
        %v3578 = vrot.slane %v3564, %v3577
        %v3579 = vcombine.low %v3547, %v3562
        %v3580 = vcombine.high %v3547, %v3562
        %v3582 = vunpack.c.l.s4 1934713408
        %v3583 = vunpack.c.0.s8 %v3582
        %v3584 = vlaneseq
        %v3585 = vshrl.u32 %v3584, 7
        %v3586 = vsub.s32 %v3583, %v3585
        %v3587 = vrot.slane %v3579, %v3586
        %v3589 = vunpack.c.l.s4 1934713408
        %v3590 = vunpack.c.0.s8 %v3589
        %v3591 = vlaneseq
        %v3592 = vshrl.u32 %v3591, 7
        %v3593 = vsub.s32 %v3590, %v3592
        %v3594 = vrot.slane %v3580, %v3593
        %v3595 = vcombine.high %v3571, 0.0
        %v3596 = vcombine.high %v3578, 0.0
        %v3597 = vcombine.high %v3587, 0.0
        %v3598 = vcombine.high %v3594, 0.0
        %v3599 = vcombine.low %v314, %v511
        %v3600 = vcombine.high %v314, %v511
        %v3602 = vunpack.c.l.s4 1983009808
        %v3603 = vunpack.c.0.s8 %v3602
        %v3604 = vlaneseq
        %v3605 = vshrl.u32 %v3604, 7
        %v3606 = vsub.s32 %v3603, %v3605
        %v3607 = vrot.slane %v3599, %v3606
        %v3609 = vunpack.c.l.s4 1983009808
        %v3610 = vunpack.c.0.s8 %v3609
        %v3611 = vlaneseq
        %v3612 = vshrl.u32 %v3611, 7
        %v3613 = vsub.s32 %v3610, %v3612
        %v3614 = vrot.slane %v3600, %v3613
        %v3615 = vcombine.low %v478, %v544
        %v3616 = vcombine.high %v478, %v544
        %v3618 = vunpack.c.l.s4 1983009808
        %v3619 = vunpack.c.0.s8 %v3618
        %v3620 = vlaneseq
        %v3621 = vshrl.u32 %v3620, 7
        %v3622 = vsub.s32 %v3619, %v3621
        %v3623 = vrot.slane %v3615, %v3622
        %v3625 = vunpack.c.l.s4 1983009808
        %v3626 = vunpack.c.0.s8 %v3625
        %v3627 = vlaneseq
        %v3628 = vshrl.u32 %v3627, 7
        %v3629 = vsub.s32 %v3626, %v3628
        %v3630 = vrot.slane %v3616, %v3629
        %v3631 = vcombine.low %v577, %v643
        %v3632 = vcombine.high %v577, %v643
        %v3634 = vunpack.c.l.s4 1983009808
        %v3635 = vunpack.c.0.s8 %v3634
        %v3636 = vlaneseq
        %v3637 = vshrl.u32 %v3636, 7
        %v3638 = vsub.s32 %v3635, %v3637
        %v3639 = vrot.slane %v3631, %v3638
        %v3641 = vunpack.c.l.s4 1983009808
        %v3642 = vunpack.c.0.s8 %v3641
        %v3643 = vlaneseq
        %v3644 = vshrl.u32 %v3643, 7
        %v3645 = vsub.s32 %v3642, %v3644
        %v3646 = vrot.slane %v3632, %v3645
        %v3647 = vcombine.low %v610, %v723
        %v3648 = vcombine.high %v610, %v723
        %v3650 = vunpack.c.l.s4 1983009808
        %v3651 = vunpack.c.0.s8 %v3650
        %v3652 = vlaneseq
        %v3653 = vshrl.u32 %v3652, 7
        %v3654 = vsub.s32 %v3651, %v3653
        %v3655 = vrot.slane %v3647, %v3654
        %v3657 = vunpack.c.l.s4 1983009808
        %v3658 = vunpack.c.0.s8 %v3657
        %v3659 = vlaneseq
        %v3660 = vshrl.u32 %v3659, 7
        %v3661 = vsub.s32 %v3658, %v3660
        %v3662 = vrot.slane %v3648, %v3661
        %v3663 = vcombine.low %v3607, %v3623
        %v3664 = vcombine.high %v3607, %v3623
        %v3666 = vunpack.c.l.s4 1934713408
        %v3667 = vunpack.c.0.s8 %v3666
        %v3668 = vlaneseq
        %v3669 = vshrl.u32 %v3668, 7
        %v3670 = vsub.s32 %v3667, %v3669
        %v3671 = vrot.slane %v3663, %v3670
        %v3673 = vunpack.c.l.s4 1934713408
        %v3674 = vunpack.c.0.s8 %v3673
        %v3675 = vlaneseq
        %v3676 = vshrl.u32 %v3675, 7
        %v3677 = vsub.s32 %v3674, %v3676
        %v3678 = vrot.slane %v3664, %v3677
        %v3679 = vcombine.low %v3614, %v3630
        %v3680 = vcombine.high %v3614, %v3630
        %v3682 = vunpack.c.l.s4 1934713408
        %v3683 = vunpack.c.0.s8 %v3682
        %v3684 = vlaneseq
        %v3685 = vshrl.u32 %v3684, 7
        %v3686 = vsub.s32 %v3683, %v3685
        %v3687 = vrot.slane %v3679, %v3686
        %v3689 = vunpack.c.l.s4 1934713408
        %v3690 = vunpack.c.0.s8 %v3689
        %v3691 = vlaneseq
        %v3692 = vshrl.u32 %v3691, 7
        %v3693 = vsub.s32 %v3690, %v3692
        %v3694 = vrot.slane %v3680, %v3693
        %v3695 = vcombine.low %v3639, %v3655
        %v3696 = vcombine.high %v3639, %v3655
        %v3698 = vunpack.c.l.s4 1934713408
        %v3699 = vunpack.c.0.s8 %v3698
        %v3700 = vlaneseq
        %v3701 = vshrl.u32 %v3700, 7
        %v3702 = vsub.s32 %v3699, %v3701
        %v3703 = vrot.slane %v3695, %v3702
        %v3705 = vunpack.c.l.s4 1934713408
        %v3706 = vunpack.c.0.s8 %v3705
        %v3707 = vlaneseq
        %v3708 = vshrl.u32 %v3707, 7
        %v3709 = vsub.s32 %v3706, %v3708
        %v3710 = vrot.slane %v3696, %v3709
        %v3711 = vcombine.low %v3646, %v3662
        %v3712 = vcombine.high %v3646, %v3662
        %v3714 = vunpack.c.l.s4 1934713408
        %v3715 = vunpack.c.0.s8 %v3714
        %v3716 = vlaneseq
        %v3717 = vshrl.u32 %v3716, 7
        %v3718 = vsub.s32 %v3715, %v3717
        %v3719 = vrot.slane %v3711, %v3718
        %v3721 = vunpack.c.l.s4 1934713408
        %v3722 = vunpack.c.0.s8 %v3721
        %v3723 = vlaneseq
        %v3724 = vshrl.u32 %v3723, 7
        %v3725 = vsub.s32 %v3722, %v3724
        %v3726 = vrot.slane %v3712, %v3725
        %v3727 = vcombine.low %v3671, %v3703
        %v3728 = vcombine.high %v3671, %v3703
        %v3729 = vcombine.low %v3678, %v3710
        %v3730 = vcombine.high %v3678, %v3710
        %v3731 = vcombine.low %v3687, %v3719
        %v3732 = vcombine.high %v3687, %v3719
        %v3733 = vcombine.low %v3694, %v3726
        %v3734 = vcombine.high %v3694, %v3726
        %v3735 = vcombine.low %v754, %v820
        %v3736 = vcombine.high %v754, %v820
        %v3738 = vunpack.c.l.s4 1983009808
        %v3739 = vunpack.c.0.s8 %v3738
        %v3740 = vlaneseq
        %v3741 = vshrl.u32 %v3740, 7
        %v3742 = vsub.s32 %v3739, %v3741
        %v3743 = vrot.slane %v3735, %v3742
        %v3745 = vunpack.c.l.s4 1983009808
        %v3746 = vunpack.c.0.s8 %v3745
        %v3747 = vlaneseq
        %v3748 = vshrl.u32 %v3747, 7
        %v3749 = vsub.s32 %v3746, %v3748
        %v3750 = vrot.slane %v3736, %v3749
        %v3751 = vcombine.low %v787, %v853
        %v3752 = vcombine.high %v787, %v853
        %v3754 = vunpack.c.l.s4 1983009808
        %v3755 = vunpack.c.0.s8 %v3754
        %v3756 = vlaneseq
        %v3757 = vshrl.u32 %v3756, 7
        %v3758 = vsub.s32 %v3755, %v3757
        %v3759 = vrot.slane %v3751, %v3758
        %v3761 = vunpack.c.l.s4 1983009808
        %v3762 = vunpack.c.0.s8 %v3761
        %v3763 = vlaneseq
        %v3764 = vshrl.u32 %v3763, 7
        %v3765 = vsub.s32 %v3762, %v3764
        %v3766 = vrot.slane %v3752, %v3765
        %v3767 = vcombine.low %v886, %v998
        %v3768 = vcombine.high %v886, %v998
        %v3770 = vunpack.c.l.s4 1983009808
        %v3771 = vunpack.c.0.s8 %v3770
        %v3772 = vlaneseq
        %v3773 = vshrl.u32 %v3772, 7
        %v3774 = vsub.s32 %v3771, %v3773
        %v3775 = vrot.slane %v3767, %v3774
        %v3777 = vunpack.c.l.s4 1983009808
        %v3778 = vunpack.c.0.s8 %v3777
        %v3779 = vlaneseq
        %v3780 = vshrl.u32 %v3779, 7
        %v3781 = vsub.s32 %v3778, %v3780
        %v3782 = vrot.slane %v3768, %v3781
        %v3783 = vcombine.low %v919, %v1029
        %v3784 = vcombine.high %v919, %v1029
        %v3786 = vunpack.c.l.s4 1983009808
        %v3787 = vunpack.c.0.s8 %v3786
        %v3788 = vlaneseq
        %v3789 = vshrl.u32 %v3788, 7
        %v3790 = vsub.s32 %v3787, %v3789
        %v3791 = vrot.slane %v3783, %v3790
        %v3793 = vunpack.c.l.s4 1983009808
        %v3794 = vunpack.c.0.s8 %v3793
        %v3795 = vlaneseq
        %v3796 = vshrl.u32 %v3795, 7
        %v3797 = vsub.s32 %v3794, %v3796
        %v3798 = vrot.slane %v3784, %v3797
        %v3799 = vcombine.low %v3743, %v3759
        %v3800 = vcombine.high %v3743, %v3759
        %v3802 = vunpack.c.l.s4 1934713408
        %v3803 = vunpack.c.0.s8 %v3802
        %v3804 = vlaneseq
        %v3805 = vshrl.u32 %v3804, 7
        %v3806 = vsub.s32 %v3803, %v3805
        %v3807 = vrot.slane %v3799, %v3806
        %v3809 = vunpack.c.l.s4 1934713408
        %v3810 = vunpack.c.0.s8 %v3809
        %v3811 = vlaneseq
        %v3812 = vshrl.u32 %v3811, 7
        %v3813 = vsub.s32 %v3810, %v3812
        %v3814 = vrot.slane %v3800, %v3813
        %v3815 = vcombine.low %v3750, %v3766
        %v3816 = vcombine.high %v3750, %v3766
        %v3818 = vunpack.c.l.s4 1934713408
        %v3819 = vunpack.c.0.s8 %v3818
        %v3820 = vlaneseq
        %v3821 = vshrl.u32 %v3820, 7
        %v3822 = vsub.s32 %v3819, %v3821
        %v3823 = vrot.slane %v3815, %v3822
        %v3825 = vunpack.c.l.s4 1934713408
        %v3826 = vunpack.c.0.s8 %v3825
        %v3827 = vlaneseq
        %v3828 = vshrl.u32 %v3827, 7
        %v3829 = vsub.s32 %v3826, %v3828
        %v3830 = vrot.slane %v3816, %v3829
        %v3831 = vcombine.low %v3775, %v3791
        %v3832 = vcombine.high %v3775, %v3791
        %v3834 = vunpack.c.l.s4 1934713408
        %v3835 = vunpack.c.0.s8 %v3834
        %v3836 = vlaneseq
        %v3837 = vshrl.u32 %v3836, 7
        %v3838 = vsub.s32 %v3835, %v3837
        %v3839 = vrot.slane %v3831, %v3838
        %v3841 = vunpack.c.l.s4 1934713408
        %v3842 = vunpack.c.0.s8 %v3841
        %v3843 = vlaneseq
        %v3844 = vshrl.u32 %v3843, 7
        %v3845 = vsub.s32 %v3842, %v3844
        %v3846 = vrot.slane %v3832, %v3845
        %v3847 = vcombine.low %v3782, %v3798
        %v3848 = vcombine.high %v3782, %v3798
        %v3850 = vunpack.c.l.s4 1934713408
        %v3851 = vunpack.c.0.s8 %v3850
        %v3852 = vlaneseq
        %v3853 = vshrl.u32 %v3852, 7
        %v3854 = vsub.s32 %v3851, %v3853
        %v3855 = vrot.slane %v3847, %v3854
        %v3857 = vunpack.c.l.s4 1934713408
        %v3858 = vunpack.c.0.s8 %v3857
        %v3859 = vlaneseq
        %v3860 = vshrl.u32 %v3859, 7
        %v3861 = vsub.s32 %v3858, %v3860
        %v3862 = vrot.slane %v3848, %v3861
        %v3863 = vcombine.low %v3807, %v3839
        %v3864 = vcombine.high %v3807, %v3839
        %v3865 = vcombine.low %v3814, %v3846
        %v3866 = vcombine.high %v3814, %v3846
        %v3867 = vcombine.low %v3823, %v3855
        %v3868 = vcombine.high %v3823, %v3855
        %v3869 = vcombine.low %v3830, %v3862
        %v3870 = vcombine.high %v3830, %v3862
        %v3871 = vcombine.high %v1056, 0.0
        %v3873 = vunpack.c.l.s4 1983009808
        %v3874 = vunpack.c.0.s8 %v3873
        %v3875 = vlaneseq
        %v3876 = vshrl.u32 %v3875, 7
        %v3877 = vsub.s32 %v3874, %v3876
        %v3878 = vrot.slane %v1056, %v3877
        %v3880 = vunpack.c.l.s4 1983009808
        %v3881 = vunpack.c.0.s8 %v3880
        %v3882 = vlaneseq
        %v3883 = vshrl.u32 %v3882, 7
        %v3884 = vsub.s32 %v3881, %v3883
        %v3885 = vrot.slane %v3871, %v3884
        %v3886 = vcombine.high %v1080, 0.0
        %v3888 = vunpack.c.l.s4 1983009808
        %v3889 = vunpack.c.0.s8 %v3888
        %v3890 = vlaneseq
        %v3891 = vshrl.u32 %v3890, 7
        %v3892 = vsub.s32 %v3889, %v3891
        %v3893 = vrot.slane %v1080, %v3892
        %v3895 = vunpack.c.l.s4 1983009808
        %v3896 = vunpack.c.0.s8 %v3895
        %v3897 = vlaneseq
        %v3898 = vshrl.u32 %v3897, 7
        %v3899 = vsub.s32 %v3896, %v3898
        %v3900 = vrot.slane %v3886, %v3899
        %v3901 = vcombine.low %v3878, %v3893
        %v3902 = vcombine.high %v3878, %v3893
        %v3904 = vunpack.c.l.s4 1934713408
        %v3905 = vunpack.c.0.s8 %v3904
        %v3906 = vlaneseq
        %v3907 = vshrl.u32 %v3906, 7
        %v3908 = vsub.s32 %v3905, %v3907
        %v3909 = vrot.slane %v3901, %v3908
        %v3911 = vunpack.c.l.s4 1934713408
        %v3912 = vunpack.c.0.s8 %v3911
        %v3913 = vlaneseq
        %v3914 = vshrl.u32 %v3913, 7
        %v3915 = vsub.s32 %v3912, %v3914
        %v3916 = vrot.slane %v3902, %v3915
        %v3917 = vcombine.low %v3885, %v3900
        %v3918 = vcombine.high %v3885, %v3900
        %v3920 = vunpack.c.l.s4 1934713408
        %v3921 = vunpack.c.0.s8 %v3920
        %v3922 = vlaneseq
        %v3923 = vshrl.u32 %v3922, 7
        %v3924 = vsub.s32 %v3921, %v3923
        %v3925 = vrot.slane %v3917, %v3924
        %v3927 = vunpack.c.l.s4 1934713408
        %v3928 = vunpack.c.0.s8 %v3927
        %v3929 = vlaneseq
        %v3930 = vshrl.u32 %v3929, 7
        %v3931 = vsub.s32 %v3928, %v3930
        %v3932 = vrot.slane %v3918, %v3931
        %v3933 = vcombine.high %v3909, 0.0
        %v3934 = vcombine.high %v3916, 0.0
        %v3935 = vcombine.high %v3925, 0.0
        %v3936 = vcombine.high %v3932, 0.0
        %v3937 = vcombine.low %v320, %v513
        %v3938 = vcombine.high %v320, %v513
        %v3940 = vunpack.c.l.s4 1983009808
        %v3941 = vunpack.c.0.s8 %v3940
        %v3942 = vlaneseq
        %v3943 = vshrl.u32 %v3942, 7
        %v3944 = vsub.s32 %v3941, %v3943
        %v3945 = vrot.slane %v3937, %v3944
        %v3947 = vunpack.c.l.s4 1983009808
        %v3948 = vunpack.c.0.s8 %v3947
        %v3949 = vlaneseq
        %v3950 = vshrl.u32 %v3949, 7
        %v3951 = vsub.s32 %v3948, %v3950
        %v3952 = vrot.slane %v3938, %v3951
        %v3953 = vcombine.low %v480, %v546
        %v3954 = vcombine.high %v480, %v546
        %v3956 = vunpack.c.l.s4 1983009808
        %v3957 = vunpack.c.0.s8 %v3956
        %v3958 = vlaneseq
        %v3959 = vshrl.u32 %v3958, 7
        %v3960 = vsub.s32 %v3957, %v3959
        %v3961 = vrot.slane %v3953, %v3960
        %v3963 = vunpack.c.l.s4 1983009808
        %v3964 = vunpack.c.0.s8 %v3963
        %v3965 = vlaneseq
        %v3966 = vshrl.u32 %v3965, 7
        %v3967 = vsub.s32 %v3964, %v3966
        %v3968 = vrot.slane %v3954, %v3967
        %v3969 = vcombine.low %v579, %v645
        %v3970 = vcombine.high %v579, %v645
        %v3972 = vunpack.c.l.s4 1983009808
        %v3973 = vunpack.c.0.s8 %v3972
        %v3974 = vlaneseq
        %v3975 = vshrl.u32 %v3974, 7
        %v3976 = vsub.s32 %v3973, %v3975
        %v3977 = vrot.slane %v3969, %v3976
        %v3979 = vunpack.c.l.s4 1983009808
        %v3980 = vunpack.c.0.s8 %v3979
        %v3981 = vlaneseq
        %v3982 = vshrl.u32 %v3981, 7
        %v3983 = vsub.s32 %v3980, %v3982
        %v3984 = vrot.slane %v3970, %v3983
        %v3985 = vcombine.low %v612, %v724
        %v3986 = vcombine.high %v612, %v724
        %v3988 = vunpack.c.l.s4 1983009808
        %v3989 = vunpack.c.0.s8 %v3988
        %v3990 = vlaneseq
        %v3991 = vshrl.u32 %v3990, 7
        %v3992 = vsub.s32 %v3989, %v3991
        %v3993 = vrot.slane %v3985, %v3992
        %v3995 = vunpack.c.l.s4 1983009808
        %v3996 = vunpack.c.0.s8 %v3995
        %v3997 = vlaneseq
        %v3998 = vshrl.u32 %v3997, 7
        %v3999 = vsub.s32 %v3996, %v3998
        %v4000 = vrot.slane %v3986, %v3999
        %v4001 = vcombine.low %v3945, %v3961
        %v4002 = vcombine.high %v3945, %v3961
        %v4004 = vunpack.c.l.s4 1934713408
        %v4005 = vunpack.c.0.s8 %v4004
        %v4006 = vlaneseq
        %v4007 = vshrl.u32 %v4006, 7
        %v4008 = vsub.s32 %v4005, %v4007
        %v4009 = vrot.slane %v4001, %v4008
        %v4011 = vunpack.c.l.s4 1934713408
        %v4012 = vunpack.c.0.s8 %v4011
        %v4013 = vlaneseq
        %v4014 = vshrl.u32 %v4013, 7
        %v4015 = vsub.s32 %v4012, %v4014
        %v4016 = vrot.slane %v4002, %v4015
        %v4017 = vcombine.low %v3952, %v3968
        %v4018 = vcombine.high %v3952, %v3968
        %v4020 = vunpack.c.l.s4 1934713408
        %v4021 = vunpack.c.0.s8 %v4020
        %v4022 = vlaneseq
        %v4023 = vshrl.u32 %v4022, 7
        %v4024 = vsub.s32 %v4021, %v4023
        %v4025 = vrot.slane %v4017, %v4024
        %v4027 = vunpack.c.l.s4 1934713408
        %v4028 = vunpack.c.0.s8 %v4027
        %v4029 = vlaneseq
        %v4030 = vshrl.u32 %v4029, 7
        %v4031 = vsub.s32 %v4028, %v4030
        %v4032 = vrot.slane %v4018, %v4031
        %v4033 = vcombine.low %v3977, %v3993
        %v4034 = vcombine.high %v3977, %v3993
        %v4036 = vunpack.c.l.s4 1934713408
        %v4037 = vunpack.c.0.s8 %v4036
        %v4038 = vlaneseq
        %v4039 = vshrl.u32 %v4038, 7
        %v4040 = vsub.s32 %v4037, %v4039
        %v4041 = vrot.slane %v4033, %v4040
        %v4043 = vunpack.c.l.s4 1934713408
        %v4044 = vunpack.c.0.s8 %v4043
        %v4045 = vlaneseq
        %v4046 = vshrl.u32 %v4045, 7
        %v4047 = vsub.s32 %v4044, %v4046
        %v4048 = vrot.slane %v4034, %v4047
        %v4049 = vcombine.low %v3984, %v4000
        %v4050 = vcombine.high %v3984, %v4000
        %v4052 = vunpack.c.l.s4 1934713408
        %v4053 = vunpack.c.0.s8 %v4052
        %v4054 = vlaneseq
        %v4055 = vshrl.u32 %v4054, 7
        %v4056 = vsub.s32 %v4053, %v4055
        %v4057 = vrot.slane %v4049, %v4056
        %v4059 = vunpack.c.l.s4 1934713408
        %v4060 = vunpack.c.0.s8 %v4059
        %v4061 = vlaneseq
        %v4062 = vshrl.u32 %v4061, 7
        %v4063 = vsub.s32 %v4060, %v4062
        %v4064 = vrot.slane %v4050, %v4063
        %v4065 = vcombine.low %v4009, %v4041
        %v4066 = vcombine.high %v4009, %v4041
        %v4067 = vcombine.low %v4016, %v4048
        %v4068 = vcombine.high %v4016, %v4048
        %v4069 = vcombine.low %v4025, %v4057
        %v4070 = vcombine.high %v4025, %v4057
        %v4071 = vcombine.low %v4032, %v4064
        %v4072 = vcombine.high %v4032, %v4064
        %v4073 = vcombine.low %v756, %v822
        %v4074 = vcombine.high %v756, %v822
        %v4076 = vunpack.c.l.s4 1983009808
        %v4077 = vunpack.c.0.s8 %v4076
        %v4078 = vlaneseq
        %v4079 = vshrl.u32 %v4078, 7
        %v4080 = vsub.s32 %v4077, %v4079
        %v4081 = vrot.slane %v4073, %v4080
        %v4083 = vunpack.c.l.s4 1983009808
        %v4084 = vunpack.c.0.s8 %v4083
        %v4085 = vlaneseq
        %v4086 = vshrl.u32 %v4085, 7
        %v4087 = vsub.s32 %v4084, %v4086
        %v4088 = vrot.slane %v4074, %v4087
        %v4089 = vcombine.low %v789, %v855
        %v4090 = vcombine.high %v789, %v855
        %v4092 = vunpack.c.l.s4 1983009808
        %v4093 = vunpack.c.0.s8 %v4092
        %v4094 = vlaneseq
        %v4095 = vshrl.u32 %v4094, 7
        %v4096 = vsub.s32 %v4093, %v4095
        %v4097 = vrot.slane %v4089, %v4096
        %v4099 = vunpack.c.l.s4 1983009808
        %v4100 = vunpack.c.0.s8 %v4099
        %v4101 = vlaneseq
        %v4102 = vshrl.u32 %v4101, 7
        %v4103 = vsub.s32 %v4100, %v4102
        %v4104 = vrot.slane %v4090, %v4103
        %v4105 = vcombine.low %v888, %v999
        %v4106 = vcombine.high %v888, %v999
        %v4108 = vunpack.c.l.s4 1983009808
        %v4109 = vunpack.c.0.s8 %v4108
        %v4110 = vlaneseq
        %v4111 = vshrl.u32 %v4110, 7
        %v4112 = vsub.s32 %v4109, %v4111
        %v4113 = vrot.slane %v4105, %v4112
        %v4115 = vunpack.c.l.s4 1983009808
        %v4116 = vunpack.c.0.s8 %v4115
        %v4117 = vlaneseq
        %v4118 = vshrl.u32 %v4117, 7
        %v4119 = vsub.s32 %v4116, %v4118
        %v4120 = vrot.slane %v4106, %v4119
        %v4121 = vcombine.low %v921, %v1031
        %v4122 = vcombine.high %v921, %v1031
        %v4124 = vunpack.c.l.s4 1983009808
        %v4125 = vunpack.c.0.s8 %v4124
        %v4126 = vlaneseq
        %v4127 = vshrl.u32 %v4126, 7
        %v4128 = vsub.s32 %v4125, %v4127
        %v4129 = vrot.slane %v4121, %v4128
        %v4131 = vunpack.c.l.s4 1983009808
        %v4132 = vunpack.c.0.s8 %v4131
        %v4133 = vlaneseq
        %v4134 = vshrl.u32 %v4133, 7
        %v4135 = vsub.s32 %v4132, %v4134
        %v4136 = vrot.slane %v4122, %v4135
        %v4137 = vcombine.low %v4081, %v4097
        %v4138 = vcombine.high %v4081, %v4097
        %v4140 = vunpack.c.l.s4 1934713408
        %v4141 = vunpack.c.0.s8 %v4140
        %v4142 = vlaneseq
        %v4143 = vshrl.u32 %v4142, 7
        %v4144 = vsub.s32 %v4141, %v4143
        %v4145 = vrot.slane %v4137, %v4144
        %v4147 = vunpack.c.l.s4 1934713408
        %v4148 = vunpack.c.0.s8 %v4147
        %v4149 = vlaneseq
        %v4150 = vshrl.u32 %v4149, 7
        %v4151 = vsub.s32 %v4148, %v4150
        %v4152 = vrot.slane %v4138, %v4151
        %v4153 = vcombine.low %v4088, %v4104
        %v4154 = vcombine.high %v4088, %v4104
        %v4156 = vunpack.c.l.s4 1934713408
        %v4157 = vunpack.c.0.s8 %v4156
        %v4158 = vlaneseq
        %v4159 = vshrl.u32 %v4158, 7
        %v4160 = vsub.s32 %v4157, %v4159
        %v4161 = vrot.slane %v4153, %v4160
        %v4163 = vunpack.c.l.s4 1934713408
        %v4164 = vunpack.c.0.s8 %v4163
        %v4165 = vlaneseq
        %v4166 = vshrl.u32 %v4165, 7
        %v4167 = vsub.s32 %v4164, %v4166
        %v4168 = vrot.slane %v4154, %v4167
        %v4169 = vcombine.low %v4113, %v4129
        %v4170 = vcombine.high %v4113, %v4129
        %v4172 = vunpack.c.l.s4 1934713408
        %v4173 = vunpack.c.0.s8 %v4172
        %v4174 = vlaneseq
        %v4175 = vshrl.u32 %v4174, 7
        %v4176 = vsub.s32 %v4173, %v4175
        %v4177 = vrot.slane %v4169, %v4176
        %v4179 = vunpack.c.l.s4 1934713408
        %v4180 = vunpack.c.0.s8 %v4179
        %v4181 = vlaneseq
        %v4182 = vshrl.u32 %v4181, 7
        %v4183 = vsub.s32 %v4180, %v4182
        %v4184 = vrot.slane %v4170, %v4183
        %v4185 = vcombine.low %v4120, %v4136
        %v4186 = vcombine.high %v4120, %v4136
        %v4188 = vunpack.c.l.s4 1934713408
        %v4189 = vunpack.c.0.s8 %v4188
        %v4190 = vlaneseq
        %v4191 = vshrl.u32 %v4190, 7
        %v4192 = vsub.s32 %v4189, %v4191
        %v4193 = vrot.slane %v4185, %v4192
        %v4195 = vunpack.c.l.s4 1934713408
        %v4196 = vunpack.c.0.s8 %v4195
        %v4197 = vlaneseq
        %v4198 = vshrl.u32 %v4197, 7
        %v4199 = vsub.s32 %v4196, %v4198
        %v4200 = vrot.slane %v4186, %v4199
        %v4201 = vcombine.low %v4145, %v4177
        %v4202 = vcombine.high %v4145, %v4177
        %v4203 = vcombine.low %v4152, %v4184
        %v4204 = vcombine.high %v4152, %v4184
        %v4205 = vcombine.low %v4161, %v4193
        %v4206 = vcombine.high %v4161, %v4193
        %v4207 = vcombine.low %v4168, %v4200
        %v4208 = vcombine.high %v4168, %v4200
        %v4209 = vcombine.high %v1058, 0.0
        %v4211 = vunpack.c.l.s4 1983009808
        %v4212 = vunpack.c.0.s8 %v4211
        %v4213 = vlaneseq
        %v4214 = vshrl.u32 %v4213, 7
        %v4215 = vsub.s32 %v4212, %v4214
        %v4216 = vrot.slane %v1058, %v4215
        %v4218 = vunpack.c.l.s4 1983009808
        %v4219 = vunpack.c.0.s8 %v4218
        %v4220 = vlaneseq
        %v4221 = vshrl.u32 %v4220, 7
        %v4222 = vsub.s32 %v4219, %v4221
        %v4223 = vrot.slane %v4209, %v4222
        %v4224 = vcombine.high %v1082, 0.0
        %v4226 = vunpack.c.l.s4 1983009808
        %v4227 = vunpack.c.0.s8 %v4226
        %v4228 = vlaneseq
        %v4229 = vshrl.u32 %v4228, 7
        %v4230 = vsub.s32 %v4227, %v4229
        %v4231 = vrot.slane %v1082, %v4230
        %v4233 = vunpack.c.l.s4 1983009808
        %v4234 = vunpack.c.0.s8 %v4233
        %v4235 = vlaneseq
        %v4236 = vshrl.u32 %v4235, 7
        %v4237 = vsub.s32 %v4234, %v4236
        %v4238 = vrot.slane %v4224, %v4237
        %v4239 = vcombine.low %v4216, %v4231
        %v4240 = vcombine.high %v4216, %v4231
        %v4242 = vunpack.c.l.s4 1934713408
        %v4243 = vunpack.c.0.s8 %v4242
        %v4244 = vlaneseq
        %v4245 = vshrl.u32 %v4244, 7
        %v4246 = vsub.s32 %v4243, %v4245
        %v4247 = vrot.slane %v4239, %v4246
        %v4249 = vunpack.c.l.s4 1934713408
        %v4250 = vunpack.c.0.s8 %v4249
        %v4251 = vlaneseq
        %v4252 = vshrl.u32 %v4251, 7
        %v4253 = vsub.s32 %v4250, %v4252
        %v4254 = vrot.slane %v4240, %v4253
        %v4255 = vcombine.low %v4223, %v4238
        %v4256 = vcombine.high %v4223, %v4238
        %v4258 = vunpack.c.l.s4 1934713408
        %v4259 = vunpack.c.0.s8 %v4258
        %v4260 = vlaneseq
        %v4261 = vshrl.u32 %v4260, 7
        %v4262 = vsub.s32 %v4259, %v4261
        %v4263 = vrot.slane %v4255, %v4262
        %v4265 = vunpack.c.l.s4 1934713408
        %v4266 = vunpack.c.0.s8 %v4265
        %v4267 = vlaneseq
        %v4268 = vshrl.u32 %v4267, 7
        %v4269 = vsub.s32 %v4266, %v4268
        %v4270 = vrot.slane %v4256, %v4269
        %v4271 = vcombine.high %v4247, 0.0
        %v4272 = vcombine.high %v4254, 0.0
        %v4273 = vcombine.high %v4263, 0.0
        %v4274 = vcombine.high %v4270, 0.0
        %v4275 = vcombine.low %v326, %v515
        %v4276 = vcombine.high %v326, %v515
        %v4278 = vunpack.c.l.s4 1983009808
        %v4279 = vunpack.c.0.s8 %v4278
        %v4280 = vlaneseq
        %v4281 = vshrl.u32 %v4280, 7
        %v4282 = vsub.s32 %v4279, %v4281
        %v4283 = vrot.slane %v4275, %v4282
        %v4285 = vunpack.c.l.s4 1983009808
        %v4286 = vunpack.c.0.s8 %v4285
        %v4287 = vlaneseq
        %v4288 = vshrl.u32 %v4287, 7
        %v4289 = vsub.s32 %v4286, %v4288
        %v4290 = vrot.slane %v4276, %v4289
        %v4291 = vcombine.low %v482, %v548
        %v4292 = vcombine.high %v482, %v548
        %v4294 = vunpack.c.l.s4 1983009808
        %v4295 = vunpack.c.0.s8 %v4294
        %v4296 = vlaneseq
        %v4297 = vshrl.u32 %v4296, 7
        %v4298 = vsub.s32 %v4295, %v4297
        %v4299 = vrot.slane %v4291, %v4298
        %v4301 = vunpack.c.l.s4 1983009808
        %v4302 = vunpack.c.0.s8 %v4301
        %v4303 = vlaneseq
        %v4304 = vshrl.u32 %v4303, 7
        %v4305 = vsub.s32 %v4302, %v4304
        %v4306 = vrot.slane %v4292, %v4305
        %v4307 = vcombine.low %v581, %v647
        %v4308 = vcombine.high %v581, %v647
        %v4310 = vunpack.c.l.s4 1983009808
        %v4311 = vunpack.c.0.s8 %v4310
        %v4312 = vlaneseq
        %v4313 = vshrl.u32 %v4312, 7
        %v4314 = vsub.s32 %v4311, %v4313
        %v4315 = vrot.slane %v4307, %v4314
        %v4317 = vunpack.c.l.s4 1983009808
        %v4318 = vunpack.c.0.s8 %v4317
        %v4319 = vlaneseq
        %v4320 = vshrl.u32 %v4319, 7
        %v4321 = vsub.s32 %v4318, %v4320
        %v4322 = vrot.slane %v4308, %v4321
        %v4323 = vcombine.low %v614, %v725
        %v4324 = vcombine.high %v614, %v725
        %v4326 = vunpack.c.l.s4 1983009808
        %v4327 = vunpack.c.0.s8 %v4326
        %v4328 = vlaneseq
        %v4329 = vshrl.u32 %v4328, 7
        %v4330 = vsub.s32 %v4327, %v4329
        %v4331 = vrot.slane %v4323, %v4330
        %v4333 = vunpack.c.l.s4 1983009808
        %v4334 = vunpack.c.0.s8 %v4333
        %v4335 = vlaneseq
        %v4336 = vshrl.u32 %v4335, 7
        %v4337 = vsub.s32 %v4334, %v4336
        %v4338 = vrot.slane %v4324, %v4337
        %v4339 = vcombine.low %v4283, %v4299
        %v4340 = vcombine.high %v4283, %v4299
        %v4342 = vunpack.c.l.s4 1934713408
        %v4343 = vunpack.c.0.s8 %v4342
        %v4344 = vlaneseq
        %v4345 = vshrl.u32 %v4344, 7
        %v4346 = vsub.s32 %v4343, %v4345
        %v4347 = vrot.slane %v4339, %v4346
        %v4349 = vunpack.c.l.s4 1934713408
        %v4350 = vunpack.c.0.s8 %v4349
        %v4351 = vlaneseq
        %v4352 = vshrl.u32 %v4351, 7
        %v4353 = vsub.s32 %v4350, %v4352
        %v4354 = vrot.slane %v4340, %v4353
        %v4355 = vcombine.low %v4290, %v4306
        %v4356 = vcombine.high %v4290, %v4306
        %v4358 = vunpack.c.l.s4 1934713408
        %v4359 = vunpack.c.0.s8 %v4358
        %v4360 = vlaneseq
        %v4361 = vshrl.u32 %v4360, 7
        %v4362 = vsub.s32 %v4359, %v4361
        %v4363 = vrot.slane %v4355, %v4362
        %v4365 = vunpack.c.l.s4 1934713408
        %v4366 = vunpack.c.0.s8 %v4365
        %v4367 = vlaneseq
        %v4368 = vshrl.u32 %v4367, 7
        %v4369 = vsub.s32 %v4366, %v4368
        %v4370 = vrot.slane %v4356, %v4369
        %v4371 = vcombine.low %v4315, %v4331
        %v4372 = vcombine.high %v4315, %v4331
        %v4374 = vunpack.c.l.s4 1934713408
        %v4375 = vunpack.c.0.s8 %v4374
        %v4376 = vlaneseq
        %v4377 = vshrl.u32 %v4376, 7
        %v4378 = vsub.s32 %v4375, %v4377
        %v4379 = vrot.slane %v4371, %v4378
        %v4381 = vunpack.c.l.s4 1934713408
        %v4382 = vunpack.c.0.s8 %v4381
        %v4383 = vlaneseq
        %v4384 = vshrl.u32 %v4383, 7
        %v4385 = vsub.s32 %v4382, %v4384
        %v4386 = vrot.slane %v4372, %v4385
        %v4387 = vcombine.low %v4322, %v4338
        %v4388 = vcombine.high %v4322, %v4338
        %v4390 = vunpack.c.l.s4 1934713408
        %v4391 = vunpack.c.0.s8 %v4390
        %v4392 = vlaneseq
        %v4393 = vshrl.u32 %v4392, 7
        %v4394 = vsub.s32 %v4391, %v4393
        %v4395 = vrot.slane %v4387, %v4394
        %v4397 = vunpack.c.l.s4 1934713408
        %v4398 = vunpack.c.0.s8 %v4397
        %v4399 = vlaneseq
        %v4400 = vshrl.u32 %v4399, 7
        %v4401 = vsub.s32 %v4398, %v4400
        %v4402 = vrot.slane %v4388, %v4401
        %v4403 = vcombine.low %v4347, %v4379
        %v4404 = vcombine.high %v4347, %v4379
        %v4405 = vcombine.low %v4354, %v4386
        %v4406 = vcombine.high %v4354, %v4386
        %v4407 = vcombine.low %v4363, %v4395
        %v4408 = vcombine.high %v4363, %v4395
        %v4409 = vcombine.low %v4370, %v4402
        %v4410 = vcombine.high %v4370, %v4402
        %v4411 = vcombine.low %v758, %v824
        %v4412 = vcombine.high %v758, %v824
        %v4414 = vunpack.c.l.s4 1983009808
        %v4415 = vunpack.c.0.s8 %v4414
        %v4416 = vlaneseq
        %v4417 = vshrl.u32 %v4416, 7
        %v4418 = vsub.s32 %v4415, %v4417
        %v4419 = vrot.slane %v4411, %v4418
        %v4421 = vunpack.c.l.s4 1983009808
        %v4422 = vunpack.c.0.s8 %v4421
        %v4423 = vlaneseq
        %v4424 = vshrl.u32 %v4423, 7
        %v4425 = vsub.s32 %v4422, %v4424
        %v4426 = vrot.slane %v4412, %v4425
        %v4427 = vcombine.low %v791, %v857
        %v4428 = vcombine.high %v791, %v857
        %v4430 = vunpack.c.l.s4 1983009808
        %v4431 = vunpack.c.0.s8 %v4430
        %v4432 = vlaneseq
        %v4433 = vshrl.u32 %v4432, 7
        %v4434 = vsub.s32 %v4431, %v4433
        %v4435 = vrot.slane %v4427, %v4434
        %v4437 = vunpack.c.l.s4 1983009808
        %v4438 = vunpack.c.0.s8 %v4437
        %v4439 = vlaneseq
        %v4440 = vshrl.u32 %v4439, 7
        %v4441 = vsub.s32 %v4438, %v4440
        %v4442 = vrot.slane %v4428, %v4441
        %v4443 = vcombine.low %v890, %v1000
        %v4444 = vcombine.high %v890, %v1000
        %v4446 = vunpack.c.l.s4 1983009808
        %v4447 = vunpack.c.0.s8 %v4446
        %v4448 = vlaneseq
        %v4449 = vshrl.u32 %v4448, 7
        %v4450 = vsub.s32 %v4447, %v4449
        %v4451 = vrot.slane %v4443, %v4450
        %v4453 = vunpack.c.l.s4 1983009808
        %v4454 = vunpack.c.0.s8 %v4453
        %v4455 = vlaneseq
        %v4456 = vshrl.u32 %v4455, 7
        %v4457 = vsub.s32 %v4454, %v4456
        %v4458 = vrot.slane %v4444, %v4457
        %v4459 = vcombine.low %v923, %v1033
        %v4460 = vcombine.high %v923, %v1033
        %v4462 = vunpack.c.l.s4 1983009808
        %v4463 = vunpack.c.0.s8 %v4462
        %v4464 = vlaneseq
        %v4465 = vshrl.u32 %v4464, 7
        %v4466 = vsub.s32 %v4463, %v4465
        %v4467 = vrot.slane %v4459, %v4466
        %v4469 = vunpack.c.l.s4 1983009808
        %v4470 = vunpack.c.0.s8 %v4469
        %v4471 = vlaneseq
        %v4472 = vshrl.u32 %v4471, 7
        %v4473 = vsub.s32 %v4470, %v4472
        %v4474 = vrot.slane %v4460, %v4473
        %v4475 = vcombine.low %v4419, %v4435
        %v4476 = vcombine.high %v4419, %v4435
        %v4478 = vunpack.c.l.s4 1934713408
        %v4479 = vunpack.c.0.s8 %v4478
        %v4480 = vlaneseq
        %v4481 = vshrl.u32 %v4480, 7
        %v4482 = vsub.s32 %v4479, %v4481
        %v4483 = vrot.slane %v4475, %v4482
        %v4485 = vunpack.c.l.s4 1934713408
        %v4486 = vunpack.c.0.s8 %v4485
        %v4487 = vlaneseq
        %v4488 = vshrl.u32 %v4487, 7
        %v4489 = vsub.s32 %v4486, %v4488
        %v4490 = vrot.slane %v4476, %v4489
        %v4491 = vcombine.low %v4426, %v4442
        %v4492 = vcombine.high %v4426, %v4442
        %v4494 = vunpack.c.l.s4 1934713408
        %v4495 = vunpack.c.0.s8 %v4494
        %v4496 = vlaneseq
        %v4497 = vshrl.u32 %v4496, 7
        %v4498 = vsub.s32 %v4495, %v4497
        %v4499 = vrot.slane %v4491, %v4498
        %v4501 = vunpack.c.l.s4 1934713408
        %v4502 = vunpack.c.0.s8 %v4501
        %v4503 = vlaneseq
        %v4504 = vshrl.u32 %v4503, 7
        %v4505 = vsub.s32 %v4502, %v4504
        %v4506 = vrot.slane %v4492, %v4505
        %v4507 = vcombine.low %v4451, %v4467
        %v4508 = vcombine.high %v4451, %v4467
        %v4510 = vunpack.c.l.s4 1934713408
        %v4511 = vunpack.c.0.s8 %v4510
        %v4512 = vlaneseq
        %v4513 = vshrl.u32 %v4512, 7
        %v4514 = vsub.s32 %v4511, %v4513
        %v4515 = vrot.slane %v4507, %v4514
        %v4517 = vunpack.c.l.s4 1934713408
        %v4518 = vunpack.c.0.s8 %v4517
        %v4519 = vlaneseq
        %v4520 = vshrl.u32 %v4519, 7
        %v4521 = vsub.s32 %v4518, %v4520
        %v4522 = vrot.slane %v4508, %v4521
        %v4523 = vcombine.low %v4458, %v4474
        %v4524 = vcombine.high %v4458, %v4474
        %v4526 = vunpack.c.l.s4 1934713408
        %v4527 = vunpack.c.0.s8 %v4526
        %v4528 = vlaneseq
        %v4529 = vshrl.u32 %v4528, 7
        %v4530 = vsub.s32 %v4527, %v4529
        %v4531 = vrot.slane %v4523, %v4530
        %v4533 = vunpack.c.l.s4 1934713408
        %v4534 = vunpack.c.0.s8 %v4533
        %v4535 = vlaneseq
        %v4536 = vshrl.u32 %v4535, 7
        %v4537 = vsub.s32 %v4534, %v4536
        %v4538 = vrot.slane %v4524, %v4537
        %v4539 = vcombine.low %v4483, %v4515
        %v4540 = vcombine.high %v4483, %v4515
        %v4541 = vcombine.low %v4490, %v4522
        %v4542 = vcombine.high %v4490, %v4522
        %v4543 = vcombine.low %v4499, %v4531
        %v4544 = vcombine.high %v4499, %v4531
        %v4545 = vcombine.low %v4506, %v4538
        %v4546 = vcombine.high %v4506, %v4538
        %v4547 = vcombine.high %v1060, 0.0
        %v4549 = vunpack.c.l.s4 1983009808
        %v4550 = vunpack.c.0.s8 %v4549
        %v4551 = vlaneseq
        %v4552 = vshrl.u32 %v4551, 7
        %v4553 = vsub.s32 %v4550, %v4552
        %v4554 = vrot.slane %v1060, %v4553
        %v4556 = vunpack.c.l.s4 1983009808
        %v4557 = vunpack.c.0.s8 %v4556
        %v4558 = vlaneseq
        %v4559 = vshrl.u32 %v4558, 7
        %v4560 = vsub.s32 %v4557, %v4559
        %v4561 = vrot.slane %v4547, %v4560
        %v4562 = vcombine.high %v1084, 0.0
        %v4564 = vunpack.c.l.s4 1983009808
        %v4565 = vunpack.c.0.s8 %v4564
        %v4566 = vlaneseq
        %v4567 = vshrl.u32 %v4566, 7
        %v4568 = vsub.s32 %v4565, %v4567
        %v4569 = vrot.slane %v1084, %v4568
        %v4571 = vunpack.c.l.s4 1983009808
        %v4572 = vunpack.c.0.s8 %v4571
        %v4573 = vlaneseq
        %v4574 = vshrl.u32 %v4573, 7
        %v4575 = vsub.s32 %v4572, %v4574
        %v4576 = vrot.slane %v4562, %v4575
        %v4577 = vcombine.low %v4554, %v4569
        %v4578 = vcombine.high %v4554, %v4569
        %v4580 = vunpack.c.l.s4 1934713408
        %v4581 = vunpack.c.0.s8 %v4580
        %v4582 = vlaneseq
        %v4583 = vshrl.u32 %v4582, 7
        %v4584 = vsub.s32 %v4581, %v4583
        %v4585 = vrot.slane %v4577, %v4584
        %v4587 = vunpack.c.l.s4 1934713408
        %v4588 = vunpack.c.0.s8 %v4587
        %v4589 = vlaneseq
        %v4590 = vshrl.u32 %v4589, 7
        %v4591 = vsub.s32 %v4588, %v4590
        %v4592 = vrot.slane %v4578, %v4591
        %v4593 = vcombine.low %v4561, %v4576
        %v4594 = vcombine.high %v4561, %v4576
        %v4596 = vunpack.c.l.s4 1934713408
        %v4597 = vunpack.c.0.s8 %v4596
        %v4598 = vlaneseq
        %v4599 = vshrl.u32 %v4598, 7
        %v4600 = vsub.s32 %v4597, %v4599
        %v4601 = vrot.slane %v4593, %v4600
        %v4603 = vunpack.c.l.s4 1934713408
        %v4604 = vunpack.c.0.s8 %v4603
        %v4605 = vlaneseq
        %v4606 = vshrl.u32 %v4605, 7
        %v4607 = vsub.s32 %v4604, %v4606
        %v4608 = vrot.slane %v4594, %v4607
        %v4609 = vcombine.high %v4585, 0.0
        %v4610 = vcombine.high %v4592, 0.0
        %v4611 = vcombine.high %v4601, 0.0
        %v4612 = vcombine.high %v4608, 0.0
        %vm4637 = vcmask 1046528
        %v4638 = vrot.slane %v1221, 1
        %v4639 = vrot.slane %v1357, 1
        %v4640 = vsel %vm4637, %v4638, %v4639
        %v4641 = vrot.slane %v1403, 1
        %v4642 = vsel %vm4637, %v4639, %v4641
        %v4643 = vrot.slane %v1222, 1
        %v4644 = vrot.slane %v1358, 1
        %v4645 = vsel %vm4637, %v4643, %v4644
        %v4646 = vrot.slane %v1427, 1
        %v4647 = vsel %vm4637, %v4644, %v4646
        %v4648 = vrot.slane %v1223, 1
        %v4649 = vrot.slane %v1359, 1
        %v4650 = vsel %vm4637, %v4648, %v4649
        %v4651 = vrot.slane %v1410, 1
        %v4652 = vsel %vm4637, %v4649, %v4651
        %v4653 = vrot.slane %v1224, 1
        %v4654 = vrot.slane %v1360, 1
        %v4655 = vsel %vm4637, %v4653, %v4654
        %v4656 = vrot.slane %v1428, 1
        %v4657 = vsel %vm4637, %v4654, %v4656
        %v4658 = vrot.slane %v1225, 1
        %v4659 = vrot.slane %v1361, 1
        %v4660 = vsel %vm4637, %v4658, %v4659
        %v4661 = vrot.slane %v1419, 1
        %v4662 = vsel %vm4637, %v4659, %v4661
        %v4663 = vrot.slane %v1226, 1
        %v4664 = vrot.slane %v1362, 1
        %v4665 = vsel %vm4637, %v4663, %v4664
        %v4666 = vrot.slane %v1429, 1
        %v4667 = vsel %vm4637, %v4664, %v4666
        %v4668 = vrot.slane %v1227, 1
        %v4669 = vrot.slane %v1363, 1
        %v4670 = vsel %vm4637, %v4668, %v4669
        %v4671 = vrot.slane %v1426, 1
        %v4672 = vsel %vm4637, %v4669, %v4671
        %v4673 = vrot.slane %v1228, 1
        %v4674 = vrot.slane %v1364, 1
        %v4675 = vsel %vm4637, %v4673, %v4674
        %v4676 = vrot.slane %v1430, 1
        %v4677 = vsel %vm4637, %v4674, %v4676
        %4678 = vrot.lane.b32.xlu0 %v4640, 127
        %v4679 = vpop.permute.xlu0 %4678
        %4680 = vrot.lane.b32.xlu0 %v4642, 127
        %v4681 = vpop.permute.xlu0 %4680
        %4682 = vrot.lane.b32.xlu0 %v4645, 127
        %v4683 = vpop.permute.xlu0 %4682
        %4684 = vrot.lane.b32.xlu0 %v4647, 127
        %v4685 = vpop.permute.xlu0 %4684
        %4686 = vrot.lane.b32.xlu0 %v4650, 127
        %v4687 = vpop.permute.xlu0 %4686
        %4688 = vrot.lane.b32.xlu0 %v4652, 127
        %v4689 = vpop.permute.xlu0 %4688
        %4690 = vrot.lane.b32.xlu0 %v4655, 127
        %v4691 = vpop.permute.xlu0 %4690
        %4692 = vrot.lane.b32.xlu0 %v4657, 127
        %v4693 = vpop.permute.xlu0 %4692
        %4694 = vrot.lane.b32.xlu0 %v4660, 127
        %v4695 = vpop.permute.xlu0 %4694
        %4696 = vrot.lane.b32.xlu0 %v4662, 127
        %v4697 = vpop.permute.xlu0 %4696
        %4698 = vrot.lane.b32.xlu0 %v4665, 127
        %v4699 = vpop.permute.xlu0 %4698
        %4700 = vrot.lane.b32.xlu0 %v4667, 127
        %v4701 = vpop.permute.xlu0 %4700
        %4702 = vrot.lane.b32.xlu0 %v4670, 127
        %v4703 = vpop.permute.xlu0 %4702
        %4704 = vrot.lane.b32.xlu0 %v4672, 127
        %v4705 = vpop.permute.xlu0 %4704
        %4706 = vrot.lane.b32.xlu0 %v4675, 127
        %v4707 = vpop.permute.xlu0 %4706
        %4708 = vrot.lane.b32.xlu0 %v4677, 127
        %v4709 = vpop.permute.xlu0 %4708
        %v4726 = vcombine.low %v4679, %v4687
        %v4727 = vcombine.high %v4679, %v4687
        %v4729 = vunpack.c.l.s4 1983009808
        %v4730 = vunpack.c.0.s8 %v4729
        %v4731 = vlaneseq
        %v4732 = vshrl.u32 %v4731, 7
        %v4733 = vsub.s32 %v4730, %v4732
        %v4734 = vrot.slane %v4726, %v4733
        %v4736 = vunpack.c.l.s4 1983009808
        %v4737 = vunpack.c.0.s8 %v4736
        %v4738 = vlaneseq
        %v4739 = vshrl.u32 %v4738, 7
        %v4740 = vsub.s32 %v4737, %v4739
        %v4741 = vrot.slane %v4727, %v4740
        %v4742 = vcombine.low %v4683, %v4691
        %v4743 = vcombine.high %v4683, %v4691
        %v4745 = vunpack.c.l.s4 1983009808
        %v4746 = vunpack.c.0.s8 %v4745
        %v4747 = vlaneseq
        %v4748 = vshrl.u32 %v4747, 7
        %v4749 = vsub.s32 %v4746, %v4748
        %v4750 = vrot.slane %v4742, %v4749
        %v4752 = vunpack.c.l.s4 1983009808
        %v4753 = vunpack.c.0.s8 %v4752
        %v4754 = vlaneseq
        %v4755 = vshrl.u32 %v4754, 7
        %v4756 = vsub.s32 %v4753, %v4755
        %v4757 = vrot.slane %v4743, %v4756
        %v4758 = vcombine.low %v4695, %v4703
        %v4759 = vcombine.high %v4695, %v4703
        %v4761 = vunpack.c.l.s4 1983009808
        %v4762 = vunpack.c.0.s8 %v4761
        %v4763 = vlaneseq
        %v4764 = vshrl.u32 %v4763, 7
        %v4765 = vsub.s32 %v4762, %v4764
        %v4766 = vrot.slane %v4758, %v4765
        %v4768 = vunpack.c.l.s4 1983009808
        %v4769 = vunpack.c.0.s8 %v4768
        %v4770 = vlaneseq
        %v4771 = vshrl.u32 %v4770, 7
        %v4772 = vsub.s32 %v4769, %v4771
        %v4773 = vrot.slane %v4759, %v4772
        %v4774 = vcombine.low %v4699, %v4707
        %v4775 = vcombine.high %v4699, %v4707
        %v4777 = vunpack.c.l.s4 1983009808
        %v4778 = vunpack.c.0.s8 %v4777
        %v4779 = vlaneseq
        %v4780 = vshrl.u32 %v4779, 7
        %v4781 = vsub.s32 %v4778, %v4780
        %v4782 = vrot.slane %v4774, %v4781
        %v4784 = vunpack.c.l.s4 1983009808
        %v4785 = vunpack.c.0.s8 %v4784
        %v4786 = vlaneseq
        %v4787 = vshrl.u32 %v4786, 7
        %v4788 = vsub.s32 %v4785, %v4787
        %v4789 = vrot.slane %v4775, %v4788
        %v4790 = vcombine.low %v4734, %v4750
        %v4791 = vcombine.high %v4734, %v4750
        %v4793 = vunpack.c.l.s4 1934713408
        %v4794 = vunpack.c.0.s8 %v4793
        %v4795 = vlaneseq
        %v4796 = vshrl.u32 %v4795, 7
        %v4797 = vsub.s32 %v4794, %v4796
        %v4798 = vrot.slane %v4790, %v4797
        %v4800 = vunpack.c.l.s4 1934713408
        %v4801 = vunpack.c.0.s8 %v4800
        %v4802 = vlaneseq
        %v4803 = vshrl.u32 %v4802, 7
        %v4804 = vsub.s32 %v4801, %v4803
        %v4805 = vrot.slane %v4791, %v4804
        %v4806 = vcombine.low %v4741, %v4757
        %v4807 = vcombine.high %v4741, %v4757
        %v4809 = vunpack.c.l.s4 1934713408
        %v4810 = vunpack.c.0.s8 %v4809
        %v4811 = vlaneseq
        %v4812 = vshrl.u32 %v4811, 7
        %v4813 = vsub.s32 %v4810, %v4812
        %v4814 = vrot.slane %v4806, %v4813
        %v4816 = vunpack.c.l.s4 1934713408
        %v4817 = vunpack.c.0.s8 %v4816
        %v4818 = vlaneseq
        %v4819 = vshrl.u32 %v4818, 7
        %v4820 = vsub.s32 %v4817, %v4819
        %v4821 = vrot.slane %v4807, %v4820
        %v4822 = vcombine.low %v4766, %v4782
        %v4823 = vcombine.high %v4766, %v4782
        %v4825 = vunpack.c.l.s4 1934713408
        %v4826 = vunpack.c.0.s8 %v4825
        %v4827 = vlaneseq
        %v4828 = vshrl.u32 %v4827, 7
        %v4829 = vsub.s32 %v4826, %v4828
        %v4830 = vrot.slane %v4822, %v4829
        %v4832 = vunpack.c.l.s4 1934713408
        %v4833 = vunpack.c.0.s8 %v4832
        %v4834 = vlaneseq
        %v4835 = vshrl.u32 %v4834, 7
        %v4836 = vsub.s32 %v4833, %v4835
        %v4837 = vrot.slane %v4823, %v4836
        %v4838 = vcombine.low %v4773, %v4789
        %v4839 = vcombine.high %v4773, %v4789
        %v4841 = vunpack.c.l.s4 1934713408
        %v4842 = vunpack.c.0.s8 %v4841
        %v4843 = vlaneseq
        %v4844 = vshrl.u32 %v4843, 7
        %v4845 = vsub.s32 %v4842, %v4844
        %v4846 = vrot.slane %v4838, %v4845
        %v4848 = vunpack.c.l.s4 1934713408
        %v4849 = vunpack.c.0.s8 %v4848
        %v4850 = vlaneseq
        %v4851 = vshrl.u32 %v4850, 7
        %v4852 = vsub.s32 %v4849, %v4851
        %v4853 = vrot.slane %v4839, %v4852
        %v4854 = vcombine.low %v4798, %v4830
        %v4855 = vcombine.high %v4798, %v4830
        %v4856 = vcombine.low %v4805, %v4837
        %v4857 = vcombine.high %v4805, %v4837
        %v4858 = vcombine.low %v4814, %v4846
        %v4859 = vcombine.high %v4814, %v4846
        %v4860 = vcombine.low %v4821, %v4853
        %v4861 = vcombine.high %v4821, %v4853
        %v4862 = vcombine.low %v4681, %v4689
        %v4863 = vcombine.high %v4681, %v4689
        %v4865 = vunpack.c.l.s4 1983009808
        %v4866 = vunpack.c.0.s8 %v4865
        %v4867 = vlaneseq
        %v4868 = vshrl.u32 %v4867, 7
        %v4869 = vsub.s32 %v4866, %v4868
        %v4870 = vrot.slane %v4862, %v4869
        %v4872 = vunpack.c.l.s4 1983009808
        %v4873 = vunpack.c.0.s8 %v4872
        %v4874 = vlaneseq
        %v4875 = vshrl.u32 %v4874, 7
        %v4876 = vsub.s32 %v4873, %v4875
        %v4877 = vrot.slane %v4863, %v4876
        %v4878 = vcombine.low %v4685, %v4693
        %v4879 = vcombine.high %v4685, %v4693
        %v4881 = vunpack.c.l.s4 1983009808
        %v4882 = vunpack.c.0.s8 %v4881
        %v4883 = vlaneseq
        %v4884 = vshrl.u32 %v4883, 7
        %v4885 = vsub.s32 %v4882, %v4884
        %v4886 = vrot.slane %v4878, %v4885
        %v4888 = vunpack.c.l.s4 1983009808
        %v4889 = vunpack.c.0.s8 %v4888
        %v4890 = vlaneseq
        %v4891 = vshrl.u32 %v4890, 7
        %v4892 = vsub.s32 %v4889, %v4891
        %v4893 = vrot.slane %v4879, %v4892
        %v4894 = vcombine.low %v4697, %v4705
        %v4895 = vcombine.high %v4697, %v4705
        %v4897 = vunpack.c.l.s4 1983009808
        %v4898 = vunpack.c.0.s8 %v4897
        %v4899 = vlaneseq
        %v4900 = vshrl.u32 %v4899, 7
        %v4901 = vsub.s32 %v4898, %v4900
        %v4902 = vrot.slane %v4894, %v4901
        %v4904 = vunpack.c.l.s4 1983009808
        %v4905 = vunpack.c.0.s8 %v4904
        %v4906 = vlaneseq
        %v4907 = vshrl.u32 %v4906, 7
        %v4908 = vsub.s32 %v4905, %v4907
        %v4909 = vrot.slane %v4895, %v4908
        %v4910 = vcombine.low %v4701, %v4709
        %v4911 = vcombine.high %v4701, %v4709
        %v4913 = vunpack.c.l.s4 1983009808
        %v4914 = vunpack.c.0.s8 %v4913
        %v4915 = vlaneseq
        %v4916 = vshrl.u32 %v4915, 7
        %v4917 = vsub.s32 %v4914, %v4916
        %v4918 = vrot.slane %v4910, %v4917
        %v4920 = vunpack.c.l.s4 1983009808
        %v4921 = vunpack.c.0.s8 %v4920
        %v4922 = vlaneseq
        %v4923 = vshrl.u32 %v4922, 7
        %v4924 = vsub.s32 %v4921, %v4923
        %v4925 = vrot.slane %v4911, %v4924
        %v4926 = vcombine.low %v4870, %v4886
        %v4927 = vcombine.high %v4870, %v4886
        %v4929 = vunpack.c.l.s4 1934713408
        %v4930 = vunpack.c.0.s8 %v4929
        %v4931 = vlaneseq
        %v4932 = vshrl.u32 %v4931, 7
        %v4933 = vsub.s32 %v4930, %v4932
        %v4934 = vrot.slane %v4926, %v4933
        %v4936 = vunpack.c.l.s4 1934713408
        %v4937 = vunpack.c.0.s8 %v4936
        %v4938 = vlaneseq
        %v4939 = vshrl.u32 %v4938, 7
        %v4940 = vsub.s32 %v4937, %v4939
        %v4941 = vrot.slane %v4927, %v4940
        %v4942 = vcombine.low %v4877, %v4893
        %v4943 = vcombine.high %v4877, %v4893
        %v4945 = vunpack.c.l.s4 1934713408
        %v4946 = vunpack.c.0.s8 %v4945
        %v4947 = vlaneseq
        %v4948 = vshrl.u32 %v4947, 7
        %v4949 = vsub.s32 %v4946, %v4948
        %v4950 = vrot.slane %v4942, %v4949
        %v4952 = vunpack.c.l.s4 1934713408
        %v4953 = vunpack.c.0.s8 %v4952
        %v4954 = vlaneseq
        %v4955 = vshrl.u32 %v4954, 7
        %v4956 = vsub.s32 %v4953, %v4955
        %v4957 = vrot.slane %v4943, %v4956
        %v4958 = vcombine.low %v4902, %v4918
        %v4959 = vcombine.high %v4902, %v4918
        %v4961 = vunpack.c.l.s4 1934713408
        %v4962 = vunpack.c.0.s8 %v4961
        %v4963 = vlaneseq
        %v4964 = vshrl.u32 %v4963, 7
        %v4965 = vsub.s32 %v4962, %v4964
        %v4966 = vrot.slane %v4958, %v4965
        %v4968 = vunpack.c.l.s4 1934713408
        %v4969 = vunpack.c.0.s8 %v4968
        %v4970 = vlaneseq
        %v4971 = vshrl.u32 %v4970, 7
        %v4972 = vsub.s32 %v4969, %v4971
        %v4973 = vrot.slane %v4959, %v4972
        %v4974 = vcombine.low %v4909, %v4925
        %v4975 = vcombine.high %v4909, %v4925
        %v4977 = vunpack.c.l.s4 1934713408
        %v4978 = vunpack.c.0.s8 %v4977
        %v4979 = vlaneseq
        %v4980 = vshrl.u32 %v4979, 7
        %v4981 = vsub.s32 %v4978, %v4980
        %v4982 = vrot.slane %v4974, %v4981
        %v4984 = vunpack.c.l.s4 1934713408
        %v4985 = vunpack.c.0.s8 %v4984
        %v4986 = vlaneseq
        %v4987 = vshrl.u32 %v4986, 7
        %v4988 = vsub.s32 %v4985, %v4987
        %v4989 = vrot.slane %v4975, %v4988
        %v4990 = vcombine.low %v4934, %v4966
        %v4991 = vcombine.high %v4934, %v4966
        %v4992 = vcombine.low %v4941, %v4973
        %v4993 = vcombine.high %v4941, %v4973
        %v4994 = vcombine.low %v4950, %v4982
        %v4995 = vcombine.high %v4950, %v4982
        %v4996 = vcombine.low %v4957, %v4989
        %v4997 = vcombine.high %v4957, %v4989
        %4999 = vrot.lane.b32.xlu0 %v4855, 16
        %v5000 = vpop.permute.xlu0 %4999
        %5003 = vrot.lane.b32.xlu0 %v4856, 32
        %v5004 = vpop.permute.xlu0 %5003
        %5007 = vrot.lane.b32.xlu0 %v4857, 48
        %v5008 = vpop.permute.xlu0 %5007
        %5011 = vrot.lane.b32.xlu0 %v4858, 64
        %v5012 = vpop.permute.xlu0 %5011
        %5015 = vrot.lane.b32.xlu0 %v4859, 80
        %v5016 = vpop.permute.xlu0 %5015
        %5019 = vrot.lane.b32.xlu0 %v4860, 96
        %v5020 = vpop.permute.xlu0 %5019
        %5023 = vrot.lane.b32.xlu0 %v4861, 112
        %v5024 = vpop.permute.xlu0 %5023
        %5027 = vrot.lane.b32.xlu0 %v4991, 16
        %v5028 = vpop.permute.xlu0 %5027
        %5031 = vrot.lane.b32.xlu0 %v4992, 32
        %v5032 = vpop.permute.xlu0 %5031
        %5035 = vrot.lane.b32.xlu0 %v4993, 48
        %v5036 = vpop.permute.xlu0 %5035
        %5039 = vrot.lane.b32.xlu0 %v4994, 64
        %v5040 = vpop.permute.xlu0 %5039
        %5043 = vrot.lane.b32.xlu0 %v4995, 80
        %v5044 = vpop.permute.xlu0 %5043
        %5047 = vrot.lane.b32.xlu0 %v4996, 96
        %v5048 = vpop.permute.xlu0 %5047
        %5051 = vrot.lane.b32.xlu0 %v4997, 112
        %v5052 = vpop.permute.xlu0 %5051
        %vm5054 = vcmask 130048
        %v5055 = vsel %vm5054, %v4854, %v5000
        %vm5056 = vcmask 261120
        %v5057 = vsel %vm5056, %v5055, %v5004
        %vm5058 = vcmask 392192
        %v5059 = vsel %vm5058, %v5057, %v5008
        %vm5060 = vcmask 523264
        %v5061 = vsel %vm5060, %v5059, %v5012
        %vm5062 = vcmask 654336
        %v5063 = vsel %vm5062, %v5061, %v5016
        %vm5064 = vcmask 785408
        %v5065 = vsel %vm5064, %v5063, %v5020
        %vm5066 = vcmask 916480
        %v5067 = vsel %vm5066, %v5065, %v5024
        %v5068 = vsel %vm5054, %v4990, %v5028
        %v5069 = vsel %vm5056, %v5068, %v5032
        %v5070 = vsel %vm5058, %v5069, %v5036
        %v5071 = vsel %vm5060, %v5070, %v5040
        %v5072 = vsel %vm5062, %v5071, %v5044
        %v5073 = vsel %vm5064, %v5072, %v5048
        %v5074 = vsel %vm5066, %v5073, %v5052
        %v5075 = vcombine.low %v1559, %v1561
        %v5076 = vcombine.high %v1559, %v1561
        %v5078 = vunpack.c.l.s4 1983009808
        %v5079 = vunpack.c.0.s8 %v5078
        %v5080 = vlaneseq
        %v5081 = vshrl.u32 %v5080, 7
        %v5082 = vsub.s32 %v5079, %v5081
        %v5083 = vrot.slane %v5075, %v5082
        %v5085 = vunpack.c.l.s4 1983009808
        %v5086 = vunpack.c.0.s8 %v5085
        %v5087 = vlaneseq
        %v5088 = vshrl.u32 %v5087, 7
        %v5089 = vsub.s32 %v5086, %v5088
        %v5090 = vrot.slane %v5076, %v5089
        %v5091 = vcombine.low %v1560, %v1562
        %v5092 = vcombine.high %v1560, %v1562
        %v5094 = vunpack.c.l.s4 1983009808
        %v5095 = vunpack.c.0.s8 %v5094
        %v5096 = vlaneseq
        %v5097 = vshrl.u32 %v5096, 7
        %v5098 = vsub.s32 %v5095, %v5097
        %v5099 = vrot.slane %v5091, %v5098
        %v5101 = vunpack.c.l.s4 1983009808
        %v5102 = vunpack.c.0.s8 %v5101
        %v5103 = vlaneseq
        %v5104 = vshrl.u32 %v5103, 7
        %v5105 = vsub.s32 %v5102, %v5104
        %v5106 = vrot.slane %v5092, %v5105
        %v5107 = vcombine.low %v1563, %v1565
        %v5108 = vcombine.high %v1563, %v1565
        %v5110 = vunpack.c.l.s4 1983009808
        %v5111 = vunpack.c.0.s8 %v5110
        %v5112 = vlaneseq
        %v5113 = vshrl.u32 %v5112, 7
        %v5114 = vsub.s32 %v5111, %v5113
        %v5115 = vrot.slane %v5107, %v5114
        %v5117 = vunpack.c.l.s4 1983009808
        %v5118 = vunpack.c.0.s8 %v5117
        %v5119 = vlaneseq
        %v5120 = vshrl.u32 %v5119, 7
        %v5121 = vsub.s32 %v5118, %v5120
        %v5122 = vrot.slane %v5108, %v5121
        %v5123 = vcombine.low %v1564, %v1566
        %v5124 = vcombine.high %v1564, %v1566
        %v5126 = vunpack.c.l.s4 1983009808
        %v5127 = vunpack.c.0.s8 %v5126
        %v5128 = vlaneseq
        %v5129 = vshrl.u32 %v5128, 7
        %v5130 = vsub.s32 %v5127, %v5129
        %v5131 = vrot.slane %v5123, %v5130
        %v5133 = vunpack.c.l.s4 1983009808
        %v5134 = vunpack.c.0.s8 %v5133
        %v5135 = vlaneseq
        %v5136 = vshrl.u32 %v5135, 7
        %v5137 = vsub.s32 %v5134, %v5136
        %v5138 = vrot.slane %v5124, %v5137
        %v5139 = vcombine.low %v5083, %v5099
        %v5140 = vcombine.high %v5083, %v5099
        %v5142 = vunpack.c.l.s4 1934713408
        %v5143 = vunpack.c.0.s8 %v5142
        %v5144 = vlaneseq
        %v5145 = vshrl.u32 %v5144, 7
        %v5146 = vsub.s32 %v5143, %v5145
        %v5147 = vrot.slane %v5139, %v5146
        %v5149 = vunpack.c.l.s4 1934713408
        %v5150 = vunpack.c.0.s8 %v5149
        %v5151 = vlaneseq
        %v5152 = vshrl.u32 %v5151, 7
        %v5153 = vsub.s32 %v5150, %v5152
        %v5154 = vrot.slane %v5140, %v5153
        %v5155 = vcombine.low %v5090, %v5106
        %v5156 = vcombine.high %v5090, %v5106
        %v5158 = vunpack.c.l.s4 1934713408
        %v5159 = vunpack.c.0.s8 %v5158
        %v5160 = vlaneseq
        %v5161 = vshrl.u32 %v5160, 7
        %v5162 = vsub.s32 %v5159, %v5161
        %v5163 = vrot.slane %v5155, %v5162
        %v5165 = vunpack.c.l.s4 1934713408
        %v5166 = vunpack.c.0.s8 %v5165
        %v5167 = vlaneseq
        %v5168 = vshrl.u32 %v5167, 7
        %v5169 = vsub.s32 %v5166, %v5168
        %v5170 = vrot.slane %v5156, %v5169
        %v5171 = vcombine.low %v5115, %v5131
        %v5172 = vcombine.high %v5115, %v5131
        %v5174 = vunpack.c.l.s4 1934713408
        %v5175 = vunpack.c.0.s8 %v5174
        %v5176 = vlaneseq
        %v5177 = vshrl.u32 %v5176, 7
        %v5178 = vsub.s32 %v5175, %v5177
        %v5179 = vrot.slane %v5171, %v5178
        %v5181 = vunpack.c.l.s4 1934713408
        %v5182 = vunpack.c.0.s8 %v5181
        %v5183 = vlaneseq
        %v5184 = vshrl.u32 %v5183, 7
        %v5185 = vsub.s32 %v5182, %v5184
        %v5186 = vrot.slane %v5172, %v5185
        %v5187 = vcombine.low %v5122, %v5138
        %v5188 = vcombine.high %v5122, %v5138
        %v5190 = vunpack.c.l.s4 1934713408
        %v5191 = vunpack.c.0.s8 %v5190
        %v5192 = vlaneseq
        %v5193 = vshrl.u32 %v5192, 7
        %v5194 = vsub.s32 %v5191, %v5193
        %v5195 = vrot.slane %v5187, %v5194
        %v5197 = vunpack.c.l.s4 1934713408
        %v5198 = vunpack.c.0.s8 %v5197
        %v5199 = vlaneseq
        %v5200 = vshrl.u32 %v5199, 7
        %v5201 = vsub.s32 %v5198, %v5200
        %v5202 = vrot.slane %v5188, %v5201
        %v5203 = vcombine.low %v5147, %v5179
        %v5204 = vcombine.high %v5147, %v5179
        %v5205 = vcombine.low %v5154, %v5186
        %v5206 = vcombine.high %v5154, %v5186
        %v5207 = vcombine.low %v5163, %v5195
        %v5208 = vcombine.high %v5163, %v5195
        %v5209 = vcombine.low %v5170, %v5202
        %v5210 = vcombine.high %v5170, %v5202
        %v5211 = vcombine.low %v1695, %v1697
        %v5212 = vcombine.high %v1695, %v1697
        %v5214 = vunpack.c.l.s4 1983009808
        %v5215 = vunpack.c.0.s8 %v5214
        %v5216 = vlaneseq
        %v5217 = vshrl.u32 %v5216, 7
        %v5218 = vsub.s32 %v5215, %v5217
        %v5219 = vrot.slane %v5211, %v5218
        %v5221 = vunpack.c.l.s4 1983009808
        %v5222 = vunpack.c.0.s8 %v5221
        %v5223 = vlaneseq
        %v5224 = vshrl.u32 %v5223, 7
        %v5225 = vsub.s32 %v5222, %v5224
        %v5226 = vrot.slane %v5212, %v5225
        %v5227 = vcombine.low %v1696, %v1698
        %v5228 = vcombine.high %v1696, %v1698
        %v5230 = vunpack.c.l.s4 1983009808
        %v5231 = vunpack.c.0.s8 %v5230
        %v5232 = vlaneseq
        %v5233 = vshrl.u32 %v5232, 7
        %v5234 = vsub.s32 %v5231, %v5233
        %v5235 = vrot.slane %v5227, %v5234
        %v5237 = vunpack.c.l.s4 1983009808
        %v5238 = vunpack.c.0.s8 %v5237
        %v5239 = vlaneseq
        %v5240 = vshrl.u32 %v5239, 7
        %v5241 = vsub.s32 %v5238, %v5240
        %v5242 = vrot.slane %v5228, %v5241
        %v5243 = vcombine.low %v1699, %v1701
        %v5244 = vcombine.high %v1699, %v1701
        %v5246 = vunpack.c.l.s4 1983009808
        %v5247 = vunpack.c.0.s8 %v5246
        %v5248 = vlaneseq
        %v5249 = vshrl.u32 %v5248, 7
        %v5250 = vsub.s32 %v5247, %v5249
        %v5251 = vrot.slane %v5243, %v5250
        %v5253 = vunpack.c.l.s4 1983009808
        %v5254 = vunpack.c.0.s8 %v5253
        %v5255 = vlaneseq
        %v5256 = vshrl.u32 %v5255, 7
        %v5257 = vsub.s32 %v5254, %v5256
        %v5258 = vrot.slane %v5244, %v5257
        %v5259 = vcombine.low %v1700, %v1702
        %v5260 = vcombine.high %v1700, %v1702
        %v5262 = vunpack.c.l.s4 1983009808
        %v5263 = vunpack.c.0.s8 %v5262
        %v5264 = vlaneseq
        %v5265 = vshrl.u32 %v5264, 7
        %v5266 = vsub.s32 %v5263, %v5265
        %v5267 = vrot.slane %v5259, %v5266
        %v5269 = vunpack.c.l.s4 1983009808
        %v5270 = vunpack.c.0.s8 %v5269
        %v5271 = vlaneseq
        %v5272 = vshrl.u32 %v5271, 7
        %v5273 = vsub.s32 %v5270, %v5272
        %v5274 = vrot.slane %v5260, %v5273
        %v5275 = vcombine.low %v5219, %v5235
        %v5276 = vcombine.high %v5219, %v5235
        %v5278 = vunpack.c.l.s4 1934713408
        %v5279 = vunpack.c.0.s8 %v5278
        %v5280 = vlaneseq
        %v5281 = vshrl.u32 %v5280, 7
        %v5282 = vsub.s32 %v5279, %v5281
        %v5283 = vrot.slane %v5275, %v5282
        %v5285 = vunpack.c.l.s4 1934713408
        %v5286 = vunpack.c.0.s8 %v5285
        %v5287 = vlaneseq
        %v5288 = vshrl.u32 %v5287, 7
        %v5289 = vsub.s32 %v5286, %v5288
        %v5290 = vrot.slane %v5276, %v5289
        %v5291 = vcombine.low %v5226, %v5242
        %v5292 = vcombine.high %v5226, %v5242
        %v5294 = vunpack.c.l.s4 1934713408
        %v5295 = vunpack.c.0.s8 %v5294
        %v5296 = vlaneseq
        %v5297 = vshrl.u32 %v5296, 7
        %v5298 = vsub.s32 %v5295, %v5297
        %v5299 = vrot.slane %v5291, %v5298
        %v5301 = vunpack.c.l.s4 1934713408
        %v5302 = vunpack.c.0.s8 %v5301
        %v5303 = vlaneseq
        %v5304 = vshrl.u32 %v5303, 7
        %v5305 = vsub.s32 %v5302, %v5304
        %v5306 = vrot.slane %v5292, %v5305
        %v5307 = vcombine.low %v5251, %v5267
        %v5308 = vcombine.high %v5251, %v5267
        %v5310 = vunpack.c.l.s4 1934713408
        %v5311 = vunpack.c.0.s8 %v5310
        %v5312 = vlaneseq
        %v5313 = vshrl.u32 %v5312, 7
        %v5314 = vsub.s32 %v5311, %v5313
        %v5315 = vrot.slane %v5307, %v5314
        %v5317 = vunpack.c.l.s4 1934713408
        %v5318 = vunpack.c.0.s8 %v5317
        %v5319 = vlaneseq
        %v5320 = vshrl.u32 %v5319, 7
        %v5321 = vsub.s32 %v5318, %v5320
        %v5322 = vrot.slane %v5308, %v5321
        %v5323 = vcombine.low %v5258, %v5274
        %v5324 = vcombine.high %v5258, %v5274
        %v5326 = vunpack.c.l.s4 1934713408
        %v5327 = vunpack.c.0.s8 %v5326
        %v5328 = vlaneseq
        %v5329 = vshrl.u32 %v5328, 7
        %v5330 = vsub.s32 %v5327, %v5329
        %v5331 = vrot.slane %v5323, %v5330
        %v5333 = vunpack.c.l.s4 1934713408
        %v5334 = vunpack.c.0.s8 %v5333
        %v5335 = vlaneseq
        %v5336 = vshrl.u32 %v5335, 7
        %v5337 = vsub.s32 %v5334, %v5336
        %v5338 = vrot.slane %v5324, %v5337
        %v5339 = vcombine.low %v5283, %v5315
        %v5340 = vcombine.high %v5283, %v5315
        %v5341 = vcombine.low %v5290, %v5322
        %v5342 = vcombine.high %v5290, %v5322
        %v5343 = vcombine.low %v5299, %v5331
        %v5344 = vcombine.high %v5299, %v5331
        %v5345 = vcombine.low %v5306, %v5338
        %v5346 = vcombine.high %v5306, %v5338
        %5348 = vrot.lane.b32.xlu0 %v5204, 16
        %v5349 = vpop.permute.xlu0 %5348
        %5352 = vrot.lane.b32.xlu0 %v5205, 32
        %v5353 = vpop.permute.xlu0 %5352
        %5356 = vrot.lane.b32.xlu0 %v5206, 48
        %v5357 = vpop.permute.xlu0 %5356
        %5360 = vrot.lane.b32.xlu0 %v5207, 64
        %v5361 = vpop.permute.xlu0 %5360
        %5364 = vrot.lane.b32.xlu0 %v5208, 80
        %v5365 = vpop.permute.xlu0 %5364
        %5368 = vrot.lane.b32.xlu0 %v5209, 96
        %v5369 = vpop.permute.xlu0 %5368
        %5372 = vrot.lane.b32.xlu0 %v5210, 112
        %v5373 = vpop.permute.xlu0 %5372
        %5376 = vrot.lane.b32.xlu0 %v5340, 16
        %v5377 = vpop.permute.xlu0 %5376
        %5380 = vrot.lane.b32.xlu0 %v5341, 32
        %v5381 = vpop.permute.xlu0 %5380
        %5384 = vrot.lane.b32.xlu0 %v5342, 48
        %v5385 = vpop.permute.xlu0 %5384
        %5388 = vrot.lane.b32.xlu0 %v5343, 64
        %v5389 = vpop.permute.xlu0 %5388
        %5392 = vrot.lane.b32.xlu0 %v5344, 80
        %v5393 = vpop.permute.xlu0 %5392
        %5396 = vrot.lane.b32.xlu0 %v5345, 96
        %v5397 = vpop.permute.xlu0 %5396
        %5400 = vrot.lane.b32.xlu0 %v5346, 112
        %v5401 = vpop.permute.xlu0 %5400
        %v5403 = vsel %vm5054, %v5203, %v5349
        %v5404 = vsel %vm5056, %v5403, %v5353
        %v5405 = vsel %vm5058, %v5404, %v5357
        %v5406 = vsel %vm5060, %v5405, %v5361
        %v5407 = vsel %vm5062, %v5406, %v5365
        %v5408 = vsel %vm5064, %v5407, %v5369
        %v5409 = vsel %vm5066, %v5408, %v5373
        %v5410 = vsel %vm5054, %v5339, %v5377
        %v5411 = vsel %vm5056, %v5410, %v5381
        %v5412 = vsel %vm5058, %v5411, %v5385
        %v5413 = vsel %vm5060, %v5412, %v5389
        %v5414 = vsel %vm5062, %v5413, %v5393
        %v5415 = vsel %vm5064, %v5414, %v5397
        %v5416 = vsel %vm5066, %v5415, %v5401
        %v5417 = vcombine.low %v1897, %v1899
        %v5418 = vcombine.high %v1897, %v1899
        %v5420 = vunpack.c.l.s4 1983009808
        %v5421 = vunpack.c.0.s8 %v5420
        %v5422 = vlaneseq
        %v5423 = vshrl.u32 %v5422, 7
        %v5424 = vsub.s32 %v5421, %v5423
        %v5425 = vrot.slane %v5417, %v5424
        %v5427 = vunpack.c.l.s4 1983009808
        %v5428 = vunpack.c.0.s8 %v5427
        %v5429 = vlaneseq
        %v5430 = vshrl.u32 %v5429, 7
        %v5431 = vsub.s32 %v5428, %v5430
        %v5432 = vrot.slane %v5418, %v5431
        %v5433 = vcombine.low %v1898, %v1900
        %v5434 = vcombine.high %v1898, %v1900
        %v5436 = vunpack.c.l.s4 1983009808
        %v5437 = vunpack.c.0.s8 %v5436
        %v5438 = vlaneseq
        %v5439 = vshrl.u32 %v5438, 7
        %v5440 = vsub.s32 %v5437, %v5439
        %v5441 = vrot.slane %v5433, %v5440
        %v5443 = vunpack.c.l.s4 1983009808
        %v5444 = vunpack.c.0.s8 %v5443
        %v5445 = vlaneseq
        %v5446 = vshrl.u32 %v5445, 7
        %v5447 = vsub.s32 %v5444, %v5446
        %v5448 = vrot.slane %v5434, %v5447
        %v5449 = vcombine.low %v1901, %v1903
        %v5450 = vcombine.high %v1901, %v1903
        %v5452 = vunpack.c.l.s4 1983009808
        %v5453 = vunpack.c.0.s8 %v5452
        %v5454 = vlaneseq
        %v5455 = vshrl.u32 %v5454, 7
        %v5456 = vsub.s32 %v5453, %v5455
        %v5457 = vrot.slane %v5449, %v5456
        %v5459 = vunpack.c.l.s4 1983009808
        %v5460 = vunpack.c.0.s8 %v5459
        %v5461 = vlaneseq
        %v5462 = vshrl.u32 %v5461, 7
        %v5463 = vsub.s32 %v5460, %v5462
        %v5464 = vrot.slane %v5450, %v5463
        %v5465 = vcombine.low %v1902, %v1904
        %v5466 = vcombine.high %v1902, %v1904
        %v5468 = vunpack.c.l.s4 1983009808
        %v5469 = vunpack.c.0.s8 %v5468
        %v5470 = vlaneseq
        %v5471 = vshrl.u32 %v5470, 7
        %v5472 = vsub.s32 %v5469, %v5471
        %v5473 = vrot.slane %v5465, %v5472
        %v5475 = vunpack.c.l.s4 1983009808
        %v5476 = vunpack.c.0.s8 %v5475
        %v5477 = vlaneseq
        %v5478 = vshrl.u32 %v5477, 7
        %v5479 = vsub.s32 %v5476, %v5478
        %v5480 = vrot.slane %v5466, %v5479
        %v5481 = vcombine.low %v5425, %v5441
        %v5482 = vcombine.high %v5425, %v5441
        %v5484 = vunpack.c.l.s4 1934713408
        %v5485 = vunpack.c.0.s8 %v5484
        %v5486 = vlaneseq
        %v5487 = vshrl.u32 %v5486, 7
        %v5488 = vsub.s32 %v5485, %v5487
        %v5489 = vrot.slane %v5481, %v5488
        %v5491 = vunpack.c.l.s4 1934713408
        %v5492 = vunpack.c.0.s8 %v5491
        %v5493 = vlaneseq
        %v5494 = vshrl.u32 %v5493, 7
        %v5495 = vsub.s32 %v5492, %v5494
        %v5496 = vrot.slane %v5482, %v5495
        %v5497 = vcombine.low %v5432, %v5448
        %v5498 = vcombine.high %v5432, %v5448
        %v5500 = vunpack.c.l.s4 1934713408
        %v5501 = vunpack.c.0.s8 %v5500
        %v5502 = vlaneseq
        %v5503 = vshrl.u32 %v5502, 7
        %v5504 = vsub.s32 %v5501, %v5503
        %v5505 = vrot.slane %v5497, %v5504
        %v5507 = vunpack.c.l.s4 1934713408
        %v5508 = vunpack.c.0.s8 %v5507
        %v5509 = vlaneseq
        %v5510 = vshrl.u32 %v5509, 7
        %v5511 = vsub.s32 %v5508, %v5510
        %v5512 = vrot.slane %v5498, %v5511
        %v5513 = vcombine.low %v5457, %v5473
        %v5514 = vcombine.high %v5457, %v5473
        %v5516 = vunpack.c.l.s4 1934713408
        %v5517 = vunpack.c.0.s8 %v5516
        %v5518 = vlaneseq
        %v5519 = vshrl.u32 %v5518, 7
        %v5520 = vsub.s32 %v5517, %v5519
        %v5521 = vrot.slane %v5513, %v5520
        %v5523 = vunpack.c.l.s4 1934713408
        %v5524 = vunpack.c.0.s8 %v5523
        %v5525 = vlaneseq
        %v5526 = vshrl.u32 %v5525, 7
        %v5527 = vsub.s32 %v5524, %v5526
        %v5528 = vrot.slane %v5514, %v5527
        %v5529 = vcombine.low %v5464, %v5480
        %v5530 = vcombine.high %v5464, %v5480
        %v5532 = vunpack.c.l.s4 1934713408
        %v5533 = vunpack.c.0.s8 %v5532
        %v5534 = vlaneseq
        %v5535 = vshrl.u32 %v5534, 7
        %v5536 = vsub.s32 %v5533, %v5535
        %v5537 = vrot.slane %v5529, %v5536
        %v5539 = vunpack.c.l.s4 1934713408
        %v5540 = vunpack.c.0.s8 %v5539
        %v5541 = vlaneseq
        %v5542 = vshrl.u32 %v5541, 7
        %v5543 = vsub.s32 %v5540, %v5542
        %v5544 = vrot.slane %v5530, %v5543
        %v5545 = vcombine.low %v5489, %v5521
        %v5546 = vcombine.high %v5489, %v5521
        %v5547 = vcombine.low %v5496, %v5528
        %v5548 = vcombine.high %v5496, %v5528
        %v5549 = vcombine.low %v5505, %v5537
        %v5550 = vcombine.high %v5505, %v5537
        %v5551 = vcombine.low %v5512, %v5544
        %v5552 = vcombine.high %v5512, %v5544
        %v5553 = vcombine.low %v2033, %v2035
        %v5554 = vcombine.high %v2033, %v2035
        %v5556 = vunpack.c.l.s4 1983009808
        %v5557 = vunpack.c.0.s8 %v5556
        %v5558 = vlaneseq
        %v5559 = vshrl.u32 %v5558, 7
        %v5560 = vsub.s32 %v5557, %v5559
        %v5561 = vrot.slane %v5553, %v5560
        %v5563 = vunpack.c.l.s4 1983009808
        %v5564 = vunpack.c.0.s8 %v5563
        %v5565 = vlaneseq
        %v5566 = vshrl.u32 %v5565, 7
        %v5567 = vsub.s32 %v5564, %v5566
        %v5568 = vrot.slane %v5554, %v5567
        %v5569 = vcombine.low %v2034, %v2036
        %v5570 = vcombine.high %v2034, %v2036
        %v5572 = vunpack.c.l.s4 1983009808
        %v5573 = vunpack.c.0.s8 %v5572
        %v5574 = vlaneseq
        %v5575 = vshrl.u32 %v5574, 7
        %v5576 = vsub.s32 %v5573, %v5575
        %v5577 = vrot.slane %v5569, %v5576
        %v5579 = vunpack.c.l.s4 1983009808
        %v5580 = vunpack.c.0.s8 %v5579
        %v5581 = vlaneseq
        %v5582 = vshrl.u32 %v5581, 7
        %v5583 = vsub.s32 %v5580, %v5582
        %v5584 = vrot.slane %v5570, %v5583
        %v5585 = vcombine.low %v2037, %v2039
        %v5586 = vcombine.high %v2037, %v2039
        %v5588 = vunpack.c.l.s4 1983009808
        %v5589 = vunpack.c.0.s8 %v5588
        %v5590 = vlaneseq
        %v5591 = vshrl.u32 %v5590, 7
        %v5592 = vsub.s32 %v5589, %v5591
        %v5593 = vrot.slane %v5585, %v5592
        %v5595 = vunpack.c.l.s4 1983009808
        %v5596 = vunpack.c.0.s8 %v5595
        %v5597 = vlaneseq
        %v5598 = vshrl.u32 %v5597, 7
        %v5599 = vsub.s32 %v5596, %v5598
        %v5600 = vrot.slane %v5586, %v5599
        %v5601 = vcombine.low %v2038, %v2040
        %v5602 = vcombine.high %v2038, %v2040
        %v5604 = vunpack.c.l.s4 1983009808
        %v5605 = vunpack.c.0.s8 %v5604
        %v5606 = vlaneseq
        %v5607 = vshrl.u32 %v5606, 7
        %v5608 = vsub.s32 %v5605, %v5607
        %v5609 = vrot.slane %v5601, %v5608
        %v5611 = vunpack.c.l.s4 1983009808
        %v5612 = vunpack.c.0.s8 %v5611
        %v5613 = vlaneseq
        %v5614 = vshrl.u32 %v5613, 7
        %v5615 = vsub.s32 %v5612, %v5614
        %v5616 = vrot.slane %v5602, %v5615
        %v5617 = vcombine.low %v5561, %v5577
        %v5618 = vcombine.high %v5561, %v5577
        %v5620 = vunpack.c.l.s4 1934713408
        %v5621 = vunpack.c.0.s8 %v5620
        %v5622 = vlaneseq
        %v5623 = vshrl.u32 %v5622, 7
        %v5624 = vsub.s32 %v5621, %v5623
        %v5625 = vrot.slane %v5617, %v5624
        %v5627 = vunpack.c.l.s4 1934713408
        %v5628 = vunpack.c.0.s8 %v5627
        %v5629 = vlaneseq
        %v5630 = vshrl.u32 %v5629, 7
        %v5631 = vsub.s32 %v5628, %v5630
        %v5632 = vrot.slane %v5618, %v5631
        %v5633 = vcombine.low %v5568, %v5584
        %v5634 = vcombine.high %v5568, %v5584
        %v5636 = vunpack.c.l.s4 1934713408
        %v5637 = vunpack.c.0.s8 %v5636
        %v5638 = vlaneseq
        %v5639 = vshrl.u32 %v5638, 7
        %v5640 = vsub.s32 %v5637, %v5639
        %v5641 = vrot.slane %v5633, %v5640
        %v5643 = vunpack.c.l.s4 1934713408
        %v5644 = vunpack.c.0.s8 %v5643
        %v5645 = vlaneseq
        %v5646 = vshrl.u32 %v5645, 7
        %v5647 = vsub.s32 %v5644, %v5646
        %v5648 = vrot.slane %v5634, %v5647
        %v5649 = vcombine.low %v5593, %v5609
        %v5650 = vcombine.high %v5593, %v5609
        %v5652 = vunpack.c.l.s4 1934713408
        %v5653 = vunpack.c.0.s8 %v5652
        %v5654 = vlaneseq
        %v5655 = vshrl.u32 %v5654, 7
        %v5656 = vsub.s32 %v5653, %v5655
        %v5657 = vrot.slane %v5649, %v5656
        %v5659 = vunpack.c.l.s4 1934713408
        %v5660 = vunpack.c.0.s8 %v5659
        %v5661 = vlaneseq
        %v5662 = vshrl.u32 %v5661, 7
        %v5663 = vsub.s32 %v5660, %v5662
        %v5664 = vrot.slane %v5650, %v5663
        %v5665 = vcombine.low %v5600, %v5616
        %v5666 = vcombine.high %v5600, %v5616
        %v5668 = vunpack.c.l.s4 1934713408
        %v5669 = vunpack.c.0.s8 %v5668
        %v5670 = vlaneseq
        %v5671 = vshrl.u32 %v5670, 7
        %v5672 = vsub.s32 %v5669, %v5671
        %v5673 = vrot.slane %v5665, %v5672
        %v5675 = vunpack.c.l.s4 1934713408
        %v5676 = vunpack.c.0.s8 %v5675
        %v5677 = vlaneseq
        %v5678 = vshrl.u32 %v5677, 7
        %v5679 = vsub.s32 %v5676, %v5678
        %v5680 = vrot.slane %v5666, %v5679
        %v5681 = vcombine.low %v5625, %v5657
        %v5682 = vcombine.high %v5625, %v5657
        %v5683 = vcombine.low %v5632, %v5664
        %v5684 = vcombine.high %v5632, %v5664
        %v5685 = vcombine.low %v5641, %v5673
        %v5686 = vcombine.high %v5641, %v5673
        %v5687 = vcombine.low %v5648, %v5680
        %v5688 = vcombine.high %v5648, %v5680
        %5690 = vrot.lane.b32.xlu0 %v5546, 16
        %v5691 = vpop.permute.xlu0 %5690
        %5694 = vrot.lane.b32.xlu0 %v5547, 32
        %v5695 = vpop.permute.xlu0 %5694
        %5698 = vrot.lane.b32.xlu0 %v5548, 48
        %v5699 = vpop.permute.xlu0 %5698
        %5702 = vrot.lane.b32.xlu0 %v5549, 64
        %v5703 = vpop.permute.xlu0 %5702
        %5706 = vrot.lane.b32.xlu0 %v5550, 80
        %v5707 = vpop.permute.xlu0 %5706
        %5710 = vrot.lane.b32.xlu0 %v5551, 96
        %v5711 = vpop.permute.xlu0 %5710
        %5714 = vrot.lane.b32.xlu0 %v5552, 112
        %v5715 = vpop.permute.xlu0 %5714
        %5718 = vrot.lane.b32.xlu0 %v5682, 16
        %v5719 = vpop.permute.xlu0 %5718
        %5722 = vrot.lane.b32.xlu0 %v5683, 32
        %v5723 = vpop.permute.xlu0 %5722
        %5726 = vrot.lane.b32.xlu0 %v5684, 48
        %v5727 = vpop.permute.xlu0 %5726
        %5730 = vrot.lane.b32.xlu0 %v5685, 64
        %v5731 = vpop.permute.xlu0 %5730
        %5734 = vrot.lane.b32.xlu0 %v5686, 80
        %v5735 = vpop.permute.xlu0 %5734
        %5738 = vrot.lane.b32.xlu0 %v5687, 96
        %v5739 = vpop.permute.xlu0 %5738
        %5742 = vrot.lane.b32.xlu0 %v5688, 112
        %v5743 = vpop.permute.xlu0 %5742
        %v5745 = vsel %vm5054, %v5545, %v5691
        %v5746 = vsel %vm5056, %v5745, %v5695
        %v5747 = vsel %vm5058, %v5746, %v5699
        %v5748 = vsel %vm5060, %v5747, %v5703
        %v5749 = vsel %vm5062, %v5748, %v5707
        %v5750 = vsel %vm5064, %v5749, %v5711
        %v5751 = vsel %vm5066, %v5750, %v5715
        %v5752 = vsel %vm5054, %v5681, %v5719
        %v5753 = vsel %vm5056, %v5752, %v5723
        %v5754 = vsel %vm5058, %v5753, %v5727
        %v5755 = vsel %vm5060, %v5754, %v5731
        %v5756 = vsel %vm5062, %v5755, %v5735
        %v5757 = vsel %vm5064, %v5756, %v5739
        %v5758 = vsel %vm5066, %v5757, %v5743
        %v5759 = vmul.f32 %v5067, %v5409
        %v5760 = vmul.f32 %v5074, %v5416
        %5777 = vrot.lane.b32.xlu0 %v1559, 127
        %v5778 = vpop.permute.xlu0 %5777
        %5779 = vrot.lane.b32.xlu0 %v1695, 127
        %v5780 = vpop.permute.xlu0 %5779
        %5781 = vrot.lane.b32.xlu0 %v1560, 127
        %v5782 = vpop.permute.xlu0 %5781
        %5783 = vrot.lane.b32.xlu0 %v1696, 127
        %v5784 = vpop.permute.xlu0 %5783
        %5785 = vrot.lane.b32.xlu0 %v1561, 127
        %v5786 = vpop.permute.xlu0 %5785
        %5787 = vrot.lane.b32.xlu0 %v1697, 127
        %v5788 = vpop.permute.xlu0 %5787
        %5789 = vrot.lane.b32.xlu0 %v1562, 127
        %v5790 = vpop.permute.xlu0 %5789
        %5791 = vrot.lane.b32.xlu0 %v1698, 127
        %v5792 = vpop.permute.xlu0 %5791
        %5793 = vrot.lane.b32.xlu0 %v1563, 127
        %v5794 = vpop.permute.xlu0 %5793
        %5795 = vrot.lane.b32.xlu0 %v1699, 127
        %v5796 = vpop.permute.xlu0 %5795
        %5797 = vrot.lane.b32.xlu0 %v1564, 127
        %v5798 = vpop.permute.xlu0 %5797
        %5799 = vrot.lane.b32.xlu0 %v1700, 127
        %v5800 = vpop.permute.xlu0 %5799
        %5801 = vrot.lane.b32.xlu0 %v1565, 127
        %v5802 = vpop.permute.xlu0 %5801
        %5803 = vrot.lane.b32.xlu0 %v1701, 127
        %v5804 = vpop.permute.xlu0 %5803
        %5805 = vrot.lane.b32.xlu0 %v1566, 127
        %v5806 = vpop.permute.xlu0 %5805
        %5807 = vrot.lane.b32.xlu0 %v1702, 127
        %v5808 = vpop.permute.xlu0 %5807
        %v5825 = vcombine.low %v5778, %v5786
        %v5826 = vcombine.high %v5778, %v5786
        %v5828 = vunpack.c.l.s4 1983009808
        %v5829 = vunpack.c.0.s8 %v5828
        %v5830 = vlaneseq
        %v5831 = vshrl.u32 %v5830, 7
        %v5832 = vsub.s32 %v5829, %v5831
        %v5833 = vrot.slane %v5825, %v5832
        %v5835 = vunpack.c.l.s4 1983009808
        %v5836 = vunpack.c.0.s8 %v5835
        %v5837 = vlaneseq
        %v5838 = vshrl.u32 %v5837, 7
        %v5839 = vsub.s32 %v5836, %v5838
        %v5840 = vrot.slane %v5826, %v5839
        %v5841 = vcombine.low %v5782, %v5790
        %v5842 = vcombine.high %v5782, %v5790
        %v5844 = vunpack.c.l.s4 1983009808
        %v5845 = vunpack.c.0.s8 %v5844
        %v5846 = vlaneseq
        %v5847 = vshrl.u32 %v5846, 7
        %v5848 = vsub.s32 %v5845, %v5847
        %v5849 = vrot.slane %v5841, %v5848
        %v5851 = vunpack.c.l.s4 1983009808
        %v5852 = vunpack.c.0.s8 %v5851
        %v5853 = vlaneseq
        %v5854 = vshrl.u32 %v5853, 7
        %v5855 = vsub.s32 %v5852, %v5854
        %v5856 = vrot.slane %v5842, %v5855
        %v5857 = vcombine.low %v5794, %v5802
        %v5858 = vcombine.high %v5794, %v5802
        %v5860 = vunpack.c.l.s4 1983009808
        %v5861 = vunpack.c.0.s8 %v5860
        %v5862 = vlaneseq
        %v5863 = vshrl.u32 %v5862, 7
        %v5864 = vsub.s32 %v5861, %v5863
        %v5865 = vrot.slane %v5857, %v5864
        %v5867 = vunpack.c.l.s4 1983009808
        %v5868 = vunpack.c.0.s8 %v5867
        %v5869 = vlaneseq
        %v5870 = vshrl.u32 %v5869, 7
        %v5871 = vsub.s32 %v5868, %v5870
        %v5872 = vrot.slane %v5858, %v5871
        %v5873 = vcombine.low %v5798, %v5806
        %v5874 = vcombine.high %v5798, %v5806
        %v5876 = vunpack.c.l.s4 1983009808
        %v5877 = vunpack.c.0.s8 %v5876
        %v5878 = vlaneseq
        %v5879 = vshrl.u32 %v5878, 7
        %v5880 = vsub.s32 %v5877, %v5879
        %v5881 = vrot.slane %v5873, %v5880
        %v5883 = vunpack.c.l.s4 1983009808
        %v5884 = vunpack.c.0.s8 %v5883
        %v5885 = vlaneseq
        %v5886 = vshrl.u32 %v5885, 7
        %v5887 = vsub.s32 %v5884, %v5886
        %v5888 = vrot.slane %v5874, %v5887
        %v5889 = vcombine.low %v5833, %v5849
        %v5890 = vcombine.high %v5833, %v5849
        %v5892 = vunpack.c.l.s4 1934713408
        %v5893 = vunpack.c.0.s8 %v5892
        %v5894 = vlaneseq
        %v5895 = vshrl.u32 %v5894, 7
        %v5896 = vsub.s32 %v5893, %v5895
        %v5897 = vrot.slane %v5889, %v5896
        %v5899 = vunpack.c.l.s4 1934713408
        %v5900 = vunpack.c.0.s8 %v5899
        %v5901 = vlaneseq
        %v5902 = vshrl.u32 %v5901, 7
        %v5903 = vsub.s32 %v5900, %v5902
        %v5904 = vrot.slane %v5890, %v5903
        %v5905 = vcombine.low %v5840, %v5856
        %v5906 = vcombine.high %v5840, %v5856
        %v5908 = vunpack.c.l.s4 1934713408
        %v5909 = vunpack.c.0.s8 %v5908
        %v5910 = vlaneseq
        %v5911 = vshrl.u32 %v5910, 7
        %v5912 = vsub.s32 %v5909, %v5911
        %v5913 = vrot.slane %v5905, %v5912
        %v5915 = vunpack.c.l.s4 1934713408
        %v5916 = vunpack.c.0.s8 %v5915
        %v5917 = vlaneseq
        %v5918 = vshrl.u32 %v5917, 7
        %v5919 = vsub.s32 %v5916, %v5918
        %v5920 = vrot.slane %v5906, %v5919
        %v5921 = vcombine.low %v5865, %v5881
        %v5922 = vcombine.high %v5865, %v5881
        %v5924 = vunpack.c.l.s4 1934713408
        %v5925 = vunpack.c.0.s8 %v5924
        %v5926 = vlaneseq
        %v5927 = vshrl.u32 %v5926, 7
        %v5928 = vsub.s32 %v5925, %v5927
        %v5929 = vrot.slane %v5921, %v5928
        %v5931 = vunpack.c.l.s4 1934713408
        %v5932 = vunpack.c.0.s8 %v5931
        %v5933 = vlaneseq
        %v5934 = vshrl.u32 %v5933, 7
        %v5935 = vsub.s32 %v5932, %v5934
        %v5936 = vrot.slane %v5922, %v5935
        %v5937 = vcombine.low %v5872, %v5888
        %v5938 = vcombine.high %v5872, %v5888
        %v5940 = vunpack.c.l.s4 1934713408
        %v5941 = vunpack.c.0.s8 %v5940
        %v5942 = vlaneseq
        %v5943 = vshrl.u32 %v5942, 7
        %v5944 = vsub.s32 %v5941, %v5943
        %v5945 = vrot.slane %v5937, %v5944
        %v5947 = vunpack.c.l.s4 1934713408
        %v5948 = vunpack.c.0.s8 %v5947
        %v5949 = vlaneseq
        %v5950 = vshrl.u32 %v5949, 7
        %v5951 = vsub.s32 %v5948, %v5950
        %v5952 = vrot.slane %v5938, %v5951
        %v5953 = vcombine.low %v5897, %v5929
        %v5954 = vcombine.high %v5897, %v5929
        %v5955 = vcombine.low %v5904, %v5936
        %v5956 = vcombine.high %v5904, %v5936
        %v5957 = vcombine.low %v5913, %v5945
        %v5958 = vcombine.high %v5913, %v5945
        %v5959 = vcombine.low %v5920, %v5952
        %v5960 = vcombine.high %v5920, %v5952
        %v5961 = vcombine.low %v5780, %v5788
        %v5962 = vcombine.high %v5780, %v5788
        %v5964 = vunpack.c.l.s4 1983009808
        %v5965 = vunpack.c.0.s8 %v5964
        %v5966 = vlaneseq
        %v5967 = vshrl.u32 %v5966, 7
        %v5968 = vsub.s32 %v5965, %v5967
        %v5969 = vrot.slane %v5961, %v5968
        %v5971 = vunpack.c.l.s4 1983009808
        %v5972 = vunpack.c.0.s8 %v5971
        %v5973 = vlaneseq
        %v5974 = vshrl.u32 %v5973, 7
        %v5975 = vsub.s32 %v5972, %v5974
        %v5976 = vrot.slane %v5962, %v5975
        %v5977 = vcombine.low %v5784, %v5792
        %v5978 = vcombine.high %v5784, %v5792
        %v5980 = vunpack.c.l.s4 1983009808
        %v5981 = vunpack.c.0.s8 %v5980
        %v5982 = vlaneseq
        %v5983 = vshrl.u32 %v5982, 7
        %v5984 = vsub.s32 %v5981, %v5983
        %v5985 = vrot.slane %v5977, %v5984
        %v5987 = vunpack.c.l.s4 1983009808
        %v5988 = vunpack.c.0.s8 %v5987
        %v5989 = vlaneseq
        %v5990 = vshrl.u32 %v5989, 7
        %v5991 = vsub.s32 %v5988, %v5990
        %v5992 = vrot.slane %v5978, %v5991
        %v5993 = vcombine.low %v5796, %v5804
        %v5994 = vcombine.high %v5796, %v5804
        %v5996 = vunpack.c.l.s4 1983009808
        %v5997 = vunpack.c.0.s8 %v5996
        %v5998 = vlaneseq
        %v5999 = vshrl.u32 %v5998, 7
        %v6000 = vsub.s32 %v5997, %v5999
        %v6001 = vrot.slane %v5993, %v6000
        %v6003 = vunpack.c.l.s4 1983009808
        %v6004 = vunpack.c.0.s8 %v6003
        %v6005 = vlaneseq
        %v6006 = vshrl.u32 %v6005, 7
        %v6007 = vsub.s32 %v6004, %v6006
        %v6008 = vrot.slane %v5994, %v6007
        %v6009 = vcombine.low %v5800, %v5808
        %v6010 = vcombine.high %v5800, %v5808
        %v6012 = vunpack.c.l.s4 1983009808
        %v6013 = vunpack.c.0.s8 %v6012
        %v6014 = vlaneseq
        %v6015 = vshrl.u32 %v6014, 7
        %v6016 = vsub.s32 %v6013, %v6015
        %v6017 = vrot.slane %v6009, %v6016
        %v6019 = vunpack.c.l.s4 1983009808
        %v6020 = vunpack.c.0.s8 %v6019
        %v6021 = vlaneseq
        %v6022 = vshrl.u32 %v6021, 7
        %v6023 = vsub.s32 %v6020, %v6022
        %v6024 = vrot.slane %v6010, %v6023
        %v6025 = vcombine.low %v5969, %v5985
        %v6026 = vcombine.high %v5969, %v5985
        %v6028 = vunpack.c.l.s4 1934713408
        %v6029 = vunpack.c.0.s8 %v6028
        %v6030 = vlaneseq
        %v6031 = vshrl.u32 %v6030, 7
        %v6032 = vsub.s32 %v6029, %v6031
        %v6033 = vrot.slane %v6025, %v6032
        %v6035 = vunpack.c.l.s4 1934713408
        %v6036 = vunpack.c.0.s8 %v6035
        %v6037 = vlaneseq
        %v6038 = vshrl.u32 %v6037, 7
        %v6039 = vsub.s32 %v6036, %v6038
        %v6040 = vrot.slane %v6026, %v6039
        %v6041 = vcombine.low %v5976, %v5992
        %v6042 = vcombine.high %v5976, %v5992
        %v6044 = vunpack.c.l.s4 1934713408
        %v6045 = vunpack.c.0.s8 %v6044
        %v6046 = vlaneseq
        %v6047 = vshrl.u32 %v6046, 7
        %v6048 = vsub.s32 %v6045, %v6047
        %v6049 = vrot.slane %v6041, %v6048
        %v6051 = vunpack.c.l.s4 1934713408
        %v6052 = vunpack.c.0.s8 %v6051
        %v6053 = vlaneseq
        %v6054 = vshrl.u32 %v6053, 7
        %v6055 = vsub.s32 %v6052, %v6054
        %v6056 = vrot.slane %v6042, %v6055
        %v6057 = vcombine.low %v6001, %v6017
        %v6058 = vcombine.high %v6001, %v6017
        %v6060 = vunpack.c.l.s4 1934713408
        %v6061 = vunpack.c.0.s8 %v6060
        %v6062 = vlaneseq
        %v6063 = vshrl.u32 %v6062, 7
        %v6064 = vsub.s32 %v6061, %v6063
        %v6065 = vrot.slane %v6057, %v6064
        %v6067 = vunpack.c.l.s4 1934713408
        %v6068 = vunpack.c.0.s8 %v6067
        %v6069 = vlaneseq
        %v6070 = vshrl.u32 %v6069, 7
        %v6071 = vsub.s32 %v6068, %v6070
        %v6072 = vrot.slane %v6058, %v6071
        %v6073 = vcombine.low %v6008, %v6024
        %v6074 = vcombine.high %v6008, %v6024
        %v6076 = vunpack.c.l.s4 1934713408
        %v6077 = vunpack.c.0.s8 %v6076
        %v6078 = vlaneseq
        %v6079 = vshrl.u32 %v6078, 7
        %v6080 = vsub.s32 %v6077, %v6079
        %v6081 = vrot.slane %v6073, %v6080
        %v6083 = vunpack.c.l.s4 1934713408
        %v6084 = vunpack.c.0.s8 %v6083
        %v6085 = vlaneseq
        %v6086 = vshrl.u32 %v6085, 7
        %v6087 = vsub.s32 %v6084, %v6086
        %v6088 = vrot.slane %v6074, %v6087
        %v6089 = vcombine.low %v6033, %v6065
        %v6090 = vcombine.high %v6033, %v6065
        %v6091 = vcombine.low %v6040, %v6072
        %v6092 = vcombine.high %v6040, %v6072
        %v6093 = vcombine.low %v6049, %v6081
        %v6094 = vcombine.high %v6049, %v6081
        %v6095 = vcombine.low %v6056, %v6088
        %v6096 = vcombine.high %v6056, %v6088
        %6098 = vrot.lane.b32.xlu0 %v5954, 16
        %v6099 = vpop.permute.xlu0 %6098
        %6102 = vrot.lane.b32.xlu0 %v5955, 32
        %v6103 = vpop.permute.xlu0 %6102
        %6106 = vrot.lane.b32.xlu0 %v5956, 48
        %v6107 = vpop.permute.xlu0 %6106
        %6110 = vrot.lane.b32.xlu0 %v5957, 64
        %v6111 = vpop.permute.xlu0 %6110
        %6114 = vrot.lane.b32.xlu0 %v5958, 80
        %v6115 = vpop.permute.xlu0 %6114
        %6118 = vrot.lane.b32.xlu0 %v5959, 96
        %v6119 = vpop.permute.xlu0 %6118
        %6122 = vrot.lane.b32.xlu0 %v5960, 112
        %v6123 = vpop.permute.xlu0 %6122
        %6126 = vrot.lane.b32.xlu0 %v6090, 16
        %v6127 = vpop.permute.xlu0 %6126
        %6130 = vrot.lane.b32.xlu0 %v6091, 32
        %v6131 = vpop.permute.xlu0 %6130
        %6134 = vrot.lane.b32.xlu0 %v6092, 48
        %v6135 = vpop.permute.xlu0 %6134
        %6138 = vrot.lane.b32.xlu0 %v6093, 64
        %v6139 = vpop.permute.xlu0 %6138
        %6142 = vrot.lane.b32.xlu0 %v6094, 80
        %v6143 = vpop.permute.xlu0 %6142
        %6146 = vrot.lane.b32.xlu0 %v6095, 96
        %v6147 = vpop.permute.xlu0 %6146
        %6150 = vrot.lane.b32.xlu0 %v6096, 112
        %v6151 = vpop.permute.xlu0 %6150
        %v6153 = vsel %vm5054, %v5953, %v6099
        %v6154 = vsel %vm5056, %v6153, %v6103
        %v6155 = vsel %vm5058, %v6154, %v6107
        %v6156 = vsel %vm5060, %v6155, %v6111
        %v6157 = vsel %vm5062, %v6156, %v6115
        %v6158 = vsel %vm5064, %v6157, %v6119
        %v6159 = vsel %vm5066, %v6158, %v6123
        %v6160 = vsel %vm5054, %v6089, %v6127
        %v6161 = vsel %vm5056, %v6160, %v6131
        %v6162 = vsel %vm5058, %v6161, %v6135
        %v6163 = vsel %vm5060, %v6162, %v6139
        %v6164 = vsel %vm5062, %v6163, %v6143
        %v6165 = vsel %vm5064, %v6164, %v6147
        %v6166 = vsel %vm5066, %v6165, %v6151
        %6183 = vrot.lane.b32.xlu0 %v2169, 127
        %v6184 = vpop.permute.xlu0 %6183
        %6185 = vrot.lane.b32.xlu0 %v2305, 127
        %v6186 = vpop.permute.xlu0 %6185
        %6187 = vrot.lane.b32.xlu0 %v2170, 127
        %v6188 = vpop.permute.xlu0 %6187
        %6189 = vrot.lane.b32.xlu0 %v2306, 127
        %v6190 = vpop.permute.xlu0 %6189
        %6191 = vrot.lane.b32.xlu0 %v2171, 127
        %v6192 = vpop.permute.xlu0 %6191
        %6193 = vrot.lane.b32.xlu0 %v2307, 127
        %v6194 = vpop.permute.xlu0 %6193
        %6195 = vrot.lane.b32.xlu0 %v2172, 127
        %v6196 = vpop.permute.xlu0 %6195
        %6197 = vrot.lane.b32.xlu0 %v2308, 127
        %v6198 = vpop.permute.xlu0 %6197
        %6199 = vrot.lane.b32.xlu0 %v2173, 127
        %v6200 = vpop.permute.xlu0 %6199
        %6201 = vrot.lane.b32.xlu0 %v2309, 127
        %v6202 = vpop.permute.xlu0 %6201
        %6203 = vrot.lane.b32.xlu0 %v2174, 127
        %v6204 = vpop.permute.xlu0 %6203
        %6205 = vrot.lane.b32.xlu0 %v2310, 127
        %v6206 = vpop.permute.xlu0 %6205
        %6207 = vrot.lane.b32.xlu0 %v2175, 127
        %v6208 = vpop.permute.xlu0 %6207
        %6209 = vrot.lane.b32.xlu0 %v2311, 127
        %v6210 = vpop.permute.xlu0 %6209
        %6211 = vrot.lane.b32.xlu0 %v2176, 127
        %v6212 = vpop.permute.xlu0 %6211
        %6213 = vrot.lane.b32.xlu0 %v2312, 127
        %v6214 = vpop.permute.xlu0 %6213
        %v6231 = vcombine.low %v6184, %v6192
        %v6232 = vcombine.high %v6184, %v6192
        %v6234 = vunpack.c.l.s4 1983009808
        %v6235 = vunpack.c.0.s8 %v6234
        %v6236 = vlaneseq
        %v6237 = vshrl.u32 %v6236, 7
        %v6238 = vsub.s32 %v6235, %v6237
        %v6239 = vrot.slane %v6231, %v6238
        %v6241 = vunpack.c.l.s4 1983009808
        %v6242 = vunpack.c.0.s8 %v6241
        %v6243 = vlaneseq
        %v6244 = vshrl.u32 %v6243, 7
        %v6245 = vsub.s32 %v6242, %v6244
        %v6246 = vrot.slane %v6232, %v6245
        %v6247 = vcombine.low %v6188, %v6196
        %v6248 = vcombine.high %v6188, %v6196
        %v6250 = vunpack.c.l.s4 1983009808
        %v6251 = vunpack.c.0.s8 %v6250
        %v6252 = vlaneseq
        %v6253 = vshrl.u32 %v6252, 7
        %v6254 = vsub.s32 %v6251, %v6253
        %v6255 = vrot.slane %v6247, %v6254
        %v6257 = vunpack.c.l.s4 1983009808
        %v6258 = vunpack.c.0.s8 %v6257
        %v6259 = vlaneseq
        %v6260 = vshrl.u32 %v6259, 7
        %v6261 = vsub.s32 %v6258, %v6260
        %v6262 = vrot.slane %v6248, %v6261
        %v6263 = vcombine.low %v6200, %v6208
        %v6264 = vcombine.high %v6200, %v6208
        %v6266 = vunpack.c.l.s4 1983009808
        %v6267 = vunpack.c.0.s8 %v6266
        %v6268 = vlaneseq
        %v6269 = vshrl.u32 %v6268, 7
        %v6270 = vsub.s32 %v6267, %v6269
        %v6271 = vrot.slane %v6263, %v6270
        %v6273 = vunpack.c.l.s4 1983009808
        %v6274 = vunpack.c.0.s8 %v6273
        %v6275 = vlaneseq
        %v6276 = vshrl.u32 %v6275, 7
        %v6277 = vsub.s32 %v6274, %v6276
        %v6278 = vrot.slane %v6264, %v6277
        %v6279 = vcombine.low %v6204, %v6212
        %v6280 = vcombine.high %v6204, %v6212
        %v6282 = vunpack.c.l.s4 1983009808
        %v6283 = vunpack.c.0.s8 %v6282
        %v6284 = vlaneseq
        %v6285 = vshrl.u32 %v6284, 7
        %v6286 = vsub.s32 %v6283, %v6285
        %v6287 = vrot.slane %v6279, %v6286
        %v6289 = vunpack.c.l.s4 1983009808
        %v6290 = vunpack.c.0.s8 %v6289
        %v6291 = vlaneseq
        %v6292 = vshrl.u32 %v6291, 7
        %v6293 = vsub.s32 %v6290, %v6292
        %v6294 = vrot.slane %v6280, %v6293
        %v6295 = vcombine.low %v6239, %v6255
        %v6296 = vcombine.high %v6239, %v6255
        %v6298 = vunpack.c.l.s4 1934713408
        %v6299 = vunpack.c.0.s8 %v6298
        %v6300 = vlaneseq
        %v6301 = vshrl.u32 %v6300, 7
        %v6302 = vsub.s32 %v6299, %v6301
        %v6303 = vrot.slane %v6295, %v6302
        %v6305 = vunpack.c.l.s4 1934713408
        %v6306 = vunpack.c.0.s8 %v6305
        %v6307 = vlaneseq
        %v6308 = vshrl.u32 %v6307, 7
        %v6309 = vsub.s32 %v6306, %v6308
        %v6310 = vrot.slane %v6296, %v6309
        %v6311 = vcombine.low %v6246, %v6262
        %v6312 = vcombine.high %v6246, %v6262
        %v6314 = vunpack.c.l.s4 1934713408
        %v6315 = vunpack.c.0.s8 %v6314
        %v6316 = vlaneseq
        %v6317 = vshrl.u32 %v6316, 7
        %v6318 = vsub.s32 %v6315, %v6317
        %v6319 = vrot.slane %v6311, %v6318
        %v6321 = vunpack.c.l.s4 1934713408
        %v6322 = vunpack.c.0.s8 %v6321
        %v6323 = vlaneseq
        %v6324 = vshrl.u32 %v6323, 7
        %v6325 = vsub.s32 %v6322, %v6324
        %v6326 = vrot.slane %v6312, %v6325
        %v6327 = vcombine.low %v6271, %v6287
        %v6328 = vcombine.high %v6271, %v6287
        %v6330 = vunpack.c.l.s4 1934713408
        %v6331 = vunpack.c.0.s8 %v6330
        %v6332 = vlaneseq
        %v6333 = vshrl.u32 %v6332, 7
        %v6334 = vsub.s32 %v6331, %v6333
        %v6335 = vrot.slane %v6327, %v6334
        %v6337 = vunpack.c.l.s4 1934713408
        %v6338 = vunpack.c.0.s8 %v6337
        %v6339 = vlaneseq
        %v6340 = vshrl.u32 %v6339, 7
        %v6341 = vsub.s32 %v6338, %v6340
        %v6342 = vrot.slane %v6328, %v6341
        %v6343 = vcombine.low %v6278, %v6294
        %v6344 = vcombine.high %v6278, %v6294
        %v6346 = vunpack.c.l.s4 1934713408
        %v6347 = vunpack.c.0.s8 %v6346
        %v6348 = vlaneseq
        %v6349 = vshrl.u32 %v6348, 7
        %v6350 = vsub.s32 %v6347, %v6349
        %v6351 = vrot.slane %v6343, %v6350
        %v6353 = vunpack.c.l.s4 1934713408
        %v6354 = vunpack.c.0.s8 %v6353
        %v6355 = vlaneseq
        %v6356 = vshrl.u32 %v6355, 7
        %v6357 = vsub.s32 %v6354, %v6356
        %v6358 = vrot.slane %v6344, %v6357
        %v6359 = vcombine.low %v6303, %v6335
        %v6360 = vcombine.high %v6303, %v6335
        %v6361 = vcombine.low %v6310, %v6342
        %v6362 = vcombine.high %v6310, %v6342
        %v6363 = vcombine.low %v6319, %v6351
        %v6364 = vcombine.high %v6319, %v6351
        %v6365 = vcombine.low %v6326, %v6358
        %v6366 = vcombine.high %v6326, %v6358
        %v6367 = vcombine.low %v6186, %v6194
        %v6368 = vcombine.high %v6186, %v6194
        %v6370 = vunpack.c.l.s4 1983009808
        %v6371 = vunpack.c.0.s8 %v6370
        %v6372 = vlaneseq
        %v6373 = vshrl.u32 %v6372, 7
        %v6374 = vsub.s32 %v6371, %v6373
        %v6375 = vrot.slane %v6367, %v6374
        %v6377 = vunpack.c.l.s4 1983009808
        %v6378 = vunpack.c.0.s8 %v6377
        %v6379 = vlaneseq
        %v6380 = vshrl.u32 %v6379, 7
        %v6381 = vsub.s32 %v6378, %v6380
        %v6382 = vrot.slane %v6368, %v6381
        %v6383 = vcombine.low %v6190, %v6198
        %v6384 = vcombine.high %v6190, %v6198
        %v6386 = vunpack.c.l.s4 1983009808
        %v6387 = vunpack.c.0.s8 %v6386
        %v6388 = vlaneseq
        %v6389 = vshrl.u32 %v6388, 7
        %v6390 = vsub.s32 %v6387, %v6389
        %v6391 = vrot.slane %v6383, %v6390
        %v6393 = vunpack.c.l.s4 1983009808
        %v6394 = vunpack.c.0.s8 %v6393
        %v6395 = vlaneseq
        %v6396 = vshrl.u32 %v6395, 7
        %v6397 = vsub.s32 %v6394, %v6396
        %v6398 = vrot.slane %v6384, %v6397
        %v6399 = vcombine.low %v6202, %v6210
        %v6400 = vcombine.high %v6202, %v6210
        %v6402 = vunpack.c.l.s4 1983009808
        %v6403 = vunpack.c.0.s8 %v6402
        %v6404 = vlaneseq
        %v6405 = vshrl.u32 %v6404, 7
        %v6406 = vsub.s32 %v6403, %v6405
        %v6407 = vrot.slane %v6399, %v6406
        %v6409 = vunpack.c.l.s4 1983009808
        %v6410 = vunpack.c.0.s8 %v6409
        %v6411 = vlaneseq
        %v6412 = vshrl.u32 %v6411, 7
        %v6413 = vsub.s32 %v6410, %v6412
        %v6414 = vrot.slane %v6400, %v6413
        %v6415 = vcombine.low %v6206, %v6214
        %v6416 = vcombine.high %v6206, %v6214
        %v6418 = vunpack.c.l.s4 1983009808
        %v6419 = vunpack.c.0.s8 %v6418
        %v6420 = vlaneseq
        %v6421 = vshrl.u32 %v6420, 7
        %v6422 = vsub.s32 %v6419, %v6421
        %v6423 = vrot.slane %v6415, %v6422
        %v6425 = vunpack.c.l.s4 1983009808
        %v6426 = vunpack.c.0.s8 %v6425
        %v6427 = vlaneseq
        %v6428 = vshrl.u32 %v6427, 7
        %v6429 = vsub.s32 %v6426, %v6428
        %v6430 = vrot.slane %v6416, %v6429
        %v6431 = vcombine.low %v6375, %v6391
        %v6432 = vcombine.high %v6375, %v6391
        %v6434 = vunpack.c.l.s4 1934713408
        %v6435 = vunpack.c.0.s8 %v6434
        %v6436 = vlaneseq
        %v6437 = vshrl.u32 %v6436, 7
        %v6438 = vsub.s32 %v6435, %v6437
        %v6439 = vrot.slane %v6431, %v6438
        %v6441 = vunpack.c.l.s4 1934713408
        %v6442 = vunpack.c.0.s8 %v6441
        %v6443 = vlaneseq
        %v6444 = vshrl.u32 %v6443, 7
        %v6445 = vsub.s32 %v6442, %v6444
        %v6446 = vrot.slane %v6432, %v6445
        %v6447 = vcombine.low %v6382, %v6398
        %v6448 = vcombine.high %v6382, %v6398
        %v6450 = vunpack.c.l.s4 1934713408
        %v6451 = vunpack.c.0.s8 %v6450
        %v6452 = vlaneseq
        %v6453 = vshrl.u32 %v6452, 7
        %v6454 = vsub.s32 %v6451, %v6453
        %v6455 = vrot.slane %v6447, %v6454
        %v6457 = vunpack.c.l.s4 1934713408
        %v6458 = vunpack.c.0.s8 %v6457
        %v6459 = vlaneseq
        %v6460 = vshrl.u32 %v6459, 7
        %v6461 = vsub.s32 %v6458, %v6460
        %v6462 = vrot.slane %v6448, %v6461
        %v6463 = vcombine.low %v6407, %v6423
        %v6464 = vcombine.high %v6407, %v6423
        %v6466 = vunpack.c.l.s4 1934713408
        %v6467 = vunpack.c.0.s8 %v6466
        %v6468 = vlaneseq
        %v6469 = vshrl.u32 %v6468, 7
        %v6470 = vsub.s32 %v6467, %v6469
        %v6471 = vrot.slane %v6463, %v6470
        %v6473 = vunpack.c.l.s4 1934713408
        %v6474 = vunpack.c.0.s8 %v6473
        %v6475 = vlaneseq
        %v6476 = vshrl.u32 %v6475, 7
        %v6477 = vsub.s32 %v6474, %v6476
        %v6478 = vrot.slane %v6464, %v6477
        %v6479 = vcombine.low %v6414, %v6430
        %v6480 = vcombine.high %v6414, %v6430
        %v6482 = vunpack.c.l.s4 1934713408
        %v6483 = vunpack.c.0.s8 %v6482
        %v6484 = vlaneseq
        %v6485 = vshrl.u32 %v6484, 7
        %v6486 = vsub.s32 %v6483, %v6485
        %v6487 = vrot.slane %v6479, %v6486
        %v6489 = vunpack.c.l.s4 1934713408
        %v6490 = vunpack.c.0.s8 %v6489
        %v6491 = vlaneseq
        %v6492 = vshrl.u32 %v6491, 7
        %v6493 = vsub.s32 %v6490, %v6492
        %v6494 = vrot.slane %v6480, %v6493
        %v6495 = vcombine.low %v6439, %v6471
        %v6496 = vcombine.high %v6439, %v6471
        %v6497 = vcombine.low %v6446, %v6478
        %v6498 = vcombine.high %v6446, %v6478
        %v6499 = vcombine.low %v6455, %v6487
        %v6500 = vcombine.high %v6455, %v6487
        %v6501 = vcombine.low %v6462, %v6494
        %v6502 = vcombine.high %v6462, %v6494
        %6504 = vrot.lane.b32.xlu0 %v6360, 16
        %v6505 = vpop.permute.xlu0 %6504
        %6508 = vrot.lane.b32.xlu0 %v6361, 32
        %v6509 = vpop.permute.xlu0 %6508
        %6512 = vrot.lane.b32.xlu0 %v6362, 48
        %v6513 = vpop.permute.xlu0 %6512
        %6516 = vrot.lane.b32.xlu0 %v6363, 64
        %v6517 = vpop.permute.xlu0 %6516
        %6520 = vrot.lane.b32.xlu0 %v6364, 80
        %v6521 = vpop.permute.xlu0 %6520
        %6524 = vrot.lane.b32.xlu0 %v6365, 96
        %v6525 = vpop.permute.xlu0 %6524
        %6528 = vrot.lane.b32.xlu0 %v6366, 112
        %v6529 = vpop.permute.xlu0 %6528
        %6532 = vrot.lane.b32.xlu0 %v6496, 16
        %v6533 = vpop.permute.xlu0 %6532
        %6536 = vrot.lane.b32.xlu0 %v6497, 32
        %v6537 = vpop.permute.xlu0 %6536
        %6540 = vrot.lane.b32.xlu0 %v6498, 48
        %v6541 = vpop.permute.xlu0 %6540
        %6544 = vrot.lane.b32.xlu0 %v6499, 64
        %v6545 = vpop.permute.xlu0 %6544
        %6548 = vrot.lane.b32.xlu0 %v6500, 80
        %v6549 = vpop.permute.xlu0 %6548
        %6552 = vrot.lane.b32.xlu0 %v6501, 96
        %v6553 = vpop.permute.xlu0 %6552
        %6556 = vrot.lane.b32.xlu0 %v6502, 112
        %v6557 = vpop.permute.xlu0 %6556
        %v6559 = vsel %vm5054, %v6359, %v6505
        %v6560 = vsel %vm5056, %v6559, %v6509
        %v6561 = vsel %vm5058, %v6560, %v6513
        %v6562 = vsel %vm5060, %v6561, %v6517
        %v6563 = vsel %vm5062, %v6562, %v6521
        %v6564 = vsel %vm5064, %v6563, %v6525
        %v6565 = vsel %vm5066, %v6564, %v6529
        %v6566 = vsel %vm5054, %v6495, %v6533
        %v6567 = vsel %vm5056, %v6566, %v6537
        %v6568 = vsel %vm5058, %v6567, %v6541
        %v6569 = vsel %vm5060, %v6568, %v6545
        %v6570 = vsel %vm5062, %v6569, %v6549
        %v6571 = vsel %vm5064, %v6570, %v6553
        %v6572 = vsel %vm5066, %v6571, %v6557
        %v6573 = vmul.f32 %v5067, %v6159
        %v6574 = vmul.f32 %v5074, %v6166
        %v6575 = vmax.f32 %v5759, %v6573
        %v6576 = vmax.f32 %v5760, %v6574
        %v6577 = vsub.f32 %v5759, %v6575
        %v6578 = vsub.f32 %v5760, %v6576
        %v6579 = vmul.f32 %v6577, 1.442695
        %v6580 = vpow.pop %v6579
        %v6581 = vmul.f32 %v6578, 1.442695
        %v6582 = vpow.pop %v6581
        %v6583 = vsub.f32 %v6573, %v6575
        %v6584 = vsub.f32 %v6574, %v6576
        %v6585 = vmul.f32 %v6583, 1.442695
        %v6586 = vpow.pop %v6585
        %v6587 = vmul.f32 %v6584, 1.442695
        %v6588 = vpow.pop %v6587
        %v6589 = vadd.f32 %v6580, %v6586
        %v6590 = vadd.f32 %v6582, %v6588
        %v6591 = vmul.f32 %v6580, %v5751
        %v6592 = vmul.f32 %v6582, %v5758
        %v6593 = vmul.f32 %v6586, %v6565
        %v6594 = vmul.f32 %v6588, %v6572
        %v6595 = vadd.f32 %v6591, %v6593
        %v6596 = vadd.f32 %v6592, %v6594
        %6597 = vrot.lane.b32.xlu0 %v1559, 126
        %v6598 = vpop.permute.xlu0 %6597
        %6599 = vrot.lane.b32.xlu0 %v1695, 126
        %v6600 = vpop.permute.xlu0 %6599
        %6601 = vrot.lane.b32.xlu0 %v1560, 126
        %v6602 = vpop.permute.xlu0 %6601
        %6603 = vrot.lane.b32.xlu0 %v1696, 126
        %v6604 = vpop.permute.xlu0 %6603
        %6605 = vrot.lane.b32.xlu0 %v1561, 126
        %v6606 = vpop.permute.xlu0 %6605
        %6607 = vrot.lane.b32.xlu0 %v1697, 126
        %v6608 = vpop.permute.xlu0 %6607
        %6609 = vrot.lane.b32.xlu0 %v1562, 126
        %v6610 = vpop.permute.xlu0 %6609
        %6611 = vrot.lane.b32.xlu0 %v1698, 126
        %v6612 = vpop.permute.xlu0 %6611
        %6613 = vrot.lane.b32.xlu0 %v1563, 126
        %v6614 = vpop.permute.xlu0 %6613
        %6615 = vrot.lane.b32.xlu0 %v1699, 126
        %v6616 = vpop.permute.xlu0 %6615
        %6617 = vrot.lane.b32.xlu0 %v1564, 126
        %v6618 = vpop.permute.xlu0 %6617
        %6619 = vrot.lane.b32.xlu0 %v1700, 126
        %v6620 = vpop.permute.xlu0 %6619
        %6621 = vrot.lane.b32.xlu0 %v1565, 126
        %v6622 = vpop.permute.xlu0 %6621
        %6623 = vrot.lane.b32.xlu0 %v1701, 126
        %v6624 = vpop.permute.xlu0 %6623
        %6625 = vrot.lane.b32.xlu0 %v1566, 126
        %v6626 = vpop.permute.xlu0 %6625
        %6627 = vrot.lane.b32.xlu0 %v1702, 126
        %v6628 = vpop.permute.xlu0 %6627
        %v6645 = vcombine.low %v6598, %v6606
        %v6646 = vcombine.high %v6598, %v6606
        %v6648 = vunpack.c.l.s4 1983009808
        %v6649 = vunpack.c.0.s8 %v6648
        %v6650 = vlaneseq
        %v6651 = vshrl.u32 %v6650, 7
        %v6652 = vsub.s32 %v6649, %v6651
        %v6653 = vrot.slane %v6645, %v6652
        %v6655 = vunpack.c.l.s4 1983009808
        %v6656 = vunpack.c.0.s8 %v6655
        %v6657 = vlaneseq
        %v6658 = vshrl.u32 %v6657, 7
        %v6659 = vsub.s32 %v6656, %v6658
        %v6660 = vrot.slane %v6646, %v6659
        %v6661 = vcombine.low %v6602, %v6610
        %v6662 = vcombine.high %v6602, %v6610
        %v6664 = vunpack.c.l.s4 1983009808
        %v6665 = vunpack.c.0.s8 %v6664
        %v6666 = vlaneseq
        %v6667 = vshrl.u32 %v6666, 7
        %v6668 = vsub.s32 %v6665, %v6667
        %v6669 = vrot.slane %v6661, %v6668
        %v6671 = vunpack.c.l.s4 1983009808
        %v6672 = vunpack.c.0.s8 %v6671
        %v6673 = vlaneseq
        %v6674 = vshrl.u32 %v6673, 7
        %v6675 = vsub.s32 %v6672, %v6674
        %v6676 = vrot.slane %v6662, %v6675
        %v6677 = vcombine.low %v6614, %v6622
        %v6678 = vcombine.high %v6614, %v6622
        %v6680 = vunpack.c.l.s4 1983009808
        %v6681 = vunpack.c.0.s8 %v6680
        %v6682 = vlaneseq
        %v6683 = vshrl.u32 %v6682, 7
        %v6684 = vsub.s32 %v6681, %v6683
        %v6685 = vrot.slane %v6677, %v6684
        %v6687 = vunpack.c.l.s4 1983009808
        %v6688 = vunpack.c.0.s8 %v6687
        %v6689 = vlaneseq
        %v6690 = vshrl.u32 %v6689, 7
        %v6691 = vsub.s32 %v6688, %v6690
        %v6692 = vrot.slane %v6678, %v6691
        %v6693 = vcombine.low %v6618, %v6626
        %v6694 = vcombine.high %v6618, %v6626
        %v6696 = vunpack.c.l.s4 1983009808
        %v6697 = vunpack.c.0.s8 %v6696
        %v6698 = vlaneseq
        %v6699 = vshrl.u32 %v6698, 7
        %v6700 = vsub.s32 %v6697, %v6699
        %v6701 = vrot.slane %v6693, %v6700
        %v6703 = vunpack.c.l.s4 1983009808
        %v6704 = vunpack.c.0.s8 %v6703
        %v6705 = vlaneseq
        %v6706 = vshrl.u32 %v6705, 7
        %v6707 = vsub.s32 %v6704, %v6706
        %v6708 = vrot.slane %v6694, %v6707
        %v6709 = vcombine.low %v6653, %v6669
        %v6710 = vcombine.high %v6653, %v6669
        %v6712 = vunpack.c.l.s4 1934713408
        %v6713 = vunpack.c.0.s8 %v6712
        %v6714 = vlaneseq
        %v6715 = vshrl.u32 %v6714, 7
        %v6716 = vsub.s32 %v6713, %v6715
        %v6717 = vrot.slane %v6709, %v6716
        %v6719 = vunpack.c.l.s4 1934713408
        %v6720 = vunpack.c.0.s8 %v6719
        %v6721 = vlaneseq
        %v6722 = vshrl.u32 %v6721, 7
        %v6723 = vsub.s32 %v6720, %v6722
        %v6724 = vrot.slane %v6710, %v6723
        %v6725 = vcombine.low %v6660, %v6676
        %v6726 = vcombine.high %v6660, %v6676
        %v6728 = vunpack.c.l.s4 1934713408
        %v6729 = vunpack.c.0.s8 %v6728
        %v6730 = vlaneseq
        %v6731 = vshrl.u32 %v6730, 7
        %v6732 = vsub.s32 %v6729, %v6731
        %v6733 = vrot.slane %v6725, %v6732
        %v6735 = vunpack.c.l.s4 1934713408
        %v6736 = vunpack.c.0.s8 %v6735
        %v6737 = vlaneseq
        %v6738 = vshrl.u32 %v6737, 7
        %v6739 = vsub.s32 %v6736, %v6738
        %v6740 = vrot.slane %v6726, %v6739
        %v6741 = vcombine.low %v6685, %v6701
        %v6742 = vcombine.high %v6685, %v6701
        %v6744 = vunpack.c.l.s4 1934713408
        %v6745 = vunpack.c.0.s8 %v6744
        %v6746 = vlaneseq
        %v6747 = vshrl.u32 %v6746, 7
        %v6748 = vsub.s32 %v6745, %v6747
        %v6749 = vrot.slane %v6741, %v6748
        %v6751 = vunpack.c.l.s4 1934713408
        %v6752 = vunpack.c.0.s8 %v6751
        %v6753 = vlaneseq
        %v6754 = vshrl.u32 %v6753, 7
        %v6755 = vsub.s32 %v6752, %v6754
        %v6756 = vrot.slane %v6742, %v6755
        %v6757 = vcombine.low %v6692, %v6708
        %v6758 = vcombine.high %v6692, %v6708
        %v6760 = vunpack.c.l.s4 1934713408
        %v6761 = vunpack.c.0.s8 %v6760
        %v6762 = vlaneseq
        %v6763 = vshrl.u32 %v6762, 7
        %v6764 = vsub.s32 %v6761, %v6763
        %v6765 = vrot.slane %v6757, %v6764
        %v6767 = vunpack.c.l.s4 1934713408
        %v6768 = vunpack.c.0.s8 %v6767
        %v6769 = vlaneseq
        %v6770 = vshrl.u32 %v6769, 7
        %v6771 = vsub.s32 %v6768, %v6770
        %v6772 = vrot.slane %v6758, %v6771
        %v6773 = vcombine.low %v6717, %v6749
        %v6774 = vcombine.high %v6717, %v6749
        %v6775 = vcombine.low %v6724, %v6756
        %v6776 = vcombine.high %v6724, %v6756
        %v6777 = vcombine.low %v6733, %v6765
        %v6778 = vcombine.high %v6733, %v6765
        %v6779 = vcombine.low %v6740, %v6772
        %v6780 = vcombine.high %v6740, %v6772
        %v6781 = vcombine.low %v6600, %v6608
        %v6782 = vcombine.high %v6600, %v6608
        %v6784 = vunpack.c.l.s4 1983009808
        %v6785 = vunpack.c.0.s8 %v6784
        %v6786 = vlaneseq
        %v6787 = vshrl.u32 %v6786, 7
        %v6788 = vsub.s32 %v6785, %v6787
        %v6789 = vrot.slane %v6781, %v6788
        %v6791 = vunpack.c.l.s4 1983009808
        %v6792 = vunpack.c.0.s8 %v6791
        %v6793 = vlaneseq
        %v6794 = vshrl.u32 %v6793, 7
        %v6795 = vsub.s32 %v6792, %v6794
        %v6796 = vrot.slane %v6782, %v6795
        %v6797 = vcombine.low %v6604, %v6612
        %v6798 = vcombine.high %v6604, %v6612
        %v6800 = vunpack.c.l.s4 1983009808
        %v6801 = vunpack.c.0.s8 %v6800
        %v6802 = vlaneseq
        %v6803 = vshrl.u32 %v6802, 7
        %v6804 = vsub.s32 %v6801, %v6803
        %v6805 = vrot.slane %v6797, %v6804
        %v6807 = vunpack.c.l.s4 1983009808
        %v6808 = vunpack.c.0.s8 %v6807
        %v6809 = vlaneseq
        %v6810 = vshrl.u32 %v6809, 7
        %v6811 = vsub.s32 %v6808, %v6810
        %v6812 = vrot.slane %v6798, %v6811
        %v6813 = vcombine.low %v6616, %v6624
        %v6814 = vcombine.high %v6616, %v6624
        %v6816 = vunpack.c.l.s4 1983009808
        %v6817 = vunpack.c.0.s8 %v6816
        %v6818 = vlaneseq
        %v6819 = vshrl.u32 %v6818, 7
        %v6820 = vsub.s32 %v6817, %v6819
        %v6821 = vrot.slane %v6813, %v6820
        %v6823 = vunpack.c.l.s4 1983009808
        %v6824 = vunpack.c.0.s8 %v6823
        %v6825 = vlaneseq
        %v6826 = vshrl.u32 %v6825, 7
        %v6827 = vsub.s32 %v6824, %v6826
        %v6828 = vrot.slane %v6814, %v6827
        %v6829 = vcombine.low %v6620, %v6628
        %v6830 = vcombine.high %v6620, %v6628
        %v6832 = vunpack.c.l.s4 1983009808
        %v6833 = vunpack.c.0.s8 %v6832
        %v6834 = vlaneseq
        %v6835 = vshrl.u32 %v6834, 7
        %v6836 = vsub.s32 %v6833, %v6835
        %v6837 = vrot.slane %v6829, %v6836
        %v6839 = vunpack.c.l.s4 1983009808
        %v6840 = vunpack.c.0.s8 %v6839
        %v6841 = vlaneseq
        %v6842 = vshrl.u32 %v6841, 7
        %v6843 = vsub.s32 %v6840, %v6842
        %v6844 = vrot.slane %v6830, %v6843
        %v6845 = vcombine.low %v6789, %v6805
        %v6846 = vcombine.high %v6789, %v6805
        %v6848 = vunpack.c.l.s4 1934713408
        %v6849 = vunpack.c.0.s8 %v6848
        %v6850 = vlaneseq
        %v6851 = vshrl.u32 %v6850, 7
        %v6852 = vsub.s32 %v6849, %v6851
        %v6853 = vrot.slane %v6845, %v6852
        %v6855 = vunpack.c.l.s4 1934713408
        %v6856 = vunpack.c.0.s8 %v6855
        %v6857 = vlaneseq
        %v6858 = vshrl.u32 %v6857, 7
        %v6859 = vsub.s32 %v6856, %v6858
        %v6860 = vrot.slane %v6846, %v6859
        %v6861 = vcombine.low %v6796, %v6812
        %v6862 = vcombine.high %v6796, %v6812
        %v6864 = vunpack.c.l.s4 1934713408
        %v6865 = vunpack.c.0.s8 %v6864
        %v6866 = vlaneseq
        %v6867 = vshrl.u32 %v6866, 7
        %v6868 = vsub.s32 %v6865, %v6867
        %v6869 = vrot.slane %v6861, %v6868
        %v6871 = vunpack.c.l.s4 1934713408
        %v6872 = vunpack.c.0.s8 %v6871
        %v6873 = vlaneseq
        %v6874 = vshrl.u32 %v6873, 7
        %v6875 = vsub.s32 %v6872, %v6874
        %v6876 = vrot.slane %v6862, %v6875
        %v6877 = vcombine.low %v6821, %v6837
        %v6878 = vcombine.high %v6821, %v6837
        %v6880 = vunpack.c.l.s4 1934713408
        %v6881 = vunpack.c.0.s8 %v6880
        %v6882 = vlaneseq
        %v6883 = vshrl.u32 %v6882, 7
        %v6884 = vsub.s32 %v6881, %v6883
        %v6885 = vrot.slane %v6877, %v6884
        %v6887 = vunpack.c.l.s4 1934713408
        %v6888 = vunpack.c.0.s8 %v6887
        %v6889 = vlaneseq
        %v6890 = vshrl.u32 %v6889, 7
        %v6891 = vsub.s32 %v6888, %v6890
        %v6892 = vrot.slane %v6878, %v6891
        %v6893 = vcombine.low %v6828, %v6844
        %v6894 = vcombine.high %v6828, %v6844
        %v6896 = vunpack.c.l.s4 1934713408
        %v6897 = vunpack.c.0.s8 %v6896
        %v6898 = vlaneseq
        %v6899 = vshrl.u32 %v6898, 7
        %v6900 = vsub.s32 %v6897, %v6899
        %v6901 = vrot.slane %v6893, %v6900
        %v6903 = vunpack.c.l.s4 1934713408
        %v6904 = vunpack.c.0.s8 %v6903
        %v6905 = vlaneseq
        %v6906 = vshrl.u32 %v6905, 7
        %v6907 = vsub.s32 %v6904, %v6906
        %v6908 = vrot.slane %v6894, %v6907
        %v6909 = vcombine.low %v6853, %v6885
        %v6910 = vcombine.high %v6853, %v6885
        %v6911 = vcombine.low %v6860, %v6892
        %v6912 = vcombine.high %v6860, %v6892
        %v6913 = vcombine.low %v6869, %v6901
        %v6914 = vcombine.high %v6869, %v6901
        %v6915 = vcombine.low %v6876, %v6908
        %v6916 = vcombine.high %v6876, %v6908
        %6918 = vrot.lane.b32.xlu0 %v6774, 16
        %v6919 = vpop.permute.xlu0 %6918
        %6922 = vrot.lane.b32.xlu0 %v6775, 32
        %v6923 = vpop.permute.xlu0 %6922
        %6926 = vrot.lane.b32.xlu0 %v6776, 48
        %v6927 = vpop.permute.xlu0 %6926
        %6930 = vrot.lane.b32.xlu0 %v6777, 64
        %v6931 = vpop.permute.xlu0 %6930
        %6934 = vrot.lane.b32.xlu0 %v6778, 80
        %v6935 = vpop.permute.xlu0 %6934
        %6938 = vrot.lane.b32.xlu0 %v6779, 96
        %v6939 = vpop.permute.xlu0 %6938
        %6942 = vrot.lane.b32.xlu0 %v6780, 112
        %v6943 = vpop.permute.xlu0 %6942
        %6946 = vrot.lane.b32.xlu0 %v6910, 16
        %v6947 = vpop.permute.xlu0 %6946
        %6950 = vrot.lane.b32.xlu0 %v6911, 32
        %v6951 = vpop.permute.xlu0 %6950
        %6954 = vrot.lane.b32.xlu0 %v6912, 48
        %v6955 = vpop.permute.xlu0 %6954
        %6958 = vrot.lane.b32.xlu0 %v6913, 64
        %v6959 = vpop.permute.xlu0 %6958
        %6962 = vrot.lane.b32.xlu0 %v6914, 80
        %v6963 = vpop.permute.xlu0 %6962
        %6966 = vrot.lane.b32.xlu0 %v6915, 96
        %v6967 = vpop.permute.xlu0 %6966
        %6970 = vrot.lane.b32.xlu0 %v6916, 112
        %v6971 = vpop.permute.xlu0 %6970
        %v6973 = vsel %vm5054, %v6773, %v6919
        %v6974 = vsel %vm5056, %v6973, %v6923
        %v6975 = vsel %vm5058, %v6974, %v6927
        %v6976 = vsel %vm5060, %v6975, %v6931
        %v6977 = vsel %vm5062, %v6976, %v6935
        %v6978 = vsel %vm5064, %v6977, %v6939
        %v6979 = vsel %vm5066, %v6978, %v6943
        %v6980 = vsel %vm5054, %v6909, %v6947
        %v6981 = vsel %vm5056, %v6980, %v6951
        %v6982 = vsel %vm5058, %v6981, %v6955
        %v6983 = vsel %vm5060, %v6982, %v6959
        %v6984 = vsel %vm5062, %v6983, %v6963
        %v6985 = vsel %vm5064, %v6984, %v6967
        %v6986 = vsel %vm5066, %v6985, %v6971
        %7003 = vrot.lane.b32.xlu0 %v2441, 126
        %v7004 = vpop.permute.xlu0 %7003
        %7005 = vrot.lane.b32.xlu0 %v2577, 126
        %v7006 = vpop.permute.xlu0 %7005
        %7007 = vrot.lane.b32.xlu0 %v2442, 126
        %v7008 = vpop.permute.xlu0 %7007
        %7009 = vrot.lane.b32.xlu0 %v2578, 126
        %v7010 = vpop.permute.xlu0 %7009
        %7011 = vrot.lane.b32.xlu0 %v2443, 126
        %v7012 = vpop.permute.xlu0 %7011
        %7013 = vrot.lane.b32.xlu0 %v2579, 126
        %v7014 = vpop.permute.xlu0 %7013
        %7015 = vrot.lane.b32.xlu0 %v2444, 126
        %v7016 = vpop.permute.xlu0 %7015
        %7017 = vrot.lane.b32.xlu0 %v2580, 126
        %v7018 = vpop.permute.xlu0 %7017
        %7019 = vrot.lane.b32.xlu0 %v2445, 126
        %v7020 = vpop.permute.xlu0 %7019
        %7021 = vrot.lane.b32.xlu0 %v2581, 126
        %v7022 = vpop.permute.xlu0 %7021
        %7023 = vrot.lane.b32.xlu0 %v2446, 126
        %v7024 = vpop.permute.xlu0 %7023
        %7025 = vrot.lane.b32.xlu0 %v2582, 126
        %v7026 = vpop.permute.xlu0 %7025
        %7027 = vrot.lane.b32.xlu0 %v2447, 126
        %v7028 = vpop.permute.xlu0 %7027
        %7029 = vrot.lane.b32.xlu0 %v2583, 126
        %v7030 = vpop.permute.xlu0 %7029
        %7031 = vrot.lane.b32.xlu0 %v2448, 126
        %v7032 = vpop.permute.xlu0 %7031
        %7033 = vrot.lane.b32.xlu0 %v2584, 126
        %v7034 = vpop.permute.xlu0 %7033
        %v7051 = vcombine.low %v7004, %v7012
        %v7052 = vcombine.high %v7004, %v7012
        %v7054 = vunpack.c.l.s4 1983009808
        %v7055 = vunpack.c.0.s8 %v7054
        %v7056 = vlaneseq
        %v7057 = vshrl.u32 %v7056, 7
        %v7058 = vsub.s32 %v7055, %v7057
        %v7059 = vrot.slane %v7051, %v7058
        %v7061 = vunpack.c.l.s4 1983009808
        %v7062 = vunpack.c.0.s8 %v7061
        %v7063 = vlaneseq
        %v7064 = vshrl.u32 %v7063, 7
        %v7065 = vsub.s32 %v7062, %v7064
        %v7066 = vrot.slane %v7052, %v7065
        %v7067 = vcombine.low %v7008, %v7016
        %v7068 = vcombine.high %v7008, %v7016
        %v7070 = vunpack.c.l.s4 1983009808
        %v7071 = vunpack.c.0.s8 %v7070
        %v7072 = vlaneseq
        %v7073 = vshrl.u32 %v7072, 7
        %v7074 = vsub.s32 %v7071, %v7073
        %v7075 = vrot.slane %v7067, %v7074
        %v7077 = vunpack.c.l.s4 1983009808
        %v7078 = vunpack.c.0.s8 %v7077
        %v7079 = vlaneseq
        %v7080 = vshrl.u32 %v7079, 7
        %v7081 = vsub.s32 %v7078, %v7080
        %v7082 = vrot.slane %v7068, %v7081
        %v7083 = vcombine.low %v7020, %v7028
        %v7084 = vcombine.high %v7020, %v7028
        %v7086 = vunpack.c.l.s4 1983009808
        %v7087 = vunpack.c.0.s8 %v7086
        %v7088 = vlaneseq
        %v7089 = vshrl.u32 %v7088, 7
        %v7090 = vsub.s32 %v7087, %v7089
        %v7091 = vrot.slane %v7083, %v7090
        %v7093 = vunpack.c.l.s4 1983009808
        %v7094 = vunpack.c.0.s8 %v7093
        %v7095 = vlaneseq
        %v7096 = vshrl.u32 %v7095, 7
        %v7097 = vsub.s32 %v7094, %v7096
        %v7098 = vrot.slane %v7084, %v7097
        %v7099 = vcombine.low %v7024, %v7032
        %v7100 = vcombine.high %v7024, %v7032
        %v7102 = vunpack.c.l.s4 1983009808
        %v7103 = vunpack.c.0.s8 %v7102
        %v7104 = vlaneseq
        %v7105 = vshrl.u32 %v7104, 7
        %v7106 = vsub.s32 %v7103, %v7105
        %v7107 = vrot.slane %v7099, %v7106
        %v7109 = vunpack.c.l.s4 1983009808
        %v7110 = vunpack.c.0.s8 %v7109
        %v7111 = vlaneseq
        %v7112 = vshrl.u32 %v7111, 7
        %v7113 = vsub.s32 %v7110, %v7112
        %v7114 = vrot.slane %v7100, %v7113
        %v7115 = vcombine.low %v7059, %v7075
        %v7116 = vcombine.high %v7059, %v7075
        %v7118 = vunpack.c.l.s4 1934713408
        %v7119 = vunpack.c.0.s8 %v7118
        %v7120 = vlaneseq
        %v7121 = vshrl.u32 %v7120, 7
        %v7122 = vsub.s32 %v7119, %v7121
        %v7123 = vrot.slane %v7115, %v7122
        %v7125 = vunpack.c.l.s4 1934713408
        %v7126 = vunpack.c.0.s8 %v7125
        %v7127 = vlaneseq
        %v7128 = vshrl.u32 %v7127, 7
        %v7129 = vsub.s32 %v7126, %v7128
        %v7130 = vrot.slane %v7116, %v7129
        %v7131 = vcombine.low %v7066, %v7082
        %v7132 = vcombine.high %v7066, %v7082
        %v7134 = vunpack.c.l.s4 1934713408
        %v7135 = vunpack.c.0.s8 %v7134
        %v7136 = vlaneseq
        %v7137 = vshrl.u32 %v7136, 7
        %v7138 = vsub.s32 %v7135, %v7137
        %v7139 = vrot.slane %v7131, %v7138
        %v7141 = vunpack.c.l.s4 1934713408
        %v7142 = vunpack.c.0.s8 %v7141
        %v7143 = vlaneseq
        %v7144 = vshrl.u32 %v7143, 7
        %v7145 = vsub.s32 %v7142, %v7144
        %v7146 = vrot.slane %v7132, %v7145
        %v7147 = vcombine.low %v7091, %v7107
        %v7148 = vcombine.high %v7091, %v7107
        %v7150 = vunpack.c.l.s4 1934713408
        %v7151 = vunpack.c.0.s8 %v7150
        %v7152 = vlaneseq
        %v7153 = vshrl.u32 %v7152, 7
        %v7154 = vsub.s32 %v7151, %v7153
        %v7155 = vrot.slane %v7147, %v7154
        %v7157 = vunpack.c.l.s4 1934713408
        %v7158 = vunpack.c.0.s8 %v7157
        %v7159 = vlaneseq
        %v7160 = vshrl.u32 %v7159, 7
        %v7161 = vsub.s32 %v7158, %v7160
        %v7162 = vrot.slane %v7148, %v7161
        %v7163 = vcombine.low %v7098, %v7114
        %v7164 = vcombine.high %v7098, %v7114
        %v7166 = vunpack.c.l.s4 1934713408
        %v7167 = vunpack.c.0.s8 %v7166
        %v7168 = vlaneseq
        %v7169 = vshrl.u32 %v7168, 7
        %v7170 = vsub.s32 %v7167, %v7169
        %v7171 = vrot.slane %v7163, %v7170
        %v7173 = vunpack.c.l.s4 1934713408
        %v7174 = vunpack.c.0.s8 %v7173
        %v7175 = vlaneseq
        %v7176 = vshrl.u32 %v7175, 7
        %v7177 = vsub.s32 %v7174, %v7176
        %v7178 = vrot.slane %v7164, %v7177
        %v7179 = vcombine.low %v7123, %v7155
        %v7180 = vcombine.high %v7123, %v7155
        %v7181 = vcombine.low %v7130, %v7162
        %v7182 = vcombine.high %v7130, %v7162
        %v7183 = vcombine.low %v7139, %v7171
        %v7184 = vcombine.high %v7139, %v7171
        %v7185 = vcombine.low %v7146, %v7178
        %v7186 = vcombine.high %v7146, %v7178
        %v7187 = vcombine.low %v7006, %v7014
        %v7188 = vcombine.high %v7006, %v7014
        %v7190 = vunpack.c.l.s4 1983009808
        %v7191 = vunpack.c.0.s8 %v7190
        %v7192 = vlaneseq
        %v7193 = vshrl.u32 %v7192, 7
        %v7194 = vsub.s32 %v7191, %v7193
        %v7195 = vrot.slane %v7187, %v7194
        %v7197 = vunpack.c.l.s4 1983009808
        %v7198 = vunpack.c.0.s8 %v7197
        %v7199 = vlaneseq
        %v7200 = vshrl.u32 %v7199, 7
        %v7201 = vsub.s32 %v7198, %v7200
        %v7202 = vrot.slane %v7188, %v7201
        %v7203 = vcombine.low %v7010, %v7018
        %v7204 = vcombine.high %v7010, %v7018
        %v7206 = vunpack.c.l.s4 1983009808
        %v7207 = vunpack.c.0.s8 %v7206
        %v7208 = vlaneseq
        %v7209 = vshrl.u32 %v7208, 7
        %v7210 = vsub.s32 %v7207, %v7209
        %v7211 = vrot.slane %v7203, %v7210
        %v7213 = vunpack.c.l.s4 1983009808
        %v7214 = vunpack.c.0.s8 %v7213
        %v7215 = vlaneseq
        %v7216 = vshrl.u32 %v7215, 7
        %v7217 = vsub.s32 %v7214, %v7216
        %v7218 = vrot.slane %v7204, %v7217
        %v7219 = vcombine.low %v7022, %v7030
        %v7220 = vcombine.high %v7022, %v7030
        %v7222 = vunpack.c.l.s4 1983009808
        %v7223 = vunpack.c.0.s8 %v7222
        %v7224 = vlaneseq
        %v7225 = vshrl.u32 %v7224, 7
        %v7226 = vsub.s32 %v7223, %v7225
        %v7227 = vrot.slane %v7219, %v7226
        %v7229 = vunpack.c.l.s4 1983009808
        %v7230 = vunpack.c.0.s8 %v7229
        %v7231 = vlaneseq
        %v7232 = vshrl.u32 %v7231, 7
        %v7233 = vsub.s32 %v7230, %v7232
        %v7234 = vrot.slane %v7220, %v7233
        %v7235 = vcombine.low %v7026, %v7034
        %v7236 = vcombine.high %v7026, %v7034
        %v7238 = vunpack.c.l.s4 1983009808
        %v7239 = vunpack.c.0.s8 %v7238
        %v7240 = vlaneseq
        %v7241 = vshrl.u32 %v7240, 7
        %v7242 = vsub.s32 %v7239, %v7241
        %v7243 = vrot.slane %v7235, %v7242
        %v7245 = vunpack.c.l.s4 1983009808
        %v7246 = vunpack.c.0.s8 %v7245
        %v7247 = vlaneseq
        %v7248 = vshrl.u32 %v7247, 7
        %v7249 = vsub.s32 %v7246, %v7248
        %v7250 = vrot.slane %v7236, %v7249
        %v7251 = vcombine.low %v7195, %v7211
        %v7252 = vcombine.high %v7195, %v7211
        %v7254 = vunpack.c.l.s4 1934713408
        %v7255 = vunpack.c.0.s8 %v7254
        %v7256 = vlaneseq
        %v7257 = vshrl.u32 %v7256, 7
        %v7258 = vsub.s32 %v7255, %v7257
        %v7259 = vrot.slane %v7251, %v7258
        %v7261 = vunpack.c.l.s4 1934713408
        %v7262 = vunpack.c.0.s8 %v7261
        %v7263 = vlaneseq
        %v7264 = vshrl.u32 %v7263, 7
        %v7265 = vsub.s32 %v7262, %v7264
        %v7266 = vrot.slane %v7252, %v7265
        %v7267 = vcombine.low %v7202, %v7218
        %v7268 = vcombine.high %v7202, %v7218
        %v7270 = vunpack.c.l.s4 1934713408
        %v7271 = vunpack.c.0.s8 %v7270
        %v7272 = vlaneseq
        %v7273 = vshrl.u32 %v7272, 7
        %v7274 = vsub.s32 %v7271, %v7273
        %v7275 = vrot.slane %v7267, %v7274
        %v7277 = vunpack.c.l.s4 1934713408
        %v7278 = vunpack.c.0.s8 %v7277
        %v7279 = vlaneseq
        %v7280 = vshrl.u32 %v7279, 7
        %v7281 = vsub.s32 %v7278, %v7280
        %v7282 = vrot.slane %v7268, %v7281
        %v7283 = vcombine.low %v7227, %v7243
        %v7284 = vcombine.high %v7227, %v7243
        %v7286 = vunpack.c.l.s4 1934713408
        %v7287 = vunpack.c.0.s8 %v7286
        %v7288 = vlaneseq
        %v7289 = vshrl.u32 %v7288, 7
        %v7290 = vsub.s32 %v7287, %v7289
        %v7291 = vrot.slane %v7283, %v7290
        %v7293 = vunpack.c.l.s4 1934713408
        %v7294 = vunpack.c.0.s8 %v7293
        %v7295 = vlaneseq
        %v7296 = vshrl.u32 %v7295, 7
        %v7297 = vsub.s32 %v7294, %v7296
        %v7298 = vrot.slane %v7284, %v7297
        %v7299 = vcombine.low %v7234, %v7250
        %v7300 = vcombine.high %v7234, %v7250
        %v7302 = vunpack.c.l.s4 1934713408
        %v7303 = vunpack.c.0.s8 %v7302
        %v7304 = vlaneseq
        %v7305 = vshrl.u32 %v7304, 7
        %v7306 = vsub.s32 %v7303, %v7305
        %v7307 = vrot.slane %v7299, %v7306
        %v7309 = vunpack.c.l.s4 1934713408
        %v7310 = vunpack.c.0.s8 %v7309
        %v7311 = vlaneseq
        %v7312 = vshrl.u32 %v7311, 7
        %v7313 = vsub.s32 %v7310, %v7312
        %v7314 = vrot.slane %v7300, %v7313
        %v7315 = vcombine.low %v7259, %v7291
        %v7316 = vcombine.high %v7259, %v7291
        %v7317 = vcombine.low %v7266, %v7298
        %v7318 = vcombine.high %v7266, %v7298
        %v7319 = vcombine.low %v7275, %v7307
        %v7320 = vcombine.high %v7275, %v7307
        %v7321 = vcombine.low %v7282, %v7314
        %v7322 = vcombine.high %v7282, %v7314
        %7324 = vrot.lane.b32.xlu0 %v7180, 16
        %v7325 = vpop.permute.xlu0 %7324
        %7328 = vrot.lane.b32.xlu0 %v7181, 32
        %v7329 = vpop.permute.xlu0 %7328
        %7332 = vrot.lane.b32.xlu0 %v7182, 48
        %v7333 = vpop.permute.xlu0 %7332
        %7336 = vrot.lane.b32.xlu0 %v7183, 64
        %v7337 = vpop.permute.xlu0 %7336
        %7340 = vrot.lane.b32.xlu0 %v7184, 80
        %v7341 = vpop.permute.xlu0 %7340
        %7344 = vrot.lane.b32.xlu0 %v7185, 96
        %v7345 = vpop.permute.xlu0 %7344
        %7348 = vrot.lane.b32.xlu0 %v7186, 112
        %v7349 = vpop.permute.xlu0 %7348
        %7352 = vrot.lane.b32.xlu0 %v7316, 16
        %v7353 = vpop.permute.xlu0 %7352
        %7356 = vrot.lane.b32.xlu0 %v7317, 32
        %v7357 = vpop.permute.xlu0 %7356
        %7360 = vrot.lane.b32.xlu0 %v7318, 48
        %v7361 = vpop.permute.xlu0 %7360
        %7364 = vrot.lane.b32.xlu0 %v7319, 64
        %v7365 = vpop.permute.xlu0 %7364
        %7368 = vrot.lane.b32.xlu0 %v7320, 80
        %v7369 = vpop.permute.xlu0 %7368
        %7372 = vrot.lane.b32.xlu0 %v7321, 96
        %v7373 = vpop.permute.xlu0 %7372
        %7376 = vrot.lane.b32.xlu0 %v7322, 112
        %v7377 = vpop.permute.xlu0 %7376
        %v7379 = vsel %vm5054, %v7179, %v7325
        %v7380 = vsel %vm5056, %v7379, %v7329
        %v7381 = vsel %vm5058, %v7380, %v7333
        %v7382 = vsel %vm5060, %v7381, %v7337
        %v7383 = vsel %vm5062, %v7382, %v7341
        %v7384 = vsel %vm5064, %v7383, %v7345
        %v7385 = vsel %vm5066, %v7384, %v7349
        %v7386 = vsel %vm5054, %v7315, %v7353
        %v7387 = vsel %vm5056, %v7386, %v7357
        %v7388 = vsel %vm5058, %v7387, %v7361
        %v7389 = vsel %vm5060, %v7388, %v7365
        %v7390 = vsel %vm5062, %v7389, %v7369
        %v7391 = vsel %vm5064, %v7390, %v7373
        %v7392 = vsel %vm5066, %v7391, %v7377
        %v7393 = vmul.f32 %v5067, %v6979
        %v7394 = vmul.f32 %v5074, %v6986
        %v7395 = vmax.f32 %v6575, %v7393
        %v7396 = vmax.f32 %v6576, %v7394
        %v7397 = vsub.f32 %v6575, %v7395
        %v7398 = vsub.f32 %v6576, %v7396
        %v7399 = vmul.f32 %v7397, 1.442695
        %v7400 = vpow.pop %v7399
        %v7401 = vmul.f32 %v7398, 1.442695
        %v7402 = vpow.pop %v7401
        %v7403 = vsub.f32 %v7393, %v7395
        %v7404 = vsub.f32 %v7394, %v7396
        %v7405 = vmul.f32 %v7403, 1.442695
        %v7406 = vpow.pop %v7405
        %v7407 = vmul.f32 %v7404, 1.442695
        %v7408 = vpow.pop %v7407
        %v7409 = vmul.f32 %v7400, %v6589
        %v7410 = vmul.f32 %v7402, %v6590
        %v7411 = vadd.f32 %v7409, %v7406
        %v7412 = vadd.f32 %v7410, %v7408
        %v7413 = vmul.f32 %v7400, %v6595
        %v7414 = vmul.f32 %v7402, %v6596
        %v7415 = vmul.f32 %v7406, %v7385
        %v7416 = vmul.f32 %v7408, %v7392
        %v7417 = vadd.f32 %v7413, %v7415
        %v7418 = vadd.f32 %v7414, %v7416
        %v7427 = vrot.slane %v1559, 1
        %v7428 = vrot.slane %v1695, 1
        %v7429 = vsel %vm4637, %v7427, %v7428
        %v7430 = vrot.slane %v1741, 1
        %v7431 = vsel %vm4637, %v7428, %v7430
        %v7432 = vrot.slane %v1560, 1
        %v7433 = vrot.slane %v1696, 1
        %v7434 = vsel %vm4637, %v7432, %v7433
        %v7435 = vrot.slane %v1765, 1
        %v7436 = vsel %vm4637, %v7433, %v7435
        %v7437 = vrot.slane %v1561, 1
        %v7438 = vrot.slane %v1697, 1
        %v7439 = vsel %vm4637, %v7437, %v7438
        %v7440 = vrot.slane %v1748, 1
        %v7441 = vsel %vm4637, %v7438, %v7440
        %v7442 = vrot.slane %v1562, 1
        %v7443 = vrot.slane %v1698, 1
        %v7444 = vsel %vm4637, %v7442, %v7443
        %v7445 = vrot.slane %v1766, 1
        %v7446 = vsel %vm4637, %v7443, %v7445
        %v7447 = vrot.slane %v1563, 1
        %v7448 = vrot.slane %v1699, 1
        %v7449 = vsel %vm4637, %v7447, %v7448
        %v7450 = vrot.slane %v1757, 1
        %v7451 = vsel %vm4637, %v7448, %v7450
        %v7452 = vrot.slane %v1564, 1
        %v7453 = vrot.slane %v1700, 1
        %v7454 = vsel %vm4637, %v7452, %v7453
        %v7455 = vrot.slane %v1767, 1
        %v7456 = vsel %vm4637, %v7453, %v7455
        %v7457 = vrot.slane %v1565, 1
        %v7458 = vrot.slane %v1701, 1
        %v7459 = vsel %vm4637, %v7457, %v7458
        %v7460 = vrot.slane %v1764, 1
        %v7461 = vsel %vm4637, %v7458, %v7460
        %v7462 = vrot.slane %v1566, 1
        %v7463 = vrot.slane %v1702, 1
        %v7464 = vsel %vm4637, %v7462, %v7463
        %v7465 = vrot.slane %v1768, 1
        %v7466 = vsel %vm4637, %v7463, %v7465
        %v7483 = vcombine.low %v7429, %v7439
        %v7484 = vcombine.high %v7429, %v7439
        %v7486 = vunpack.c.l.s4 1983009808
        %v7487 = vunpack.c.0.s8 %v7486
        %v7488 = vlaneseq
        %v7489 = vshrl.u32 %v7488, 7
        %v7490 = vsub.s32 %v7487, %v7489
        %v7491 = vrot.slane %v7483, %v7490
        %v7493 = vunpack.c.l.s4 1983009808
        %v7494 = vunpack.c.0.s8 %v7493
        %v7495 = vlaneseq
        %v7496 = vshrl.u32 %v7495, 7
        %v7497 = vsub.s32 %v7494, %v7496
        %v7498 = vrot.slane %v7484, %v7497
        %v7499 = vcombine.low %v7434, %v7444
        %v7500 = vcombine.high %v7434, %v7444
        %v7502 = vunpack.c.l.s4 1983009808
        %v7503 = vunpack.c.0.s8 %v7502
        %v7504 = vlaneseq
        %v7505 = vshrl.u32 %v7504, 7
        %v7506 = vsub.s32 %v7503, %v7505
        %v7507 = vrot.slane %v7499, %v7506
        %v7509 = vunpack.c.l.s4 1983009808
        %v7510 = vunpack.c.0.s8 %v7509
        %v7511 = vlaneseq
        %v7512 = vshrl.u32 %v7511, 7
        %v7513 = vsub.s32 %v7510, %v7512
        %v7514 = vrot.slane %v7500, %v7513
        %v7515 = vcombine.low %v7449, %v7459
        %v7516 = vcombine.high %v7449, %v7459
        %v7518 = vunpack.c.l.s4 1983009808
        %v7519 = vunpack.c.0.s8 %v7518
        %v7520 = vlaneseq
        %v7521 = vshrl.u32 %v7520, 7
        %v7522 = vsub.s32 %v7519, %v7521
        %v7523 = vrot.slane %v7515, %v7522
        %v7525 = vunpack.c.l.s4 1983009808
        %v7526 = vunpack.c.0.s8 %v7525
        %v7527 = vlaneseq
        %v7528 = vshrl.u32 %v7527, 7
        %v7529 = vsub.s32 %v7526, %v7528
        %v7530 = vrot.slane %v7516, %v7529
        %v7531 = vcombine.low %v7454, %v7464
        %v7532 = vcombine.high %v7454, %v7464
        %v7534 = vunpack.c.l.s4 1983009808
        %v7535 = vunpack.c.0.s8 %v7534
        %v7536 = vlaneseq
        %v7537 = vshrl.u32 %v7536, 7
        %v7538 = vsub.s32 %v7535, %v7537
        %v7539 = vrot.slane %v7531, %v7538
        %v7541 = vunpack.c.l.s4 1983009808
        %v7542 = vunpack.c.0.s8 %v7541
        %v7543 = vlaneseq
        %v7544 = vshrl.u32 %v7543, 7
        %v7545 = vsub.s32 %v7542, %v7544
        %v7546 = vrot.slane %v7532, %v7545
        %v7547 = vcombine.low %v7491, %v7507
        %v7548 = vcombine.high %v7491, %v7507
        %v7550 = vunpack.c.l.s4 1934713408
        %v7551 = vunpack.c.0.s8 %v7550
        %v7552 = vlaneseq
        %v7553 = vshrl.u32 %v7552, 7
        %v7554 = vsub.s32 %v7551, %v7553
        %v7555 = vrot.slane %v7547, %v7554
        %v7557 = vunpack.c.l.s4 1934713408
        %v7558 = vunpack.c.0.s8 %v7557
        %v7559 = vlaneseq
        %v7560 = vshrl.u32 %v7559, 7
        %v7561 = vsub.s32 %v7558, %v7560
        %v7562 = vrot.slane %v7548, %v7561
        %v7563 = vcombine.low %v7498, %v7514
        %v7564 = vcombine.high %v7498, %v7514
        %v7566 = vunpack.c.l.s4 1934713408
        %v7567 = vunpack.c.0.s8 %v7566
        %v7568 = vlaneseq
        %v7569 = vshrl.u32 %v7568, 7
        %v7570 = vsub.s32 %v7567, %v7569
        %v7571 = vrot.slane %v7563, %v7570
        %v7573 = vunpack.c.l.s4 1934713408
        %v7574 = vunpack.c.0.s8 %v7573
        %v7575 = vlaneseq
        %v7576 = vshrl.u32 %v7575, 7
        %v7577 = vsub.s32 %v7574, %v7576
        %v7578 = vrot.slane %v7564, %v7577
        %v7579 = vcombine.low %v7523, %v7539
        %v7580 = vcombine.high %v7523, %v7539
        %v7582 = vunpack.c.l.s4 1934713408
        %v7583 = vunpack.c.0.s8 %v7582
        %v7584 = vlaneseq
        %v7585 = vshrl.u32 %v7584, 7
        %v7586 = vsub.s32 %v7583, %v7585
        %v7587 = vrot.slane %v7579, %v7586
        %v7589 = vunpack.c.l.s4 1934713408
        %v7590 = vunpack.c.0.s8 %v7589
        %v7591 = vlaneseq
        %v7592 = vshrl.u32 %v7591, 7
        %v7593 = vsub.s32 %v7590, %v7592
        %v7594 = vrot.slane %v7580, %v7593
        %v7595 = vcombine.low %v7530, %v7546
        %v7596 = vcombine.high %v7530, %v7546
        %v7598 = vunpack.c.l.s4 1934713408
        %v7599 = vunpack.c.0.s8 %v7598
        %v7600 = vlaneseq
        %v7601 = vshrl.u32 %v7600, 7
        %v7602 = vsub.s32 %v7599, %v7601
        %v7603 = vrot.slane %v7595, %v7602
        %v7605 = vunpack.c.l.s4 1934713408
        %v7606 = vunpack.c.0.s8 %v7605
        %v7607 = vlaneseq
        %v7608 = vshrl.u32 %v7607, 7
        %v7609 = vsub.s32 %v7606, %v7608
        %v7610 = vrot.slane %v7596, %v7609
        %v7611 = vcombine.low %v7555, %v7587
        %v7612 = vcombine.high %v7555, %v7587
        %v7613 = vcombine.low %v7562, %v7594
        %v7614 = vcombine.high %v7562, %v7594
        %v7615 = vcombine.low %v7571, %v7603
        %v7616 = vcombine.high %v7571, %v7603
        %v7617 = vcombine.low %v7578, %v7610
        %v7618 = vcombine.high %v7578, %v7610
        %v7619 = vcombine.low %v7431, %v7441
        %v7620 = vcombine.high %v7431, %v7441
        %v7622 = vunpack.c.l.s4 1983009808
        %v7623 = vunpack.c.0.s8 %v7622
        %v7624 = vlaneseq
        %v7625 = vshrl.u32 %v7624, 7
        %v7626 = vsub.s32 %v7623, %v7625
        %v7627 = vrot.slane %v7619, %v7626
        %v7629 = vunpack.c.l.s4 1983009808
        %v7630 = vunpack.c.0.s8 %v7629
        %v7631 = vlaneseq
        %v7632 = vshrl.u32 %v7631, 7
        %v7633 = vsub.s32 %v7630, %v7632
        %v7634 = vrot.slane %v7620, %v7633
        %v7635 = vcombine.low %v7436, %v7446
        %v7636 = vcombine.high %v7436, %v7446
        %v7638 = vunpack.c.l.s4 1983009808
        %v7639 = vunpack.c.0.s8 %v7638
        %v7640 = vlaneseq
        %v7641 = vshrl.u32 %v7640, 7
        %v7642 = vsub.s32 %v7639, %v7641
        %v7643 = vrot.slane %v7635, %v7642
        %v7645 = vunpack.c.l.s4 1983009808
        %v7646 = vunpack.c.0.s8 %v7645
        %v7647 = vlaneseq
        %v7648 = vshrl.u32 %v7647, 7
        %v7649 = vsub.s32 %v7646, %v7648
        %v7650 = vrot.slane %v7636, %v7649
        %v7651 = vcombine.low %v7451, %v7461
        %v7652 = vcombine.high %v7451, %v7461
        %v7654 = vunpack.c.l.s4 1983009808
        %v7655 = vunpack.c.0.s8 %v7654
        %v7656 = vlaneseq
        %v7657 = vshrl.u32 %v7656, 7
        %v7658 = vsub.s32 %v7655, %v7657
        %v7659 = vrot.slane %v7651, %v7658
        %v7661 = vunpack.c.l.s4 1983009808
        %v7662 = vunpack.c.0.s8 %v7661
        %v7663 = vlaneseq
        %v7664 = vshrl.u32 %v7663, 7
        %v7665 = vsub.s32 %v7662, %v7664
        %v7666 = vrot.slane %v7652, %v7665
        %v7667 = vcombine.low %v7456, %v7466
        %v7668 = vcombine.high %v7456, %v7466
        %v7670 = vunpack.c.l.s4 1983009808
        %v7671 = vunpack.c.0.s8 %v7670
        %v7672 = vlaneseq
        %v7673 = vshrl.u32 %v7672, 7
        %v7674 = vsub.s32 %v7671, %v7673
        %v7675 = vrot.slane %v7667, %v7674
        %v7677 = vunpack.c.l.s4 1983009808
        %v7678 = vunpack.c.0.s8 %v7677
        %v7679 = vlaneseq
        %v7680 = vshrl.u32 %v7679, 7
        %v7681 = vsub.s32 %v7678, %v7680
        %v7682 = vrot.slane %v7668, %v7681
        %v7683 = vcombine.low %v7627, %v7643
        %v7684 = vcombine.high %v7627, %v7643
        %v7686 = vunpack.c.l.s4 1934713408
        %v7687 = vunpack.c.0.s8 %v7686
        %v7688 = vlaneseq
        %v7689 = vshrl.u32 %v7688, 7
        %v7690 = vsub.s32 %v7687, %v7689
        %v7691 = vrot.slane %v7683, %v7690
        %v7693 = vunpack.c.l.s4 1934713408
        %v7694 = vunpack.c.0.s8 %v7693
        %v7695 = vlaneseq
        %v7696 = vshrl.u32 %v7695, 7
        %v7697 = vsub.s32 %v7694, %v7696
        %v7698 = vrot.slane %v7684, %v7697
        %v7699 = vcombine.low %v7634, %v7650
        %v7700 = vcombine.high %v7634, %v7650
        %v7702 = vunpack.c.l.s4 1934713408
        %v7703 = vunpack.c.0.s8 %v7702
        %v7704 = vlaneseq
        %v7705 = vshrl.u32 %v7704, 7
        %v7706 = vsub.s32 %v7703, %v7705
        %v7707 = vrot.slane %v7699, %v7706
        %v7709 = vunpack.c.l.s4 1934713408
        %v7710 = vunpack.c.0.s8 %v7709
        %v7711 = vlaneseq
        %v7712 = vshrl.u32 %v7711, 7
        %v7713 = vsub.s32 %v7710, %v7712
        %v7714 = vrot.slane %v7700, %v7713
        %v7715 = vcombine.low %v7659, %v7675
        %v7716 = vcombine.high %v7659, %v7675
        %v7718 = vunpack.c.l.s4 1934713408
        %v7719 = vunpack.c.0.s8 %v7718
        %v7720 = vlaneseq
        %v7721 = vshrl.u32 %v7720, 7
        %v7722 = vsub.s32 %v7719, %v7721
        %v7723 = vrot.slane %v7715, %v7722
        %v7725 = vunpack.c.l.s4 1934713408
        %v7726 = vunpack.c.0.s8 %v7725
        %v7727 = vlaneseq
        %v7728 = vshrl.u32 %v7727, 7
        %v7729 = vsub.s32 %v7726, %v7728
        %v7730 = vrot.slane %v7716, %v7729
        %v7731 = vcombine.low %v7666, %v7682
        %v7732 = vcombine.high %v7666, %v7682
        %v7734 = vunpack.c.l.s4 1934713408
        %v7735 = vunpack.c.0.s8 %v7734
        %v7736 = vlaneseq
        %v7737 = vshrl.u32 %v7736, 7
        %v7738 = vsub.s32 %v7735, %v7737
        %v7739 = vrot.slane %v7731, %v7738
        %v7741 = vunpack.c.l.s4 1934713408
        %v7742 = vunpack.c.0.s8 %v7741
        %v7743 = vlaneseq
        %v7744 = vshrl.u32 %v7743, 7
        %v7745 = vsub.s32 %v7742, %v7744
        %v7746 = vrot.slane %v7732, %v7745
        %v7747 = vcombine.low %v7691, %v7723
        %v7748 = vcombine.high %v7691, %v7723
        %v7749 = vcombine.low %v7698, %v7730
        %v7750 = vcombine.high %v7698, %v7730
        %v7751 = vcombine.low %v7707, %v7739
        %v7752 = vcombine.high %v7707, %v7739
        %v7753 = vcombine.low %v7714, %v7746
        %v7754 = vcombine.high %v7714, %v7746
        %7756 = vrot.lane.b32.xlu0 %v7612, 16
        %v7757 = vpop.permute.xlu0 %7756
        %7760 = vrot.lane.b32.xlu0 %v7613, 32
        %v7761 = vpop.permute.xlu0 %7760
        %7764 = vrot.lane.b32.xlu0 %v7614, 48
        %v7765 = vpop.permute.xlu0 %7764
        %7768 = vrot.lane.b32.xlu0 %v7615, 64
        %v7769 = vpop.permute.xlu0 %7768
        %7772 = vrot.lane.b32.xlu0 %v7616, 80
        %v7773 = vpop.permute.xlu0 %7772
        %7776 = vrot.lane.b32.xlu0 %v7617, 96
        %v7777 = vpop.permute.xlu0 %7776
        %7780 = vrot.lane.b32.xlu0 %v7618, 112
        %v7781 = vpop.permute.xlu0 %7780
        %7784 = vrot.lane.b32.xlu0 %v7748, 16
        %v7785 = vpop.permute.xlu0 %7784
        %7788 = vrot.lane.b32.xlu0 %v7749, 32
        %v7789 = vpop.permute.xlu0 %7788
        %7792 = vrot.lane.b32.xlu0 %v7750, 48
        %v7793 = vpop.permute.xlu0 %7792
        %7796 = vrot.lane.b32.xlu0 %v7751, 64
        %v7797 = vpop.permute.xlu0 %7796
        %7800 = vrot.lane.b32.xlu0 %v7752, 80
        %v7801 = vpop.permute.xlu0 %7800
        %7804 = vrot.lane.b32.xlu0 %v7753, 96
        %v7805 = vpop.permute.xlu0 %7804
        %7808 = vrot.lane.b32.xlu0 %v7754, 112
        %v7809 = vpop.permute.xlu0 %7808
        %v7811 = vsel %vm5054, %v7611, %v7757
        %v7812 = vsel %vm5056, %v7811, %v7761
        %v7813 = vsel %vm5058, %v7812, %v7765
        %v7814 = vsel %vm5060, %v7813, %v7769
        %v7815 = vsel %vm5062, %v7814, %v7773
        %v7816 = vsel %vm5064, %v7815, %v7777
        %v7817 = vsel %vm5066, %v7816, %v7781
        %v7818 = vsel %vm5054, %v7747, %v7785
        %v7819 = vsel %vm5056, %v7818, %v7789
        %v7820 = vsel %vm5058, %v7819, %v7793
        %v7821 = vsel %vm5060, %v7820, %v7797
        %v7822 = vsel %vm5062, %v7821, %v7801
        %v7823 = vsel %vm5064, %v7822, %v7805
        %v7824 = vsel %vm5066, %v7823, %v7809
        %v7849 = vrot.slane %v2713, 1
        %v7850 = vrot.slane %v2849, 1
        %v7851 = vsel %vm4637, %v7849, %v7850
        %v7852 = vrot.slane %v2895, 1
        %v7853 = vsel %vm4637, %v7850, %v7852
        %v7854 = vrot.slane %v2714, 1
        %v7855 = vrot.slane %v2850, 1
        %v7856 = vsel %vm4637, %v7854, %v7855
        %v7857 = vrot.slane %v2919, 1
        %v7858 = vsel %vm4637, %v7855, %v7857
        %v7859 = vrot.slane %v2715, 1
        %v7860 = vrot.slane %v2851, 1
        %v7861 = vsel %vm4637, %v7859, %v7860
        %v7862 = vrot.slane %v2902, 1
        %v7863 = vsel %vm4637, %v7860, %v7862
        %v7864 = vrot.slane %v2716, 1
        %v7865 = vrot.slane %v2852, 1
        %v7866 = vsel %vm4637, %v7864, %v7865
        %v7867 = vrot.slane %v2920, 1
        %v7868 = vsel %vm4637, %v7865, %v7867
        %v7869 = vrot.slane %v2717, 1
        %v7870 = vrot.slane %v2853, 1
        %v7871 = vsel %vm4637, %v7869, %v7870
        %v7872 = vrot.slane %v2911, 1
        %v7873 = vsel %vm4637, %v7870, %v7872
        %v7874 = vrot.slane %v2718, 1
        %v7875 = vrot.slane %v2854, 1
        %v7876 = vsel %vm4637, %v7874, %v7875
        %v7877 = vrot.slane %v2921, 1
        %v7878 = vsel %vm4637, %v7875, %v7877
        %v7879 = vrot.slane %v2719, 1
        %v7880 = vrot.slane %v2855, 1
        %v7881 = vsel %vm4637, %v7879, %v7880
        %v7882 = vrot.slane %v2918, 1
        %v7883 = vsel %vm4637, %v7880, %v7882
        %v7884 = vrot.slane %v2720, 1
        %v7885 = vrot.slane %v2856, 1
        %v7886 = vsel %vm4637, %v7884, %v7885
        %v7887 = vrot.slane %v2922, 1
        %v7888 = vsel %vm4637, %v7885, %v7887
        %v7905 = vcombine.low %v7851, %v7861
        %v7906 = vcombine.high %v7851, %v7861
        %v7908 = vunpack.c.l.s4 1983009808
        %v7909 = vunpack.c.0.s8 %v7908
        %v7910 = vlaneseq
        %v7911 = vshrl.u32 %v7910, 7
        %v7912 = vsub.s32 %v7909, %v7911
        %v7913 = vrot.slane %v7905, %v7912
        %v7915 = vunpack.c.l.s4 1983009808
        %v7916 = vunpack.c.0.s8 %v7915
        %v7917 = vlaneseq
        %v7918 = vshrl.u32 %v7917, 7
        %v7919 = vsub.s32 %v7916, %v7918
        %v7920 = vrot.slane %v7906, %v7919
        %v7921 = vcombine.low %v7856, %v7866
        %v7922 = vcombine.high %v7856, %v7866
        %v7924 = vunpack.c.l.s4 1983009808
        %v7925 = vunpack.c.0.s8 %v7924
        %v7926 = vlaneseq
        %v7927 = vshrl.u32 %v7926, 7
        %v7928 = vsub.s32 %v7925, %v7927
        %v7929 = vrot.slane %v7921, %v7928
        %v7931 = vunpack.c.l.s4 1983009808
        %v7932 = vunpack.c.0.s8 %v7931
        %v7933 = vlaneseq
        %v7934 = vshrl.u32 %v7933, 7
        %v7935 = vsub.s32 %v7932, %v7934
        %v7936 = vrot.slane %v7922, %v7935
        %v7937 = vcombine.low %v7871, %v7881
        %v7938 = vcombine.high %v7871, %v7881
        %v7940 = vunpack.c.l.s4 1983009808
        %v7941 = vunpack.c.0.s8 %v7940
        %v7942 = vlaneseq
        %v7943 = vshrl.u32 %v7942, 7
        %v7944 = vsub.s32 %v7941, %v7943
        %v7945 = vrot.slane %v7937, %v7944
        %v7947 = vunpack.c.l.s4 1983009808
        %v7948 = vunpack.c.0.s8 %v7947
        %v7949 = vlaneseq
        %v7950 = vshrl.u32 %v7949, 7
        %v7951 = vsub.s32 %v7948, %v7950
        %v7952 = vrot.slane %v7938, %v7951
        %v7953 = vcombine.low %v7876, %v7886
        %v7954 = vcombine.high %v7876, %v7886
        %v7956 = vunpack.c.l.s4 1983009808
        %v7957 = vunpack.c.0.s8 %v7956
        %v7958 = vlaneseq
        %v7959 = vshrl.u32 %v7958, 7
        %v7960 = vsub.s32 %v7957, %v7959
        %v7961 = vrot.slane %v7953, %v7960
        %v7963 = vunpack.c.l.s4 1983009808
        %v7964 = vunpack.c.0.s8 %v7963
        %v7965 = vlaneseq
        %v7966 = vshrl.u32 %v7965, 7
        %v7967 = vsub.s32 %v7964, %v7966
        %v7968 = vrot.slane %v7954, %v7967
        %v7969 = vcombine.low %v7913, %v7929
        %v7970 = vcombine.high %v7913, %v7929
        %v7972 = vunpack.c.l.s4 1934713408
        %v7973 = vunpack.c.0.s8 %v7972
        %v7974 = vlaneseq
        %v7975 = vshrl.u32 %v7974, 7
        %v7976 = vsub.s32 %v7973, %v7975
        %v7977 = vrot.slane %v7969, %v7976
        %v7979 = vunpack.c.l.s4 1934713408
        %v7980 = vunpack.c.0.s8 %v7979
        %v7981 = vlaneseq
        %v7982 = vshrl.u32 %v7981, 7
        %v7983 = vsub.s32 %v7980, %v7982
        %v7984 = vrot.slane %v7970, %v7983
        %v7985 = vcombine.low %v7920, %v7936
        %v7986 = vcombine.high %v7920, %v7936
        %v7988 = vunpack.c.l.s4 1934713408
        %v7989 = vunpack.c.0.s8 %v7988
        %v7990 = vlaneseq
        %v7991 = vshrl.u32 %v7990, 7
        %v7992 = vsub.s32 %v7989, %v7991
        %v7993 = vrot.slane %v7985, %v7992
        %v7995 = vunpack.c.l.s4 1934713408
        %v7996 = vunpack.c.0.s8 %v7995
        %v7997 = vlaneseq
        %v7998 = vshrl.u32 %v7997, 7
        %v7999 = vsub.s32 %v7996, %v7998
        %v8000 = vrot.slane %v7986, %v7999
        %v8001 = vcombine.low %v7945, %v7961
        %v8002 = vcombine.high %v7945, %v7961
        %v8004 = vunpack.c.l.s4 1934713408
        %v8005 = vunpack.c.0.s8 %v8004
        %v8006 = vlaneseq
        %v8007 = vshrl.u32 %v8006, 7
        %v8008 = vsub.s32 %v8005, %v8007
        %v8009 = vrot.slane %v8001, %v8008
        %v8011 = vunpack.c.l.s4 1934713408
        %v8012 = vunpack.c.0.s8 %v8011
        %v8013 = vlaneseq
        %v8014 = vshrl.u32 %v8013, 7
        %v8015 = vsub.s32 %v8012, %v8014
        %v8016 = vrot.slane %v8002, %v8015
        %v8017 = vcombine.low %v7952, %v7968
        %v8018 = vcombine.high %v7952, %v7968
        %v8020 = vunpack.c.l.s4 1934713408
        %v8021 = vunpack.c.0.s8 %v8020
        %v8022 = vlaneseq
        %v8023 = vshrl.u32 %v8022, 7
        %v8024 = vsub.s32 %v8021, %v8023
        %v8025 = vrot.slane %v8017, %v8024
        %v8027 = vunpack.c.l.s4 1934713408
        %v8028 = vunpack.c.0.s8 %v8027
        %v8029 = vlaneseq
        %v8030 = vshrl.u32 %v8029, 7
        %v8031 = vsub.s32 %v8028, %v8030
        %v8032 = vrot.slane %v8018, %v8031
        %v8033 = vcombine.low %v7977, %v8009
        %v8034 = vcombine.high %v7977, %v8009
        %v8035 = vcombine.low %v7984, %v8016
        %v8036 = vcombine.high %v7984, %v8016
        %v8037 = vcombine.low %v7993, %v8025
        %v8038 = vcombine.high %v7993, %v8025
        %v8039 = vcombine.low %v8000, %v8032
        %v8040 = vcombine.high %v8000, %v8032
        %v8041 = vcombine.low %v7853, %v7863
        %v8042 = vcombine.high %v7853, %v7863
        %v8044 = vunpack.c.l.s4 1983009808
        %v8045 = vunpack.c.0.s8 %v8044
        %v8046 = vlaneseq
        %v8047 = vshrl.u32 %v8046, 7
        %v8048 = vsub.s32 %v8045, %v8047
        %v8049 = vrot.slane %v8041, %v8048
        %v8051 = vunpack.c.l.s4 1983009808
        %v8052 = vunpack.c.0.s8 %v8051
        %v8053 = vlaneseq
        %v8054 = vshrl.u32 %v8053, 7
        %v8055 = vsub.s32 %v8052, %v8054
        %v8056 = vrot.slane %v8042, %v8055
        %v8057 = vcombine.low %v7858, %v7868
        %v8058 = vcombine.high %v7858, %v7868
        %v8060 = vunpack.c.l.s4 1983009808
        %v8061 = vunpack.c.0.s8 %v8060
        %v8062 = vlaneseq
        %v8063 = vshrl.u32 %v8062, 7
        %v8064 = vsub.s32 %v8061, %v8063
        %v8065 = vrot.slane %v8057, %v8064
        %v8067 = vunpack.c.l.s4 1983009808
        %v8068 = vunpack.c.0.s8 %v8067
        %v8069 = vlaneseq
        %v8070 = vshrl.u32 %v8069, 7
        %v8071 = vsub.s32 %v8068, %v8070
        %v8072 = vrot.slane %v8058, %v8071
        %v8073 = vcombine.low %v7873, %v7883
        %v8074 = vcombine.high %v7873, %v7883
        %v8076 = vunpack.c.l.s4 1983009808
        %v8077 = vunpack.c.0.s8 %v8076
        %v8078 = vlaneseq
        %v8079 = vshrl.u32 %v8078, 7
        %v8080 = vsub.s32 %v8077, %v8079
        %v8081 = vrot.slane %v8073, %v8080
        %v8083 = vunpack.c.l.s4 1983009808
        %v8084 = vunpack.c.0.s8 %v8083
        %v8085 = vlaneseq
        %v8086 = vshrl.u32 %v8085, 7
        %v8087 = vsub.s32 %v8084, %v8086
        %v8088 = vrot.slane %v8074, %v8087
        %v8089 = vcombine.low %v7878, %v7888
        %v8090 = vcombine.high %v7878, %v7888
        %v8092 = vunpack.c.l.s4 1983009808
        %v8093 = vunpack.c.0.s8 %v8092
        %v8094 = vlaneseq
        %v8095 = vshrl.u32 %v8094, 7
        %v8096 = vsub.s32 %v8093, %v8095
        %v8097 = vrot.slane %v8089, %v8096
        %v8099 = vunpack.c.l.s4 1983009808
        %v8100 = vunpack.c.0.s8 %v8099
        %v8101 = vlaneseq
        %v8102 = vshrl.u32 %v8101, 7
        %v8103 = vsub.s32 %v8100, %v8102
        %v8104 = vrot.slane %v8090, %v8103
        %v8105 = vcombine.low %v8049, %v8065
        %v8106 = vcombine.high %v8049, %v8065
        %v8108 = vunpack.c.l.s4 1934713408
        %v8109 = vunpack.c.0.s8 %v8108
        %v8110 = vlaneseq
        %v8111 = vshrl.u32 %v8110, 7
        %v8112 = vsub.s32 %v8109, %v8111
        %v8113 = vrot.slane %v8105, %v8112
        %v8115 = vunpack.c.l.s4 1934713408
        %v8116 = vunpack.c.0.s8 %v8115
        %v8117 = vlaneseq
        %v8118 = vshrl.u32 %v8117, 7
        %v8119 = vsub.s32 %v8116, %v8118
        %v8120 = vrot.slane %v8106, %v8119
        %v8121 = vcombine.low %v8056, %v8072
        %v8122 = vcombine.high %v8056, %v8072
        %v8124 = vunpack.c.l.s4 1934713408
        %v8125 = vunpack.c.0.s8 %v8124
        %v8126 = vlaneseq
        %v8127 = vshrl.u32 %v8126, 7
        %v8128 = vsub.s32 %v8125, %v8127
        %v8129 = vrot.slane %v8121, %v8128
        %v8131 = vunpack.c.l.s4 1934713408
        %v8132 = vunpack.c.0.s8 %v8131
        %v8133 = vlaneseq
        %v8134 = vshrl.u32 %v8133, 7
        %v8135 = vsub.s32 %v8132, %v8134
        %v8136 = vrot.slane %v8122, %v8135
        %v8137 = vcombine.low %v8081, %v8097
        %v8138 = vcombine.high %v8081, %v8097
        %v8140 = vunpack.c.l.s4 1934713408
        %v8141 = vunpack.c.0.s8 %v8140
        %v8142 = vlaneseq
        %v8143 = vshrl.u32 %v8142, 7
        %v8144 = vsub.s32 %v8141, %v8143
        %v8145 = vrot.slane %v8137, %v8144
        %v8147 = vunpack.c.l.s4 1934713408
        %v8148 = vunpack.c.0.s8 %v8147
        %v8149 = vlaneseq
        %v8150 = vshrl.u32 %v8149, 7
        %v8151 = vsub.s32 %v8148, %v8150
        %v8152 = vrot.slane %v8138, %v8151
        %v8153 = vcombine.low %v8088, %v8104
        %v8154 = vcombine.high %v8088, %v8104
        %v8156 = vunpack.c.l.s4 1934713408
        %v8157 = vunpack.c.0.s8 %v8156
        %v8158 = vlaneseq
        %v8159 = vshrl.u32 %v8158, 7
        %v8160 = vsub.s32 %v8157, %v8159
        %v8161 = vrot.slane %v8153, %v8160
        %v8163 = vunpack.c.l.s4 1934713408
        %v8164 = vunpack.c.0.s8 %v8163
        %v8165 = vlaneseq
        %v8166 = vshrl.u32 %v8165, 7
        %v8167 = vsub.s32 %v8164, %v8166
        %v8168 = vrot.slane %v8154, %v8167
        %v8169 = vcombine.low %v8113, %v8145
        %v8170 = vcombine.high %v8113, %v8145
        %v8171 = vcombine.low %v8120, %v8152
        %v8172 = vcombine.high %v8120, %v8152
        %v8173 = vcombine.low %v8129, %v8161
        %v8174 = vcombine.high %v8129, %v8161
        %v8175 = vcombine.low %v8136, %v8168
        %v8176 = vcombine.high %v8136, %v8168
        %8178 = vrot.lane.b32.xlu0 %v8034, 16
        %v8179 = vpop.permute.xlu0 %8178
        %8182 = vrot.lane.b32.xlu0 %v8035, 32
        %v8183 = vpop.permute.xlu0 %8182
        %8186 = vrot.lane.b32.xlu0 %v8036, 48
        %v8187 = vpop.permute.xlu0 %8186
        %8190 = vrot.lane.b32.xlu0 %v8037, 64
        %v8191 = vpop.permute.xlu0 %8190
        %8194 = vrot.lane.b32.xlu0 %v8038, 80
        %v8195 = vpop.permute.xlu0 %8194
        %8198 = vrot.lane.b32.xlu0 %v8039, 96
        %v8199 = vpop.permute.xlu0 %8198
        %8202 = vrot.lane.b32.xlu0 %v8040, 112
        %v8203 = vpop.permute.xlu0 %8202
        %8206 = vrot.lane.b32.xlu0 %v8170, 16
        %v8207 = vpop.permute.xlu0 %8206
        %8210 = vrot.lane.b32.xlu0 %v8171, 32
        %v8211 = vpop.permute.xlu0 %8210
        %8214 = vrot.lane.b32.xlu0 %v8172, 48
        %v8215 = vpop.permute.xlu0 %8214
        %8218 = vrot.lane.b32.xlu0 %v8173, 64
        %v8219 = vpop.permute.xlu0 %8218
        %8222 = vrot.lane.b32.xlu0 %v8174, 80
        %v8223 = vpop.permute.xlu0 %8222
        %8226 = vrot.lane.b32.xlu0 %v8175, 96
        %v8227 = vpop.permute.xlu0 %8226
        %8230 = vrot.lane.b32.xlu0 %v8176, 112
        %v8231 = vpop.permute.xlu0 %8230
        %v8233 = vsel %vm5054, %v8033, %v8179
        %v8234 = vsel %vm5056, %v8233, %v8183
        %v8235 = vsel %vm5058, %v8234, %v8187
        %v8236 = vsel %vm5060, %v8235, %v8191
        %v8237 = vsel %vm5062, %v8236, %v8195
        %v8238 = vsel %vm5064, %v8237, %v8199
        %v8239 = vsel %vm5066, %v8238, %v8203
        %v8240 = vsel %vm5054, %v8169, %v8207
        %v8241 = vsel %vm5056, %v8240, %v8211
        %v8242 = vsel %vm5058, %v8241, %v8215
        %v8243 = vsel %vm5060, %v8242, %v8219
        %v8244 = vsel %vm5062, %v8243, %v8223
        %v8245 = vsel %vm5064, %v8244, %v8227
        %v8246 = vsel %vm5066, %v8245, %v8231
        %v8247 = vmul.f32 %v5067, %v7817
        %v8248 = vmul.f32 %v5074, %v7824
        %v8249 = vmax.f32 %v7395, %v8247
        %v8250 = vmax.f32 %v7396, %v8248
        %v8251 = vsub.f32 %v7395, %v8249
        %v8252 = vsub.f32 %v7396, %v8250
        %v8253 = vmul.f32 %v8251, 1.442695
        %v8254 = vpow.pop %v8253
        %v8255 = vmul.f32 %v8252, 1.442695
        %v8256 = vpow.pop %v8255
        %v8257 = vsub.f32 %v8247, %v8249
        %v8258 = vsub.f32 %v8248, %v8250
        %v8259 = vmul.f32 %v8257, 1.442695
        %v8260 = vpow.pop %v8259
        %v8261 = vmul.f32 %v8258, 1.442695
        %v8262 = vpow.pop %v8261
        %v8263 = vmul.f32 %v8254, %v7411
        %v8264 = vmul.f32 %v8256, %v7412
        %v8265 = vadd.f32 %v8263, %v8260
        %v8266 = vadd.f32 %v8264, %v8262
        %v8267 = vmul.f32 %v8254, %v7417
        %v8268 = vmul.f32 %v8256, %v7418
        %v8269 = vmul.f32 %v8260, %v8239
        %v8270 = vmul.f32 %v8262, %v8246
        %v8271 = vadd.f32 %v8267, %v8269
        %v8272 = vadd.f32 %v8268, %v8270
        %8273 = vrot.lane.b32.xlu0 %v7429, 127
        %v8274 = vpop.permute.xlu0 %8273
        %8275 = vrot.lane.b32.xlu0 %v7431, 127
        %v8276 = vpop.permute.xlu0 %8275
        %8277 = vrot.lane.b32.xlu0 %v7434, 127
        %v8278 = vpop.permute.xlu0 %8277
        %8279 = vrot.lane.b32.xlu0 %v7436, 127
        %v8280 = vpop.permute.xlu0 %8279
        %8281 = vrot.lane.b32.xlu0 %v7439, 127
        %v8282 = vpop.permute.xlu0 %8281
        %8283 = vrot.lane.b32.xlu0 %v7441, 127
        %v8284 = vpop.permute.xlu0 %8283
        %8285 = vrot.lane.b32.xlu0 %v7444, 127
        %v8286 = vpop.permute.xlu0 %8285
        %8287 = vrot.lane.b32.xlu0 %v7446, 127
        %v8288 = vpop.permute.xlu0 %8287
        %8289 = vrot.lane.b32.xlu0 %v7449, 127
        %v8290 = vpop.permute.xlu0 %8289
        %8291 = vrot.lane.b32.xlu0 %v7451, 127
        %v8292 = vpop.permute.xlu0 %8291
        %8293 = vrot.lane.b32.xlu0 %v7454, 127
        %v8294 = vpop.permute.xlu0 %8293
        %8295 = vrot.lane.b32.xlu0 %v7456, 127
        %v8296 = vpop.permute.xlu0 %8295
        %8297 = vrot.lane.b32.xlu0 %v7459, 127
        %v8298 = vpop.permute.xlu0 %8297
        %8299 = vrot.lane.b32.xlu0 %v7461, 127
        %v8300 = vpop.permute.xlu0 %8299
        %8301 = vrot.lane.b32.xlu0 %v7464, 127
        %v8302 = vpop.permute.xlu0 %8301
        %8303 = vrot.lane.b32.xlu0 %v7466, 127
        %v8304 = vpop.permute.xlu0 %8303
        %v8321 = vcombine.low %v8274, %v8282
        %v8322 = vcombine.high %v8274, %v8282
        %v8324 = vunpack.c.l.s4 1983009808
        %v8325 = vunpack.c.0.s8 %v8324
        %v8326 = vlaneseq
        %v8327 = vshrl.u32 %v8326, 7
        %v8328 = vsub.s32 %v8325, %v8327
        %v8329 = vrot.slane %v8321, %v8328
        %v8331 = vunpack.c.l.s4 1983009808
        %v8332 = vunpack.c.0.s8 %v8331
        %v8333 = vlaneseq
        %v8334 = vshrl.u32 %v8333, 7
        %v8335 = vsub.s32 %v8332, %v8334
        %v8336 = vrot.slane %v8322, %v8335
        %v8337 = vcombine.low %v8278, %v8286
        %v8338 = vcombine.high %v8278, %v8286
        %v8340 = vunpack.c.l.s4 1983009808
        %v8341 = vunpack.c.0.s8 %v8340
        %v8342 = vlaneseq
        %v8343 = vshrl.u32 %v8342, 7
        %v8344 = vsub.s32 %v8341, %v8343
        %v8345 = vrot.slane %v8337, %v8344
        %v8347 = vunpack.c.l.s4 1983009808
        %v8348 = vunpack.c.0.s8 %v8347
        %v8349 = vlaneseq
        %v8350 = vshrl.u32 %v8349, 7
        %v8351 = vsub.s32 %v8348, %v8350
        %v8352 = vrot.slane %v8338, %v8351
        %v8353 = vcombine.low %v8290, %v8298
        %v8354 = vcombine.high %v8290, %v8298
        %v8356 = vunpack.c.l.s4 1983009808
        %v8357 = vunpack.c.0.s8 %v8356
        %v8358 = vlaneseq
        %v8359 = vshrl.u32 %v8358, 7
        %v8360 = vsub.s32 %v8357, %v8359
        %v8361 = vrot.slane %v8353, %v8360
        %v8363 = vunpack.c.l.s4 1983009808
        %v8364 = vunpack.c.0.s8 %v8363
        %v8365 = vlaneseq
        %v8366 = vshrl.u32 %v8365, 7
        %v8367 = vsub.s32 %v8364, %v8366
        %v8368 = vrot.slane %v8354, %v8367
        %v8369 = vcombine.low %v8294, %v8302
        %v8370 = vcombine.high %v8294, %v8302
        %v8372 = vunpack.c.l.s4 1983009808
        %v8373 = vunpack.c.0.s8 %v8372
        %v8374 = vlaneseq
        %v8375 = vshrl.u32 %v8374, 7
        %v8376 = vsub.s32 %v8373, %v8375
        %v8377 = vrot.slane %v8369, %v8376
        %v8379 = vunpack.c.l.s4 1983009808
        %v8380 = vunpack.c.0.s8 %v8379
        %v8381 = vlaneseq
        %v8382 = vshrl.u32 %v8381, 7
        %v8383 = vsub.s32 %v8380, %v8382
        %v8384 = vrot.slane %v8370, %v8383
        %v8385 = vcombine.low %v8329, %v8345
        %v8386 = vcombine.high %v8329, %v8345
        %v8388 = vunpack.c.l.s4 1934713408
        %v8389 = vunpack.c.0.s8 %v8388
        %v8390 = vlaneseq
        %v8391 = vshrl.u32 %v8390, 7
        %v8392 = vsub.s32 %v8389, %v8391
        %v8393 = vrot.slane %v8385, %v8392
        %v8395 = vunpack.c.l.s4 1934713408
        %v8396 = vunpack.c.0.s8 %v8395
        %v8397 = vlaneseq
        %v8398 = vshrl.u32 %v8397, 7
        %v8399 = vsub.s32 %v8396, %v8398
        %v8400 = vrot.slane %v8386, %v8399
        %v8401 = vcombine.low %v8336, %v8352
        %v8402 = vcombine.high %v8336, %v8352
        %v8404 = vunpack.c.l.s4 1934713408
        %v8405 = vunpack.c.0.s8 %v8404
        %v8406 = vlaneseq
        %v8407 = vshrl.u32 %v8406, 7
        %v8408 = vsub.s32 %v8405, %v8407
        %v8409 = vrot.slane %v8401, %v8408
        %v8411 = vunpack.c.l.s4 1934713408
        %v8412 = vunpack.c.0.s8 %v8411
        %v8413 = vlaneseq
        %v8414 = vshrl.u32 %v8413, 7
        %v8415 = vsub.s32 %v8412, %v8414
        %v8416 = vrot.slane %v8402, %v8415
        %v8417 = vcombine.low %v8361, %v8377
        %v8418 = vcombine.high %v8361, %v8377
        %v8420 = vunpack.c.l.s4 1934713408
        %v8421 = vunpack.c.0.s8 %v8420
        %v8422 = vlaneseq
        %v8423 = vshrl.u32 %v8422, 7
        %v8424 = vsub.s32 %v8421, %v8423
        %v8425 = vrot.slane %v8417, %v8424
        %v8427 = vunpack.c.l.s4 1934713408
        %v8428 = vunpack.c.0.s8 %v8427
        %v8429 = vlaneseq
        %v8430 = vshrl.u32 %v8429, 7
        %v8431 = vsub.s32 %v8428, %v8430
        %v8432 = vrot.slane %v8418, %v8431
        %v8433 = vcombine.low %v8368, %v8384
        %v8434 = vcombine.high %v8368, %v8384
        %v8436 = vunpack.c.l.s4 1934713408
        %v8437 = vunpack.c.0.s8 %v8436
        %v8438 = vlaneseq
        %v8439 = vshrl.u32 %v8438, 7
        %v8440 = vsub.s32 %v8437, %v8439
        %v8441 = vrot.slane %v8433, %v8440
        %v8443 = vunpack.c.l.s4 1934713408
        %v8444 = vunpack.c.0.s8 %v8443
        %v8445 = vlaneseq
        %v8446 = vshrl.u32 %v8445, 7
        %v8447 = vsub.s32 %v8444, %v8446
        %v8448 = vrot.slane %v8434, %v8447
        %v8449 = vcombine.low %v8393, %v8425
        %v8450 = vcombine.high %v8393, %v8425
        %v8451 = vcombine.low %v8400, %v8432
        %v8452 = vcombine.high %v8400, %v8432
        %v8453 = vcombine.low %v8409, %v8441
        %v8454 = vcombine.high %v8409, %v8441
        %v8455 = vcombine.low %v8416, %v8448
        %v8456 = vcombine.high %v8416, %v8448
        %v8457 = vcombine.low %v8276, %v8284
        %v8458 = vcombine.high %v8276, %v8284
        %v8460 = vunpack.c.l.s4 1983009808
        %v8461 = vunpack.c.0.s8 %v8460
        %v8462 = vlaneseq
        %v8463 = vshrl.u32 %v8462, 7
        %v8464 = vsub.s32 %v8461, %v8463
        %v8465 = vrot.slane %v8457, %v8464
        %v8467 = vunpack.c.l.s4 1983009808
        %v8468 = vunpack.c.0.s8 %v8467
        %v8469 = vlaneseq
        %v8470 = vshrl.u32 %v8469, 7
        %v8471 = vsub.s32 %v8468, %v8470
        %v8472 = vrot.slane %v8458, %v8471
        %v8473 = vcombine.low %v8280, %v8288
        %v8474 = vcombine.high %v8280, %v8288
        %v8476 = vunpack.c.l.s4 1983009808
        %v8477 = vunpack.c.0.s8 %v8476
        %v8478 = vlaneseq
        %v8479 = vshrl.u32 %v8478, 7
        %v8480 = vsub.s32 %v8477, %v8479
        %v8481 = vrot.slane %v8473, %v8480
        %v8483 = vunpack.c.l.s4 1983009808
        %v8484 = vunpack.c.0.s8 %v8483
        %v8485 = vlaneseq
        %v8486 = vshrl.u32 %v8485, 7
        %v8487 = vsub.s32 %v8484, %v8486
        %v8488 = vrot.slane %v8474, %v8487
        %v8489 = vcombine.low %v8292, %v8300
        %v8490 = vcombine.high %v8292, %v8300
        %v8492 = vunpack.c.l.s4 1983009808
        %v8493 = vunpack.c.0.s8 %v8492
        %v8494 = vlaneseq
        %v8495 = vshrl.u32 %v8494, 7
        %v8496 = vsub.s32 %v8493, %v8495
        %v8497 = vrot.slane %v8489, %v8496
        %v8499 = vunpack.c.l.s4 1983009808
        %v8500 = vunpack.c.0.s8 %v8499
        %v8501 = vlaneseq
        %v8502 = vshrl.u32 %v8501, 7
        %v8503 = vsub.s32 %v8500, %v8502
        %v8504 = vrot.slane %v8490, %v8503
        %v8505 = vcombine.low %v8296, %v8304
        %v8506 = vcombine.high %v8296, %v8304
        %v8508 = vunpack.c.l.s4 1983009808
        %v8509 = vunpack.c.0.s8 %v8508
        %v8510 = vlaneseq
        %v8511 = vshrl.u32 %v8510, 7
        %v8512 = vsub.s32 %v8509, %v8511
        %v8513 = vrot.slane %v8505, %v8512
        %v8515 = vunpack.c.l.s4 1983009808
        %v8516 = vunpack.c.0.s8 %v8515
        %v8517 = vlaneseq
        %v8518 = vshrl.u32 %v8517, 7
        %v8519 = vsub.s32 %v8516, %v8518
        %v8520 = vrot.slane %v8506, %v8519
        %v8521 = vcombine.low %v8465, %v8481
        %v8522 = vcombine.high %v8465, %v8481
        %v8524 = vunpack.c.l.s4 1934713408
        %v8525 = vunpack.c.0.s8 %v8524
        %v8526 = vlaneseq
        %v8527 = vshrl.u32 %v8526, 7
        %v8528 = vsub.s32 %v8525, %v8527
        %v8529 = vrot.slane %v8521, %v8528
        %v8531 = vunpack.c.l.s4 1934713408
        %v8532 = vunpack.c.0.s8 %v8531
        %v8533 = vlaneseq
        %v8534 = vshrl.u32 %v8533, 7
        %v8535 = vsub.s32 %v8532, %v8534
        %v8536 = vrot.slane %v8522, %v8535
        %v8537 = vcombine.low %v8472, %v8488
        %v8538 = vcombine.high %v8472, %v8488
        %v8540 = vunpack.c.l.s4 1934713408
        %v8541 = vunpack.c.0.s8 %v8540
        %v8542 = vlaneseq
        %v8543 = vshrl.u32 %v8542, 7
        %v8544 = vsub.s32 %v8541, %v8543
        %v8545 = vrot.slane %v8537, %v8544
        %v8547 = vunpack.c.l.s4 1934713408
        %v8548 = vunpack.c.0.s8 %v8547
        %v8549 = vlaneseq
        %v8550 = vshrl.u32 %v8549, 7
        %v8551 = vsub.s32 %v8548, %v8550
        %v8552 = vrot.slane %v8538, %v8551
        %v8553 = vcombine.low %v8497, %v8513
        %v8554 = vcombine.high %v8497, %v8513
        %v8556 = vunpack.c.l.s4 1934713408
        %v8557 = vunpack.c.0.s8 %v8556
        %v8558 = vlaneseq
        %v8559 = vshrl.u32 %v8558, 7
        %v8560 = vsub.s32 %v8557, %v8559
        %v8561 = vrot.slane %v8553, %v8560
        %v8563 = vunpack.c.l.s4 1934713408
        %v8564 = vunpack.c.0.s8 %v8563
        %v8565 = vlaneseq
        %v8566 = vshrl.u32 %v8565, 7
        %v8567 = vsub.s32 %v8564, %v8566
        %v8568 = vrot.slane %v8554, %v8567
        %v8569 = vcombine.low %v8504, %v8520
        %v8570 = vcombine.high %v8504, %v8520
        %v8572 = vunpack.c.l.s4 1934713408
        %v8573 = vunpack.c.0.s8 %v8572
        %v8574 = vlaneseq
        %v8575 = vshrl.u32 %v8574, 7
        %v8576 = vsub.s32 %v8573, %v8575
        %v8577 = vrot.slane %v8569, %v8576
        %v8579 = vunpack.c.l.s4 1934713408
        %v8580 = vunpack.c.0.s8 %v8579
        %v8581 = vlaneseq
        %v8582 = vshrl.u32 %v8581, 7
        %v8583 = vsub.s32 %v8580, %v8582
        %v8584 = vrot.slane %v8570, %v8583
        %v8585 = vcombine.low %v8529, %v8561
        %v8586 = vcombine.high %v8529, %v8561
        %v8587 = vcombine.low %v8536, %v8568
        %v8588 = vcombine.high %v8536, %v8568
        %v8589 = vcombine.low %v8545, %v8577
        %v8590 = vcombine.high %v8545, %v8577
        %v8591 = vcombine.low %v8552, %v8584
        %v8592 = vcombine.high %v8552, %v8584
        %8594 = vrot.lane.b32.xlu0 %v8450, 16
        %v8595 = vpop.permute.xlu0 %8594
        %8598 = vrot.lane.b32.xlu0 %v8451, 32
        %v8599 = vpop.permute.xlu0 %8598
        %8602 = vrot.lane.b32.xlu0 %v8452, 48
        %v8603 = vpop.permute.xlu0 %8602
        %8606 = vrot.lane.b32.xlu0 %v8453, 64
        %v8607 = vpop.permute.xlu0 %8606
        %8610 = vrot.lane.b32.xlu0 %v8454, 80
        %v8611 = vpop.permute.xlu0 %8610
        %8614 = vrot.lane.b32.xlu0 %v8455, 96
        %v8615 = vpop.permute.xlu0 %8614
        %8618 = vrot.lane.b32.xlu0 %v8456, 112
        %v8619 = vpop.permute.xlu0 %8618
        %8622 = vrot.lane.b32.xlu0 %v8586, 16
        %v8623 = vpop.permute.xlu0 %8622
        %8626 = vrot.lane.b32.xlu0 %v8587, 32
        %v8627 = vpop.permute.xlu0 %8626
        %8630 = vrot.lane.b32.xlu0 %v8588, 48
        %v8631 = vpop.permute.xlu0 %8630
        %8634 = vrot.lane.b32.xlu0 %v8589, 64
        %v8635 = vpop.permute.xlu0 %8634
        %8638 = vrot.lane.b32.xlu0 %v8590, 80
        %v8639 = vpop.permute.xlu0 %8638
        %8642 = vrot.lane.b32.xlu0 %v8591, 96
        %v8643 = vpop.permute.xlu0 %8642
        %8646 = vrot.lane.b32.xlu0 %v8592, 112
        %v8647 = vpop.permute.xlu0 %8646
        %v8649 = vsel %vm5054, %v8449, %v8595
        %v8650 = vsel %vm5056, %v8649, %v8599
        %v8651 = vsel %vm5058, %v8650, %v8603
        %v8652 = vsel %vm5060, %v8651, %v8607
        %v8653 = vsel %vm5062, %v8652, %v8611
        %v8654 = vsel %vm5064, %v8653, %v8615
        %v8655 = vsel %vm5066, %v8654, %v8619
        %v8656 = vsel %vm5054, %v8585, %v8623
        %v8657 = vsel %vm5056, %v8656, %v8627
        %v8658 = vsel %vm5058, %v8657, %v8631
        %v8659 = vsel %vm5060, %v8658, %v8635
        %v8660 = vsel %vm5062, %v8659, %v8639
        %v8661 = vsel %vm5064, %v8660, %v8643
        %v8662 = vsel %vm5066, %v8661, %v8647
        %v8687 = vrot.slane %v3051, 1
        %v8688 = vrot.slane %v3187, 1
        %v8689 = vsel %vm4637, %v8687, %v8688
        %v8690 = vrot.slane %v3233, 1
        %v8691 = vsel %vm4637, %v8688, %v8690
        %v8692 = vrot.slane %v3052, 1
        %v8693 = vrot.slane %v3188, 1
        %v8694 = vsel %vm4637, %v8692, %v8693
        %v8695 = vrot.slane %v3257, 1
        %v8696 = vsel %vm4637, %v8693, %v8695
        %v8697 = vrot.slane %v3053, 1
        %v8698 = vrot.slane %v3189, 1
        %v8699 = vsel %vm4637, %v8697, %v8698
        %v8700 = vrot.slane %v3240, 1
        %v8701 = vsel %vm4637, %v8698, %v8700
        %v8702 = vrot.slane %v3054, 1
        %v8703 = vrot.slane %v3190, 1
        %v8704 = vsel %vm4637, %v8702, %v8703
        %v8705 = vrot.slane %v3258, 1
        %v8706 = vsel %vm4637, %v8703, %v8705
        %v8707 = vrot.slane %v3055, 1
        %v8708 = vrot.slane %v3191, 1
        %v8709 = vsel %vm4637, %v8707, %v8708
        %v8710 = vrot.slane %v3249, 1
        %v8711 = vsel %vm4637, %v8708, %v8710
        %v8712 = vrot.slane %v3056, 1
        %v8713 = vrot.slane %v3192, 1
        %v8714 = vsel %vm4637, %v8712, %v8713
        %v8715 = vrot.slane %v3259, 1
        %v8716 = vsel %vm4637, %v8713, %v8715
        %v8717 = vrot.slane %v3057, 1
        %v8718 = vrot.slane %v3193, 1
        %v8719 = vsel %vm4637, %v8717, %v8718
        %v8720 = vrot.slane %v3256, 1
        %v8721 = vsel %vm4637, %v8718, %v8720
        %v8722 = vrot.slane %v3058, 1
        %v8723 = vrot.slane %v3194, 1
        %v8724 = vsel %vm4637, %v8722, %v8723
        %v8725 = vrot.slane %v3260, 1
        %v8726 = vsel %vm4637, %v8723, %v8725
        %8727 = vrot.lane.b32.xlu0 %v8689, 127
        %v8728 = vpop.permute.xlu0 %8727
        %8729 = vrot.lane.b32.xlu0 %v8691, 127
        %v8730 = vpop.permute.xlu0 %8729
        %8731 = vrot.lane.b32.xlu0 %v8694, 127
        %v8732 = vpop.permute.xlu0 %8731
        %8733 = vrot.lane.b32.xlu0 %v8696, 127
        %v8734 = vpop.permute.xlu0 %8733
        %8735 = vrot.lane.b32.xlu0 %v8699, 127
        %v8736 = vpop.permute.xlu0 %8735
        %8737 = vrot.lane.b32.xlu0 %v8701, 127
        %v8738 = vpop.permute.xlu0 %8737
        %8739 = vrot.lane.b32.xlu0 %v8704, 127
        %v8740 = vpop.permute.xlu0 %8739
        %8741 = vrot.lane.b32.xlu0 %v8706, 127
        %v8742 = vpop.permute.xlu0 %8741
        %8743 = vrot.lane.b32.xlu0 %v8709, 127
        %v8744 = vpop.permute.xlu0 %8743
        %8745 = vrot.lane.b32.xlu0 %v8711, 127
        %v8746 = vpop.permute.xlu0 %8745
        %8747 = vrot.lane.b32.xlu0 %v8714, 127
        %v8748 = vpop.permute.xlu0 %8747
        %8749 = vrot.lane.b32.xlu0 %v8716, 127
        %v8750 = vpop.permute.xlu0 %8749
        %8751 = vrot.lane.b32.xlu0 %v8719, 127
        %v8752 = vpop.permute.xlu0 %8751
        %8753 = vrot.lane.b32.xlu0 %v8721, 127
        %v8754 = vpop.permute.xlu0 %8753
        %8755 = vrot.lane.b32.xlu0 %v8724, 127
        %v8756 = vpop.permute.xlu0 %8755
        %8757 = vrot.lane.b32.xlu0 %v8726, 127
        %v8758 = vpop.permute.xlu0 %8757
        %v8775 = vcombine.low %v8728, %v8736
        %v8776 = vcombine.high %v8728, %v8736
        %v8778 = vunpack.c.l.s4 1983009808
        %v8779 = vunpack.c.0.s8 %v8778
        %v8780 = vlaneseq
        %v8781 = vshrl.u32 %v8780, 7
        %v8782 = vsub.s32 %v8779, %v8781
        %v8783 = vrot.slane %v8775, %v8782
        %v8785 = vunpack.c.l.s4 1983009808
        %v8786 = vunpack.c.0.s8 %v8785
        %v8787 = vlaneseq
        %v8788 = vshrl.u32 %v8787, 7
        %v8789 = vsub.s32 %v8786, %v8788
        %v8790 = vrot.slane %v8776, %v8789
        %v8791 = vcombine.low %v8732, %v8740
        %v8792 = vcombine.high %v8732, %v8740
        %v8794 = vunpack.c.l.s4 1983009808
        %v8795 = vunpack.c.0.s8 %v8794
        %v8796 = vlaneseq
        %v8797 = vshrl.u32 %v8796, 7
        %v8798 = vsub.s32 %v8795, %v8797
        %v8799 = vrot.slane %v8791, %v8798
        %v8801 = vunpack.c.l.s4 1983009808
        %v8802 = vunpack.c.0.s8 %v8801
        %v8803 = vlaneseq
        %v8804 = vshrl.u32 %v8803, 7
        %v8805 = vsub.s32 %v8802, %v8804
        %v8806 = vrot.slane %v8792, %v8805
        %v8807 = vcombine.low %v8744, %v8752
        %v8808 = vcombine.high %v8744, %v8752
        %v8810 = vunpack.c.l.s4 1983009808
        %v8811 = vunpack.c.0.s8 %v8810
        %v8812 = vlaneseq
        %v8813 = vshrl.u32 %v8812, 7
        %v8814 = vsub.s32 %v8811, %v8813
        %v8815 = vrot.slane %v8807, %v8814
        %v8817 = vunpack.c.l.s4 1983009808
        %v8818 = vunpack.c.0.s8 %v8817
        %v8819 = vlaneseq
        %v8820 = vshrl.u32 %v8819, 7
        %v8821 = vsub.s32 %v8818, %v8820
        %v8822 = vrot.slane %v8808, %v8821
        %v8823 = vcombine.low %v8748, %v8756
        %v8824 = vcombine.high %v8748, %v8756
        %v8826 = vunpack.c.l.s4 1983009808
        %v8827 = vunpack.c.0.s8 %v8826
        %v8828 = vlaneseq
        %v8829 = vshrl.u32 %v8828, 7
        %v8830 = vsub.s32 %v8827, %v8829
        %v8831 = vrot.slane %v8823, %v8830
        %v8833 = vunpack.c.l.s4 1983009808
        %v8834 = vunpack.c.0.s8 %v8833
        %v8835 = vlaneseq
        %v8836 = vshrl.u32 %v8835, 7
        %v8837 = vsub.s32 %v8834, %v8836
        %v8838 = vrot.slane %v8824, %v8837
        %v8839 = vcombine.low %v8783, %v8799
        %v8840 = vcombine.high %v8783, %v8799
        %v8842 = vunpack.c.l.s4 1934713408
        %v8843 = vunpack.c.0.s8 %v8842
        %v8844 = vlaneseq
        %v8845 = vshrl.u32 %v8844, 7
        %v8846 = vsub.s32 %v8843, %v8845
        %v8847 = vrot.slane %v8839, %v8846
        %v8849 = vunpack.c.l.s4 1934713408
        %v8850 = vunpack.c.0.s8 %v8849
        %v8851 = vlaneseq
        %v8852 = vshrl.u32 %v8851, 7
        %v8853 = vsub.s32 %v8850, %v8852
        %v8854 = vrot.slane %v8840, %v8853
        %v8855 = vcombine.low %v8790, %v8806
        %v8856 = vcombine.high %v8790, %v8806
        %v8858 = vunpack.c.l.s4 1934713408
        %v8859 = vunpack.c.0.s8 %v8858
        %v8860 = vlaneseq
        %v8861 = vshrl.u32 %v8860, 7
        %v8862 = vsub.s32 %v8859, %v8861
        %v8863 = vrot.slane %v8855, %v8862
        %v8865 = vunpack.c.l.s4 1934713408
        %v8866 = vunpack.c.0.s8 %v8865
        %v8867 = vlaneseq
        %v8868 = vshrl.u32 %v8867, 7
        %v8869 = vsub.s32 %v8866, %v8868
        %v8870 = vrot.slane %v8856, %v8869
        %v8871 = vcombine.low %v8815, %v8831
        %v8872 = vcombine.high %v8815, %v8831
        %v8874 = vunpack.c.l.s4 1934713408
        %v8875 = vunpack.c.0.s8 %v8874
        %v8876 = vlaneseq
        %v8877 = vshrl.u32 %v8876, 7
        %v8878 = vsub.s32 %v8875, %v8877
        %v8879 = vrot.slane %v8871, %v8878
        %v8881 = vunpack.c.l.s4 1934713408
        %v8882 = vunpack.c.0.s8 %v8881
        %v8883 = vlaneseq
        %v8884 = vshrl.u32 %v8883, 7
        %v8885 = vsub.s32 %v8882, %v8884
        %v8886 = vrot.slane %v8872, %v8885
        %v8887 = vcombine.low %v8822, %v8838
        %v8888 = vcombine.high %v8822, %v8838
        %v8890 = vunpack.c.l.s4 1934713408
        %v8891 = vunpack.c.0.s8 %v8890
        %v8892 = vlaneseq
        %v8893 = vshrl.u32 %v8892, 7
        %v8894 = vsub.s32 %v8891, %v8893
        %v8895 = vrot.slane %v8887, %v8894
        %v8897 = vunpack.c.l.s4 1934713408
        %v8898 = vunpack.c.0.s8 %v8897
        %v8899 = vlaneseq
        %v8900 = vshrl.u32 %v8899, 7
        %v8901 = vsub.s32 %v8898, %v8900
        %v8902 = vrot.slane %v8888, %v8901
        %v8903 = vcombine.low %v8847, %v8879
        %v8904 = vcombine.high %v8847, %v8879
        %v8905 = vcombine.low %v8854, %v8886
        %v8906 = vcombine.high %v8854, %v8886
        %v8907 = vcombine.low %v8863, %v8895
        %v8908 = vcombine.high %v8863, %v8895
        %v8909 = vcombine.low %v8870, %v8902
        %v8910 = vcombine.high %v8870, %v8902
        %v8911 = vcombine.low %v8730, %v8738
        %v8912 = vcombine.high %v8730, %v8738
        %v8914 = vunpack.c.l.s4 1983009808
        %v8915 = vunpack.c.0.s8 %v8914
        %v8916 = vlaneseq
        %v8917 = vshrl.u32 %v8916, 7
        %v8918 = vsub.s32 %v8915, %v8917
        %v8919 = vrot.slane %v8911, %v8918
        %v8921 = vunpack.c.l.s4 1983009808
        %v8922 = vunpack.c.0.s8 %v8921
        %v8923 = vlaneseq
        %v8924 = vshrl.u32 %v8923, 7
        %v8925 = vsub.s32 %v8922, %v8924
        %v8926 = vrot.slane %v8912, %v8925
        %v8927 = vcombine.low %v8734, %v8742
        %v8928 = vcombine.high %v8734, %v8742
        %v8930 = vunpack.c.l.s4 1983009808
        %v8931 = vunpack.c.0.s8 %v8930
        %v8932 = vlaneseq
        %v8933 = vshrl.u32 %v8932, 7
        %v8934 = vsub.s32 %v8931, %v8933
        %v8935 = vrot.slane %v8927, %v8934
        %v8937 = vunpack.c.l.s4 1983009808
        %v8938 = vunpack.c.0.s8 %v8937
        %v8939 = vlaneseq
        %v8940 = vshrl.u32 %v8939, 7
        %v8941 = vsub.s32 %v8938, %v8940
        %v8942 = vrot.slane %v8928, %v8941
        %v8943 = vcombine.low %v8746, %v8754
        %v8944 = vcombine.high %v8746, %v8754
        %v8946 = vunpack.c.l.s4 1983009808
        %v8947 = vunpack.c.0.s8 %v8946
        %v8948 = vlaneseq
        %v8949 = vshrl.u32 %v8948, 7
        %v8950 = vsub.s32 %v8947, %v8949
        %v8951 = vrot.slane %v8943, %v8950
        %v8953 = vunpack.c.l.s4 1983009808
        %v8954 = vunpack.c.0.s8 %v8953
        %v8955 = vlaneseq
        %v8956 = vshrl.u32 %v8955, 7
        %v8957 = vsub.s32 %v8954, %v8956
        %v8958 = vrot.slane %v8944, %v8957
        %v8959 = vcombine.low %v8750, %v8758
        %v8960 = vcombine.high %v8750, %v8758
        %v8962 = vunpack.c.l.s4 1983009808
        %v8963 = vunpack.c.0.s8 %v8962
        %v8964 = vlaneseq
        %v8965 = vshrl.u32 %v8964, 7
        %v8966 = vsub.s32 %v8963, %v8965
        %v8967 = vrot.slane %v8959, %v8966
        %v8969 = vunpack.c.l.s4 1983009808
        %v8970 = vunpack.c.0.s8 %v8969
        %v8971 = vlaneseq
        %v8972 = vshrl.u32 %v8971, 7
        %v8973 = vsub.s32 %v8970, %v8972
        %v8974 = vrot.slane %v8960, %v8973
        %v8975 = vcombine.low %v8919, %v8935
        %v8976 = vcombine.high %v8919, %v8935
        %v8978 = vunpack.c.l.s4 1934713408
        %v8979 = vunpack.c.0.s8 %v8978
        %v8980 = vlaneseq
        %v8981 = vshrl.u32 %v8980, 7
        %v8982 = vsub.s32 %v8979, %v8981
        %v8983 = vrot.slane %v8975, %v8982
        %v8985 = vunpack.c.l.s4 1934713408
        %v8986 = vunpack.c.0.s8 %v8985
        %v8987 = vlaneseq
        %v8988 = vshrl.u32 %v8987, 7
        %v8989 = vsub.s32 %v8986, %v8988
        %v8990 = vrot.slane %v8976, %v8989
        %v8991 = vcombine.low %v8926, %v8942
        %v8992 = vcombine.high %v8926, %v8942
        %v8994 = vunpack.c.l.s4 1934713408
        %v8995 = vunpack.c.0.s8 %v8994
        %v8996 = vlaneseq
        %v8997 = vshrl.u32 %v8996, 7
        %v8998 = vsub.s32 %v8995, %v8997
        %v8999 = vrot.slane %v8991, %v8998
        %v9001 = vunpack.c.l.s4 1934713408
        %v9002 = vunpack.c.0.s8 %v9001
        %v9003 = vlaneseq
        %v9004 = vshrl.u32 %v9003, 7
        %v9005 = vsub.s32 %v9002, %v9004
        %v9006 = vrot.slane %v8992, %v9005
        %v9007 = vcombine.low %v8951, %v8967
        %v9008 = vcombine.high %v8951, %v8967
        %v9010 = vunpack.c.l.s4 1934713408
        %v9011 = vunpack.c.0.s8 %v9010
        %v9012 = vlaneseq
        %v9013 = vshrl.u32 %v9012, 7
        %v9014 = vsub.s32 %v9011, %v9013
        %v9015 = vrot.slane %v9007, %v9014
        %v9017 = vunpack.c.l.s4 1934713408
        %v9018 = vunpack.c.0.s8 %v9017
        %v9019 = vlaneseq
        %v9020 = vshrl.u32 %v9019, 7
        %v9021 = vsub.s32 %v9018, %v9020
        %v9022 = vrot.slane %v9008, %v9021
        %v9023 = vcombine.low %v8958, %v8974
        %v9024 = vcombine.high %v8958, %v8974
        %v9026 = vunpack.c.l.s4 1934713408
        %v9027 = vunpack.c.0.s8 %v9026
        %v9028 = vlaneseq
        %v9029 = vshrl.u32 %v9028, 7
        %v9030 = vsub.s32 %v9027, %v9029
        %v9031 = vrot.slane %v9023, %v9030
        %v9033 = vunpack.c.l.s4 1934713408
        %v9034 = vunpack.c.0.s8 %v9033
        %v9035 = vlaneseq
        %v9036 = vshrl.u32 %v9035, 7
        %v9037 = vsub.s32 %v9034, %v9036
        %v9038 = vrot.slane %v9024, %v9037
        %v9039 = vcombine.low %v8983, %v9015
        %v9040 = vcombine.high %v8983, %v9015
        %v9041 = vcombine.low %v8990, %v9022
        %v9042 = vcombine.high %v8990, %v9022
        %v9043 = vcombine.low %v8999, %v9031
        %v9044 = vcombine.high %v8999, %v9031
        %v9045 = vcombine.low %v9006, %v9038
        %v9046 = vcombine.high %v9006, %v9038
        %9048 = vrot.lane.b32.xlu0 %v8904, 16
        %v9049 = vpop.permute.xlu0 %9048
        %9052 = vrot.lane.b32.xlu0 %v8905, 32
        %v9053 = vpop.permute.xlu0 %9052
        %9056 = vrot.lane.b32.xlu0 %v8906, 48
        %v9057 = vpop.permute.xlu0 %9056
        %9060 = vrot.lane.b32.xlu0 %v8907, 64
        %v9061 = vpop.permute.xlu0 %9060
        %9064 = vrot.lane.b32.xlu0 %v8908, 80
        %v9065 = vpop.permute.xlu0 %9064
        %9068 = vrot.lane.b32.xlu0 %v8909, 96
        %v9069 = vpop.permute.xlu0 %9068
        %9072 = vrot.lane.b32.xlu0 %v8910, 112
        %v9073 = vpop.permute.xlu0 %9072
        %9076 = vrot.lane.b32.xlu0 %v9040, 16
        %v9077 = vpop.permute.xlu0 %9076
        %9080 = vrot.lane.b32.xlu0 %v9041, 32
        %v9081 = vpop.permute.xlu0 %9080
        %9084 = vrot.lane.b32.xlu0 %v9042, 48
        %v9085 = vpop.permute.xlu0 %9084
        %9088 = vrot.lane.b32.xlu0 %v9043, 64
        %v9089 = vpop.permute.xlu0 %9088
        %9092 = vrot.lane.b32.xlu0 %v9044, 80
        %v9093 = vpop.permute.xlu0 %9092
        %9096 = vrot.lane.b32.xlu0 %v9045, 96
        %v9097 = vpop.permute.xlu0 %9096
        %9100 = vrot.lane.b32.xlu0 %v9046, 112
        %v9101 = vpop.permute.xlu0 %9100
        %v9103 = vsel %vm5054, %v8903, %v9049
        %v9104 = vsel %vm5056, %v9103, %v9053
        %v9105 = vsel %vm5058, %v9104, %v9057
        %v9106 = vsel %vm5060, %v9105, %v9061
        %v9107 = vsel %vm5062, %v9106, %v9065
        %v9108 = vsel %vm5064, %v9107, %v9069
        %v9109 = vsel %vm5066, %v9108, %v9073
        %v9110 = vsel %vm5054, %v9039, %v9077
        %v9111 = vsel %vm5056, %v9110, %v9081
        %v9112 = vsel %vm5058, %v9111, %v9085
        %v9113 = vsel %vm5060, %v9112, %v9089
        %v9114 = vsel %vm5062, %v9113, %v9093
        %v9115 = vsel %vm5064, %v9114, %v9097
        %v9116 = vsel %vm5066, %v9115, %v9101
        %v9117 = vmul.f32 %v5067, %v8655
        %v9118 = vmul.f32 %v5074, %v8662
        %v9119 = vmax.f32 %v8249, %v9117
        %v9120 = vmax.f32 %v8250, %v9118
        %v9121 = vsub.f32 %v8249, %v9119
        %v9122 = vsub.f32 %v8250, %v9120
        %v9123 = vmul.f32 %v9121, 1.442695
        %v9124 = vpow.pop %v9123
        %v9125 = vmul.f32 %v9122, 1.442695
        %v9126 = vpow.pop %v9125
        %v9127 = vsub.f32 %v9117, %v9119
        %v9128 = vsub.f32 %v9118, %v9120
        %v9129 = vmul.f32 %v9127, 1.442695
        %v9130 = vpow.pop %v9129
        %v9131 = vmul.f32 %v9128, 1.442695
        %v9132 = vpow.pop %v9131
        %v9133 = vmul.f32 %v9124, %v8265
        %v9134 = vmul.f32 %v9126, %v8266
        %v9135 = vadd.f32 %v9133, %v9130
        %v9136 = vadd.f32 %v9134, %v9132
        %v9137 = vmul.f32 %v9124, %v8271
        %v9138 = vmul.f32 %v9126, %v8272
        %v9139 = vmul.f32 %v9130, %v9109
        %v9140 = vmul.f32 %v9132, %v9116
        %v9141 = vadd.f32 %v9137, %v9139
        %v9142 = vadd.f32 %v9138, %v9140
        %9143 = vrot.lane.b32.xlu0 %v7429, 126
        %v9144 = vpop.permute.xlu0 %9143
        %9145 = vrot.lane.b32.xlu0 %v7431, 126
        %v9146 = vpop.permute.xlu0 %9145
        %9147 = vrot.lane.b32.xlu0 %v7434, 126
        %v9148 = vpop.permute.xlu0 %9147
        %9149 = vrot.lane.b32.xlu0 %v7436, 126
        %v9150 = vpop.permute.xlu0 %9149
        %9151 = vrot.lane.b32.xlu0 %v7439, 126
        %v9152 = vpop.permute.xlu0 %9151
        %9153 = vrot.lane.b32.xlu0 %v7441, 126
        %v9154 = vpop.permute.xlu0 %9153
        %9155 = vrot.lane.b32.xlu0 %v7444, 126
        %v9156 = vpop.permute.xlu0 %9155
        %9157 = vrot.lane.b32.xlu0 %v7446, 126
        %v9158 = vpop.permute.xlu0 %9157
        %9159 = vrot.lane.b32.xlu0 %v7449, 126
        %v9160 = vpop.permute.xlu0 %9159
        %9161 = vrot.lane.b32.xlu0 %v7451, 126
        %v9162 = vpop.permute.xlu0 %9161
        %9163 = vrot.lane.b32.xlu0 %v7454, 126
        %v9164 = vpop.permute.xlu0 %9163
        %9165 = vrot.lane.b32.xlu0 %v7456, 126
        %v9166 = vpop.permute.xlu0 %9165
        %9167 = vrot.lane.b32.xlu0 %v7459, 126
        %v9168 = vpop.permute.xlu0 %9167
        %9169 = vrot.lane.b32.xlu0 %v7461, 126
        %v9170 = vpop.permute.xlu0 %9169
        %9171 = vrot.lane.b32.xlu0 %v7464, 126
        %v9172 = vpop.permute.xlu0 %9171
        %9173 = vrot.lane.b32.xlu0 %v7466, 126
        %v9174 = vpop.permute.xlu0 %9173
        %v9191 = vcombine.low %v9144, %v9152
        %v9192 = vcombine.high %v9144, %v9152
        %v9194 = vunpack.c.l.s4 1983009808
        %v9195 = vunpack.c.0.s8 %v9194
        %v9196 = vlaneseq
        %v9197 = vshrl.u32 %v9196, 7
        %v9198 = vsub.s32 %v9195, %v9197
        %v9199 = vrot.slane %v9191, %v9198
        %v9201 = vunpack.c.l.s4 1983009808
        %v9202 = vunpack.c.0.s8 %v9201
        %v9203 = vlaneseq
        %v9204 = vshrl.u32 %v9203, 7
        %v9205 = vsub.s32 %v9202, %v9204
        %v9206 = vrot.slane %v9192, %v9205
        %v9207 = vcombine.low %v9148, %v9156
        %v9208 = vcombine.high %v9148, %v9156
        %v9210 = vunpack.c.l.s4 1983009808
        %v9211 = vunpack.c.0.s8 %v9210
        %v9212 = vlaneseq
        %v9213 = vshrl.u32 %v9212, 7
        %v9214 = vsub.s32 %v9211, %v9213
        %v9215 = vrot.slane %v9207, %v9214
        %v9217 = vunpack.c.l.s4 1983009808
        %v9218 = vunpack.c.0.s8 %v9217
        %v9219 = vlaneseq
        %v9220 = vshrl.u32 %v9219, 7
        %v9221 = vsub.s32 %v9218, %v9220
        %v9222 = vrot.slane %v9208, %v9221
        %v9223 = vcombine.low %v9160, %v9168
        %v9224 = vcombine.high %v9160, %v9168
        %v9226 = vunpack.c.l.s4 1983009808
        %v9227 = vunpack.c.0.s8 %v9226
        %v9228 = vlaneseq
        %v9229 = vshrl.u32 %v9228, 7
        %v9230 = vsub.s32 %v9227, %v9229
        %v9231 = vrot.slane %v9223, %v9230
        %v9233 = vunpack.c.l.s4 1983009808
        %v9234 = vunpack.c.0.s8 %v9233
        %v9235 = vlaneseq
        %v9236 = vshrl.u32 %v9235, 7
        %v9237 = vsub.s32 %v9234, %v9236
        %v9238 = vrot.slane %v9224, %v9237
        %v9239 = vcombine.low %v9164, %v9172
        %v9240 = vcombine.high %v9164, %v9172
        %v9242 = vunpack.c.l.s4 1983009808
        %v9243 = vunpack.c.0.s8 %v9242
        %v9244 = vlaneseq
        %v9245 = vshrl.u32 %v9244, 7
        %v9246 = vsub.s32 %v9243, %v9245
        %v9247 = vrot.slane %v9239, %v9246
        %v9249 = vunpack.c.l.s4 1983009808
        %v9250 = vunpack.c.0.s8 %v9249
        %v9251 = vlaneseq
        %v9252 = vshrl.u32 %v9251, 7
        %v9253 = vsub.s32 %v9250, %v9252
        %v9254 = vrot.slane %v9240, %v9253
        %v9255 = vcombine.low %v9199, %v9215
        %v9256 = vcombine.high %v9199, %v9215
        %v9258 = vunpack.c.l.s4 1934713408
        %v9259 = vunpack.c.0.s8 %v9258
        %v9260 = vlaneseq
        %v9261 = vshrl.u32 %v9260, 7
        %v9262 = vsub.s32 %v9259, %v9261
        %v9263 = vrot.slane %v9255, %v9262
        %v9265 = vunpack.c.l.s4 1934713408
        %v9266 = vunpack.c.0.s8 %v9265
        %v9267 = vlaneseq
        %v9268 = vshrl.u32 %v9267, 7
        %v9269 = vsub.s32 %v9266, %v9268
        %v9270 = vrot.slane %v9256, %v9269
        %v9271 = vcombine.low %v9206, %v9222
        %v9272 = vcombine.high %v9206, %v9222
        %v9274 = vunpack.c.l.s4 1934713408
        %v9275 = vunpack.c.0.s8 %v9274
        %v9276 = vlaneseq
        %v9277 = vshrl.u32 %v9276, 7
        %v9278 = vsub.s32 %v9275, %v9277
        %v9279 = vrot.slane %v9271, %v9278
        %v9281 = vunpack.c.l.s4 1934713408
        %v9282 = vunpack.c.0.s8 %v9281
        %v9283 = vlaneseq
        %v9284 = vshrl.u32 %v9283, 7
        %v9285 = vsub.s32 %v9282, %v9284
        %v9286 = vrot.slane %v9272, %v9285
        %v9287 = vcombine.low %v9231, %v9247
        %v9288 = vcombine.high %v9231, %v9247
        %v9290 = vunpack.c.l.s4 1934713408
        %v9291 = vunpack.c.0.s8 %v9290
        %v9292 = vlaneseq
        %v9293 = vshrl.u32 %v9292, 7
        %v9294 = vsub.s32 %v9291, %v9293
        %v9295 = vrot.slane %v9287, %v9294
        %v9297 = vunpack.c.l.s4 1934713408
        %v9298 = vunpack.c.0.s8 %v9297
        %v9299 = vlaneseq
        %v9300 = vshrl.u32 %v9299, 7
        %v9301 = vsub.s32 %v9298, %v9300
        %v9302 = vrot.slane %v9288, %v9301
        %v9303 = vcombine.low %v9238, %v9254
        %v9304 = vcombine.high %v9238, %v9254
        %v9306 = vunpack.c.l.s4 1934713408
        %v9307 = vunpack.c.0.s8 %v9306
        %v9308 = vlaneseq
        %v9309 = vshrl.u32 %v9308, 7
        %v9310 = vsub.s32 %v9307, %v9309
        %v9311 = vrot.slane %v9303, %v9310
        %v9313 = vunpack.c.l.s4 1934713408
        %v9314 = vunpack.c.0.s8 %v9313
        %v9315 = vlaneseq
        %v9316 = vshrl.u32 %v9315, 7
        %v9317 = vsub.s32 %v9314, %v9316
        %v9318 = vrot.slane %v9304, %v9317
        %v9319 = vcombine.low %v9263, %v9295
        %v9320 = vcombine.high %v9263, %v9295
        %v9321 = vcombine.low %v9270, %v9302
        %v9322 = vcombine.high %v9270, %v9302
        %v9323 = vcombine.low %v9279, %v9311
        %v9324 = vcombine.high %v9279, %v9311
        %v9325 = vcombine.low %v9286, %v9318
        %v9326 = vcombine.high %v9286, %v9318
        %v9327 = vcombine.low %v9146, %v9154
        %v9328 = vcombine.high %v9146, %v9154
        %v9330 = vunpack.c.l.s4 1983009808
        %v9331 = vunpack.c.0.s8 %v9330
        %v9332 = vlaneseq
        %v9333 = vshrl.u32 %v9332, 7
        %v9334 = vsub.s32 %v9331, %v9333
        %v9335 = vrot.slane %v9327, %v9334
        %v9337 = vunpack.c.l.s4 1983009808
        %v9338 = vunpack.c.0.s8 %v9337
        %v9339 = vlaneseq
        %v9340 = vshrl.u32 %v9339, 7
        %v9341 = vsub.s32 %v9338, %v9340
        %v9342 = vrot.slane %v9328, %v9341
        %v9343 = vcombine.low %v9150, %v9158
        %v9344 = vcombine.high %v9150, %v9158
        %v9346 = vunpack.c.l.s4 1983009808
        %v9347 = vunpack.c.0.s8 %v9346
        %v9348 = vlaneseq
        %v9349 = vshrl.u32 %v9348, 7
        %v9350 = vsub.s32 %v9347, %v9349
        %v9351 = vrot.slane %v9343, %v9350
        %v9353 = vunpack.c.l.s4 1983009808
        %v9354 = vunpack.c.0.s8 %v9353
        %v9355 = vlaneseq
        %v9356 = vshrl.u32 %v9355, 7
        %v9357 = vsub.s32 %v9354, %v9356
        %v9358 = vrot.slane %v9344, %v9357
        %v9359 = vcombine.low %v9162, %v9170
        %v9360 = vcombine.high %v9162, %v9170
        %v9362 = vunpack.c.l.s4 1983009808
        %v9363 = vunpack.c.0.s8 %v9362
        %v9364 = vlaneseq
        %v9365 = vshrl.u32 %v9364, 7
        %v9366 = vsub.s32 %v9363, %v9365
        %v9367 = vrot.slane %v9359, %v9366
        %v9369 = vunpack.c.l.s4 1983009808
        %v9370 = vunpack.c.0.s8 %v9369
        %v9371 = vlaneseq
        %v9372 = vshrl.u32 %v9371, 7
        %v9373 = vsub.s32 %v9370, %v9372
        %v9374 = vrot.slane %v9360, %v9373
        %v9375 = vcombine.low %v9166, %v9174
        %v9376 = vcombine.high %v9166, %v9174
        %v9378 = vunpack.c.l.s4 1983009808
        %v9379 = vunpack.c.0.s8 %v9378
        %v9380 = vlaneseq
        %v9381 = vshrl.u32 %v9380, 7
        %v9382 = vsub.s32 %v9379, %v9381
        %v9383 = vrot.slane %v9375, %v9382
        %v9385 = vunpack.c.l.s4 1983009808
        %v9386 = vunpack.c.0.s8 %v9385
        %v9387 = vlaneseq
        %v9388 = vshrl.u32 %v9387, 7
        %v9389 = vsub.s32 %v9386, %v9388
        %v9390 = vrot.slane %v9376, %v9389
        %v9391 = vcombine.low %v9335, %v9351
        %v9392 = vcombine.high %v9335, %v9351
        %v9394 = vunpack.c.l.s4 1934713408
        %v9395 = vunpack.c.0.s8 %v9394
        %v9396 = vlaneseq
        %v9397 = vshrl.u32 %v9396, 7
        %v9398 = vsub.s32 %v9395, %v9397
        %v9399 = vrot.slane %v9391, %v9398
        %v9401 = vunpack.c.l.s4 1934713408
        %v9402 = vunpack.c.0.s8 %v9401
        %v9403 = vlaneseq
        %v9404 = vshrl.u32 %v9403, 7
        %v9405 = vsub.s32 %v9402, %v9404
        %v9406 = vrot.slane %v9392, %v9405
        %v9407 = vcombine.low %v9342, %v9358
        %v9408 = vcombine.high %v9342, %v9358
        %v9410 = vunpack.c.l.s4 1934713408
        %v9411 = vunpack.c.0.s8 %v9410
        %v9412 = vlaneseq
        %v9413 = vshrl.u32 %v9412, 7
        %v9414 = vsub.s32 %v9411, %v9413
        %v9415 = vrot.slane %v9407, %v9414
        %v9417 = vunpack.c.l.s4 1934713408
        %v9418 = vunpack.c.0.s8 %v9417
        %v9419 = vlaneseq
        %v9420 = vshrl.u32 %v9419, 7
        %v9421 = vsub.s32 %v9418, %v9420
        %v9422 = vrot.slane %v9408, %v9421
        %v9423 = vcombine.low %v9367, %v9383
        %v9424 = vcombine.high %v9367, %v9383
        %v9426 = vunpack.c.l.s4 1934713408
        %v9427 = vunpack.c.0.s8 %v9426
        %v9428 = vlaneseq
        %v9429 = vshrl.u32 %v9428, 7
        %v9430 = vsub.s32 %v9427, %v9429
        %v9431 = vrot.slane %v9423, %v9430
        %v9433 = vunpack.c.l.s4 1934713408
        %v9434 = vunpack.c.0.s8 %v9433
        %v9435 = vlaneseq
        %v9436 = vshrl.u32 %v9435, 7
        %v9437 = vsub.s32 %v9434, %v9436
        %v9438 = vrot.slane %v9424, %v9437
        %v9439 = vcombine.low %v9374, %v9390
        %v9440 = vcombine.high %v9374, %v9390
        %v9442 = vunpack.c.l.s4 1934713408
        %v9443 = vunpack.c.0.s8 %v9442
        %v9444 = vlaneseq
        %v9445 = vshrl.u32 %v9444, 7
        %v9446 = vsub.s32 %v9443, %v9445
        %v9447 = vrot.slane %v9439, %v9446
        %v9449 = vunpack.c.l.s4 1934713408
        %v9450 = vunpack.c.0.s8 %v9449
        %v9451 = vlaneseq
        %v9452 = vshrl.u32 %v9451, 7
        %v9453 = vsub.s32 %v9450, %v9452
        %v9454 = vrot.slane %v9440, %v9453
        %v9455 = vcombine.low %v9399, %v9431
        %v9456 = vcombine.high %v9399, %v9431
        %v9457 = vcombine.low %v9406, %v9438
        %v9458 = vcombine.high %v9406, %v9438
        %v9459 = vcombine.low %v9415, %v9447
        %v9460 = vcombine.high %v9415, %v9447
        %v9461 = vcombine.low %v9422, %v9454
        %v9462 = vcombine.high %v9422, %v9454
        %9464 = vrot.lane.b32.xlu0 %v9320, 16
        %v9465 = vpop.permute.xlu0 %9464
        %9468 = vrot.lane.b32.xlu0 %v9321, 32
        %v9469 = vpop.permute.xlu0 %9468
        %9472 = vrot.lane.b32.xlu0 %v9322, 48
        %v9473 = vpop.permute.xlu0 %9472
        %9476 = vrot.lane.b32.xlu0 %v9323, 64
        %v9477 = vpop.permute.xlu0 %9476
        %9480 = vrot.lane.b32.xlu0 %v9324, 80
        %v9481 = vpop.permute.xlu0 %9480
        %9484 = vrot.lane.b32.xlu0 %v9325, 96
        %v9485 = vpop.permute.xlu0 %9484
        %9488 = vrot.lane.b32.xlu0 %v9326, 112
        %v9489 = vpop.permute.xlu0 %9488
        %9492 = vrot.lane.b32.xlu0 %v9456, 16
        %v9493 = vpop.permute.xlu0 %9492
        %9496 = vrot.lane.b32.xlu0 %v9457, 32
        %v9497 = vpop.permute.xlu0 %9496
        %9500 = vrot.lane.b32.xlu0 %v9458, 48
        %v9501 = vpop.permute.xlu0 %9500
        %9504 = vrot.lane.b32.xlu0 %v9459, 64
        %v9505 = vpop.permute.xlu0 %9504
        %9508 = vrot.lane.b32.xlu0 %v9460, 80
        %v9509 = vpop.permute.xlu0 %9508
        %9512 = vrot.lane.b32.xlu0 %v9461, 96
        %v9513 = vpop.permute.xlu0 %9512
        %9516 = vrot.lane.b32.xlu0 %v9462, 112
        %v9517 = vpop.permute.xlu0 %9516
        %v9519 = vsel %vm5054, %v9319, %v9465
        %v9520 = vsel %vm5056, %v9519, %v9469
        %v9521 = vsel %vm5058, %v9520, %v9473
        %v9522 = vsel %vm5060, %v9521, %v9477
        %v9523 = vsel %vm5062, %v9522, %v9481
        %v9524 = vsel %vm5064, %v9523, %v9485
        %v9525 = vsel %vm5066, %v9524, %v9489
        %v9526 = vsel %vm5054, %v9455, %v9493
        %v9527 = vsel %vm5056, %v9526, %v9497
        %v9528 = vsel %vm5058, %v9527, %v9501
        %v9529 = vsel %vm5060, %v9528, %v9505
        %v9530 = vsel %vm5062, %v9529, %v9509
        %v9531 = vsel %vm5064, %v9530, %v9513
        %v9532 = vsel %vm5066, %v9531, %v9517
        %v9557 = vrot.slane %v3389, 1
        %v9558 = vrot.slane %v3525, 1
        %v9559 = vsel %vm4637, %v9557, %v9558
        %v9560 = vrot.slane %v3571, 1
        %v9561 = vsel %vm4637, %v9558, %v9560
        %v9562 = vrot.slane %v3390, 1
        %v9563 = vrot.slane %v3526, 1
        %v9564 = vsel %vm4637, %v9562, %v9563
        %v9565 = vrot.slane %v3595, 1
        %v9566 = vsel %vm4637, %v9563, %v9565
        %v9567 = vrot.slane %v3391, 1
        %v9568 = vrot.slane %v3527, 1
        %v9569 = vsel %vm4637, %v9567, %v9568
        %v9570 = vrot.slane %v3578, 1
        %v9571 = vsel %vm4637, %v9568, %v9570
        %v9572 = vrot.slane %v3392, 1
        %v9573 = vrot.slane %v3528, 1
        %v9574 = vsel %vm4637, %v9572, %v9573
        %v9575 = vrot.slane %v3596, 1
        %v9576 = vsel %vm4637, %v9573, %v9575
        %v9577 = vrot.slane %v3393, 1
        %v9578 = vrot.slane %v3529, 1
        %v9579 = vsel %vm4637, %v9577, %v9578
        %v9580 = vrot.slane %v3587, 1
        %v9581 = vsel %vm4637, %v9578, %v9580
        %v9582 = vrot.slane %v3394, 1
        %v9583 = vrot.slane %v3530, 1
        %v9584 = vsel %vm4637, %v9582, %v9583
        %v9585 = vrot.slane %v3597, 1
        %v9586 = vsel %vm4637, %v9583, %v9585
        %v9587 = vrot.slane %v3395, 1
        %v9588 = vrot.slane %v3531, 1
        %v9589 = vsel %vm4637, %v9587, %v9588
        %v9590 = vrot.slane %v3594, 1
        %v9591 = vsel %vm4637, %v9588, %v9590
        %v9592 = vrot.slane %v3396, 1
        %v9593 = vrot.slane %v3532, 1
        %v9594 = vsel %vm4637, %v9592, %v9593
        %v9595 = vrot.slane %v3598, 1
        %v9596 = vsel %vm4637, %v9593, %v9595
        %9597 = vrot.lane.b32.xlu0 %v9559, 126
        %v9598 = vpop.permute.xlu0 %9597
        %9599 = vrot.lane.b32.xlu0 %v9561, 126
        %v9600 = vpop.permute.xlu0 %9599
        %9601 = vrot.lane.b32.xlu0 %v9564, 126
        %v9602 = vpop.permute.xlu0 %9601
        %9603 = vrot.lane.b32.xlu0 %v9566, 126
        %v9604 = vpop.permute.xlu0 %9603
        %9605 = vrot.lane.b32.xlu0 %v9569, 126
        %v9606 = vpop.permute.xlu0 %9605
        %9607 = vrot.lane.b32.xlu0 %v9571, 126
        %v9608 = vpop.permute.xlu0 %9607
        %9609 = vrot.lane.b32.xlu0 %v9574, 126
        %v9610 = vpop.permute.xlu0 %9609
        %9611 = vrot.lane.b32.xlu0 %v9576, 126
        %v9612 = vpop.permute.xlu0 %9611
        %9613 = vrot.lane.b32.xlu0 %v9579, 126
        %v9614 = vpop.permute.xlu0 %9613
        %9615 = vrot.lane.b32.xlu0 %v9581, 126
        %v9616 = vpop.permute.xlu0 %9615
        %9617 = vrot.lane.b32.xlu0 %v9584, 126
        %v9618 = vpop.permute.xlu0 %9617
        %9619 = vrot.lane.b32.xlu0 %v9586, 126
        %v9620 = vpop.permute.xlu0 %9619
        %9621 = vrot.lane.b32.xlu0 %v9589, 126
        %v9622 = vpop.permute.xlu0 %9621
        %9623 = vrot.lane.b32.xlu0 %v9591, 126
        %v9624 = vpop.permute.xlu0 %9623
        %9625 = vrot.lane.b32.xlu0 %v9594, 126
        %v9626 = vpop.permute.xlu0 %9625
        %9627 = vrot.lane.b32.xlu0 %v9596, 126
        %v9628 = vpop.permute.xlu0 %9627
        %v9645 = vcombine.low %v9598, %v9606
        %v9646 = vcombine.high %v9598, %v9606
        %v9648 = vunpack.c.l.s4 1983009808
        %v9649 = vunpack.c.0.s8 %v9648
        %v9650 = vlaneseq
        %v9651 = vshrl.u32 %v9650, 7
        %v9652 = vsub.s32 %v9649, %v9651
        %v9653 = vrot.slane %v9645, %v9652
        %v9655 = vunpack.c.l.s4 1983009808
        %v9656 = vunpack.c.0.s8 %v9655
        %v9657 = vlaneseq
        %v9658 = vshrl.u32 %v9657, 7
        %v9659 = vsub.s32 %v9656, %v9658
        %v9660 = vrot.slane %v9646, %v9659
        %v9661 = vcombine.low %v9602, %v9610
        %v9662 = vcombine.high %v9602, %v9610
        %v9664 = vunpack.c.l.s4 1983009808
        %v9665 = vunpack.c.0.s8 %v9664
        %v9666 = vlaneseq
        %v9667 = vshrl.u32 %v9666, 7
        %v9668 = vsub.s32 %v9665, %v9667
        %v9669 = vrot.slane %v9661, %v9668
        %v9671 = vunpack.c.l.s4 1983009808
        %v9672 = vunpack.c.0.s8 %v9671
        %v9673 = vlaneseq
        %v9674 = vshrl.u32 %v9673, 7
        %v9675 = vsub.s32 %v9672, %v9674
        %v9676 = vrot.slane %v9662, %v9675
        %v9677 = vcombine.low %v9614, %v9622
        %v9678 = vcombine.high %v9614, %v9622
        %v9680 = vunpack.c.l.s4 1983009808
        %v9681 = vunpack.c.0.s8 %v9680
        %v9682 = vlaneseq
        %v9683 = vshrl.u32 %v9682, 7
        %v9684 = vsub.s32 %v9681, %v9683
        %v9685 = vrot.slane %v9677, %v9684
        %v9687 = vunpack.c.l.s4 1983009808
        %v9688 = vunpack.c.0.s8 %v9687
        %v9689 = vlaneseq
        %v9690 = vshrl.u32 %v9689, 7
        %v9691 = vsub.s32 %v9688, %v9690
        %v9692 = vrot.slane %v9678, %v9691
        %v9693 = vcombine.low %v9618, %v9626
        %v9694 = vcombine.high %v9618, %v9626
        %v9696 = vunpack.c.l.s4 1983009808
        %v9697 = vunpack.c.0.s8 %v9696
        %v9698 = vlaneseq
        %v9699 = vshrl.u32 %v9698, 7
        %v9700 = vsub.s32 %v9697, %v9699
        %v9701 = vrot.slane %v9693, %v9700
        %v9703 = vunpack.c.l.s4 1983009808
        %v9704 = vunpack.c.0.s8 %v9703
        %v9705 = vlaneseq
        %v9706 = vshrl.u32 %v9705, 7
        %v9707 = vsub.s32 %v9704, %v9706
        %v9708 = vrot.slane %v9694, %v9707
        %v9709 = vcombine.low %v9653, %v9669
        %v9710 = vcombine.high %v9653, %v9669
        %v9712 = vunpack.c.l.s4 1934713408
        %v9713 = vunpack.c.0.s8 %v9712
        %v9714 = vlaneseq
        %v9715 = vshrl.u32 %v9714, 7
        %v9716 = vsub.s32 %v9713, %v9715
        %v9717 = vrot.slane %v9709, %v9716
        %v9719 = vunpack.c.l.s4 1934713408
        %v9720 = vunpack.c.0.s8 %v9719
        %v9721 = vlaneseq
        %v9722 = vshrl.u32 %v9721, 7
        %v9723 = vsub.s32 %v9720, %v9722
        %v9724 = vrot.slane %v9710, %v9723
        %v9725 = vcombine.low %v9660, %v9676
        %v9726 = vcombine.high %v9660, %v9676
        %v9728 = vunpack.c.l.s4 1934713408
        %v9729 = vunpack.c.0.s8 %v9728
        %v9730 = vlaneseq
        %v9731 = vshrl.u32 %v9730, 7
        %v9732 = vsub.s32 %v9729, %v9731
        %v9733 = vrot.slane %v9725, %v9732
        %v9735 = vunpack.c.l.s4 1934713408
        %v9736 = vunpack.c.0.s8 %v9735
        %v9737 = vlaneseq
        %v9738 = vshrl.u32 %v9737, 7
        %v9739 = vsub.s32 %v9736, %v9738
        %v9740 = vrot.slane %v9726, %v9739
        %v9741 = vcombine.low %v9685, %v9701
        %v9742 = vcombine.high %v9685, %v9701
        %v9744 = vunpack.c.l.s4 1934713408
        %v9745 = vunpack.c.0.s8 %v9744
        %v9746 = vlaneseq
        %v9747 = vshrl.u32 %v9746, 7
        %v9748 = vsub.s32 %v9745, %v9747
        %v9749 = vrot.slane %v9741, %v9748
        %v9751 = vunpack.c.l.s4 1934713408
        %v9752 = vunpack.c.0.s8 %v9751
        %v9753 = vlaneseq
        %v9754 = vshrl.u32 %v9753, 7
        %v9755 = vsub.s32 %v9752, %v9754
        %v9756 = vrot.slane %v9742, %v9755
        %v9757 = vcombine.low %v9692, %v9708
        %v9758 = vcombine.high %v9692, %v9708
        %v9760 = vunpack.c.l.s4 1934713408
        %v9761 = vunpack.c.0.s8 %v9760
        %v9762 = vlaneseq
        %v9763 = vshrl.u32 %v9762, 7
        %v9764 = vsub.s32 %v9761, %v9763
        %v9765 = vrot.slane %v9757, %v9764
        %v9767 = vunpack.c.l.s4 1934713408
        %v9768 = vunpack.c.0.s8 %v9767
        %v9769 = vlaneseq
        %v9770 = vshrl.u32 %v9769, 7
        %v9771 = vsub.s32 %v9768, %v9770
        %v9772 = vrot.slane %v9758, %v9771
        %v9773 = vcombine.low %v9717, %v9749
        %v9774 = vcombine.high %v9717, %v9749
        %v9775 = vcombine.low %v9724, %v9756
        %v9776 = vcombine.high %v9724, %v9756
        %v9777 = vcombine.low %v9733, %v9765
        %v9778 = vcombine.high %v9733, %v9765
        %v9779 = vcombine.low %v9740, %v9772
        %v9780 = vcombine.high %v9740, %v9772
        %v9781 = vcombine.low %v9600, %v9608
        %v9782 = vcombine.high %v9600, %v9608
        %v9784 = vunpack.c.l.s4 1983009808
        %v9785 = vunpack.c.0.s8 %v9784
        %v9786 = vlaneseq
        %v9787 = vshrl.u32 %v9786, 7
        %v9788 = vsub.s32 %v9785, %v9787
        %v9789 = vrot.slane %v9781, %v9788
        %v9791 = vunpack.c.l.s4 1983009808
        %v9792 = vunpack.c.0.s8 %v9791
        %v9793 = vlaneseq
        %v9794 = vshrl.u32 %v9793, 7
        %v9795 = vsub.s32 %v9792, %v9794
        %v9796 = vrot.slane %v9782, %v9795
        %v9797 = vcombine.low %v9604, %v9612
        %v9798 = vcombine.high %v9604, %v9612
        %v9800 = vunpack.c.l.s4 1983009808
        %v9801 = vunpack.c.0.s8 %v9800
        %v9802 = vlaneseq
        %v9803 = vshrl.u32 %v9802, 7
        %v9804 = vsub.s32 %v9801, %v9803
        %v9805 = vrot.slane %v9797, %v9804
        %v9807 = vunpack.c.l.s4 1983009808
        %v9808 = vunpack.c.0.s8 %v9807
        %v9809 = vlaneseq
        %v9810 = vshrl.u32 %v9809, 7
        %v9811 = vsub.s32 %v9808, %v9810
        %v9812 = vrot.slane %v9798, %v9811
        %v9813 = vcombine.low %v9616, %v9624
        %v9814 = vcombine.high %v9616, %v9624
        %v9816 = vunpack.c.l.s4 1983009808
        %v9817 = vunpack.c.0.s8 %v9816
        %v9818 = vlaneseq
        %v9819 = vshrl.u32 %v9818, 7
        %v9820 = vsub.s32 %v9817, %v9819
        %v9821 = vrot.slane %v9813, %v9820
        %v9823 = vunpack.c.l.s4 1983009808
        %v9824 = vunpack.c.0.s8 %v9823
        %v9825 = vlaneseq
        %v9826 = vshrl.u32 %v9825, 7
        %v9827 = vsub.s32 %v9824, %v9826
        %v9828 = vrot.slane %v9814, %v9827
        %v9829 = vcombine.low %v9620, %v9628
        %v9830 = vcombine.high %v9620, %v9628
        %v9832 = vunpack.c.l.s4 1983009808
        %v9833 = vunpack.c.0.s8 %v9832
        %v9834 = vlaneseq
        %v9835 = vshrl.u32 %v9834, 7
        %v9836 = vsub.s32 %v9833, %v9835
        %v9837 = vrot.slane %v9829, %v9836
        %v9839 = vunpack.c.l.s4 1983009808
        %v9840 = vunpack.c.0.s8 %v9839
        %v9841 = vlaneseq
        %v9842 = vshrl.u32 %v9841, 7
        %v9843 = vsub.s32 %v9840, %v9842
        %v9844 = vrot.slane %v9830, %v9843
        %v9845 = vcombine.low %v9789, %v9805
        %v9846 = vcombine.high %v9789, %v9805
        %v9848 = vunpack.c.l.s4 1934713408
        %v9849 = vunpack.c.0.s8 %v9848
        %v9850 = vlaneseq
        %v9851 = vshrl.u32 %v9850, 7
        %v9852 = vsub.s32 %v9849, %v9851
        %v9853 = vrot.slane %v9845, %v9852
        %v9855 = vunpack.c.l.s4 1934713408
        %v9856 = vunpack.c.0.s8 %v9855
        %v9857 = vlaneseq
        %v9858 = vshrl.u32 %v9857, 7
        %v9859 = vsub.s32 %v9856, %v9858
        %v9860 = vrot.slane %v9846, %v9859
        %v9861 = vcombine.low %v9796, %v9812
        %v9862 = vcombine.high %v9796, %v9812
        %v9864 = vunpack.c.l.s4 1934713408
        %v9865 = vunpack.c.0.s8 %v9864
        %v9866 = vlaneseq
        %v9867 = vshrl.u32 %v9866, 7
        %v9868 = vsub.s32 %v9865, %v9867
        %v9869 = vrot.slane %v9861, %v9868
        %v9871 = vunpack.c.l.s4 1934713408
        %v9872 = vunpack.c.0.s8 %v9871
        %v9873 = vlaneseq
        %v9874 = vshrl.u32 %v9873, 7
        %v9875 = vsub.s32 %v9872, %v9874
        %v9876 = vrot.slane %v9862, %v9875
        %v9877 = vcombine.low %v9821, %v9837
        %v9878 = vcombine.high %v9821, %v9837
        %v9880 = vunpack.c.l.s4 1934713408
        %v9881 = vunpack.c.0.s8 %v9880
        %v9882 = vlaneseq
        %v9883 = vshrl.u32 %v9882, 7
        %v9884 = vsub.s32 %v9881, %v9883
        %v9885 = vrot.slane %v9877, %v9884
        %v9887 = vunpack.c.l.s4 1934713408
        %v9888 = vunpack.c.0.s8 %v9887
        %v9889 = vlaneseq
        %v9890 = vshrl.u32 %v9889, 7
        %v9891 = vsub.s32 %v9888, %v9890
        %v9892 = vrot.slane %v9878, %v9891
        %v9893 = vcombine.low %v9828, %v9844
        %v9894 = vcombine.high %v9828, %v9844
        %v9896 = vunpack.c.l.s4 1934713408
        %v9897 = vunpack.c.0.s8 %v9896
        %v9898 = vlaneseq
        %v9899 = vshrl.u32 %v9898, 7
        %v9900 = vsub.s32 %v9897, %v9899
        %v9901 = vrot.slane %v9893, %v9900
        %v9903 = vunpack.c.l.s4 1934713408
        %v9904 = vunpack.c.0.s8 %v9903
        %v9905 = vlaneseq
        %v9906 = vshrl.u32 %v9905, 7
        %v9907 = vsub.s32 %v9904, %v9906
        %v9908 = vrot.slane %v9894, %v9907
        %v9909 = vcombine.low %v9853, %v9885
        %v9910 = vcombine.high %v9853, %v9885
        %v9911 = vcombine.low %v9860, %v9892
        %v9912 = vcombine.high %v9860, %v9892
        %v9913 = vcombine.low %v9869, %v9901
        %v9914 = vcombine.high %v9869, %v9901
        %v9915 = vcombine.low %v9876, %v9908
        %v9916 = vcombine.high %v9876, %v9908
        %9918 = vrot.lane.b32.xlu0 %v9774, 16
        %v9919 = vpop.permute.xlu0 %9918
        %9922 = vrot.lane.b32.xlu0 %v9775, 32
        %v9923 = vpop.permute.xlu0 %9922
        %9926 = vrot.lane.b32.xlu0 %v9776, 48
        %v9927 = vpop.permute.xlu0 %9926
        %9930 = vrot.lane.b32.xlu0 %v9777, 64
        %v9931 = vpop.permute.xlu0 %9930
        %9934 = vrot.lane.b32.xlu0 %v9778, 80
        %v9935 = vpop.permute.xlu0 %9934
        %9938 = vrot.lane.b32.xlu0 %v9779, 96
        %v9939 = vpop.permute.xlu0 %9938
        %9942 = vrot.lane.b32.xlu0 %v9780, 112
        %v9943 = vpop.permute.xlu0 %9942
        %9946 = vrot.lane.b32.xlu0 %v9910, 16
        %v9947 = vpop.permute.xlu0 %9946
        %9950 = vrot.lane.b32.xlu0 %v9911, 32
        %v9951 = vpop.permute.xlu0 %9950
        %9954 = vrot.lane.b32.xlu0 %v9912, 48
        %v9955 = vpop.permute.xlu0 %9954
        %9958 = vrot.lane.b32.xlu0 %v9913, 64
        %v9959 = vpop.permute.xlu0 %9958
        %9962 = vrot.lane.b32.xlu0 %v9914, 80
        %v9963 = vpop.permute.xlu0 %9962
        %9966 = vrot.lane.b32.xlu0 %v9915, 96
        %v9967 = vpop.permute.xlu0 %9966
        %9970 = vrot.lane.b32.xlu0 %v9916, 112
        %v9971 = vpop.permute.xlu0 %9970
        %v9973 = vsel %vm5054, %v9773, %v9919
        %v9974 = vsel %vm5056, %v9973, %v9923
        %v9975 = vsel %vm5058, %v9974, %v9927
        %v9976 = vsel %vm5060, %v9975, %v9931
        %v9977 = vsel %vm5062, %v9976, %v9935
        %v9978 = vsel %vm5064, %v9977, %v9939
        %v9979 = vsel %vm5066, %v9978, %v9943
        %v9980 = vsel %vm5054, %v9909, %v9947
        %v9981 = vsel %vm5056, %v9980, %v9951
        %v9982 = vsel %vm5058, %v9981, %v9955
        %v9983 = vsel %vm5060, %v9982, %v9959
        %v9984 = vsel %vm5062, %v9983, %v9963
        %v9985 = vsel %vm5064, %v9984, %v9967
        %v9986 = vsel %vm5066, %v9985, %v9971
        %v9987 = vmul.f32 %v5067, %v9525
        %v9988 = vmul.f32 %v5074, %v9532
        %v9989 = vmax.f32 %v9119, %v9987
        %v9990 = vmax.f32 %v9120, %v9988
        %v9991 = vsub.f32 %v9119, %v9989
        %v9992 = vsub.f32 %v9120, %v9990
        %v9993 = vmul.f32 %v9991, 1.442695
        %v9994 = vpow.pop %v9993
        %v9995 = vmul.f32 %v9992, 1.442695
        %v9996 = vpow.pop %v9995
        %v9997 = vsub.f32 %v9987, %v9989
        %v9998 = vsub.f32 %v9988, %v9990
        %v9999 = vmul.f32 %v9997, 1.442695
        %v10000 = vpow.pop %v9999
        %v10001 = vmul.f32 %v9998, 1.442695
        %v10002 = vpow.pop %v10001
        %v10003 = vmul.f32 %v9994, %v9135
        %v10004 = vmul.f32 %v9996, %v9136
        %v10005 = vadd.f32 %v10003, %v10000
        %v10006 = vadd.f32 %v10004, %v10002
        %v10007 = vmul.f32 %v9994, %v9141
        %v10008 = vmul.f32 %v9996, %v9142
        %v10009 = vmul.f32 %v10000, %v9979
        %v10010 = vmul.f32 %v10002, %v9986
        %v10011 = vadd.f32 %v10007, %v10009
        %v10012 = vadd.f32 %v10008, %v10010
        %vm10013 = vcmask 1045504
        %v10014 = vrot.slane %v1559, 2
        %v10015 = vrot.slane %v1695, 2
        %v10016 = vsel %vm10013, %v10014, %v10015
        %v10017 = vrot.slane %v1741, 2
        %v10018 = vsel %vm10013, %v10015, %v10017
        %v10019 = vrot.slane %v1560, 2
        %v10020 = vrot.slane %v1696, 2
        %v10021 = vsel %vm10013, %v10019, %v10020
        %v10022 = vrot.slane %v1765, 2
        %v10023 = vsel %vm10013, %v10020, %v10022
        %v10024 = vrot.slane %v1561, 2
        %v10025 = vrot.slane %v1697, 2
        %v10026 = vsel %vm10013, %v10024, %v10025
        %v10027 = vrot.slane %v1748, 2
        %v10028 = vsel %vm10013, %v10025, %v10027
        %v10029 = vrot.slane %v1562, 2
        %v10030 = vrot.slane %v1698, 2
        %v10031 = vsel %vm10013, %v10029, %v10030
        %v10032 = vrot.slane %v1766, 2
        %v10033 = vsel %vm10013, %v10030, %v10032
        %v10034 = vrot.slane %v1563, 2
        %v10035 = vrot.slane %v1699, 2
        %v10036 = vsel %vm10013, %v10034, %v10035
        %v10037 = vrot.slane %v1757, 2
        %v10038 = vsel %vm10013, %v10035, %v10037
        %v10039 = vrot.slane %v1564, 2
        %v10040 = vrot.slane %v1700, 2
        %v10041 = vsel %vm10013, %v10039, %v10040
        %v10042 = vrot.slane %v1767, 2
        %v10043 = vsel %vm10013, %v10040, %v10042
        %v10044 = vrot.slane %v1565, 2
        %v10045 = vrot.slane %v1701, 2
        %v10046 = vsel %vm10013, %v10044, %v10045
        %v10047 = vrot.slane %v1764, 2
        %v10048 = vsel %vm10013, %v10045, %v10047
        %v10049 = vrot.slane %v1566, 2
        %v10050 = vrot.slane %v1702, 2
        %v10051 = vsel %vm10013, %v10049, %v10050
        %v10052 = vrot.slane %v1768, 2
        %v10053 = vsel %vm10013, %v10050, %v10052
        %v10070 = vcombine.low %v10016, %v10026
        %v10071 = vcombine.high %v10016, %v10026
        %v10073 = vunpack.c.l.s4 1983009808
        %v10074 = vunpack.c.0.s8 %v10073
        %v10075 = vlaneseq
        %v10076 = vshrl.u32 %v10075, 7
        %v10077 = vsub.s32 %v10074, %v10076
        %v10078 = vrot.slane %v10070, %v10077
        %v10080 = vunpack.c.l.s4 1983009808
        %v10081 = vunpack.c.0.s8 %v10080
        %v10082 = vlaneseq
        %v10083 = vshrl.u32 %v10082, 7
        %v10084 = vsub.s32 %v10081, %v10083
        %v10085 = vrot.slane %v10071, %v10084
        %v10086 = vcombine.low %v10021, %v10031
        %v10087 = vcombine.high %v10021, %v10031
        %v10089 = vunpack.c.l.s4 1983009808
        %v10090 = vunpack.c.0.s8 %v10089
        %v10091 = vlaneseq
        %v10092 = vshrl.u32 %v10091, 7
        %v10093 = vsub.s32 %v10090, %v10092
        %v10094 = vrot.slane %v10086, %v10093
        %v10096 = vunpack.c.l.s4 1983009808
        %v10097 = vunpack.c.0.s8 %v10096
        %v10098 = vlaneseq
        %v10099 = vshrl.u32 %v10098, 7
        %v10100 = vsub.s32 %v10097, %v10099
        %v10101 = vrot.slane %v10087, %v10100
        %v10102 = vcombine.low %v10036, %v10046
        %v10103 = vcombine.high %v10036, %v10046
        %v10105 = vunpack.c.l.s4 1983009808
        %v10106 = vunpack.c.0.s8 %v10105
        %v10107 = vlaneseq
        %v10108 = vshrl.u32 %v10107, 7
        %v10109 = vsub.s32 %v10106, %v10108
        %v10110 = vrot.slane %v10102, %v10109
        %v10112 = vunpack.c.l.s4 1983009808
        %v10113 = vunpack.c.0.s8 %v10112
        %v10114 = vlaneseq
        %v10115 = vshrl.u32 %v10114, 7
        %v10116 = vsub.s32 %v10113, %v10115
        %v10117 = vrot.slane %v10103, %v10116
        %v10118 = vcombine.low %v10041, %v10051
        %v10119 = vcombine.high %v10041, %v10051
        %v10121 = vunpack.c.l.s4 1983009808
        %v10122 = vunpack.c.0.s8 %v10121
        %v10123 = vlaneseq
        %v10124 = vshrl.u32 %v10123, 7
        %v10125 = vsub.s32 %v10122, %v10124
        %v10126 = vrot.slane %v10118, %v10125
        %v10128 = vunpack.c.l.s4 1983009808
        %v10129 = vunpack.c.0.s8 %v10128
        %v10130 = vlaneseq
        %v10131 = vshrl.u32 %v10130, 7
        %v10132 = vsub.s32 %v10129, %v10131
        %v10133 = vrot.slane %v10119, %v10132
        %v10134 = vcombine.low %v10078, %v10094
        %v10135 = vcombine.high %v10078, %v10094
        %v10137 = vunpack.c.l.s4 1934713408
        %v10138 = vunpack.c.0.s8 %v10137
        %v10139 = vlaneseq
        %v10140 = vshrl.u32 %v10139, 7
        %v10141 = vsub.s32 %v10138, %v10140
        %v10142 = vrot.slane %v10134, %v10141
        %v10144 = vunpack.c.l.s4 1934713408
        %v10145 = vunpack.c.0.s8 %v10144
        %v10146 = vlaneseq
        %v10147 = vshrl.u32 %v10146, 7
        %v10148 = vsub.s32 %v10145, %v10147
        %v10149 = vrot.slane %v10135, %v10148
        %v10150 = vcombine.low %v10085, %v10101
        %v10151 = vcombine.high %v10085, %v10101
        %v10153 = vunpack.c.l.s4 1934713408
        %v10154 = vunpack.c.0.s8 %v10153
        %v10155 = vlaneseq
        %v10156 = vshrl.u32 %v10155, 7
        %v10157 = vsub.s32 %v10154, %v10156
        %v10158 = vrot.slane %v10150, %v10157
        %v10160 = vunpack.c.l.s4 1934713408
        %v10161 = vunpack.c.0.s8 %v10160
        %v10162 = vlaneseq
        %v10163 = vshrl.u32 %v10162, 7
        %v10164 = vsub.s32 %v10161, %v10163
        %v10165 = vrot.slane %v10151, %v10164
        %v10166 = vcombine.low %v10110, %v10126
        %v10167 = vcombine.high %v10110, %v10126
        %v10169 = vunpack.c.l.s4 1934713408
        %v10170 = vunpack.c.0.s8 %v10169
        %v10171 = vlaneseq
        %v10172 = vshrl.u32 %v10171, 7
        %v10173 = vsub.s32 %v10170, %v10172
        %v10174 = vrot.slane %v10166, %v10173
        %v10176 = vunpack.c.l.s4 1934713408
        %v10177 = vunpack.c.0.s8 %v10176
        %v10178 = vlaneseq
        %v10179 = vshrl.u32 %v10178, 7
        %v10180 = vsub.s32 %v10177, %v10179
        %v10181 = vrot.slane %v10167, %v10180
        %v10182 = vcombine.low %v10117, %v10133
        %v10183 = vcombine.high %v10117, %v10133
        %v10185 = vunpack.c.l.s4 1934713408
        %v10186 = vunpack.c.0.s8 %v10185
        %v10187 = vlaneseq
        %v10188 = vshrl.u32 %v10187, 7
        %v10189 = vsub.s32 %v10186, %v10188
        %v10190 = vrot.slane %v10182, %v10189
        %v10192 = vunpack.c.l.s4 1934713408
        %v10193 = vunpack.c.0.s8 %v10192
        %v10194 = vlaneseq
        %v10195 = vshrl.u32 %v10194, 7
        %v10196 = vsub.s32 %v10193, %v10195
        %v10197 = vrot.slane %v10183, %v10196
        %v10198 = vcombine.low %v10142, %v10174
        %v10199 = vcombine.high %v10142, %v10174
        %v10200 = vcombine.low %v10149, %v10181
        %v10201 = vcombine.high %v10149, %v10181
        %v10202 = vcombine.low %v10158, %v10190
        %v10203 = vcombine.high %v10158, %v10190
        %v10204 = vcombine.low %v10165, %v10197
        %v10205 = vcombine.high %v10165, %v10197
        %v10206 = vcombine.low %v10018, %v10028
        %v10207 = vcombine.high %v10018, %v10028
        %v10209 = vunpack.c.l.s4 1983009808
        %v10210 = vunpack.c.0.s8 %v10209
        %v10211 = vlaneseq
        %v10212 = vshrl.u32 %v10211, 7
        %v10213 = vsub.s32 %v10210, %v10212
        %v10214 = vrot.slane %v10206, %v10213
        %v10216 = vunpack.c.l.s4 1983009808
        %v10217 = vunpack.c.0.s8 %v10216
        %v10218 = vlaneseq
        %v10219 = vshrl.u32 %v10218, 7
        %v10220 = vsub.s32 %v10217, %v10219
        %v10221 = vrot.slane %v10207, %v10220
        %v10222 = vcombine.low %v10023, %v10033
        %v10223 = vcombine.high %v10023, %v10033
        %v10225 = vunpack.c.l.s4 1983009808
        %v10226 = vunpack.c.0.s8 %v10225
        %v10227 = vlaneseq
        %v10228 = vshrl.u32 %v10227, 7
        %v10229 = vsub.s32 %v10226, %v10228
        %v10230 = vrot.slane %v10222, %v10229
        %v10232 = vunpack.c.l.s4 1983009808
        %v10233 = vunpack.c.0.s8 %v10232
        %v10234 = vlaneseq
        %v10235 = vshrl.u32 %v10234, 7
        %v10236 = vsub.s32 %v10233, %v10235
        %v10237 = vrot.slane %v10223, %v10236
        %v10238 = vcombine.low %v10038, %v10048
        %v10239 = vcombine.high %v10038, %v10048
        %v10241 = vunpack.c.l.s4 1983009808
        %v10242 = vunpack.c.0.s8 %v10241
        %v10243 = vlaneseq
        %v10244 = vshrl.u32 %v10243, 7
        %v10245 = vsub.s32 %v10242, %v10244
        %v10246 = vrot.slane %v10238, %v10245
        %v10248 = vunpack.c.l.s4 1983009808
        %v10249 = vunpack.c.0.s8 %v10248
        %v10250 = vlaneseq
        %v10251 = vshrl.u32 %v10250, 7
        %v10252 = vsub.s32 %v10249, %v10251
        %v10253 = vrot.slane %v10239, %v10252
        %v10254 = vcombine.low %v10043, %v10053
        %v10255 = vcombine.high %v10043, %v10053
        %v10257 = vunpack.c.l.s4 1983009808
        %v10258 = vunpack.c.0.s8 %v10257
        %v10259 = vlaneseq
        %v10260 = vshrl.u32 %v10259, 7
        %v10261 = vsub.s32 %v10258, %v10260
        %v10262 = vrot.slane %v10254, %v10261
        %v10264 = vunpack.c.l.s4 1983009808
        %v10265 = vunpack.c.0.s8 %v10264
        %v10266 = vlaneseq
        %v10267 = vshrl.u32 %v10266, 7
        %v10268 = vsub.s32 %v10265, %v10267
        %v10269 = vrot.slane %v10255, %v10268
        %v10270 = vcombine.low %v10214, %v10230
        %v10271 = vcombine.high %v10214, %v10230
        %v10273 = vunpack.c.l.s4 1934713408
        %v10274 = vunpack.c.0.s8 %v10273
        %v10275 = vlaneseq
        %v10276 = vshrl.u32 %v10275, 7
        %v10277 = vsub.s32 %v10274, %v10276
        %v10278 = vrot.slane %v10270, %v10277
        %v10280 = vunpack.c.l.s4 1934713408
        %v10281 = vunpack.c.0.s8 %v10280
        %v10282 = vlaneseq
        %v10283 = vshrl.u32 %v10282, 7
        %v10284 = vsub.s32 %v10281, %v10283
        %v10285 = vrot.slane %v10271, %v10284
        %v10286 = vcombine.low %v10221, %v10237
        %v10287 = vcombine.high %v10221, %v10237
        %v10289 = vunpack.c.l.s4 1934713408
        %v10290 = vunpack.c.0.s8 %v10289
        %v10291 = vlaneseq
        %v10292 = vshrl.u32 %v10291, 7
        %v10293 = vsub.s32 %v10290, %v10292
        %v10294 = vrot.slane %v10286, %v10293
        %v10296 = vunpack.c.l.s4 1934713408
        %v10297 = vunpack.c.0.s8 %v10296
        %v10298 = vlaneseq
        %v10299 = vshrl.u32 %v10298, 7
        %v10300 = vsub.s32 %v10297, %v10299
        %v10301 = vrot.slane %v10287, %v10300
        %v10302 = vcombine.low %v10246, %v10262
        %v10303 = vcombine.high %v10246, %v10262
        %v10305 = vunpack.c.l.s4 1934713408
        %v10306 = vunpack.c.0.s8 %v10305
        %v10307 = vlaneseq
        %v10308 = vshrl.u32 %v10307, 7
        %v10309 = vsub.s32 %v10306, %v10308
        %v10310 = vrot.slane %v10302, %v10309
        %v10312 = vunpack.c.l.s4 1934713408
        %v10313 = vunpack.c.0.s8 %v10312
        %v10314 = vlaneseq
        %v10315 = vshrl.u32 %v10314, 7
        %v10316 = vsub.s32 %v10313, %v10315
        %v10317 = vrot.slane %v10303, %v10316
        %v10318 = vcombine.low %v10253, %v10269
        %v10319 = vcombine.high %v10253, %v10269
        %v10321 = vunpack.c.l.s4 1934713408
        %v10322 = vunpack.c.0.s8 %v10321
        %v10323 = vlaneseq
        %v10324 = vshrl.u32 %v10323, 7
        %v10325 = vsub.s32 %v10322, %v10324
        %v10326 = vrot.slane %v10318, %v10325
        %v10328 = vunpack.c.l.s4 1934713408
        %v10329 = vunpack.c.0.s8 %v10328
        %v10330 = vlaneseq
        %v10331 = vshrl.u32 %v10330, 7
        %v10332 = vsub.s32 %v10329, %v10331
        %v10333 = vrot.slane %v10319, %v10332
        %v10334 = vcombine.low %v10278, %v10310
        %v10335 = vcombine.high %v10278, %v10310
        %v10336 = vcombine.low %v10285, %v10317
        %v10337 = vcombine.high %v10285, %v10317
        %v10338 = vcombine.low %v10294, %v10326
        %v10339 = vcombine.high %v10294, %v10326
        %v10340 = vcombine.low %v10301, %v10333
        %v10341 = vcombine.high %v10301, %v10333
        %10343 = vrot.lane.b32.xlu0 %v10199, 16
        %v10344 = vpop.permute.xlu0 %10343
        %10347 = vrot.lane.b32.xlu0 %v10200, 32
        %v10348 = vpop.permute.xlu0 %10347
        %10351 = vrot.lane.b32.xlu0 %v10201, 48
        %v10352 = vpop.permute.xlu0 %10351
        %10355 = vrot.lane.b32.xlu0 %v10202, 64
        %v10356 = vpop.permute.xlu0 %10355
        %10359 = vrot.lane.b32.xlu0 %v10203, 80
        %v10360 = vpop.permute.xlu0 %10359
        %10363 = vrot.lane.b32.xlu0 %v10204, 96
        %v10364 = vpop.permute.xlu0 %10363
        %10367 = vrot.lane.b32.xlu0 %v10205, 112
        %v10368 = vpop.permute.xlu0 %10367
        %10371 = vrot.lane.b32.xlu0 %v10335, 16
        %v10372 = vpop.permute.xlu0 %10371
        %10375 = vrot.lane.b32.xlu0 %v10336, 32
        %v10376 = vpop.permute.xlu0 %10375
        %10379 = vrot.lane.b32.xlu0 %v10337, 48
        %v10380 = vpop.permute.xlu0 %10379
        %10383 = vrot.lane.b32.xlu0 %v10338, 64
        %v10384 = vpop.permute.xlu0 %10383
        %10387 = vrot.lane.b32.xlu0 %v10339, 80
        %v10388 = vpop.permute.xlu0 %10387
        %10391 = vrot.lane.b32.xlu0 %v10340, 96
        %v10392 = vpop.permute.xlu0 %10391
        %10395 = vrot.lane.b32.xlu0 %v10341, 112
        %v10396 = vpop.permute.xlu0 %10395
        %v10398 = vsel %vm5054, %v10198, %v10344
        %v10399 = vsel %vm5056, %v10398, %v10348
        %v10400 = vsel %vm5058, %v10399, %v10352
        %v10401 = vsel %vm5060, %v10400, %v10356
        %v10402 = vsel %vm5062, %v10401, %v10360
        %v10403 = vsel %vm5064, %v10402, %v10364
        %v10404 = vsel %vm5066, %v10403, %v10368
        %v10405 = vsel %vm5054, %v10334, %v10372
        %v10406 = vsel %vm5056, %v10405, %v10376
        %v10407 = vsel %vm5058, %v10406, %v10380
        %v10408 = vsel %vm5060, %v10407, %v10384
        %v10409 = vsel %vm5062, %v10408, %v10388
        %v10410 = vsel %vm5064, %v10409, %v10392
        %v10411 = vsel %vm5066, %v10410, %v10396
        %v10436 = vrot.slane %v3727, 2
        %v10437 = vrot.slane %v3863, 2
        %v10438 = vsel %vm10013, %v10436, %v10437
        %v10439 = vrot.slane %v3909, 2
        %v10440 = vsel %vm10013, %v10437, %v10439
        %v10441 = vrot.slane %v3728, 2
        %v10442 = vrot.slane %v3864, 2
        %v10443 = vsel %vm10013, %v10441, %v10442
        %v10444 = vrot.slane %v3933, 2
        %v10445 = vsel %vm10013, %v10442, %v10444
        %v10446 = vrot.slane %v3729, 2
        %v10447 = vrot.slane %v3865, 2
        %v10448 = vsel %vm10013, %v10446, %v10447
        %v10449 = vrot.slane %v3916, 2
        %v10450 = vsel %vm10013, %v10447, %v10449
        %v10451 = vrot.slane %v3730, 2
        %v10452 = vrot.slane %v3866, 2
        %v10453 = vsel %vm10013, %v10451, %v10452
        %v10454 = vrot.slane %v3934, 2
        %v10455 = vsel %vm10013, %v10452, %v10454
        %v10456 = vrot.slane %v3731, 2
        %v10457 = vrot.slane %v3867, 2
        %v10458 = vsel %vm10013, %v10456, %v10457
        %v10459 = vrot.slane %v3925, 2
        %v10460 = vsel %vm10013, %v10457, %v10459
        %v10461 = vrot.slane %v3732, 2
        %v10462 = vrot.slane %v3868, 2
        %v10463 = vsel %vm10013, %v10461, %v10462
        %v10464 = vrot.slane %v3935, 2
        %v10465 = vsel %vm10013, %v10462, %v10464
        %v10466 = vrot.slane %v3733, 2
        %v10467 = vrot.slane %v3869, 2
        %v10468 = vsel %vm10013, %v10466, %v10467
        %v10469 = vrot.slane %v3932, 2
        %v10470 = vsel %vm10013, %v10467, %v10469
        %v10471 = vrot.slane %v3734, 2
        %v10472 = vrot.slane %v3870, 2
        %v10473 = vsel %vm10013, %v10471, %v10472
        %v10474 = vrot.slane %v3936, 2
        %v10475 = vsel %vm10013, %v10472, %v10474
        %v10492 = vcombine.low %v10438, %v10448
        %v10493 = vcombine.high %v10438, %v10448
        %v10495 = vunpack.c.l.s4 1983009808
        %v10496 = vunpack.c.0.s8 %v10495
        %v10497 = vlaneseq
        %v10498 = vshrl.u32 %v10497, 7
        %v10499 = vsub.s32 %v10496, %v10498
        %v10500 = vrot.slane %v10492, %v10499
        %v10502 = vunpack.c.l.s4 1983009808
        %v10503 = vunpack.c.0.s8 %v10502
        %v10504 = vlaneseq
        %v10505 = vshrl.u32 %v10504, 7
        %v10506 = vsub.s32 %v10503, %v10505
        %v10507 = vrot.slane %v10493, %v10506
        %v10508 = vcombine.low %v10443, %v10453
        %v10509 = vcombine.high %v10443, %v10453
        %v10511 = vunpack.c.l.s4 1983009808
        %v10512 = vunpack.c.0.s8 %v10511
        %v10513 = vlaneseq
        %v10514 = vshrl.u32 %v10513, 7
        %v10515 = vsub.s32 %v10512, %v10514
        %v10516 = vrot.slane %v10508, %v10515
        %v10518 = vunpack.c.l.s4 1983009808
        %v10519 = vunpack.c.0.s8 %v10518
        %v10520 = vlaneseq
        %v10521 = vshrl.u32 %v10520, 7
        %v10522 = vsub.s32 %v10519, %v10521
        %v10523 = vrot.slane %v10509, %v10522
        %v10524 = vcombine.low %v10458, %v10468
        %v10525 = vcombine.high %v10458, %v10468
        %v10527 = vunpack.c.l.s4 1983009808
        %v10528 = vunpack.c.0.s8 %v10527
        %v10529 = vlaneseq
        %v10530 = vshrl.u32 %v10529, 7
        %v10531 = vsub.s32 %v10528, %v10530
        %v10532 = vrot.slane %v10524, %v10531
        %v10534 = vunpack.c.l.s4 1983009808
        %v10535 = vunpack.c.0.s8 %v10534
        %v10536 = vlaneseq
        %v10537 = vshrl.u32 %v10536, 7
        %v10538 = vsub.s32 %v10535, %v10537
        %v10539 = vrot.slane %v10525, %v10538
        %v10540 = vcombine.low %v10463, %v10473
        %v10541 = vcombine.high %v10463, %v10473
        %v10543 = vunpack.c.l.s4 1983009808
        %v10544 = vunpack.c.0.s8 %v10543
        %v10545 = vlaneseq
        %v10546 = vshrl.u32 %v10545, 7
        %v10547 = vsub.s32 %v10544, %v10546
        %v10548 = vrot.slane %v10540, %v10547
        %v10550 = vunpack.c.l.s4 1983009808
        %v10551 = vunpack.c.0.s8 %v10550
        %v10552 = vlaneseq
        %v10553 = vshrl.u32 %v10552, 7
        %v10554 = vsub.s32 %v10551, %v10553
        %v10555 = vrot.slane %v10541, %v10554
        %v10556 = vcombine.low %v10500, %v10516
        %v10557 = vcombine.high %v10500, %v10516
        %v10559 = vunpack.c.l.s4 1934713408
        %v10560 = vunpack.c.0.s8 %v10559
        %v10561 = vlaneseq
        %v10562 = vshrl.u32 %v10561, 7
        %v10563 = vsub.s32 %v10560, %v10562
        %v10564 = vrot.slane %v10556, %v10563
        %v10566 = vunpack.c.l.s4 1934713408
        %v10567 = vunpack.c.0.s8 %v10566
        %v10568 = vlaneseq
        %v10569 = vshrl.u32 %v10568, 7
        %v10570 = vsub.s32 %v10567, %v10569
        %v10571 = vrot.slane %v10557, %v10570
        %v10572 = vcombine.low %v10507, %v10523
        %v10573 = vcombine.high %v10507, %v10523
        %v10575 = vunpack.c.l.s4 1934713408
        %v10576 = vunpack.c.0.s8 %v10575
        %v10577 = vlaneseq
        %v10578 = vshrl.u32 %v10577, 7
        %v10579 = vsub.s32 %v10576, %v10578
        %v10580 = vrot.slane %v10572, %v10579
        %v10582 = vunpack.c.l.s4 1934713408
        %v10583 = vunpack.c.0.s8 %v10582
        %v10584 = vlaneseq
        %v10585 = vshrl.u32 %v10584, 7
        %v10586 = vsub.s32 %v10583, %v10585
        %v10587 = vrot.slane %v10573, %v10586
        %v10588 = vcombine.low %v10532, %v10548
        %v10589 = vcombine.high %v10532, %v10548
        %v10591 = vunpack.c.l.s4 1934713408
        %v10592 = vunpack.c.0.s8 %v10591
        %v10593 = vlaneseq
        %v10594 = vshrl.u32 %v10593, 7
        %v10595 = vsub.s32 %v10592, %v10594
        %v10596 = vrot.slane %v10588, %v10595
        %v10598 = vunpack.c.l.s4 1934713408
        %v10599 = vunpack.c.0.s8 %v10598
        %v10600 = vlaneseq
        %v10601 = vshrl.u32 %v10600, 7
        %v10602 = vsub.s32 %v10599, %v10601
        %v10603 = vrot.slane %v10589, %v10602
        %v10604 = vcombine.low %v10539, %v10555
        %v10605 = vcombine.high %v10539, %v10555
        %v10607 = vunpack.c.l.s4 1934713408
        %v10608 = vunpack.c.0.s8 %v10607
        %v10609 = vlaneseq
        %v10610 = vshrl.u32 %v10609, 7
        %v10611 = vsub.s32 %v10608, %v10610
        %v10612 = vrot.slane %v10604, %v10611
        %v10614 = vunpack.c.l.s4 1934713408
        %v10615 = vunpack.c.0.s8 %v10614
        %v10616 = vlaneseq
        %v10617 = vshrl.u32 %v10616, 7
        %v10618 = vsub.s32 %v10615, %v10617
        %v10619 = vrot.slane %v10605, %v10618
        %v10620 = vcombine.low %v10564, %v10596
        %v10621 = vcombine.high %v10564, %v10596
        %v10622 = vcombine.low %v10571, %v10603
        %v10623 = vcombine.high %v10571, %v10603
        %v10624 = vcombine.low %v10580, %v10612
        %v10625 = vcombine.high %v10580, %v10612
        %v10626 = vcombine.low %v10587, %v10619
        %v10627 = vcombine.high %v10587, %v10619
        %v10628 = vcombine.low %v10440, %v10450
        %v10629 = vcombine.high %v10440, %v10450
        %v10631 = vunpack.c.l.s4 1983009808
        %v10632 = vunpack.c.0.s8 %v10631
        %v10633 = vlaneseq
        %v10634 = vshrl.u32 %v10633, 7
        %v10635 = vsub.s32 %v10632, %v10634
        %v10636 = vrot.slane %v10628, %v10635
        %v10638 = vunpack.c.l.s4 1983009808
        %v10639 = vunpack.c.0.s8 %v10638
        %v10640 = vlaneseq
        %v10641 = vshrl.u32 %v10640, 7
        %v10642 = vsub.s32 %v10639, %v10641
        %v10643 = vrot.slane %v10629, %v10642
        %v10644 = vcombine.low %v10445, %v10455
        %v10645 = vcombine.high %v10445, %v10455
        %v10647 = vunpack.c.l.s4 1983009808
        %v10648 = vunpack.c.0.s8 %v10647
        %v10649 = vlaneseq
        %v10650 = vshrl.u32 %v10649, 7
        %v10651 = vsub.s32 %v10648, %v10650
        %v10652 = vrot.slane %v10644, %v10651
        %v10654 = vunpack.c.l.s4 1983009808
        %v10655 = vunpack.c.0.s8 %v10654
        %v10656 = vlaneseq
        %v10657 = vshrl.u32 %v10656, 7
        %v10658 = vsub.s32 %v10655, %v10657
        %v10659 = vrot.slane %v10645, %v10658
        %v10660 = vcombine.low %v10460, %v10470
        %v10661 = vcombine.high %v10460, %v10470
        %v10663 = vunpack.c.l.s4 1983009808
        %v10664 = vunpack.c.0.s8 %v10663
        %v10665 = vlaneseq
        %v10666 = vshrl.u32 %v10665, 7
        %v10667 = vsub.s32 %v10664, %v10666
        %v10668 = vrot.slane %v10660, %v10667
        %v10670 = vunpack.c.l.s4 1983009808
        %v10671 = vunpack.c.0.s8 %v10670
        %v10672 = vlaneseq
        %v10673 = vshrl.u32 %v10672, 7
        %v10674 = vsub.s32 %v10671, %v10673
        %v10675 = vrot.slane %v10661, %v10674
        %v10676 = vcombine.low %v10465, %v10475
        %v10677 = vcombine.high %v10465, %v10475
        %v10679 = vunpack.c.l.s4 1983009808
        %v10680 = vunpack.c.0.s8 %v10679
        %v10681 = vlaneseq
        %v10682 = vshrl.u32 %v10681, 7
        %v10683 = vsub.s32 %v10680, %v10682
        %v10684 = vrot.slane %v10676, %v10683
        %v10686 = vunpack.c.l.s4 1983009808
        %v10687 = vunpack.c.0.s8 %v10686
        %v10688 = vlaneseq
        %v10689 = vshrl.u32 %v10688, 7
        %v10690 = vsub.s32 %v10687, %v10689
        %v10691 = vrot.slane %v10677, %v10690
        %v10692 = vcombine.low %v10636, %v10652
        %v10693 = vcombine.high %v10636, %v10652
        %v10695 = vunpack.c.l.s4 1934713408
        %v10696 = vunpack.c.0.s8 %v10695
        %v10697 = vlaneseq
        %v10698 = vshrl.u32 %v10697, 7
        %v10699 = vsub.s32 %v10696, %v10698
        %v10700 = vrot.slane %v10692, %v10699
        %v10702 = vunpack.c.l.s4 1934713408
        %v10703 = vunpack.c.0.s8 %v10702
        %v10704 = vlaneseq
        %v10705 = vshrl.u32 %v10704, 7
        %v10706 = vsub.s32 %v10703, %v10705
        %v10707 = vrot.slane %v10693, %v10706
        %v10708 = vcombine.low %v10643, %v10659
        %v10709 = vcombine.high %v10643, %v10659
        %v10711 = vunpack.c.l.s4 1934713408
        %v10712 = vunpack.c.0.s8 %v10711
        %v10713 = vlaneseq
        %v10714 = vshrl.u32 %v10713, 7
        %v10715 = vsub.s32 %v10712, %v10714
        %v10716 = vrot.slane %v10708, %v10715
        %v10718 = vunpack.c.l.s4 1934713408
        %v10719 = vunpack.c.0.s8 %v10718
        %v10720 = vlaneseq
        %v10721 = vshrl.u32 %v10720, 7
        %v10722 = vsub.s32 %v10719, %v10721
        %v10723 = vrot.slane %v10709, %v10722
        %v10724 = vcombine.low %v10668, %v10684
        %v10725 = vcombine.high %v10668, %v10684
        %v10727 = vunpack.c.l.s4 1934713408
        %v10728 = vunpack.c.0.s8 %v10727
        %v10729 = vlaneseq
        %v10730 = vshrl.u32 %v10729, 7
        %v10731 = vsub.s32 %v10728, %v10730
        %v10732 = vrot.slane %v10724, %v10731
        %v10734 = vunpack.c.l.s4 1934713408
        %v10735 = vunpack.c.0.s8 %v10734
        %v10736 = vlaneseq
        %v10737 = vshrl.u32 %v10736, 7
        %v10738 = vsub.s32 %v10735, %v10737
        %v10739 = vrot.slane %v10725, %v10738
        %v10740 = vcombine.low %v10675, %v10691
        %v10741 = vcombine.high %v10675, %v10691
        %v10743 = vunpack.c.l.s4 1934713408
        %v10744 = vunpack.c.0.s8 %v10743
        %v10745 = vlaneseq
        %v10746 = vshrl.u32 %v10745, 7
        %v10747 = vsub.s32 %v10744, %v10746
        %v10748 = vrot.slane %v10740, %v10747
        %v10750 = vunpack.c.l.s4 1934713408
        %v10751 = vunpack.c.0.s8 %v10750
        %v10752 = vlaneseq
        %v10753 = vshrl.u32 %v10752, 7
        %v10754 = vsub.s32 %v10751, %v10753
        %v10755 = vrot.slane %v10741, %v10754
        %v10756 = vcombine.low %v10700, %v10732
        %v10757 = vcombine.high %v10700, %v10732
        %v10758 = vcombine.low %v10707, %v10739
        %v10759 = vcombine.high %v10707, %v10739
        %v10760 = vcombine.low %v10716, %v10748
        %v10761 = vcombine.high %v10716, %v10748
        %v10762 = vcombine.low %v10723, %v10755
        %v10763 = vcombine.high %v10723, %v10755
        %10765 = vrot.lane.b32.xlu0 %v10621, 16
        %v10766 = vpop.permute.xlu0 %10765
        %10769 = vrot.lane.b32.xlu0 %v10622, 32
        %v10770 = vpop.permute.xlu0 %10769
        %10773 = vrot.lane.b32.xlu0 %v10623, 48
        %v10774 = vpop.permute.xlu0 %10773
        %10777 = vrot.lane.b32.xlu0 %v10624, 64
        %v10778 = vpop.permute.xlu0 %10777
        %10781 = vrot.lane.b32.xlu0 %v10625, 80
        %v10782 = vpop.permute.xlu0 %10781
        %10785 = vrot.lane.b32.xlu0 %v10626, 96
        %v10786 = vpop.permute.xlu0 %10785
        %10789 = vrot.lane.b32.xlu0 %v10627, 112
        %v10790 = vpop.permute.xlu0 %10789
        %10793 = vrot.lane.b32.xlu0 %v10757, 16
        %v10794 = vpop.permute.xlu0 %10793
        %10797 = vrot.lane.b32.xlu0 %v10758, 32
        %v10798 = vpop.permute.xlu0 %10797
        %10801 = vrot.lane.b32.xlu0 %v10759, 48
        %v10802 = vpop.permute.xlu0 %10801
        %10805 = vrot.lane.b32.xlu0 %v10760, 64
        %v10806 = vpop.permute.xlu0 %10805
        %10809 = vrot.lane.b32.xlu0 %v10761, 80
        %v10810 = vpop.permute.xlu0 %10809
        %10813 = vrot.lane.b32.xlu0 %v10762, 96
        %v10814 = vpop.permute.xlu0 %10813
        %10817 = vrot.lane.b32.xlu0 %v10763, 112
        %v10818 = vpop.permute.xlu0 %10817
        %v10820 = vsel %vm5054, %v10620, %v10766
        %v10821 = vsel %vm5056, %v10820, %v10770
        %v10822 = vsel %vm5058, %v10821, %v10774
        %v10823 = vsel %vm5060, %v10822, %v10778
        %v10824 = vsel %vm5062, %v10823, %v10782
        %v10825 = vsel %vm5064, %v10824, %v10786
        %v10826 = vsel %vm5066, %v10825, %v10790
        %v10827 = vsel %vm5054, %v10756, %v10794
        %v10828 = vsel %vm5056, %v10827, %v10798
        %v10829 = vsel %vm5058, %v10828, %v10802
        %v10830 = vsel %vm5060, %v10829, %v10806
        %v10831 = vsel %vm5062, %v10830, %v10810
        %v10832 = vsel %vm5064, %v10831, %v10814
        %v10833 = vsel %vm5066, %v10832, %v10818
        %v10834 = vmul.f32 %v5067, %v10404
        %v10835 = vmul.f32 %v5074, %v10411
        %v10836 = vmax.f32 %v9989, %v10834
        %v10837 = vmax.f32 %v9990, %v10835
        %v10838 = vsub.f32 %v9989, %v10836
        %v10839 = vsub.f32 %v9990, %v10837
        %v10840 = vmul.f32 %v10838, 1.442695
        %v10841 = vpow.pop %v10840
        %v10842 = vmul.f32 %v10839, 1.442695
        %v10843 = vpow.pop %v10842
        %v10844 = vsub.f32 %v10834, %v10836
        %v10845 = vsub.f32 %v10835, %v10837
        %v10846 = vmul.f32 %v10844, 1.442695
        %v10847 = vpow.pop %v10846
        %v10848 = vmul.f32 %v10845, 1.442695
        %v10849 = vpow.pop %v10848
        %v10850 = vmul.f32 %v10841, %v10005
        %v10851 = vmul.f32 %v10843, %v10006
        %v10852 = vadd.f32 %v10850, %v10847
        %v10853 = vadd.f32 %v10851, %v10849
        %v10854 = vmul.f32 %v10841, %v10011
        %v10855 = vmul.f32 %v10843, %v10012
        %v10856 = vmul.f32 %v10847, %v10826
        %v10857 = vmul.f32 %v10849, %v10833
        %v10858 = vadd.f32 %v10854, %v10856
        %v10859 = vadd.f32 %v10855, %v10857
        %10860 = vrot.lane.b32.xlu0 %v10016, 127
        %v10861 = vpop.permute.xlu0 %10860
        %10862 = vrot.lane.b32.xlu0 %v10018, 127
        %v10863 = vpop.permute.xlu0 %10862
        %10864 = vrot.lane.b32.xlu0 %v10021, 127
        %v10865 = vpop.permute.xlu0 %10864
        %10866 = vrot.lane.b32.xlu0 %v10023, 127
        %v10867 = vpop.permute.xlu0 %10866
        %10868 = vrot.lane.b32.xlu0 %v10026, 127
        %v10869 = vpop.permute.xlu0 %10868
        %10870 = vrot.lane.b32.xlu0 %v10028, 127
        %v10871 = vpop.permute.xlu0 %10870
        %10872 = vrot.lane.b32.xlu0 %v10031, 127
        %v10873 = vpop.permute.xlu0 %10872
        %10874 = vrot.lane.b32.xlu0 %v10033, 127
        %v10875 = vpop.permute.xlu0 %10874
        %10876 = vrot.lane.b32.xlu0 %v10036, 127
        %v10877 = vpop.permute.xlu0 %10876
        %10878 = vrot.lane.b32.xlu0 %v10038, 127
        %v10879 = vpop.permute.xlu0 %10878
        %10880 = vrot.lane.b32.xlu0 %v10041, 127
        %v10881 = vpop.permute.xlu0 %10880
        %10882 = vrot.lane.b32.xlu0 %v10043, 127
        %v10883 = vpop.permute.xlu0 %10882
        %10884 = vrot.lane.b32.xlu0 %v10046, 127
        %v10885 = vpop.permute.xlu0 %10884
        %10886 = vrot.lane.b32.xlu0 %v10048, 127
        %v10887 = vpop.permute.xlu0 %10886
        %10888 = vrot.lane.b32.xlu0 %v10051, 127
        %v10889 = vpop.permute.xlu0 %10888
        %10890 = vrot.lane.b32.xlu0 %v10053, 127
        %v10891 = vpop.permute.xlu0 %10890
        %v10908 = vcombine.low %v10861, %v10869
        %v10909 = vcombine.high %v10861, %v10869
        %v10911 = vunpack.c.l.s4 1983009808
        %v10912 = vunpack.c.0.s8 %v10911
        %v10913 = vlaneseq
        %v10914 = vshrl.u32 %v10913, 7
        %v10915 = vsub.s32 %v10912, %v10914
        %v10916 = vrot.slane %v10908, %v10915
        %v10918 = vunpack.c.l.s4 1983009808
        %v10919 = vunpack.c.0.s8 %v10918
        %v10920 = vlaneseq
        %v10921 = vshrl.u32 %v10920, 7
        %v10922 = vsub.s32 %v10919, %v10921
        %v10923 = vrot.slane %v10909, %v10922
        %v10924 = vcombine.low %v10865, %v10873
        %v10925 = vcombine.high %v10865, %v10873
        %v10927 = vunpack.c.l.s4 1983009808
        %v10928 = vunpack.c.0.s8 %v10927
        %v10929 = vlaneseq
        %v10930 = vshrl.u32 %v10929, 7
        %v10931 = vsub.s32 %v10928, %v10930
        %v10932 = vrot.slane %v10924, %v10931
        %v10934 = vunpack.c.l.s4 1983009808
        %v10935 = vunpack.c.0.s8 %v10934
        %v10936 = vlaneseq
        %v10937 = vshrl.u32 %v10936, 7
        %v10938 = vsub.s32 %v10935, %v10937
        %v10939 = vrot.slane %v10925, %v10938
        %v10940 = vcombine.low %v10877, %v10885
        %v10941 = vcombine.high %v10877, %v10885
        %v10943 = vunpack.c.l.s4 1983009808
        %v10944 = vunpack.c.0.s8 %v10943
        %v10945 = vlaneseq
        %v10946 = vshrl.u32 %v10945, 7
        %v10947 = vsub.s32 %v10944, %v10946
        %v10948 = vrot.slane %v10940, %v10947
        %v10950 = vunpack.c.l.s4 1983009808
        %v10951 = vunpack.c.0.s8 %v10950
        %v10952 = vlaneseq
        %v10953 = vshrl.u32 %v10952, 7
        %v10954 = vsub.s32 %v10951, %v10953
        %v10955 = vrot.slane %v10941, %v10954
        %v10956 = vcombine.low %v10881, %v10889
        %v10957 = vcombine.high %v10881, %v10889
        %v10959 = vunpack.c.l.s4 1983009808
        %v10960 = vunpack.c.0.s8 %v10959
        %v10961 = vlaneseq
        %v10962 = vshrl.u32 %v10961, 7
        %v10963 = vsub.s32 %v10960, %v10962
        %v10964 = vrot.slane %v10956, %v10963
        %v10966 = vunpack.c.l.s4 1983009808
        %v10967 = vunpack.c.0.s8 %v10966
        %v10968 = vlaneseq
        %v10969 = vshrl.u32 %v10968, 7
        %v10970 = vsub.s32 %v10967, %v10969
        %v10971 = vrot.slane %v10957, %v10970
        %v10972 = vcombine.low %v10916, %v10932
        %v10973 = vcombine.high %v10916, %v10932
        %v10975 = vunpack.c.l.s4 1934713408
        %v10976 = vunpack.c.0.s8 %v10975
        %v10977 = vlaneseq
        %v10978 = vshrl.u32 %v10977, 7
        %v10979 = vsub.s32 %v10976, %v10978
        %v10980 = vrot.slane %v10972, %v10979
        %v10982 = vunpack.c.l.s4 1934713408
        %v10983 = vunpack.c.0.s8 %v10982
        %v10984 = vlaneseq
        %v10985 = vshrl.u32 %v10984, 7
        %v10986 = vsub.s32 %v10983, %v10985
        %v10987 = vrot.slane %v10973, %v10986
        %v10988 = vcombine.low %v10923, %v10939
        %v10989 = vcombine.high %v10923, %v10939
        %v10991 = vunpack.c.l.s4 1934713408
        %v10992 = vunpack.c.0.s8 %v10991
        %v10993 = vlaneseq
        %v10994 = vshrl.u32 %v10993, 7
        %v10995 = vsub.s32 %v10992, %v10994
        %v10996 = vrot.slane %v10988, %v10995
        %v10998 = vunpack.c.l.s4 1934713408
        %v10999 = vunpack.c.0.s8 %v10998
        %v11000 = vlaneseq
        %v11001 = vshrl.u32 %v11000, 7
        %v11002 = vsub.s32 %v10999, %v11001
        %v11003 = vrot.slane %v10989, %v11002
        %v11004 = vcombine.low %v10948, %v10964
        %v11005 = vcombine.high %v10948, %v10964
        %v11007 = vunpack.c.l.s4 1934713408
        %v11008 = vunpack.c.0.s8 %v11007
        %v11009 = vlaneseq
        %v11010 = vshrl.u32 %v11009, 7
        %v11011 = vsub.s32 %v11008, %v11010
        %v11012 = vrot.slane %v11004, %v11011
        %v11014 = vunpack.c.l.s4 1934713408
        %v11015 = vunpack.c.0.s8 %v11014
        %v11016 = vlaneseq
        %v11017 = vshrl.u32 %v11016, 7
        %v11018 = vsub.s32 %v11015, %v11017
        %v11019 = vrot.slane %v11005, %v11018
        %v11020 = vcombine.low %v10955, %v10971
        %v11021 = vcombine.high %v10955, %v10971
        %v11023 = vunpack.c.l.s4 1934713408
        %v11024 = vunpack.c.0.s8 %v11023
        %v11025 = vlaneseq
        %v11026 = vshrl.u32 %v11025, 7
        %v11027 = vsub.s32 %v11024, %v11026
        %v11028 = vrot.slane %v11020, %v11027
        %v11030 = vunpack.c.l.s4 1934713408
        %v11031 = vunpack.c.0.s8 %v11030
        %v11032 = vlaneseq
        %v11033 = vshrl.u32 %v11032, 7
        %v11034 = vsub.s32 %v11031, %v11033
        %v11035 = vrot.slane %v11021, %v11034
        %v11036 = vcombine.low %v10980, %v11012
        %v11037 = vcombine.high %v10980, %v11012
        %v11038 = vcombine.low %v10987, %v11019
        %v11039 = vcombine.high %v10987, %v11019
        %v11040 = vcombine.low %v10996, %v11028
        %v11041 = vcombine.high %v10996, %v11028
        %v11042 = vcombine.low %v11003, %v11035
        %v11043 = vcombine.high %v11003, %v11035
        %v11044 = vcombine.low %v10863, %v10871
        %v11045 = vcombine.high %v10863, %v10871
        %v11047 = vunpack.c.l.s4 1983009808
        %v11048 = vunpack.c.0.s8 %v11047
        %v11049 = vlaneseq
        %v11050 = vshrl.u32 %v11049, 7
        %v11051 = vsub.s32 %v11048, %v11050
        %v11052 = vrot.slane %v11044, %v11051
        %v11054 = vunpack.c.l.s4 1983009808
        %v11055 = vunpack.c.0.s8 %v11054
        %v11056 = vlaneseq
        %v11057 = vshrl.u32 %v11056, 7
        %v11058 = vsub.s32 %v11055, %v11057
        %v11059 = vrot.slane %v11045, %v11058
        %v11060 = vcombine.low %v10867, %v10875
        %v11061 = vcombine.high %v10867, %v10875
        %v11063 = vunpack.c.l.s4 1983009808
        %v11064 = vunpack.c.0.s8 %v11063
        %v11065 = vlaneseq
        %v11066 = vshrl.u32 %v11065, 7
        %v11067 = vsub.s32 %v11064, %v11066
        %v11068 = vrot.slane %v11060, %v11067
        %v11070 = vunpack.c.l.s4 1983009808
        %v11071 = vunpack.c.0.s8 %v11070
        %v11072 = vlaneseq
        %v11073 = vshrl.u32 %v11072, 7
        %v11074 = vsub.s32 %v11071, %v11073
        %v11075 = vrot.slane %v11061, %v11074
        %v11076 = vcombine.low %v10879, %v10887
        %v11077 = vcombine.high %v10879, %v10887
        %v11079 = vunpack.c.l.s4 1983009808
        %v11080 = vunpack.c.0.s8 %v11079
        %v11081 = vlaneseq
        %v11082 = vshrl.u32 %v11081, 7
        %v11083 = vsub.s32 %v11080, %v11082
        %v11084 = vrot.slane %v11076, %v11083
        %v11086 = vunpack.c.l.s4 1983009808
        %v11087 = vunpack.c.0.s8 %v11086
        %v11088 = vlaneseq
        %v11089 = vshrl.u32 %v11088, 7
        %v11090 = vsub.s32 %v11087, %v11089
        %v11091 = vrot.slane %v11077, %v11090
        %v11092 = vcombine.low %v10883, %v10891
        %v11093 = vcombine.high %v10883, %v10891
        %v11095 = vunpack.c.l.s4 1983009808
        %v11096 = vunpack.c.0.s8 %v11095
        %v11097 = vlaneseq
        %v11098 = vshrl.u32 %v11097, 7
        %v11099 = vsub.s32 %v11096, %v11098
        %v11100 = vrot.slane %v11092, %v11099
        %v11102 = vunpack.c.l.s4 1983009808
        %v11103 = vunpack.c.0.s8 %v11102
        %v11104 = vlaneseq
        %v11105 = vshrl.u32 %v11104, 7
        %v11106 = vsub.s32 %v11103, %v11105
        %v11107 = vrot.slane %v11093, %v11106
        %v11108 = vcombine.low %v11052, %v11068
        %v11109 = vcombine.high %v11052, %v11068
        %v11111 = vunpack.c.l.s4 1934713408
        %v11112 = vunpack.c.0.s8 %v11111
        %v11113 = vlaneseq
        %v11114 = vshrl.u32 %v11113, 7
        %v11115 = vsub.s32 %v11112, %v11114
        %v11116 = vrot.slane %v11108, %v11115
        %v11118 = vunpack.c.l.s4 1934713408
        %v11119 = vunpack.c.0.s8 %v11118
        %v11120 = vlaneseq
        %v11121 = vshrl.u32 %v11120, 7
        %v11122 = vsub.s32 %v11119, %v11121
        %v11123 = vrot.slane %v11109, %v11122
        %v11124 = vcombine.low %v11059, %v11075
        %v11125 = vcombine.high %v11059, %v11075
        %v11127 = vunpack.c.l.s4 1934713408
        %v11128 = vunpack.c.0.s8 %v11127
        %v11129 = vlaneseq
        %v11130 = vshrl.u32 %v11129, 7
        %v11131 = vsub.s32 %v11128, %v11130
        %v11132 = vrot.slane %v11124, %v11131
        %v11134 = vunpack.c.l.s4 1934713408
        %v11135 = vunpack.c.0.s8 %v11134
        %v11136 = vlaneseq
        %v11137 = vshrl.u32 %v11136, 7
        %v11138 = vsub.s32 %v11135, %v11137
        %v11139 = vrot.slane %v11125, %v11138
        %v11140 = vcombine.low %v11084, %v11100
        %v11141 = vcombine.high %v11084, %v11100
        %v11143 = vunpack.c.l.s4 1934713408
        %v11144 = vunpack.c.0.s8 %v11143
        %v11145 = vlaneseq
        %v11146 = vshrl.u32 %v11145, 7
        %v11147 = vsub.s32 %v11144, %v11146
        %v11148 = vrot.slane %v11140, %v11147
        %v11150 = vunpack.c.l.s4 1934713408
        %v11151 = vunpack.c.0.s8 %v11150
        %v11152 = vlaneseq
        %v11153 = vshrl.u32 %v11152, 7
        %v11154 = vsub.s32 %v11151, %v11153
        %v11155 = vrot.slane %v11141, %v11154
        %v11156 = vcombine.low %v11091, %v11107
        %v11157 = vcombine.high %v11091, %v11107
        %v11159 = vunpack.c.l.s4 1934713408
        %v11160 = vunpack.c.0.s8 %v11159
        %v11161 = vlaneseq
        %v11162 = vshrl.u32 %v11161, 7
        %v11163 = vsub.s32 %v11160, %v11162
        %v11164 = vrot.slane %v11156, %v11163
        %v11166 = vunpack.c.l.s4 1934713408
        %v11167 = vunpack.c.0.s8 %v11166
        %v11168 = vlaneseq
        %v11169 = vshrl.u32 %v11168, 7
        %v11170 = vsub.s32 %v11167, %v11169
        %v11171 = vrot.slane %v11157, %v11170
        %v11172 = vcombine.low %v11116, %v11148
        %v11173 = vcombine.high %v11116, %v11148
        %v11174 = vcombine.low %v11123, %v11155
        %v11175 = vcombine.high %v11123, %v11155
        %v11176 = vcombine.low %v11132, %v11164
        %v11177 = vcombine.high %v11132, %v11164
        %v11178 = vcombine.low %v11139, %v11171
        %v11179 = vcombine.high %v11139, %v11171
        %11181 = vrot.lane.b32.xlu0 %v11037, 16
        %v11182 = vpop.permute.xlu0 %11181
        %11185 = vrot.lane.b32.xlu0 %v11038, 32
        %v11186 = vpop.permute.xlu0 %11185
        %11189 = vrot.lane.b32.xlu0 %v11039, 48
        %v11190 = vpop.permute.xlu0 %11189
        %11193 = vrot.lane.b32.xlu0 %v11040, 64
        %v11194 = vpop.permute.xlu0 %11193
        %11197 = vrot.lane.b32.xlu0 %v11041, 80
        %v11198 = vpop.permute.xlu0 %11197
        %11201 = vrot.lane.b32.xlu0 %v11042, 96
        %v11202 = vpop.permute.xlu0 %11201
        %11205 = vrot.lane.b32.xlu0 %v11043, 112
        %v11206 = vpop.permute.xlu0 %11205
        %11209 = vrot.lane.b32.xlu0 %v11173, 16
        %v11210 = vpop.permute.xlu0 %11209
        %11213 = vrot.lane.b32.xlu0 %v11174, 32
        %v11214 = vpop.permute.xlu0 %11213
        %11217 = vrot.lane.b32.xlu0 %v11175, 48
        %v11218 = vpop.permute.xlu0 %11217
        %11221 = vrot.lane.b32.xlu0 %v11176, 64
        %v11222 = vpop.permute.xlu0 %11221
        %11225 = vrot.lane.b32.xlu0 %v11177, 80
        %v11226 = vpop.permute.xlu0 %11225
        %11229 = vrot.lane.b32.xlu0 %v11178, 96
        %v11230 = vpop.permute.xlu0 %11229
        %11233 = vrot.lane.b32.xlu0 %v11179, 112
        %v11234 = vpop.permute.xlu0 %11233
        %v11236 = vsel %vm5054, %v11036, %v11182
        %v11237 = vsel %vm5056, %v11236, %v11186
        %v11238 = vsel %vm5058, %v11237, %v11190
        %v11239 = vsel %vm5060, %v11238, %v11194
        %v11240 = vsel %vm5062, %v11239, %v11198
        %v11241 = vsel %vm5064, %v11240, %v11202
        %v11242 = vsel %vm5066, %v11241, %v11206
        %v11243 = vsel %vm5054, %v11172, %v11210
        %v11244 = vsel %vm5056, %v11243, %v11214
        %v11245 = vsel %vm5058, %v11244, %v11218
        %v11246 = vsel %vm5060, %v11245, %v11222
        %v11247 = vsel %vm5062, %v11246, %v11226
        %v11248 = vsel %vm5064, %v11247, %v11230
        %v11249 = vsel %vm5066, %v11248, %v11234
        %v11274 = vrot.slane %v4065, 2
        %v11275 = vrot.slane %v4201, 2
        %v11276 = vsel %vm10013, %v11274, %v11275
        %v11277 = vrot.slane %v4247, 2
        %v11278 = vsel %vm10013, %v11275, %v11277
        %v11279 = vrot.slane %v4066, 2
        %v11280 = vrot.slane %v4202, 2
        %v11281 = vsel %vm10013, %v11279, %v11280
        %v11282 = vrot.slane %v4271, 2
        %v11283 = vsel %vm10013, %v11280, %v11282
        %v11284 = vrot.slane %v4067, 2
        %v11285 = vrot.slane %v4203, 2
        %v11286 = vsel %vm10013, %v11284, %v11285
        %v11287 = vrot.slane %v4254, 2
        %v11288 = vsel %vm10013, %v11285, %v11287
        %v11289 = vrot.slane %v4068, 2
        %v11290 = vrot.slane %v4204, 2
        %v11291 = vsel %vm10013, %v11289, %v11290
        %v11292 = vrot.slane %v4272, 2
        %v11293 = vsel %vm10013, %v11290, %v11292
        %v11294 = vrot.slane %v4069, 2
        %v11295 = vrot.slane %v4205, 2
        %v11296 = vsel %vm10013, %v11294, %v11295
        %v11297 = vrot.slane %v4263, 2
        %v11298 = vsel %vm10013, %v11295, %v11297
        %v11299 = vrot.slane %v4070, 2
        %v11300 = vrot.slane %v4206, 2
        %v11301 = vsel %vm10013, %v11299, %v11300
        %v11302 = vrot.slane %v4273, 2
        %v11303 = vsel %vm10013, %v11300, %v11302
        %v11304 = vrot.slane %v4071, 2
        %v11305 = vrot.slane %v4207, 2
        %v11306 = vsel %vm10013, %v11304, %v11305
        %v11307 = vrot.slane %v4270, 2
        %v11308 = vsel %vm10013, %v11305, %v11307
        %v11309 = vrot.slane %v4072, 2
        %v11310 = vrot.slane %v4208, 2
        %v11311 = vsel %vm10013, %v11309, %v11310
        %v11312 = vrot.slane %v4274, 2
        %v11313 = vsel %vm10013, %v11310, %v11312
        %11314 = vrot.lane.b32.xlu0 %v11276, 127
        %v11315 = vpop.permute.xlu0 %11314
        %11316 = vrot.lane.b32.xlu0 %v11278, 127
        %v11317 = vpop.permute.xlu0 %11316
        %11318 = vrot.lane.b32.xlu0 %v11281, 127
        %v11319 = vpop.permute.xlu0 %11318
        %11320 = vrot.lane.b32.xlu0 %v11283, 127
        %v11321 = vpop.permute.xlu0 %11320
        %11322 = vrot.lane.b32.xlu0 %v11286, 127
        %v11323 = vpop.permute.xlu0 %11322
        %11324 = vrot.lane.b32.xlu0 %v11288, 127
        %v11325 = vpop.permute.xlu0 %11324
        %11326 = vrot.lane.b32.xlu0 %v11291, 127
        %v11327 = vpop.permute.xlu0 %11326
        %11328 = vrot.lane.b32.xlu0 %v11293, 127
        %v11329 = vpop.permute.xlu0 %11328
        %11330 = vrot.lane.b32.xlu0 %v11296, 127
        %v11331 = vpop.permute.xlu0 %11330
        %11332 = vrot.lane.b32.xlu0 %v11298, 127
        %v11333 = vpop.permute.xlu0 %11332
        %11334 = vrot.lane.b32.xlu0 %v11301, 127
        %v11335 = vpop.permute.xlu0 %11334
        %11336 = vrot.lane.b32.xlu0 %v11303, 127
        %v11337 = vpop.permute.xlu0 %11336
        %11338 = vrot.lane.b32.xlu0 %v11306, 127
        %v11339 = vpop.permute.xlu0 %11338
        %11340 = vrot.lane.b32.xlu0 %v11308, 127
        %v11341 = vpop.permute.xlu0 %11340
        %11342 = vrot.lane.b32.xlu0 %v11311, 127
        %v11343 = vpop.permute.xlu0 %11342
        %11344 = vrot.lane.b32.xlu0 %v11313, 127
        %v11345 = vpop.permute.xlu0 %11344
        %v11362 = vcombine.low %v11315, %v11323
        %v11363 = vcombine.high %v11315, %v11323
        %v11365 = vunpack.c.l.s4 1983009808
        %v11366 = vunpack.c.0.s8 %v11365
        %v11367 = vlaneseq
        %v11368 = vshrl.u32 %v11367, 7
        %v11369 = vsub.s32 %v11366, %v11368
        %v11370 = vrot.slane %v11362, %v11369
        %v11372 = vunpack.c.l.s4 1983009808
        %v11373 = vunpack.c.0.s8 %v11372
        %v11374 = vlaneseq
        %v11375 = vshrl.u32 %v11374, 7
        %v11376 = vsub.s32 %v11373, %v11375
        %v11377 = vrot.slane %v11363, %v11376
        %v11378 = vcombine.low %v11319, %v11327
        %v11379 = vcombine.high %v11319, %v11327
        %v11381 = vunpack.c.l.s4 1983009808
        %v11382 = vunpack.c.0.s8 %v11381
        %v11383 = vlaneseq
        %v11384 = vshrl.u32 %v11383, 7
        %v11385 = vsub.s32 %v11382, %v11384
        %v11386 = vrot.slane %v11378, %v11385
        %v11388 = vunpack.c.l.s4 1983009808
        %v11389 = vunpack.c.0.s8 %v11388
        %v11390 = vlaneseq
        %v11391 = vshrl.u32 %v11390, 7
        %v11392 = vsub.s32 %v11389, %v11391
        %v11393 = vrot.slane %v11379, %v11392
        %v11394 = vcombine.low %v11331, %v11339
        %v11395 = vcombine.high %v11331, %v11339
        %v11397 = vunpack.c.l.s4 1983009808
        %v11398 = vunpack.c.0.s8 %v11397
        %v11399 = vlaneseq
        %v11400 = vshrl.u32 %v11399, 7
        %v11401 = vsub.s32 %v11398, %v11400
        %v11402 = vrot.slane %v11394, %v11401
        %v11404 = vunpack.c.l.s4 1983009808
        %v11405 = vunpack.c.0.s8 %v11404
        %v11406 = vlaneseq
        %v11407 = vshrl.u32 %v11406, 7
        %v11408 = vsub.s32 %v11405, %v11407
        %v11409 = vrot.slane %v11395, %v11408
        %v11410 = vcombine.low %v11335, %v11343
        %v11411 = vcombine.high %v11335, %v11343
        %v11413 = vunpack.c.l.s4 1983009808
        %v11414 = vunpack.c.0.s8 %v11413
        %v11415 = vlaneseq
        %v11416 = vshrl.u32 %v11415, 7
        %v11417 = vsub.s32 %v11414, %v11416
        %v11418 = vrot.slane %v11410, %v11417
        %v11420 = vunpack.c.l.s4 1983009808
        %v11421 = vunpack.c.0.s8 %v11420
        %v11422 = vlaneseq
        %v11423 = vshrl.u32 %v11422, 7
        %v11424 = vsub.s32 %v11421, %v11423
        %v11425 = vrot.slane %v11411, %v11424
        %v11426 = vcombine.low %v11370, %v11386
        %v11427 = vcombine.high %v11370, %v11386
        %v11429 = vunpack.c.l.s4 1934713408
        %v11430 = vunpack.c.0.s8 %v11429
        %v11431 = vlaneseq
        %v11432 = vshrl.u32 %v11431, 7
        %v11433 = vsub.s32 %v11430, %v11432
        %v11434 = vrot.slane %v11426, %v11433
        %v11436 = vunpack.c.l.s4 1934713408
        %v11437 = vunpack.c.0.s8 %v11436
        %v11438 = vlaneseq
        %v11439 = vshrl.u32 %v11438, 7
        %v11440 = vsub.s32 %v11437, %v11439
        %v11441 = vrot.slane %v11427, %v11440
        %v11442 = vcombine.low %v11377, %v11393
        %v11443 = vcombine.high %v11377, %v11393
        %v11445 = vunpack.c.l.s4 1934713408
        %v11446 = vunpack.c.0.s8 %v11445
        %v11447 = vlaneseq
        %v11448 = vshrl.u32 %v11447, 7
        %v11449 = vsub.s32 %v11446, %v11448
        %v11450 = vrot.slane %v11442, %v11449
        %v11452 = vunpack.c.l.s4 1934713408
        %v11453 = vunpack.c.0.s8 %v11452
        %v11454 = vlaneseq
        %v11455 = vshrl.u32 %v11454, 7
        %v11456 = vsub.s32 %v11453, %v11455
        %v11457 = vrot.slane %v11443, %v11456
        %v11458 = vcombine.low %v11402, %v11418
        %v11459 = vcombine.high %v11402, %v11418
        %v11461 = vunpack.c.l.s4 1934713408
        %v11462 = vunpack.c.0.s8 %v11461
        %v11463 = vlaneseq
        %v11464 = vshrl.u32 %v11463, 7
        %v11465 = vsub.s32 %v11462, %v11464
        %v11466 = vrot.slane %v11458, %v11465
        %v11468 = vunpack.c.l.s4 1934713408
        %v11469 = vunpack.c.0.s8 %v11468
        %v11470 = vlaneseq
        %v11471 = vshrl.u32 %v11470, 7
        %v11472 = vsub.s32 %v11469, %v11471
        %v11473 = vrot.slane %v11459, %v11472
        %v11474 = vcombine.low %v11409, %v11425
        %v11475 = vcombine.high %v11409, %v11425
        %v11477 = vunpack.c.l.s4 1934713408
        %v11478 = vunpack.c.0.s8 %v11477
        %v11479 = vlaneseq
        %v11480 = vshrl.u32 %v11479, 7
        %v11481 = vsub.s32 %v11478, %v11480
        %v11482 = vrot.slane %v11474, %v11481
        %v11484 = vunpack.c.l.s4 1934713408
        %v11485 = vunpack.c.0.s8 %v11484
        %v11486 = vlaneseq
        %v11487 = vshrl.u32 %v11486, 7
        %v11488 = vsub.s32 %v11485, %v11487
        %v11489 = vrot.slane %v11475, %v11488
        %v11490 = vcombine.low %v11434, %v11466
        %v11491 = vcombine.high %v11434, %v11466
        %v11492 = vcombine.low %v11441, %v11473
        %v11493 = vcombine.high %v11441, %v11473
        %v11494 = vcombine.low %v11450, %v11482
        %v11495 = vcombine.high %v11450, %v11482
        %v11496 = vcombine.low %v11457, %v11489
        %v11497 = vcombine.high %v11457, %v11489
        %v11498 = vcombine.low %v11317, %v11325
        %v11499 = vcombine.high %v11317, %v11325
        %v11501 = vunpack.c.l.s4 1983009808
        %v11502 = vunpack.c.0.s8 %v11501
        %v11503 = vlaneseq
        %v11504 = vshrl.u32 %v11503, 7
        %v11505 = vsub.s32 %v11502, %v11504
        %v11506 = vrot.slane %v11498, %v11505
        %v11508 = vunpack.c.l.s4 1983009808
        %v11509 = vunpack.c.0.s8 %v11508
        %v11510 = vlaneseq
        %v11511 = vshrl.u32 %v11510, 7
        %v11512 = vsub.s32 %v11509, %v11511
        %v11513 = vrot.slane %v11499, %v11512
        %v11514 = vcombine.low %v11321, %v11329
        %v11515 = vcombine.high %v11321, %v11329
        %v11517 = vunpack.c.l.s4 1983009808
        %v11518 = vunpack.c.0.s8 %v11517
        %v11519 = vlaneseq
        %v11520 = vshrl.u32 %v11519, 7
        %v11521 = vsub.s32 %v11518, %v11520
        %v11522 = vrot.slane %v11514, %v11521
        %v11524 = vunpack.c.l.s4 1983009808
        %v11525 = vunpack.c.0.s8 %v11524
        %v11526 = vlaneseq
        %v11527 = vshrl.u32 %v11526, 7
        %v11528 = vsub.s32 %v11525, %v11527
        %v11529 = vrot.slane %v11515, %v11528
        %v11530 = vcombine.low %v11333, %v11341
        %v11531 = vcombine.high %v11333, %v11341
        %v11533 = vunpack.c.l.s4 1983009808
        %v11534 = vunpack.c.0.s8 %v11533
        %v11535 = vlaneseq
        %v11536 = vshrl.u32 %v11535, 7
        %v11537 = vsub.s32 %v11534, %v11536
        %v11538 = vrot.slane %v11530, %v11537
        %v11540 = vunpack.c.l.s4 1983009808
        %v11541 = vunpack.c.0.s8 %v11540
        %v11542 = vlaneseq
        %v11543 = vshrl.u32 %v11542, 7
        %v11544 = vsub.s32 %v11541, %v11543
        %v11545 = vrot.slane %v11531, %v11544
        %v11546 = vcombine.low %v11337, %v11345
        %v11547 = vcombine.high %v11337, %v11345
        %v11549 = vunpack.c.l.s4 1983009808
        %v11550 = vunpack.c.0.s8 %v11549
        %v11551 = vlaneseq
        %v11552 = vshrl.u32 %v11551, 7
        %v11553 = vsub.s32 %v11550, %v11552
        %v11554 = vrot.slane %v11546, %v11553
        %v11556 = vunpack.c.l.s4 1983009808
        %v11557 = vunpack.c.0.s8 %v11556
        %v11558 = vlaneseq
        %v11559 = vshrl.u32 %v11558, 7
        %v11560 = vsub.s32 %v11557, %v11559
        %v11561 = vrot.slane %v11547, %v11560
        %v11562 = vcombine.low %v11506, %v11522
        %v11563 = vcombine.high %v11506, %v11522
        %v11565 = vunpack.c.l.s4 1934713408
        %v11566 = vunpack.c.0.s8 %v11565
        %v11567 = vlaneseq
        %v11568 = vshrl.u32 %v11567, 7
        %v11569 = vsub.s32 %v11566, %v11568
        %v11570 = vrot.slane %v11562, %v11569
        %v11572 = vunpack.c.l.s4 1934713408
        %v11573 = vunpack.c.0.s8 %v11572
        %v11574 = vlaneseq
        %v11575 = vshrl.u32 %v11574, 7
        %v11576 = vsub.s32 %v11573, %v11575
        %v11577 = vrot.slane %v11563, %v11576
        %v11578 = vcombine.low %v11513, %v11529
        %v11579 = vcombine.high %v11513, %v11529
        %v11581 = vunpack.c.l.s4 1934713408
        %v11582 = vunpack.c.0.s8 %v11581
        %v11583 = vlaneseq
        %v11584 = vshrl.u32 %v11583, 7
        %v11585 = vsub.s32 %v11582, %v11584
        %v11586 = vrot.slane %v11578, %v11585
        %v11588 = vunpack.c.l.s4 1934713408
        %v11589 = vunpack.c.0.s8 %v11588
        %v11590 = vlaneseq
        %v11591 = vshrl.u32 %v11590, 7
        %v11592 = vsub.s32 %v11589, %v11591
        %v11593 = vrot.slane %v11579, %v11592
        %v11594 = vcombine.low %v11538, %v11554
        %v11595 = vcombine.high %v11538, %v11554
        %v11597 = vunpack.c.l.s4 1934713408
        %v11598 = vunpack.c.0.s8 %v11597
        %v11599 = vlaneseq
        %v11600 = vshrl.u32 %v11599, 7
        %v11601 = vsub.s32 %v11598, %v11600
        %v11602 = vrot.slane %v11594, %v11601
        %v11604 = vunpack.c.l.s4 1934713408
        %v11605 = vunpack.c.0.s8 %v11604
        %v11606 = vlaneseq
        %v11607 = vshrl.u32 %v11606, 7
        %v11608 = vsub.s32 %v11605, %v11607
        %v11609 = vrot.slane %v11595, %v11608
        %v11610 = vcombine.low %v11545, %v11561
        %v11611 = vcombine.high %v11545, %v11561
        %v11613 = vunpack.c.l.s4 1934713408
        %v11614 = vunpack.c.0.s8 %v11613
        %v11615 = vlaneseq
        %v11616 = vshrl.u32 %v11615, 7
        %v11617 = vsub.s32 %v11614, %v11616
        %v11618 = vrot.slane %v11610, %v11617
        %v11620 = vunpack.c.l.s4 1934713408
        %v11621 = vunpack.c.0.s8 %v11620
        %v11622 = vlaneseq
        %v11623 = vshrl.u32 %v11622, 7
        %v11624 = vsub.s32 %v11621, %v11623
        %v11625 = vrot.slane %v11611, %v11624
        %v11626 = vcombine.low %v11570, %v11602
        %v11627 = vcombine.high %v11570, %v11602
        %v11628 = vcombine.low %v11577, %v11609
        %v11629 = vcombine.high %v11577, %v11609
        %v11630 = vcombine.low %v11586, %v11618
        %v11631 = vcombine.high %v11586, %v11618
        %v11632 = vcombine.low %v11593, %v11625
        %v11633 = vcombine.high %v11593, %v11625
        %11635 = vrot.lane.b32.xlu0 %v11491, 16
        %v11636 = vpop.permute.xlu0 %11635
        %11639 = vrot.lane.b32.xlu0 %v11492, 32
        %v11640 = vpop.permute.xlu0 %11639
        %11643 = vrot.lane.b32.xlu0 %v11493, 48
        %v11644 = vpop.permute.xlu0 %11643
        %11647 = vrot.lane.b32.xlu0 %v11494, 64
        %v11648 = vpop.permute.xlu0 %11647
        %11651 = vrot.lane.b32.xlu0 %v11495, 80
        %v11652 = vpop.permute.xlu0 %11651
        %11655 = vrot.lane.b32.xlu0 %v11496, 96
        %v11656 = vpop.permute.xlu0 %11655
        %11659 = vrot.lane.b32.xlu0 %v11497, 112
        %v11660 = vpop.permute.xlu0 %11659
        %11663 = vrot.lane.b32.xlu0 %v11627, 16
        %v11664 = vpop.permute.xlu0 %11663
        %11667 = vrot.lane.b32.xlu0 %v11628, 32
        %v11668 = vpop.permute.xlu0 %11667
        %11671 = vrot.lane.b32.xlu0 %v11629, 48
        %v11672 = vpop.permute.xlu0 %11671
        %11675 = vrot.lane.b32.xlu0 %v11630, 64
        %v11676 = vpop.permute.xlu0 %11675
        %11679 = vrot.lane.b32.xlu0 %v11631, 80
        %v11680 = vpop.permute.xlu0 %11679
        %11683 = vrot.lane.b32.xlu0 %v11632, 96
        %v11684 = vpop.permute.xlu0 %11683
        %11687 = vrot.lane.b32.xlu0 %v11633, 112
        %v11688 = vpop.permute.xlu0 %11687
        %v11690 = vsel %vm5054, %v11490, %v11636
        %v11691 = vsel %vm5056, %v11690, %v11640
        %v11692 = vsel %vm5058, %v11691, %v11644
        %v11693 = vsel %vm5060, %v11692, %v11648
        %v11694 = vsel %vm5062, %v11693, %v11652
        %v11695 = vsel %vm5064, %v11694, %v11656
        %v11696 = vsel %vm5066, %v11695, %v11660
        %v11697 = vsel %vm5054, %v11626, %v11664
        %v11698 = vsel %vm5056, %v11697, %v11668
        %v11699 = vsel %vm5058, %v11698, %v11672
        %v11700 = vsel %vm5060, %v11699, %v11676
        %v11701 = vsel %vm5062, %v11700, %v11680
        %v11702 = vsel %vm5064, %v11701, %v11684
        %v11703 = vsel %vm5066, %v11702, %v11688
        %v11704 = vmul.f32 %v5067, %v11242
        %v11705 = vmul.f32 %v5074, %v11249
        %v11706 = vmax.f32 %v10836, %v11704
        %v11707 = vmax.f32 %v10837, %v11705
        %v11708 = vsub.f32 %v10836, %v11706
        %v11709 = vsub.f32 %v10837, %v11707
        %v11710 = vmul.f32 %v11708, 1.442695
        %v11711 = vpow.pop %v11710
        %v11712 = vmul.f32 %v11709, 1.442695
        %v11713 = vpow.pop %v11712
        %v11714 = vsub.f32 %v11704, %v11706
        %v11715 = vsub.f32 %v11705, %v11707
        %v11716 = vmul.f32 %v11714, 1.442695
        %v11717 = vpow.pop %v11716
        %v11718 = vmul.f32 %v11715, 1.442695
        %v11719 = vpow.pop %v11718
        %v11720 = vmul.f32 %v11711, %v10852
        %v11721 = vmul.f32 %v11713, %v10853
        %v11722 = vadd.f32 %v11720, %v11717
        %v11723 = vadd.f32 %v11721, %v11719
        %v11724 = vmul.f32 %v11711, %v10858
        %v11725 = vmul.f32 %v11713, %v10859
        %v11726 = vmul.f32 %v11717, %v11696
        %v11727 = vmul.f32 %v11719, %v11703
        %v11728 = vadd.f32 %v11724, %v11726
        %v11729 = vadd.f32 %v11725, %v11727
        %11730 = vrot.lane.b32.xlu0 %v10016, 126
        %v11731 = vpop.permute.xlu0 %11730
        %11732 = vrot.lane.b32.xlu0 %v10018, 126
        %v11733 = vpop.permute.xlu0 %11732
        %11734 = vrot.lane.b32.xlu0 %v10021, 126
        %v11735 = vpop.permute.xlu0 %11734
        %11736 = vrot.lane.b32.xlu0 %v10023, 126
        %v11737 = vpop.permute.xlu0 %11736
        %11738 = vrot.lane.b32.xlu0 %v10026, 126
        %v11739 = vpop.permute.xlu0 %11738
        %11740 = vrot.lane.b32.xlu0 %v10028, 126
        %v11741 = vpop.permute.xlu0 %11740
        %11742 = vrot.lane.b32.xlu0 %v10031, 126
        %v11743 = vpop.permute.xlu0 %11742
        %11744 = vrot.lane.b32.xlu0 %v10033, 126
        %v11745 = vpop.permute.xlu0 %11744
        %11746 = vrot.lane.b32.xlu0 %v10036, 126
        %v11747 = vpop.permute.xlu0 %11746
        %11748 = vrot.lane.b32.xlu0 %v10038, 126
        %v11749 = vpop.permute.xlu0 %11748
        %11750 = vrot.lane.b32.xlu0 %v10041, 126
        %v11751 = vpop.permute.xlu0 %11750
        %11752 = vrot.lane.b32.xlu0 %v10043, 126
        %v11753 = vpop.permute.xlu0 %11752
        %11754 = vrot.lane.b32.xlu0 %v10046, 126
        %v11755 = vpop.permute.xlu0 %11754
        %11756 = vrot.lane.b32.xlu0 %v10048, 126
        %v11757 = vpop.permute.xlu0 %11756
        %11758 = vrot.lane.b32.xlu0 %v10051, 126
        %v11759 = vpop.permute.xlu0 %11758
        %11760 = vrot.lane.b32.xlu0 %v10053, 126
        %v11761 = vpop.permute.xlu0 %11760
        %v11778 = vcombine.low %v11731, %v11739
        %v11779 = vcombine.high %v11731, %v11739
        %v11781 = vunpack.c.l.s4 1983009808
        %v11782 = vunpack.c.0.s8 %v11781
        %v11783 = vlaneseq
        %v11784 = vshrl.u32 %v11783, 7
        %v11785 = vsub.s32 %v11782, %v11784
        %v11786 = vrot.slane %v11778, %v11785
        %v11788 = vunpack.c.l.s4 1983009808
        %v11789 = vunpack.c.0.s8 %v11788
        %v11790 = vlaneseq
        %v11791 = vshrl.u32 %v11790, 7
        %v11792 = vsub.s32 %v11789, %v11791
        %v11793 = vrot.slane %v11779, %v11792
        %v11794 = vcombine.low %v11735, %v11743
        %v11795 = vcombine.high %v11735, %v11743
        %v11797 = vunpack.c.l.s4 1983009808
        %v11798 = vunpack.c.0.s8 %v11797
        %v11799 = vlaneseq
        %v11800 = vshrl.u32 %v11799, 7
        %v11801 = vsub.s32 %v11798, %v11800
        %v11802 = vrot.slane %v11794, %v11801
        %v11804 = vunpack.c.l.s4 1983009808
        %v11805 = vunpack.c.0.s8 %v11804
        %v11806 = vlaneseq
        %v11807 = vshrl.u32 %v11806, 7
        %v11808 = vsub.s32 %v11805, %v11807
        %v11809 = vrot.slane %v11795, %v11808
        %v11810 = vcombine.low %v11747, %v11755
        %v11811 = vcombine.high %v11747, %v11755
        %v11813 = vunpack.c.l.s4 1983009808
        %v11814 = vunpack.c.0.s8 %v11813
        %v11815 = vlaneseq
        %v11816 = vshrl.u32 %v11815, 7
        %v11817 = vsub.s32 %v11814, %v11816
        %v11818 = vrot.slane %v11810, %v11817
        %v11820 = vunpack.c.l.s4 1983009808
        %v11821 = vunpack.c.0.s8 %v11820
        %v11822 = vlaneseq
        %v11823 = vshrl.u32 %v11822, 7
        %v11824 = vsub.s32 %v11821, %v11823
        %v11825 = vrot.slane %v11811, %v11824
        %v11826 = vcombine.low %v11751, %v11759
        %v11827 = vcombine.high %v11751, %v11759
        %v11829 = vunpack.c.l.s4 1983009808
        %v11830 = vunpack.c.0.s8 %v11829
        %v11831 = vlaneseq
        %v11832 = vshrl.u32 %v11831, 7
        %v11833 = vsub.s32 %v11830, %v11832
        %v11834 = vrot.slane %v11826, %v11833
        %v11836 = vunpack.c.l.s4 1983009808
        %v11837 = vunpack.c.0.s8 %v11836
        %v11838 = vlaneseq
        %v11839 = vshrl.u32 %v11838, 7
        %v11840 = vsub.s32 %v11837, %v11839
        %v11841 = vrot.slane %v11827, %v11840
        %v11842 = vcombine.low %v11786, %v11802
        %v11843 = vcombine.high %v11786, %v11802
        %v11845 = vunpack.c.l.s4 1934713408
        %v11846 = vunpack.c.0.s8 %v11845
        %v11847 = vlaneseq
        %v11848 = vshrl.u32 %v11847, 7
        %v11849 = vsub.s32 %v11846, %v11848
        %v11850 = vrot.slane %v11842, %v11849
        %v11852 = vunpack.c.l.s4 1934713408
        %v11853 = vunpack.c.0.s8 %v11852
        %v11854 = vlaneseq
        %v11855 = vshrl.u32 %v11854, 7
        %v11856 = vsub.s32 %v11853, %v11855
        %v11857 = vrot.slane %v11843, %v11856
        %v11858 = vcombine.low %v11793, %v11809
        %v11859 = vcombine.high %v11793, %v11809
        %v11861 = vunpack.c.l.s4 1934713408
        %v11862 = vunpack.c.0.s8 %v11861
        %v11863 = vlaneseq
        %v11864 = vshrl.u32 %v11863, 7
        %v11865 = vsub.s32 %v11862, %v11864
        %v11866 = vrot.slane %v11858, %v11865
        %v11868 = vunpack.c.l.s4 1934713408
        %v11869 = vunpack.c.0.s8 %v11868
        %v11870 = vlaneseq
        %v11871 = vshrl.u32 %v11870, 7
        %v11872 = vsub.s32 %v11869, %v11871
        %v11873 = vrot.slane %v11859, %v11872
        %v11874 = vcombine.low %v11818, %v11834
        %v11875 = vcombine.high %v11818, %v11834
        %v11877 = vunpack.c.l.s4 1934713408
        %v11878 = vunpack.c.0.s8 %v11877
        %v11879 = vlaneseq
        %v11880 = vshrl.u32 %v11879, 7
        %v11881 = vsub.s32 %v11878, %v11880
        %v11882 = vrot.slane %v11874, %v11881
        %v11884 = vunpack.c.l.s4 1934713408
        %v11885 = vunpack.c.0.s8 %v11884
        %v11886 = vlaneseq
        %v11887 = vshrl.u32 %v11886, 7
        %v11888 = vsub.s32 %v11885, %v11887
        %v11889 = vrot.slane %v11875, %v11888
        %v11890 = vcombine.low %v11825, %v11841
        %v11891 = vcombine.high %v11825, %v11841
        %v11893 = vunpack.c.l.s4 1934713408
        %v11894 = vunpack.c.0.s8 %v11893
        %v11895 = vlaneseq
        %v11896 = vshrl.u32 %v11895, 7
        %v11897 = vsub.s32 %v11894, %v11896
        %v11898 = vrot.slane %v11890, %v11897
        %v11900 = vunpack.c.l.s4 1934713408
        %v11901 = vunpack.c.0.s8 %v11900
        %v11902 = vlaneseq
        %v11903 = vshrl.u32 %v11902, 7
        %v11904 = vsub.s32 %v11901, %v11903
        %v11905 = vrot.slane %v11891, %v11904
        %v11906 = vcombine.low %v11850, %v11882
        %v11907 = vcombine.high %v11850, %v11882
        %v11908 = vcombine.low %v11857, %v11889
        %v11909 = vcombine.high %v11857, %v11889
        %v11910 = vcombine.low %v11866, %v11898
        %v11911 = vcombine.high %v11866, %v11898
        %v11912 = vcombine.low %v11873, %v11905
        %v11913 = vcombine.high %v11873, %v11905
        %v11914 = vcombine.low %v11733, %v11741
        %v11915 = vcombine.high %v11733, %v11741
        %v11917 = vunpack.c.l.s4 1983009808
        %v11918 = vunpack.c.0.s8 %v11917
        %v11919 = vlaneseq
        %v11920 = vshrl.u32 %v11919, 7
        %v11921 = vsub.s32 %v11918, %v11920
        %v11922 = vrot.slane %v11914, %v11921
        %v11924 = vunpack.c.l.s4 1983009808
        %v11925 = vunpack.c.0.s8 %v11924
        %v11926 = vlaneseq
        %v11927 = vshrl.u32 %v11926, 7
        %v11928 = vsub.s32 %v11925, %v11927
        %v11929 = vrot.slane %v11915, %v11928
        %v11930 = vcombine.low %v11737, %v11745
        %v11931 = vcombine.high %v11737, %v11745
        %v11933 = vunpack.c.l.s4 1983009808
        %v11934 = vunpack.c.0.s8 %v11933
        %v11935 = vlaneseq
        %v11936 = vshrl.u32 %v11935, 7
        %v11937 = vsub.s32 %v11934, %v11936
        %v11938 = vrot.slane %v11930, %v11937
        %v11940 = vunpack.c.l.s4 1983009808
        %v11941 = vunpack.c.0.s8 %v11940
        %v11942 = vlaneseq
        %v11943 = vshrl.u32 %v11942, 7
        %v11944 = vsub.s32 %v11941, %v11943
        %v11945 = vrot.slane %v11931, %v11944
        %v11946 = vcombine.low %v11749, %v11757
        %v11947 = vcombine.high %v11749, %v11757
        %v11949 = vunpack.c.l.s4 1983009808
        %v11950 = vunpack.c.0.s8 %v11949
        %v11951 = vlaneseq
        %v11952 = vshrl.u32 %v11951, 7
        %v11953 = vsub.s32 %v11950, %v11952
        %v11954 = vrot.slane %v11946, %v11953
        %v11956 = vunpack.c.l.s4 1983009808
        %v11957 = vunpack.c.0.s8 %v11956
        %v11958 = vlaneseq
        %v11959 = vshrl.u32 %v11958, 7
        %v11960 = vsub.s32 %v11957, %v11959
        %v11961 = vrot.slane %v11947, %v11960
        %v11962 = vcombine.low %v11753, %v11761
        %v11963 = vcombine.high %v11753, %v11761
        %v11965 = vunpack.c.l.s4 1983009808
        %v11966 = vunpack.c.0.s8 %v11965
        %v11967 = vlaneseq
        %v11968 = vshrl.u32 %v11967, 7
        %v11969 = vsub.s32 %v11966, %v11968
        %v11970 = vrot.slane %v11962, %v11969
        %v11972 = vunpack.c.l.s4 1983009808
        %v11973 = vunpack.c.0.s8 %v11972
        %v11974 = vlaneseq
        %v11975 = vshrl.u32 %v11974, 7
        %v11976 = vsub.s32 %v11973, %v11975
        %v11977 = vrot.slane %v11963, %v11976
        %v11978 = vcombine.low %v11922, %v11938
        %v11979 = vcombine.high %v11922, %v11938
        %v11981 = vunpack.c.l.s4 1934713408
        %v11982 = vunpack.c.0.s8 %v11981
        %v11983 = vlaneseq
        %v11984 = vshrl.u32 %v11983, 7
        %v11985 = vsub.s32 %v11982, %v11984
        %v11986 = vrot.slane %v11978, %v11985
        %v11988 = vunpack.c.l.s4 1934713408
        %v11989 = vunpack.c.0.s8 %v11988
        %v11990 = vlaneseq
        %v11991 = vshrl.u32 %v11990, 7
        %v11992 = vsub.s32 %v11989, %v11991
        %v11993 = vrot.slane %v11979, %v11992
        %v11994 = vcombine.low %v11929, %v11945
        %v11995 = vcombine.high %v11929, %v11945
        %v11997 = vunpack.c.l.s4 1934713408
        %v11998 = vunpack.c.0.s8 %v11997
        %v11999 = vlaneseq
        %v12000 = vshrl.u32 %v11999, 7
        %v12001 = vsub.s32 %v11998, %v12000
        %v12002 = vrot.slane %v11994, %v12001
        %v12004 = vunpack.c.l.s4 1934713408
        %v12005 = vunpack.c.0.s8 %v12004
        %v12006 = vlaneseq
        %v12007 = vshrl.u32 %v12006, 7
        %v12008 = vsub.s32 %v12005, %v12007
        %v12009 = vrot.slane %v11995, %v12008
        %v12010 = vcombine.low %v11954, %v11970
        %v12011 = vcombine.high %v11954, %v11970
        %v12013 = vunpack.c.l.s4 1934713408
        %v12014 = vunpack.c.0.s8 %v12013
        %v12015 = vlaneseq
        %v12016 = vshrl.u32 %v12015, 7
        %v12017 = vsub.s32 %v12014, %v12016
        %v12018 = vrot.slane %v12010, %v12017
        %v12020 = vunpack.c.l.s4 1934713408
        %v12021 = vunpack.c.0.s8 %v12020
        %v12022 = vlaneseq
        %v12023 = vshrl.u32 %v12022, 7
        %v12024 = vsub.s32 %v12021, %v12023
        %v12025 = vrot.slane %v12011, %v12024
        %v12026 = vcombine.low %v11961, %v11977
        %v12027 = vcombine.high %v11961, %v11977
        %v12029 = vunpack.c.l.s4 1934713408
        %v12030 = vunpack.c.0.s8 %v12029
        %v12031 = vlaneseq
        %v12032 = vshrl.u32 %v12031, 7
        %v12033 = vsub.s32 %v12030, %v12032
        %v12034 = vrot.slane %v12026, %v12033
        %v12036 = vunpack.c.l.s4 1934713408
        %v12037 = vunpack.c.0.s8 %v12036
        %v12038 = vlaneseq
        %v12039 = vshrl.u32 %v12038, 7
        %v12040 = vsub.s32 %v12037, %v12039
        %v12041 = vrot.slane %v12027, %v12040
        %v12042 = vcombine.low %v11986, %v12018
        %v12043 = vcombine.high %v11986, %v12018
        %v12044 = vcombine.low %v11993, %v12025
        %v12045 = vcombine.high %v11993, %v12025
        %v12046 = vcombine.low %v12002, %v12034
        %v12047 = vcombine.high %v12002, %v12034
        %v12048 = vcombine.low %v12009, %v12041
        %v12049 = vcombine.high %v12009, %v12041
        %12051 = vrot.lane.b32.xlu0 %v11907, 16
        %v12052 = vpop.permute.xlu0 %12051
        %12055 = vrot.lane.b32.xlu0 %v11908, 32
        %v12056 = vpop.permute.xlu0 %12055
        %12059 = vrot.lane.b32.xlu0 %v11909, 48
        %v12060 = vpop.permute.xlu0 %12059
        %12063 = vrot.lane.b32.xlu0 %v11910, 64
        %v12064 = vpop.permute.xlu0 %12063
        %12067 = vrot.lane.b32.xlu0 %v11911, 80
        %v12068 = vpop.permute.xlu0 %12067
        %12071 = vrot.lane.b32.xlu0 %v11912, 96
        %v12072 = vpop.permute.xlu0 %12071
        %12075 = vrot.lane.b32.xlu0 %v11913, 112
        %v12076 = vpop.permute.xlu0 %12075
        %12079 = vrot.lane.b32.xlu0 %v12043, 16
        %v12080 = vpop.permute.xlu0 %12079
        %12083 = vrot.lane.b32.xlu0 %v12044, 32
        %v12084 = vpop.permute.xlu0 %12083
        %12087 = vrot.lane.b32.xlu0 %v12045, 48
        %v12088 = vpop.permute.xlu0 %12087
        %12091 = vrot.lane.b32.xlu0 %v12046, 64
        %v12092 = vpop.permute.xlu0 %12091
        %12095 = vrot.lane.b32.xlu0 %v12047, 80
        %v12096 = vpop.permute.xlu0 %12095
        %12099 = vrot.lane.b32.xlu0 %v12048, 96
        %v12100 = vpop.permute.xlu0 %12099
        %12103 = vrot.lane.b32.xlu0 %v12049, 112
        %v12104 = vpop.permute.xlu0 %12103
        %v12106 = vsel %vm5054, %v11906, %v12052
        %v12107 = vsel %vm5056, %v12106, %v12056
        %v12108 = vsel %vm5058, %v12107, %v12060
        %v12109 = vsel %vm5060, %v12108, %v12064
        %v12110 = vsel %vm5062, %v12109, %v12068
        %v12111 = vsel %vm5064, %v12110, %v12072
        %v12112 = vsel %vm5066, %v12111, %v12076
        %v12113 = vsel %vm5054, %v12042, %v12080
        %v12114 = vsel %vm5056, %v12113, %v12084
        %v12115 = vsel %vm5058, %v12114, %v12088
        %v12116 = vsel %vm5060, %v12115, %v12092
        %v12117 = vsel %vm5062, %v12116, %v12096
        %v12118 = vsel %vm5064, %v12117, %v12100
        %v12119 = vsel %vm5066, %v12118, %v12104
        %v12144 = vrot.slane %v4403, 2
        %v12145 = vrot.slane %v4539, 2
        %v12146 = vsel %vm10013, %v12144, %v12145
        %v12147 = vrot.slane %v4585, 2
        %v12148 = vsel %vm10013, %v12145, %v12147
        %v12149 = vrot.slane %v4404, 2
        %v12150 = vrot.slane %v4540, 2
        %v12151 = vsel %vm10013, %v12149, %v12150
        %v12152 = vrot.slane %v4609, 2
        %v12153 = vsel %vm10013, %v12150, %v12152
        %v12154 = vrot.slane %v4405, 2
        %v12155 = vrot.slane %v4541, 2
        %v12156 = vsel %vm10013, %v12154, %v12155
        %v12157 = vrot.slane %v4592, 2
        %v12158 = vsel %vm10013, %v12155, %v12157
        %v12159 = vrot.slane %v4406, 2
        %v12160 = vrot.slane %v4542, 2
        %v12161 = vsel %vm10013, %v12159, %v12160
        %v12162 = vrot.slane %v4610, 2
        %v12163 = vsel %vm10013, %v12160, %v12162
        %v12164 = vrot.slane %v4407, 2
        %v12165 = vrot.slane %v4543, 2
        %v12166 = vsel %vm10013, %v12164, %v12165
        %v12167 = vrot.slane %v4601, 2
        %v12168 = vsel %vm10013, %v12165, %v12167
        %v12169 = vrot.slane %v4408, 2
        %v12170 = vrot.slane %v4544, 2
        %v12171 = vsel %vm10013, %v12169, %v12170
        %v12172 = vrot.slane %v4611, 2
        %v12173 = vsel %vm10013, %v12170, %v12172
        %v12174 = vrot.slane %v4409, 2
        %v12175 = vrot.slane %v4545, 2
        %v12176 = vsel %vm10013, %v12174, %v12175
        %v12177 = vrot.slane %v4608, 2
        %v12178 = vsel %vm10013, %v12175, %v12177
        %v12179 = vrot.slane %v4410, 2
        %v12180 = vrot.slane %v4546, 2
        %v12181 = vsel %vm10013, %v12179, %v12180
        %v12182 = vrot.slane %v4612, 2
        %v12183 = vsel %vm10013, %v12180, %v12182
        %12184 = vrot.lane.b32.xlu0 %v12146, 126
        %v12185 = vpop.permute.xlu0 %12184
        %12186 = vrot.lane.b32.xlu0 %v12148, 126
        %v12187 = vpop.permute.xlu0 %12186
        %12188 = vrot.lane.b32.xlu0 %v12151, 126
        %v12189 = vpop.permute.xlu0 %12188
        %12190 = vrot.lane.b32.xlu0 %v12153, 126
        %v12191 = vpop.permute.xlu0 %12190
        %12192 = vrot.lane.b32.xlu0 %v12156, 126
        %v12193 = vpop.permute.xlu0 %12192
        %12194 = vrot.lane.b32.xlu0 %v12158, 126
        %v12195 = vpop.permute.xlu0 %12194
        %12196 = vrot.lane.b32.xlu0 %v12161, 126
        %v12197 = vpop.permute.xlu0 %12196
        %12198 = vrot.lane.b32.xlu0 %v12163, 126
        %v12199 = vpop.permute.xlu0 %12198
        %12200 = vrot.lane.b32.xlu0 %v12166, 126
        %v12201 = vpop.permute.xlu0 %12200
        %12202 = vrot.lane.b32.xlu0 %v12168, 126
        %v12203 = vpop.permute.xlu0 %12202
        %12204 = vrot.lane.b32.xlu0 %v12171, 126
        %v12205 = vpop.permute.xlu0 %12204
        %12206 = vrot.lane.b32.xlu0 %v12173, 126
        %v12207 = vpop.permute.xlu0 %12206
        %12208 = vrot.lane.b32.xlu0 %v12176, 126
        %v12209 = vpop.permute.xlu0 %12208
        %12210 = vrot.lane.b32.xlu0 %v12178, 126
        %v12211 = vpop.permute.xlu0 %12210
        %12212 = vrot.lane.b32.xlu0 %v12181, 126
        %v12213 = vpop.permute.xlu0 %12212
        %12214 = vrot.lane.b32.xlu0 %v12183, 126
        %v12215 = vpop.permute.xlu0 %12214
        %v12232 = vcombine.low %v12185, %v12193
        %v12233 = vcombine.high %v12185, %v12193
        %v12235 = vunpack.c.l.s4 1983009808
        %v12236 = vunpack.c.0.s8 %v12235
        %v12237 = vlaneseq
        %v12238 = vshrl.u32 %v12237, 7
        %v12239 = vsub.s32 %v12236, %v12238
        %v12240 = vrot.slane %v12232, %v12239
        %v12242 = vunpack.c.l.s4 1983009808
        %v12243 = vunpack.c.0.s8 %v12242
        %v12244 = vlaneseq
        %v12245 = vshrl.u32 %v12244, 7
        %v12246 = vsub.s32 %v12243, %v12245
        %v12247 = vrot.slane %v12233, %v12246
        %v12248 = vcombine.low %v12189, %v12197
        %v12249 = vcombine.high %v12189, %v12197
        %v12251 = vunpack.c.l.s4 1983009808
        %v12252 = vunpack.c.0.s8 %v12251
        %v12253 = vlaneseq
        %v12254 = vshrl.u32 %v12253, 7
        %v12255 = vsub.s32 %v12252, %v12254
        %v12256 = vrot.slane %v12248, %v12255
        %v12258 = vunpack.c.l.s4 1983009808
        %v12259 = vunpack.c.0.s8 %v12258
        %v12260 = vlaneseq
        %v12261 = vshrl.u32 %v12260, 7
        %v12262 = vsub.s32 %v12259, %v12261
        %v12263 = vrot.slane %v12249, %v12262
        %v12264 = vcombine.low %v12201, %v12209
        %v12265 = vcombine.high %v12201, %v12209
        %v12267 = vunpack.c.l.s4 1983009808
        %v12268 = vunpack.c.0.s8 %v12267
        %v12269 = vlaneseq
        %v12270 = vshrl.u32 %v12269, 7
        %v12271 = vsub.s32 %v12268, %v12270
        %v12272 = vrot.slane %v12264, %v12271
        %v12274 = vunpack.c.l.s4 1983009808
        %v12275 = vunpack.c.0.s8 %v12274
        %v12276 = vlaneseq
        %v12277 = vshrl.u32 %v12276, 7
        %v12278 = vsub.s32 %v12275, %v12277
        %v12279 = vrot.slane %v12265, %v12278
        %v12280 = vcombine.low %v12205, %v12213
        %v12281 = vcombine.high %v12205, %v12213
        %v12283 = vunpack.c.l.s4 1983009808
        %v12284 = vunpack.c.0.s8 %v12283
        %v12285 = vlaneseq
        %v12286 = vshrl.u32 %v12285, 7
        %v12287 = vsub.s32 %v12284, %v12286
        %v12288 = vrot.slane %v12280, %v12287
        %v12290 = vunpack.c.l.s4 1983009808
        %v12291 = vunpack.c.0.s8 %v12290
        %v12292 = vlaneseq
        %v12293 = vshrl.u32 %v12292, 7
        %v12294 = vsub.s32 %v12291, %v12293
        %v12295 = vrot.slane %v12281, %v12294
        %v12296 = vcombine.low %v12240, %v12256
        %v12297 = vcombine.high %v12240, %v12256
        %v12299 = vunpack.c.l.s4 1934713408
        %v12300 = vunpack.c.0.s8 %v12299
        %v12301 = vlaneseq
        %v12302 = vshrl.u32 %v12301, 7
        %v12303 = vsub.s32 %v12300, %v12302
        %v12304 = vrot.slane %v12296, %v12303
        %v12306 = vunpack.c.l.s4 1934713408
        %v12307 = vunpack.c.0.s8 %v12306
        %v12308 = vlaneseq
        %v12309 = vshrl.u32 %v12308, 7
        %v12310 = vsub.s32 %v12307, %v12309
        %v12311 = vrot.slane %v12297, %v12310
        %v12312 = vcombine.low %v12247, %v12263
        %v12313 = vcombine.high %v12247, %v12263
        %v12315 = vunpack.c.l.s4 1934713408
        %v12316 = vunpack.c.0.s8 %v12315
        %v12317 = vlaneseq
        %v12318 = vshrl.u32 %v12317, 7
        %v12319 = vsub.s32 %v12316, %v12318
        %v12320 = vrot.slane %v12312, %v12319
        %v12322 = vunpack.c.l.s4 1934713408
        %v12323 = vunpack.c.0.s8 %v12322
        %v12324 = vlaneseq
        %v12325 = vshrl.u32 %v12324, 7
        %v12326 = vsub.s32 %v12323, %v12325
        %v12327 = vrot.slane %v12313, %v12326
        %v12328 = vcombine.low %v12272, %v12288
        %v12329 = vcombine.high %v12272, %v12288
        %v12331 = vunpack.c.l.s4 1934713408
        %v12332 = vunpack.c.0.s8 %v12331
        %v12333 = vlaneseq
        %v12334 = vshrl.u32 %v12333, 7
        %v12335 = vsub.s32 %v12332, %v12334
        %v12336 = vrot.slane %v12328, %v12335
        %v12338 = vunpack.c.l.s4 1934713408
        %v12339 = vunpack.c.0.s8 %v12338
        %v12340 = vlaneseq
        %v12341 = vshrl.u32 %v12340, 7
        %v12342 = vsub.s32 %v12339, %v12341
        %v12343 = vrot.slane %v12329, %v12342
        %v12344 = vcombine.low %v12279, %v12295
        %v12345 = vcombine.high %v12279, %v12295
        %v12347 = vunpack.c.l.s4 1934713408
        %v12348 = vunpack.c.0.s8 %v12347
        %v12349 = vlaneseq
        %v12350 = vshrl.u32 %v12349, 7
        %v12351 = vsub.s32 %v12348, %v12350
        %v12352 = vrot.slane %v12344, %v12351
        %v12354 = vunpack.c.l.s4 1934713408
        %v12355 = vunpack.c.0.s8 %v12354
        %v12356 = vlaneseq
        %v12357 = vshrl.u32 %v12356, 7
        %v12358 = vsub.s32 %v12355, %v12357
        %v12359 = vrot.slane %v12345, %v12358
        %v12360 = vcombine.low %v12304, %v12336
        %v12361 = vcombine.high %v12304, %v12336
        %v12362 = vcombine.low %v12311, %v12343
        %v12363 = vcombine.high %v12311, %v12343
        %v12364 = vcombine.low %v12320, %v12352
        %v12365 = vcombine.high %v12320, %v12352
        %v12366 = vcombine.low %v12327, %v12359
        %v12367 = vcombine.high %v12327, %v12359
        %v12368 = vcombine.low %v12187, %v12195
        %v12369 = vcombine.high %v12187, %v12195
        %v12371 = vunpack.c.l.s4 1983009808
        %v12372 = vunpack.c.0.s8 %v12371
        %v12373 = vlaneseq
        %v12374 = vshrl.u32 %v12373, 7
        %v12375 = vsub.s32 %v12372, %v12374
        %v12376 = vrot.slane %v12368, %v12375
        %v12378 = vunpack.c.l.s4 1983009808
        %v12379 = vunpack.c.0.s8 %v12378
        %v12380 = vlaneseq
        %v12381 = vshrl.u32 %v12380, 7
        %v12382 = vsub.s32 %v12379, %v12381
        %v12383 = vrot.slane %v12369, %v12382
        %v12384 = vcombine.low %v12191, %v12199
        %v12385 = vcombine.high %v12191, %v12199
        %v12387 = vunpack.c.l.s4 1983009808
        %v12388 = vunpack.c.0.s8 %v12387
        %v12389 = vlaneseq
        %v12390 = vshrl.u32 %v12389, 7
        %v12391 = vsub.s32 %v12388, %v12390
        %v12392 = vrot.slane %v12384, %v12391
        %v12394 = vunpack.c.l.s4 1983009808
        %v12395 = vunpack.c.0.s8 %v12394
        %v12396 = vlaneseq
        %v12397 = vshrl.u32 %v12396, 7
        %v12398 = vsub.s32 %v12395, %v12397
        %v12399 = vrot.slane %v12385, %v12398
        %v12400 = vcombine.low %v12203, %v12211
        %v12401 = vcombine.high %v12203, %v12211
        %v12403 = vunpack.c.l.s4 1983009808
        %v12404 = vunpack.c.0.s8 %v12403
        %v12405 = vlaneseq
        %v12406 = vshrl.u32 %v12405, 7
        %v12407 = vsub.s32 %v12404, %v12406
        %v12408 = vrot.slane %v12400, %v12407
        %v12410 = vunpack.c.l.s4 1983009808
        %v12411 = vunpack.c.0.s8 %v12410
        %v12412 = vlaneseq
        %v12413 = vshrl.u32 %v12412, 7
        %v12414 = vsub.s32 %v12411, %v12413
        %v12415 = vrot.slane %v12401, %v12414
        %v12416 = vcombine.low %v12207, %v12215
        %v12417 = vcombine.high %v12207, %v12215
        %v12419 = vunpack.c.l.s4 1983009808
        %v12420 = vunpack.c.0.s8 %v12419
        %v12421 = vlaneseq
        %v12422 = vshrl.u32 %v12421, 7
        %v12423 = vsub.s32 %v12420, %v12422
        %v12424 = vrot.slane %v12416, %v12423
        %v12426 = vunpack.c.l.s4 1983009808
        %v12427 = vunpack.c.0.s8 %v12426
        %v12428 = vlaneseq
        %v12429 = vshrl.u32 %v12428, 7
        %v12430 = vsub.s32 %v12427, %v12429
        %v12431 = vrot.slane %v12417, %v12430
        %v12432 = vcombine.low %v12376, %v12392
        %v12433 = vcombine.high %v12376, %v12392
        %v12435 = vunpack.c.l.s4 1934713408
        %v12436 = vunpack.c.0.s8 %v12435
        %v12437 = vlaneseq
        %v12438 = vshrl.u32 %v12437, 7
        %v12439 = vsub.s32 %v12436, %v12438
        %v12440 = vrot.slane %v12432, %v12439
        %v12442 = vunpack.c.l.s4 1934713408
        %v12443 = vunpack.c.0.s8 %v12442
        %v12444 = vlaneseq
        %v12445 = vshrl.u32 %v12444, 7
        %v12446 = vsub.s32 %v12443, %v12445
        %v12447 = vrot.slane %v12433, %v12446
        %v12448 = vcombine.low %v12383, %v12399
        %v12449 = vcombine.high %v12383, %v12399
        %v12451 = vunpack.c.l.s4 1934713408
        %v12452 = vunpack.c.0.s8 %v12451
        %v12453 = vlaneseq
        %v12454 = vshrl.u32 %v12453, 7
        %v12455 = vsub.s32 %v12452, %v12454
        %v12456 = vrot.slane %v12448, %v12455
        %v12458 = vunpack.c.l.s4 1934713408
        %v12459 = vunpack.c.0.s8 %v12458
        %v12460 = vlaneseq
        %v12461 = vshrl.u32 %v12460, 7
        %v12462 = vsub.s32 %v12459, %v12461
        %v12463 = vrot.slane %v12449, %v12462
        %v12464 = vcombine.low %v12408, %v12424
        %v12465 = vcombine.high %v12408, %v12424
        %v12467 = vunpack.c.l.s4 1934713408
        %v12468 = vunpack.c.0.s8 %v12467
        %v12469 = vlaneseq
        %v12470 = vshrl.u32 %v12469, 7
        %v12471 = vsub.s32 %v12468, %v12470
        %v12472 = vrot.slane %v12464, %v12471
        %v12474 = vunpack.c.l.s4 1934713408
        %v12475 = vunpack.c.0.s8 %v12474
        %v12476 = vlaneseq
        %v12477 = vshrl.u32 %v12476, 7
        %v12478 = vsub.s32 %v12475, %v12477
        %v12479 = vrot.slane %v12465, %v12478
        %v12480 = vcombine.low %v12415, %v12431
        %v12481 = vcombine.high %v12415, %v12431
        %v12483 = vunpack.c.l.s4 1934713408
        %v12484 = vunpack.c.0.s8 %v12483
        %v12485 = vlaneseq
        %v12486 = vshrl.u32 %v12485, 7
        %v12487 = vsub.s32 %v12484, %v12486
        %v12488 = vrot.slane %v12480, %v12487
        %v12490 = vunpack.c.l.s4 1934713408
        %v12491 = vunpack.c.0.s8 %v12490
        %v12492 = vlaneseq
        %v12493 = vshrl.u32 %v12492, 7
        %v12494 = vsub.s32 %v12491, %v12493
        %v12495 = vrot.slane %v12481, %v12494
        %v12496 = vcombine.low %v12440, %v12472
        %v12497 = vcombine.high %v12440, %v12472
        %v12498 = vcombine.low %v12447, %v12479
        %v12499 = vcombine.high %v12447, %v12479
        %v12500 = vcombine.low %v12456, %v12488
        %v12501 = vcombine.high %v12456, %v12488
        %v12502 = vcombine.low %v12463, %v12495
        %v12503 = vcombine.high %v12463, %v12495
        %12505 = vrot.lane.b32.xlu0 %v12361, 16
        %v12506 = vpop.permute.xlu0 %12505
        %12509 = vrot.lane.b32.xlu0 %v12362, 32
        %v12510 = vpop.permute.xlu0 %12509
        %12513 = vrot.lane.b32.xlu0 %v12363, 48
        %v12514 = vpop.permute.xlu0 %12513
        %12517 = vrot.lane.b32.xlu0 %v12364, 64
        %v12518 = vpop.permute.xlu0 %12517
        %12521 = vrot.lane.b32.xlu0 %v12365, 80
        %v12522 = vpop.permute.xlu0 %12521
        %12525 = vrot.lane.b32.xlu0 %v12366, 96
        %v12526 = vpop.permute.xlu0 %12525
        %12529 = vrot.lane.b32.xlu0 %v12367, 112
        %v12530 = vpop.permute.xlu0 %12529
        %12533 = vrot.lane.b32.xlu0 %v12497, 16
        %v12534 = vpop.permute.xlu0 %12533
        %12537 = vrot.lane.b32.xlu0 %v12498, 32
        %v12538 = vpop.permute.xlu0 %12537
        %12541 = vrot.lane.b32.xlu0 %v12499, 48
        %v12542 = vpop.permute.xlu0 %12541
        %12545 = vrot.lane.b32.xlu0 %v12500, 64
        %v12546 = vpop.permute.xlu0 %12545
        %12549 = vrot.lane.b32.xlu0 %v12501, 80
        %v12550 = vpop.permute.xlu0 %12549
        %12553 = vrot.lane.b32.xlu0 %v12502, 96
        %v12554 = vpop.permute.xlu0 %12553
        %12557 = vrot.lane.b32.xlu0 %v12503, 112
        %v12558 = vpop.permute.xlu0 %12557
        %v12560 = vsel %vm5054, %v12360, %v12506
        %v12561 = vsel %vm5056, %v12560, %v12510
        %v12562 = vsel %vm5058, %v12561, %v12514
        %v12563 = vsel %vm5060, %v12562, %v12518
        %v12564 = vsel %vm5062, %v12563, %v12522
        %v12565 = vsel %vm5064, %v12564, %v12526
        %v12566 = vsel %vm5066, %v12565, %v12530
        %v12567 = vsel %vm5054, %v12496, %v12534
        %v12568 = vsel %vm5056, %v12567, %v12538
        %v12569 = vsel %vm5058, %v12568, %v12542
        %v12570 = vsel %vm5060, %v12569, %v12546
        %v12571 = vsel %vm5062, %v12570, %v12550
        %v12572 = vsel %vm5064, %v12571, %v12554
        %v12573 = vsel %vm5066, %v12572, %v12558
        %v12574 = vmul.f32 %v5067, %v12112
        %v12575 = vmul.f32 %v5074, %v12119
        %v12576 = vmax.f32 %v11706, %v12574
        %v12577 = vmax.f32 %v11707, %v12575
        %v12578 = vsub.f32 %v11706, %v12576
        %v12579 = vsub.f32 %v11707, %v12577
        %v12580 = vmul.f32 %v12578, 1.442695
        %v12581 = vpow.pop %v12580
        %v12582 = vmul.f32 %v12579, 1.442695
        %v12583 = vpow.pop %v12582
        %v12584 = vsub.f32 %v12574, %v12576
        %v12585 = vsub.f32 %v12575, %v12577
        %v12586 = vmul.f32 %v12584, 1.442695
        %v12587 = vpow.pop %v12586
        %v12588 = vmul.f32 %v12585, 1.442695
        %v12589 = vpow.pop %v12588
        %v12590 = vmul.f32 %v12581, %v11722
        %v12591 = vmul.f32 %v12583, %v11723
        %v12592 = vadd.f32 %v12590, %v12587
        %v12593 = vadd.f32 %v12591, %v12589
        %v12594 = vmul.f32 %v12581, %v11728
        %v12595 = vmul.f32 %v12583, %v11729
        %v12596 = vmul.f32 %v12587, %v12566
        %v12597 = vmul.f32 %v12589, %v12573
        %v12598 = vadd.f32 %v12594, %v12596
        %v12599 = vadd.f32 %v12595, %v12597
        %v12600 = vrcp.pop %v12592
        %v12601 = vrcp.pop %v12593
        %v12602 = vmul.f32 %v12598, %v12600
        %v12603 = vmul.f32 %v12599, %v12601
        %12604 = vst [vmem:[%s136] sm:$0xff] %v12602
        %12605 = vst [vmem:[%s136 + $0x8] sm:$0xff] %v12603
        %s12606 = sand.u32 %s71, 1
        %s12607 = scalar_lea.sflag [#allocation3], %s12606
        %s12608 = sand.u32 %s71, 1
        %s12609 = smul.addr %s12608, 16
        %s12610 = scalar_lea.vmem [#allocation2], %s12609
        // Predicated region
        $region29: #{tpu_custom_call.1} parent=27 // pred_check
          %p12611 = pneg %p81
        $region30: #{tpu_custom_call.1} parent=27 // pred_check_branch
          %12613 = sbr.rel (%p12611) target = $region32
        $region31: #{tpu_custom_call.1} parent=27 // pred_region
          %s12615 = ssub.s32 256, 256
          %12616 = vsyncadd %s12607, %s12615
          %s12617 = smul.addr %s16, 2
          %s12618 = smul.addr %s12617, 128
          %s12619 = scalar_lea.hbm %s2, %s12618
          %s12621 = sshll.u32 %s12610, 4
          %s12622 = int_to_ptr.vmem [resolvable:$true] %s12621
          %12624 = dma.vmem_to_hbm [thread:$0]  %s12622, 256, %s12619, %s12607
        $region32: #{tpu_custom_call.1} parent=27 // pred_fallthru
          _
      $region28: #{tpu_custom_call.1} parent=5 // pred_fallthru
        _
      %p12625 = scmp.le.s32.totalorder 2, %s11
      // Predicated region
      $region33: #{tpu_custom_call.1} parent=5 // pred_check
        %p12626 = pneg %p12625
      $region34: #{tpu_custom_call.1} parent=5 // pred_check_branch
        %12628 = sbr.rel (%p12626) target = $region36
      $region35: #{tpu_custom_call.1} parent=5 // pred_region
        %s12629 = ssub.s32 %s11, 2
        // Predicated region
        $region37: #{tpu_custom_call.1} parent=35 // pred_check
          %p12630 = pneg %p87
        $region38: #{tpu_custom_call.1} parent=35 // pred_check_branch
          %12632 = sbr.rel (%p12630) target = $region40
        $region39: #{tpu_custom_call.1} parent=35 // pred_region
          %s12633 = sand.u32 %s72, 1
          %s12634 = scalar_lea.sflag [#allocation3], %s12633
          %s12635 = sand.u32 %s72, 1
          %s12636 = smul.addr %s12635, 16
          %s12637 = scalar_lea.vmem [#allocation2], %s12636
          %12638 = dma.done %s12634, 256
        $region40: #{tpu_custom_call.1} parent=35 // pred_fallthru
          _
      $region36: #{tpu_custom_call.1} parent=5 // pred_fallthru
        _
    $region6: #{tpu_custom_call.1} parent=1 // loop_footer
      %s15 = sadd.s32 1, %s11
    $region7: #{tpu_custom_call.1} parent=1 // loop_footer_branch
      %10 = sbr.rel target = $region3
    $region8: #{tpu_custom_call.1} parent=1 // loop_exit
      _
    %12639 = vsyncpa [#allocation3], 1
    %s12640 = scalar_lea.sflag [#allocation3], 1
    %12641 = vsyncpa %s12640, 1

</llo_original>
